<compile_context>
chip_gen: v5e
topology: v5e:2x2
jax: 0.10.0
libtpu: 0.0.40
codegen_flags: <defaults>
</compile_context>

<pallas_src>
import jax
import jax.numpy as jnp
from jax.experimental import pallas as pl
from jax.experimental.pallas import tpu as pltpu

FEATURE_NUM = 18
HIDDEN_DIM = 64          # H
F_PAD = 128              # padded feature (contraction) width
GATE_PAD = 128           # each live gate (i, g, o) padded to one 128-lane block
D1, D1_PAD = 1028, 1152  # first dense layer width, padded to a multiple of 128
D2, D3 = 512, 128
OUT_PAD = 128            # final scalar output padded to a lane-dense block
TILE_B = 256             # batch tile (>= MXU height on v5e/v6e/v7x)


def _lstm_regression_kernel(x_ref, wg_ref, bg_ref,
                            w1_ref, b1_ref, w2_ref, b2_ref,
                            w3_ref, b3_ref, w4_ref, b4_ref,
                            out_ref):
    # ---- LSTM cell, single time step, zero initial state ----
    x = x_ref[...]                                                     # (TB, 128) bf16
    gates = jnp.dot(x, wg_ref[...],
                    preferred_element_type=jnp.float32) + bg_ref[...]  # (TB, 384) f32

    i_g = jax.nn.sigmoid(gates[:, 0 * GATE_PAD:1 * GATE_PAD])
    g_g = jnp.tanh(gates[:, 1 * GATE_PAD:2 * GATE_PAD])
    o_g = jax.nn.sigmoid(gates[:, 2 * GATE_PAD:3 * GATE_PAD])
    # Padded gate lanes: g == tanh(0) == 0, so h == 0 there and the zero-padded
    # rows of w1 never see garbage.
    h = (o_g * jnp.tanh(i_g * g_g)).astype(jnp.bfloat16)               # (TB, 128)

    # ---- dense head: 4 stacked Linears, no activations ----
    a = jnp.dot(h, w1_ref[...], preferred_element_type=jnp.float32) + b1_ref[...]
    a = jnp.dot(a.astype(jnp.bfloat16), w2_ref[...],
                preferred_element_type=jnp.float32) + b2_ref[...]
    a = jnp.dot(a.astype(jnp.bfloat16), w3_ref[...],
                preferred_element_type=jnp.float32) + b3_ref[...]
    a = jnp.dot(a.astype(jnp.bfloat16), w4_ref[...],
                preferred_element_type=jnp.float32) + b4_ref[...]
    out_ref[...] = a.astype(out_ref.dtype)                             # (TB, 128); col 0 = result


def lstm_regression_forward(x, kparams, tile_b=TILE_B):
    """x: (B, feature_num) f32. kparams: packed/padded kernel parameters."""
    B = x.shape[0]
    num_tiles = pl.cdiv(B, tile_b)
    b_pad = num_tiles * tile_b

    # Pad batch to a tile multiple and features to 128 lanes; cast to bf16.
    x_p = jnp.zeros((b_pad, F_PAD), jnp.bfloat16)
    x_p = x_p.at[:B, :FEATURE_NUM].set(x.astype(jnp.bfloat16))

    weights = (kparams["wg"], kparams["bg"],
               kparams["w1"], kparams["b1"], kparams["w2"], kparams["b2"],
               kparams["w3"], kparams["b3"], kparams["w4"], kparams["b4"])

    def resident(a):  # weight/bias stays VMEM-resident across the batch grid
        return pl.BlockSpec(a.shape, lambda b: (0, 0))

    weight_bytes = sum(int(a.size) * a.dtype.itemsize for a in weights)
    flops_per_row = 2 * (F_PAD * 3 * GATE_PAD + GATE_PAD * D1_PAD
                         + D1_PAD * D2 + D2 * D3 + D3 * OUT_PAD)
    cost = pl.CostEstimate(
        flops=b_pad * flops_per_row,
        transcendentals=b_pad * 4 * GATE_PAD,
        bytes_accessed=weight_bytes + b_pad * F_PAD * 2 + b_pad * OUT_PAD * 4)

    out = pl.pallas_call(
        _lstm_regression_kernel,
        out_shape=jax.ShapeDtypeStruct((b_pad, OUT_PAD), jnp.float32),
        grid_spec=pltpu.PrefetchScalarGridSpec(
            num_scalar_prefetch=0,
            grid=(num_tiles,),
            in_specs=[pl.BlockSpec((tile_b, F_PAD), lambda b: (b, 0))]
                     + [resident(a) for a in weights],
            out_specs=pl.BlockSpec((tile_b, OUT_PAD), lambda b: (b, 0)),
        ),
        compiler_params=pltpu.CompilerParams(
            dimension_semantics=("parallel",)),
        cost_estimate=cost,
    )(x_p, *weights)

    return out[:B, :1]


def init_torch_params(key):
    """PyTorch-shaped parameters. Values are bf16-quantized (stored f32) so the
    pure-f32 reference and the bf16 kernel see bit-identical parameters."""
    ks = jax.random.split(key, 11)
    scale = 0.05

    def q(a):
        return a.astype(jnp.bfloat16).astype(jnp.float32)

    p = {
        "w_ih": q(scale * jax.random.normal(ks[0], (4 * HIDDEN_DIM, FEATURE_NUM), jnp.float32)),
        "b_ih": q(scale * jax.random.normal(ks[1], (4 * HIDDEN_DIM,), jnp.float32)),
        "b_hh": q(scale * jax.random.normal(ks[2], (4 * HIDDEN_DIM,), jnp.float32)),
    }
    dims = (HIDDEN_DIM, D1, D2, D3, 1)
    for li in range(4):
        p[f"w{li + 1}"] = q(scale * jax.random.normal(
            ks[3 + 2 * li], (dims[li + 1], dims[li]), jnp.float32))
        p[f"b{li + 1}"] = q(scale * jax.random.normal(
            ks[4 + 2 * li], (dims[li + 1],), jnp.float32))
    return p


def pack_params(tp):
    """Pack PyTorch-layout params into the padded, transposed kernel layout."""
    H = HIDDEN_DIM
    w_ih_t = tp["w_ih"].T                  # (F, 4H)
    b = tp["b_ih"] + tp["b_hh"]            # (4H,)

    wg = jnp.zeros((F_PAD, 3 * GATE_PAD), jnp.float32)
    bg = jnp.zeros((1, 3 * GATE_PAD), jnp.float32)
    # PyTorch gate order is (i, f, g, o); f multiplies c0 == 0 and is dropped.
    for dst, src in enumerate((0, 2, 3)):  # i, g, o
        wg = wg.at[:FEATURE_NUM, dst * GATE_PAD:dst * GATE_PAD + H].set(
            w_ih_t[:, src * H:(src + 1) * H])
        bg = bg.at[:, dst * GATE_PAD:dst * GATE_PAD + H].set(
            b[src * H:(src + 1) * H])

    w1 = jnp.zeros((GATE_PAD, D1_PAD), jnp.float32).at[:H, :D1].set(tp["w1"].T)
    b1 = jnp.zeros((1, D1_PAD), jnp.float32).at[:, :D1].set(tp["b1"])
    w2 = jnp.zeros((D1_PAD, D2), jnp.float32).at[:D1, :].set(tp["w2"].T)
    b2 = tp["b2"].reshape(1, D2)
    w3 = tp["w3"].T                        # (512, 128)
    b3 = tp["b3"].reshape(1, D3)
    w4 = jnp.zeros((D3, OUT_PAD), jnp.float32).at[:, :1].set(tp["w4"].T)
    b4 = jnp.zeros((1, OUT_PAD), jnp.float32).at[:, :1].set(tp["b4"])

    bf = lambda a: a.astype(jnp.bfloat16)
    return {"wg": bf(wg), "bg": bg,          # biases stay f32 (added post-accumulation)
            "w1": bf(w1), "b1": b1, "w2": bf(w2), "b2": b2,
            "w3": bf(w3), "b3": b3, "w4": bf(w4), "b4": b4}


def reference_forward(x, tp):
    """Pure-JAX f32 reference of the full PyTorch forward (sanity check)."""
    H = HIDDEN_DIM
    gates = x @ tp["w_ih"].T + tp["b_ih"] + tp["b_hh"]
    i = jax.nn.sigmoid(gates[:, 0 * H:1 * H])
    f = jax.nn.sigmoid(gates[:, 1 * H:2 * H])   # multiplies c0 == 0
    g = jnp.tanh(gates[:, 2 * H:3 * H])
    o = jax.nn.sigmoid(gates[:, 3 * H:4 * H])
    c = f * 0.0 + i * g
    h = o * jnp.tanh(c)
    for li in range(1, 5):
        h = h @ tp[f"w{li}"].T + tp[f"b{li}"]
    return h


if __name__ == "__main__":
    key = jax.random.PRNGKey(0)
    k_x, k_p = jax.random.split(key)

    B = 8
    x = jax.random.normal(k_x, (B, FEATURE_NUM), jnp.float32)
    x = x.astype(jnp.bfloat16).astype(jnp.float32)  # quantize once; kernel & ref see same values

    tparams = init_torch_params(k_p)
    kparams = pack_params(tparams)

    out = lstm_regression_forward(x, kparams)
    out = jax.block_until_ready(out)
    ref = reference_forward(x, tparams)

    assert out.shape == (B, 1), out.shape
    assert bool(jnp.all(jnp.isfinite(out)))
    # bf16 intermediate activations vs f32 reference -> relaxed tolerance.
    assert jnp.allclose(out, ref, atol=3e-2, rtol=3e-2), (out, ref)

    print("KERNEL_OK")
</pallas_src>

<mosaic_0001>
module attributes {stable_mosaic.version = 11 : i64} {
  func.func @_lstm_regression_kernel(%arg0: i32, %arg1: memref<256x128xbf16, #tpu.memory_space<vmem>>, %arg2: memref<128x384xbf16, #tpu.memory_space<vmem>>, %arg3: memref<1x384xf32, #tpu.memory_space<vmem>>, %arg4: memref<128x1152xbf16, #tpu.memory_space<vmem>>, %arg5: memref<1x1152xf32, #tpu.memory_space<vmem>>, %arg6: memref<1152x512xbf16, #tpu.memory_space<vmem>>, %arg7: memref<1x512xf32, #tpu.memory_space<vmem>>, %arg8: memref<512x128xbf16, #tpu.memory_space<vmem>>, %arg9: memref<1x128xf32, #tpu.memory_space<vmem>>, %arg10: memref<128x128xbf16, #tpu.memory_space<vmem>>, %arg11: memref<1x128xf32, #tpu.memory_space<vmem>>, %arg12: memref<256x128xf32, #tpu.memory_space<vmem>>) attributes {dimension_semantics = [#tpu.dimension_semantics<parallel>], iteration_bounds = array<i64: 1>, scalar_prefetch = 0 : i64, scratch_operands = 0 : i64, tpu.core_type = #tpu.core_type<tc>, window_params = [{transform_indices = @transform_0, window_bounds = array<i64: 256, 128>}, {pipeline_mode = #tpu.pipeline_mode<synchronous>, transform_indices = @transform_1, window_bounds = array<i64: 128, 384>}, {pipeline_mode = #tpu.pipeline_mode<synchronous>, transform_indices = @transform_2, window_bounds = array<i64: 1, 384>}, {pipeline_mode = #tpu.pipeline_mode<synchronous>, transform_indices = @transform_3, window_bounds = array<i64: 128, 1152>}, {pipeline_mode = #tpu.pipeline_mode<synchronous>, transform_indices = @transform_4, window_bounds = array<i64: 1, 1152>}, {pipeline_mode = #tpu.pipeline_mode<synchronous>, transform_indices = @transform_5, window_bounds = array<i64: 1152, 512>}, {pipeline_mode = #tpu.pipeline_mode<synchronous>, transform_indices = @transform_6, window_bounds = array<i64: 1, 512>}, {pipeline_mode = #tpu.pipeline_mode<synchronous>, transform_indices = @transform_7, window_bounds = array<i64: 512, 128>}, {pipeline_mode = #tpu.pipeline_mode<synchronous>, transform_indices = @transform_8, window_bounds = array<i64: 1, 128>}, {pipeline_mode = #tpu.pipeline_mode<synchronous>, transform_indices = @transform_9, window_bounds = array<i64: 128, 128>}, {pipeline_mode = #tpu.pipeline_mode<synchronous>, transform_indices = @transform_10, window_bounds = array<i64: 1, 128>}, {transform_indices = @transform_11, window_bounds = array<i64: 256, 128>}]} {
    %c0 = arith.constant 0 : index
    %c0_0 = arith.constant 0 : index
    %0 = vector.load %arg1[%c0, %c0_0] : memref<256x128xbf16, #tpu.memory_space<vmem>>, vector<256x128xbf16>
    %c0_1 = arith.constant 0 : index
    %c0_2 = arith.constant 0 : index
    %1 = vector.load %arg2[%c0_1, %c0_2] : memref<128x384xbf16, #tpu.memory_space<vmem>>, vector<128x384xbf16>
    %cst = arith.constant dense<0.000000e+00> : vector<256x384xf32>
    %2 = tpu.matmul %0, %1, %cst {dimension_numbers = #tpu.dot_dimension_numbers<[1], [0], [0], [1], [0, 0, 1, 1], [], []>} : vector<256x128xbf16>, vector<128x384xbf16>, vector<256x384xf32> -> vector<256x384xf32>
    %c0_3 = arith.constant 0 : index
    %c0_4 = arith.constant 0 : index
    %3 = vector.load %arg3[%c0_3, %c0_4] : memref<1x384xf32, #tpu.memory_space<vmem>>, vector<1x384xf32>
    %4 = vector.broadcast %3 : vector<1x384xf32> to vector<256x384xf32>
    %5 = arith.addf %2, %4 : vector<256x384xf32>
    %6 = vector.extract_strided_slice %5 {offsets = [0, 0], sizes = [256, 128], strides = [1, 1]} : vector<256x384xf32> to vector<256x128xf32>
    %7 = arith.negf %6 : vector<256x128xf32>
    %8 = math.exp %7 : vector<256x128xf32>
    %cst_5 = arith.constant 1.000000e+00 : f32
    %9 = vector.broadcast %cst_5 : f32 to vector<256x128xf32>
    %10 = arith.addf %9, %8 : vector<256x128xf32>
    %11 = arith.divf %9, %10 : vector<256x128xf32>
    %12 = vector.extract_strided_slice %5 {offsets = [0, 128], sizes = [256, 128], strides = [1, 1]} : vector<256x384xf32> to vector<256x128xf32>
    %13 = math.tanh %12 : vector<256x128xf32>
    %14 = vector.extract_strided_slice %5 {offsets = [0, 256], sizes = [256, 128], strides = [1, 1]} : vector<256x384xf32> to vector<256x128xf32>
    %15 = arith.negf %14 : vector<256x128xf32>
    %16 = math.exp %15 : vector<256x128xf32>
    %cst_6 = arith.constant 1.000000e+00 : f32
    %17 = vector.broadcast %cst_6 : f32 to vector<256x128xf32>
    %18 = arith.addf %17, %16 : vector<256x128xf32>
    %19 = arith.divf %17, %18 : vector<256x128xf32>
    %20 = arith.mulf %11, %13 : vector<256x128xf32>
    %21 = math.tanh %20 : vector<256x128xf32>
    %22 = arith.mulf %19, %21 : vector<256x128xf32>
    %23 = arith.truncf %22 : vector<256x128xf32> to vector<256x128xbf16>
    %c0_7 = arith.constant 0 : index
    %c0_8 = arith.constant 0 : index
    %24 = vector.load %arg4[%c0_7, %c0_8] : memref<128x1152xbf16, #tpu.memory_space<vmem>>, vector<128x1152xbf16>
    %cst_9 = arith.constant dense<0.000000e+00> : vector<256x1152xf32>
    %25 = tpu.matmul %23, %24, %cst_9 {dimension_numbers = #tpu.dot_dimension_numbers<[1], [0], [0], [1], [0, 0, 1, 1], [], []>} : vector<256x128xbf16>, vector<128x1152xbf16>, vector<256x1152xf32> -> vector<256x1152xf32>
    %c0_10 = arith.constant 0 : index
    %c0_11 = arith.constant 0 : index
    %26 = vector.load %arg5[%c0_10, %c0_11] : memref<1x1152xf32, #tpu.memory_space<vmem>>, vector<1x1152xf32>
    %27 = vector.broadcast %26 : vector<1x1152xf32> to vector<256x1152xf32>
    %28 = arith.addf %25, %27 : vector<256x1152xf32>
    %29 = arith.truncf %28 : vector<256x1152xf32> to vector<256x1152xbf16>
    %c0_12 = arith.constant 0 : index
    %c0_13 = arith.constant 0 : index
    %30 = vector.load %arg6[%c0_12, %c0_13] : memref<1152x512xbf16, #tpu.memory_space<vmem>>, vector<1152x512xbf16>
    %cst_14 = arith.constant dense<0.000000e+00> : vector<256x512xf32>
    %31 = tpu.matmul %29, %30, %cst_14 {dimension_numbers = #tpu.dot_dimension_numbers<[1], [0], [0], [1], [0, 0, 1, 1], [], []>} : vector<256x1152xbf16>, vector<1152x512xbf16>, vector<256x512xf32> -> vector<256x512xf32>
    %c0_15 = arith.constant 0 : index
    %c0_16 = arith.constant 0 : index
    %32 = vector.load %arg7[%c0_15, %c0_16] : memref<1x512xf32, #tpu.memory_space<vmem>>, vector<1x512xf32>
    %33 = vector.broadcast %32 : vector<1x512xf32> to vector<256x512xf32>
    %34 = arith.addf %31, %33 : vector<256x512xf32>
    %35 = arith.truncf %34 : vector<256x512xf32> to vector<256x512xbf16>
    %c0_17 = arith.constant 0 : index
    %c0_18 = arith.constant 0 : index
    %36 = vector.load %arg8[%c0_17, %c0_18] : memref<512x128xbf16, #tpu.memory_space<vmem>>, vector<512x128xbf16>
    %cst_19 = arith.constant dense<0.000000e+00> : vector<256x128xf32>
    %37 = tpu.matmul %35, %36, %cst_19 {dimension_numbers = #tpu.dot_dimension_numbers<[1], [0], [0], [1], [0, 0, 1, 1], [], []>} : vector<256x512xbf16>, vector<512x128xbf16>, vector<256x128xf32> -> vector<256x128xf32>
    %c0_20 = arith.constant 0 : index
    %c0_21 = arith.constant 0 : index
    %38 = vector.load %arg9[%c0_20, %c0_21] : memref<1x128xf32, #tpu.memory_space<vmem>>, vector<1x128xf32>
    %39 = vector.broadcast %38 : vector<1x128xf32> to vector<256x128xf32>
    %40 = arith.addf %37, %39 : vector<256x128xf32>
    %41 = arith.truncf %40 : vector<256x128xf32> to vector<256x128xbf16>
    %c0_22 = arith.constant 0 : index
    %c0_23 = arith.constant 0 : index
    %42 = vector.load %arg10[%c0_22, %c0_23] : memref<128x128xbf16, #tpu.memory_space<vmem>>, vector<128x128xbf16>
    %cst_24 = arith.constant dense<0.000000e+00> : vector<256x128xf32>
    %43 = tpu.matmul %41, %42, %cst_24 {dimension_numbers = #tpu.dot_dimension_numbers<[1], [0], [0], [1], [0, 0, 1, 1], [], []>} : vector<256x128xbf16>, vector<128x128xbf16>, vector<256x128xf32> -> vector<256x128xf32>
    %c0_25 = arith.constant 0 : index
    %c0_26 = arith.constant 0 : index
    %44 = vector.load %arg11[%c0_25, %c0_26] : memref<1x128xf32, #tpu.memory_space<vmem>>, vector<1x128xf32>
    %45 = vector.broadcast %44 : vector<1x128xf32> to vector<256x128xf32>
    %46 = arith.addf %43, %45 : vector<256x128xf32>
    %c0_27 = arith.constant 0 : index
    %c0_28 = arith.constant 0 : index
    %47 = vector.load %arg12[%c0_27, %c0_28] : memref<256x128xf32, #tpu.memory_space<vmem>>, vector<256x128xf32>
    tpu.vector_store %arg12[%c0_27, %c0_28], %46 {strides = array<i32>} : memref<256x128xf32, #tpu.memory_space<vmem>>, vector<256x128xf32>,
    return
  }
  func.func @transform_0(%arg0: i32) -> (i32, i32) {
    %c0_i32 = arith.constant 0 : i32
    %c0_i32_0 = arith.constant 0 : i32
    return %arg0, %c0_i32 : i32, i32
  }
  func.func @transform_1(%arg0: i32) -> (i32, i32) {
    %c0_i32 = arith.constant 0 : i32
    %c0_i32_0 = arith.constant 0 : i32
    %c0_i32_1 = arith.constant 0 : i32
    return %c0_i32, %c0_i32_0 : i32, i32
  }
  func.func @transform_2(%arg0: i32) -> (i32, i32) {
    %c0_i32 = arith.constant 0 : i32
    %c0_i32_0 = arith.constant 0 : i32
    %c0_i32_1 = arith.constant 0 : i32
    return %c0_i32, %c0_i32_0 : i32, i32
  }
  func.func @transform_3(%arg0: i32) -> (i32, i32) {
    %c0_i32 = arith.constant 0 : i32
    %c0_i32_0 = arith.constant 0 : i32
    %c0_i32_1 = arith.constant 0 : i32
    return %c0_i32, %c0_i32_0 : i32, i32
  }
  func.func @transform_4(%arg0: i32) -> (i32, i32) {
    %c0_i32 = arith.constant 0 : i32
    %c0_i32_0 = arith.constant 0 : i32
    %c0_i32_1 = arith.constant 0 : i32
    return %c0_i32, %c0_i32_0 : i32, i32
  }
  func.func @transform_5(%arg0: i32) -> (i32, i32) {
    %c0_i32 = arith.constant 0 : i32
    %c0_i32_0 = arith.constant 0 : i32
    %c0_i32_1 = arith.constant 0 : i32
    return %c0_i32, %c0_i32_0 : i32, i32
  }
  func.func @transform_6(%arg0: i32) -> (i32, i32) {
    %c0_i32 = arith.constant 0 : i32
    %c0_i32_0 = arith.constant 0 : i32
    %c0_i32_1 = arith.constant 0 : i32
    return %c0_i32, %c0_i32_0 : i32, i32
  }
  func.func @transform_7(%arg0: i32) -> (i32, i32) {
    %c0_i32 = arith.constant 0 : i32
    %c0_i32_0 = arith.constant 0 : i32
    %c0_i32_1 = arith.constant 0 : i32
    return %c0_i32, %c0_i32_0 : i32, i32
  }
  func.func @transform_8(%arg0: i32) -> (i32, i32) {
    %c0_i32 = arith.constant 0 : i32
    %c0_i32_0 = arith.constant 0 : i32
    %c0_i32_1 = arith.constant 0 : i32
    return %c0_i32, %c0_i32_0 : i32, i32
  }
  func.func @transform_9(%arg0: i32) -> (i32, i32) {
    %c0_i32 = arith.constant 0 : i32
    %c0_i32_0 = arith.constant 0 : i32
    %c0_i32_1 = arith.constant 0 : i32
    return %c0_i32, %c0_i32_0 : i32, i32
  }
  func.func @transform_10(%arg0: i32) -> (i32, i32) {
    %c0_i32 = arith.constant 0 : i32
    %c0_i32_0 = arith.constant 0 : i32
    %c0_i32_1 = arith.constant 0 : i32
    return %c0_i32, %c0_i32_0 : i32, i32
  }
  func.func @transform_11(%arg0: i32) -> (i32, i32) {
    %c0_i32 = arith.constant 0 : i32
    %c0_i32_0 = arith.constant 0 : i32
    return %arg0, %c0_i32 : i32, i32
  }
}

</mosaic_0001>

<llo_original>
// kernel: tpu_custom_call.1
$region0: #{tpu_custom_call.1}
  #allocation0 [shape = 'u32[]', space=smem, size = 0x4, offset = 0x4, fixed_abs, tag = 'smem constant byte address 0x4 - core index']
  #allocation1 [shape = 'u32[72,128]{1,0:T(1,128)}', space=vmem, size = 0x9000, scoped, tag = 'internal scratch']
  %s0 = inlined_call_operand.hbm [shape: bf16[256,128], index: 0, kind: input, shape index: {}]
  %s1 = inlined_call_operand.hbm [shape: bf16[128,384], index: 1, kind: input, shape index: {}]
  %s2 = inlined_call_operand.hbm [shape: f32[1,384], index: 2, kind: input, shape index: {}]
  %s3 = inlined_call_operand.hbm [shape: bf16[128,1152], index: 3, kind: input, shape index: {}]
  %s4 = inlined_call_operand.hbm [shape: f32[1,1152], index: 4, kind: input, shape index: {}]
  %s5 = inlined_call_operand.hbm [shape: bf16[1152,512], index: 5, kind: input, shape index: {}]
  %s6 = inlined_call_operand.hbm [shape: f32[1,512], index: 6, kind: input, shape index: {}]
  %s7 = inlined_call_operand.hbm [shape: bf16[512,128], index: 7, kind: input, shape index: {}]
  %s8 = inlined_call_operand.hbm [shape: f32[1,128], index: 8, kind: input, shape index: {}]
  %s9 = inlined_call_operand.hbm [shape: bf16[128,128], index: 9, kind: input, shape index: {}]
  %s10 = inlined_call_operand.hbm [shape: f32[1,128], index: 10, kind: input, shape index: {}]
  %s11 = inlined_call_operand.hbm [shape: f32[256,128], index: 11, kind: output, shape index: {}]
  %s12 = sld [smem:[#allocation0]]
  $region98: #{tpu_custom_call.1} parent=0
    _
  %s14 = ssub.s32 1, %s12
  %s15 = scalar_select 0, %s14, %s12
  $region1: #{tpu_custom_call.1} parent=0
    #allocation2 [shape = 'u8[65536]{0}', space=vmem, size = 0x10000, scoped, tag = 'input window, operand 0, single buffered']
    #allocation3 [shape = 's32[1]{0}', space=sflag, size = 0x4, scoped, tag = 'scoped memory for tpu_custom_call.1']
    #allocation4 [shape = 's32[1]{0}', space=sflag, size = 0x4, scoped, tag = 'scoped memory for tpu_custom_call.1']
    #allocation5 [shape = 'u8[98304]{0}', space=vmem, size = 0x18000, scoped, tag = 'input window, operand 1, single buffered']
    #allocation6 [shape = 's32[1]{0}', space=sflag, size = 0x4, scoped, tag = 'scoped memory for tpu_custom_call.1']
    #allocation7 [shape = 'u8[1536]{0}', space=vmem, size = 0x800, scoped, tag = 'input window, operand 2, single buffered']
    #allocation8 [shape = 'u8[294912]{0}', space=vmem, size = 0x48000, scoped, tag = 'input window, operand 3, single buffered']
    #allocation9 [shape = 's32[1]{0}', space=sflag, size = 0x4, scoped, tag = 'scoped memory for tpu_custom_call.1']
    #allocation10 [shape = 'u8[4608]{0}', space=vmem, size = 0x1400, scoped, tag = 'input window, operand 4, single buffered']
    #allocation11 [shape = 'u8[1179648]{0}', space=vmem, size = 0x120000, scoped, tag = 'input window, operand 5, single buffered']
    #allocation12 [shape = 's32[1]{0}', space=sflag, size = 0x4, scoped, tag = 'scoped memory for tpu_custom_call.1']
    #allocation13 [shape = 'u8[2048]{0}', space=vmem, size = 0x800, scoped, tag = 'input window, operand 6, single buffered']
    #allocation14 [shape = 'u8[131072]{0}', space=vmem, size = 0x20000, scoped, tag = 'input window, operand 7, single buffered']
    #allocation15 [shape = 's32[1]{0}', space=sflag, size = 0x4, scoped, tag = 'scoped memory for tpu_custom_call.1']
    #allocation16 [shape = 'u8[512]{0}', space=vmem, size = 0x400, scoped, tag = 'input window, operand 8, single buffered']
    #allocation17 [shape = 'u8[32768]{0}', space=vmem, size = 0x8000, scoped, tag = 'input window, operand 9, single buffered']
    #allocation18 [shape = 's32[1]{0}', space=sflag, size = 0x4, scoped, tag = 'scoped memory for tpu_custom_call.1']
    #allocation19 [shape = 'u8[512]{0}', space=vmem, size = 0x400, scoped, tag = 'input window, operand 10, single buffered']
    #allocation20 [shape = 'u8[131072]{0}', space=vmem, size = 0x20000, scoped, tag = 'output window, operand 0, single buffered']
    %16 = vsyncpa [#allocation3], 0
    %17 = vsyncpa [#allocation6], 0
    %18 = vsyncpa [#allocation9], 0
    %19 = vsyncpa [#allocation12], 0
    %20 = vsyncpa [#allocation15], 0
    %21 = vsyncpa [#allocation18], 0
    %22 = vsyncpa [#allocation4], 0
    // Predicated region
    $region2: #{tpu_custom_call.1} parent=1 // pred_check
      _
    $region3: #{tpu_custom_call.1} parent=1 // pred_check_branch
      %24 = sbr.rel (0) target = $region5
    $region4: #{tpu_custom_call.1} parent=1 // pred_region
      %26 = vsyncadd [#allocation3], 0
      %s27 = sshll.u32 %s0, 4
      %s28 = int_to_ptr.hbm [resolvable:$true] %s27
      %s29 = sshll.u32 [#allocation2], 4
      %s30 = int_to_ptr.vmem [resolvable:$true] %s29
      %35 = dma.hbm_to_vmem [thread:$0]  %s28, 2048, %s30, [#allocation3], 64, 64, 4
    $region5: #{tpu_custom_call.1} parent=1 // pred_fallthru
      _
    // Predicated region
    $region6: #{tpu_custom_call.1} parent=1 // pred_check
      _
    $region7: #{tpu_custom_call.1} parent=1 // pred_check_branch
      %37 = sbr.rel (0) target = $region9
    $region8: #{tpu_custom_call.1} parent=1 // pred_region
      %39 = vsyncadd [#allocation6], 0
      %s40 = sshll.u32 %s1, 4
      %s41 = int_to_ptr.hbm [resolvable:$true] %s40
      %s42 = sshll.u32 [#allocation5], 4
      %s43 = int_to_ptr.vmem [resolvable:$true] %s42
      %48 = dma.hbm_to_vmem [thread:$0]  %s41, 3072, %s43, [#allocation6], 192, 192, 12
    $region9: #{tpu_custom_call.1} parent=1 // pred_fallthru
      _
    // Predicated region
    $region10: #{tpu_custom_call.1} parent=1 // pred_check
      _
    $region11: #{tpu_custom_call.1} parent=1 // pred_check_branch
      %50 = sbr.rel (0) target = $region13
    $region12: #{tpu_custom_call.1} parent=1 // pred_region
      %52 = vsyncadd [#allocation6], 0
      %s54 = sshll.u32 %s2, 4
      %s55 = int_to_ptr.hbm [resolvable:$true] %s54
      %s56 = sshll.u32 [#allocation7], 4
      %s57 = int_to_ptr.vmem [resolvable:$true] %s56
      %59 = dma.hbm_to_vmem [thread:$0]  %s55, 48, %s57, [#allocation6]
    $region13: #{tpu_custom_call.1} parent=1 // pred_fallthru
      _
    // Predicated region
    $region14: #{tpu_custom_call.1} parent=1 // pred_check
      _
    $region15: #{tpu_custom_call.1} parent=1 // pred_check_branch
      %61 = sbr.rel (0) target = $region17
    $region16: #{tpu_custom_call.1} parent=1 // pred_region
      %63 = vsyncadd [#allocation9], 0
      %s64 = sshll.u32 %s3, 4
      %s65 = int_to_ptr.hbm [resolvable:$true] %s64
      %s66 = sshll.u32 [#allocation8], 4
      %s67 = int_to_ptr.vmem [resolvable:$true] %s66
      %72 = dma.hbm_to_vmem [thread:$0]  %s65, 9216, %s67, [#allocation9], 576, 576, 36
    $region17: #{tpu_custom_call.1} parent=1 // pred_fallthru
      _
    // Predicated region
    $region18: #{tpu_custom_call.1} parent=1 // pred_check
      _
    $region19: #{tpu_custom_call.1} parent=1 // pred_check_branch
      %74 = sbr.rel (0) target = $region21
    $region20: #{tpu_custom_call.1} parent=1 // pred_region
      %76 = vsyncadd [#allocation9], 0
      %s78 = sshll.u32 %s4, 4
      %s79 = int_to_ptr.hbm [resolvable:$true] %s78
      %s80 = sshll.u32 [#allocation10], 4
      %s81 = int_to_ptr.vmem [resolvable:$true] %s80
      %83 = dma.hbm_to_vmem [thread:$0]  %s79, 144, %s81, [#allocation9]
    $region21: #{tpu_custom_call.1} parent=1 // pred_fallthru
      _
    // Predicated region
    $region22: #{tpu_custom_call.1} parent=1 // pred_check
      _
    $region23: #{tpu_custom_call.1} parent=1 // pred_check_branch
      %85 = sbr.rel (0) target = $region25
    $region24: #{tpu_custom_call.1} parent=1 // pred_region
      %87 = vsyncadd [#allocation12], 0
      %s88 = sshll.u32 %s5, 4
      %s89 = int_to_ptr.hbm [resolvable:$true] %s88
      %s90 = sshll.u32 [#allocation11], 4
      %s91 = int_to_ptr.vmem [resolvable:$true] %s90
      %96 = dma.hbm_to_vmem [thread:$0]  %s89, 36864, %s91, [#allocation12], 256, 256, 16
    $region25: #{tpu_custom_call.1} parent=1 // pred_fallthru
      _
    // Predicated region
    $region26: #{tpu_custom_call.1} parent=1 // pred_check
      _
    $region27: #{tpu_custom_call.1} parent=1 // pred_check_branch
      %98 = sbr.rel (0) target = $region29
    $region28: #{tpu_custom_call.1} parent=1 // pred_region
      %100 = vsyncadd [#allocation12], 0
      %s102 = sshll.u32 %s6, 4
      %s103 = int_to_ptr.hbm [resolvable:$true] %s102
      %s104 = sshll.u32 [#allocation13], 4
      %s105 = int_to_ptr.vmem [resolvable:$true] %s104
      %107 = dma.hbm_to_vmem [thread:$0]  %s103, 64, %s105, [#allocation12]
    $region29: #{tpu_custom_call.1} parent=1 // pred_fallthru
      _
    // Predicated region
    $region30: #{tpu_custom_call.1} parent=1 // pred_check
      _
    $region31: #{tpu_custom_call.1} parent=1 // pred_check_branch
      %109 = sbr.rel (0) target = $region33
    $region32: #{tpu_custom_call.1} parent=1 // pred_region
      %111 = vsyncadd [#allocation15], 0
      %s112 = sshll.u32 %s7, 4
      %s113 = int_to_ptr.hbm [resolvable:$true] %s112
      %s114 = sshll.u32 [#allocation14], 4
      %s115 = int_to_ptr.vmem [resolvable:$true] %s114
      %120 = dma.hbm_to_vmem [thread:$0]  %s113, 4096, %s115, [#allocation15], 64, 64, 4
    $region33: #{tpu_custom_call.1} parent=1 // pred_fallthru
      _
    // Predicated region
    $region34: #{tpu_custom_call.1} parent=1 // pred_check
      _
    $region35: #{tpu_custom_call.1} parent=1 // pred_check_branch
      %122 = sbr.rel (0) target = $region37
    $region36: #{tpu_custom_call.1} parent=1 // pred_region
      %124 = vsyncadd [#allocation15], 0
      %s126 = sshll.u32 %s8, 4
      %s127 = int_to_ptr.hbm [resolvable:$true] %s126
      %s128 = sshll.u32 [#allocation16], 4
      %s129 = int_to_ptr.vmem [resolvable:$true] %s128
      %131 = dma.hbm_to_vmem [thread:$0]  %s127, 16, %s129, [#allocation15]
    $region37: #{tpu_custom_call.1} parent=1 // pred_fallthru
      _
    // Predicated region
    $region38: #{tpu_custom_call.1} parent=1 // pred_check
      _
    $region39: #{tpu_custom_call.1} parent=1 // pred_check_branch
      %133 = sbr.rel (0) target = $region41
    $region40: #{tpu_custom_call.1} parent=1 // pred_region
      %135 = vsyncadd [#allocation18], 0
      %s136 = sshll.u32 %s9, 4
      %s137 = int_to_ptr.hbm [resolvable:$true] %s136
      %s138 = sshll.u32 [#allocation17], 4
      %s139 = int_to_ptr.vmem [resolvable:$true] %s138
      %144 = dma.hbm_to_vmem [thread:$0]  %s137, 1024, %s139, [#allocation18], 64, 64, 4
    $region41: #{tpu_custom_call.1} parent=1 // pred_fallthru
      _
    // Predicated region
    $region42: #{tpu_custom_call.1} parent=1 // pred_check
      _
    $region43: #{tpu_custom_call.1} parent=1 // pred_check_branch
      %146 = sbr.rel (0) target = $region45
    $region44: #{tpu_custom_call.1} parent=1 // pred_region
      %148 = vsyncadd [#allocation18], 0
      %s150 = sshll.u32 %s10, 4
      %s151 = int_to_ptr.hbm [resolvable:$true] %s150
      %s152 = sshll.u32 [#allocation19], 4
      %s153 = int_to_ptr.vmem [resolvable:$true] %s152
      %155 = dma.hbm_to_vmem [thread:$0]  %s151, 16, %s153, [#allocation18]
    $region45: #{tpu_custom_call.1} parent=1 // pred_fallthru
      _
    // Predicated region
    $region46: #{tpu_custom_call.1} parent=1 // pred_check
      _
    $region47: #{tpu_custom_call.1} parent=1 // pred_check_branch
      %157 = sbr.rel (0) target = $region49
    $region48: #{tpu_custom_call.1} parent=1 // pred_region
      %159 = dma.done [#allocation3], 2048
    $region49: #{tpu_custom_call.1} parent=1 // pred_fallthru
      _
    // Predicated region
    $region50: #{tpu_custom_call.1} parent=1 // pred_check
      _
    $region51: #{tpu_custom_call.1} parent=1 // pred_check_branch
      %161 = sbr.rel (0) target = $region53
    $region52: #{tpu_custom_call.1} parent=1 // pred_region
      %163 = dma.done [#allocation6], 3072
    $region53: #{tpu_custom_call.1} parent=1 // pred_fallthru
      _
    // Predicated region
    $region54: #{tpu_custom_call.1} parent=1 // pred_check
      _
    $region55: #{tpu_custom_call.1} parent=1 // pred_check_branch
      %165 = sbr.rel (0) target = $region57
    $region56: #{tpu_custom_call.1} parent=1 // pred_region
      %167 = dma.done [#allocation6], 48
    $region57: #{tpu_custom_call.1} parent=1 // pred_fallthru
      _
    // Predicated region
    $region58: #{tpu_custom_call.1} parent=1 // pred_check
      _
    $region59: #{tpu_custom_call.1} parent=1 // pred_check_branch
      %169 = sbr.rel (0) target = $region61
    $region60: #{tpu_custom_call.1} parent=1 // pred_region
      %171 = dma.done [#allocation9], 9216
    $region61: #{tpu_custom_call.1} parent=1 // pred_fallthru
      _
    // Predicated region
    $region62: #{tpu_custom_call.1} parent=1 // pred_check
      _
    $region63: #{tpu_custom_call.1} parent=1 // pred_check_branch
      %173 = sbr.rel (0) target = $region65
    $region64: #{tpu_custom_call.1} parent=1 // pred_region
      %175 = dma.done [#allocation9], 144
    $region65: #{tpu_custom_call.1} parent=1 // pred_fallthru
      _
    // Predicated region
    $region66: #{tpu_custom_call.1} parent=1 // pred_check
      _
    $region67: #{tpu_custom_call.1} parent=1 // pred_check_branch
      %177 = sbr.rel (0) target = $region69
    $region68: #{tpu_custom_call.1} parent=1 // pred_region
      %179 = dma.done [#allocation12], 36864
    $region69: #{tpu_custom_call.1} parent=1 // pred_fallthru
      _
    // Predicated region
    $region70: #{tpu_custom_call.1} parent=1 // pred_check
      _
    $region71: #{tpu_custom_call.1} parent=1 // pred_check_branch
      %181 = sbr.rel (0) target = $region73
    $region72: #{tpu_custom_call.1} parent=1 // pred_region
      %183 = dma.done [#allocation12], 64
    $region73: #{tpu_custom_call.1} parent=1 // pred_fallthru
      _
    // Predicated region
    $region74: #{tpu_custom_call.1} parent=1 // pred_check
      _
    $region75: #{tpu_custom_call.1} parent=1 // pred_check_branch
      %185 = sbr.rel (0) target = $region77
    $region76: #{tpu_custom_call.1} parent=1 // pred_region
      %187 = dma.done [#allocation15], 4096
    $region77: #{tpu_custom_call.1} parent=1 // pred_fallthru
      _
    // Predicated region
    $region78: #{tpu_custom_call.1} parent=1 // pred_check
      _
    $region79: #{tpu_custom_call.1} parent=1 // pred_check_branch
      %189 = sbr.rel (0) target = $region81
    $region80: #{tpu_custom_call.1} parent=1 // pred_region
      %191 = dma.done [#allocation15], 16
    $region81: #{tpu_custom_call.1} parent=1 // pred_fallthru
      _
    // Predicated region
    $region82: #{tpu_custom_call.1} parent=1 // pred_check
      _
    $region83: #{tpu_custom_call.1} parent=1 // pred_check_branch
      %193 = sbr.rel (0) target = $region85
    $region84: #{tpu_custom_call.1} parent=1 // pred_region
      %195 = dma.done [#allocation18], 1024
    $region85: #{tpu_custom_call.1} parent=1 // pred_fallthru
      _
    // Predicated region
    $region86: #{tpu_custom_call.1} parent=1 // pred_check
      _
    $region87: #{tpu_custom_call.1} parent=1 // pred_check_branch
      %197 = sbr.rel (0) target = $region89
    $region88: #{tpu_custom_call.1} parent=1 // pred_region
      %199 = dma.done [#allocation18], 16
    $region89: #{tpu_custom_call.1} parent=1 // pred_fallthru
      _
    %v200 = vld [vmem:[#allocation2] sm:$0xf]
    %v201 = vld [vmem:[#allocation2 + $0x4] sm:$0xf]
    %v202 = vld [vmem:[#allocation2 + $0x8] sm:$0xf]
    %v203 = vld [vmem:[#allocation2 + $0xc] sm:$0xf]
    %v204 = vld [vmem:[#allocation2 + $0x10] sm:$0xf]
    %v205 = vld [vmem:[#allocation2 + $0x14] sm:$0xf]
    %v206 = vld [vmem:[#allocation2 + $0x18] sm:$0xf]
    %v207 = vld [vmem:[#allocation2 + $0x1c] sm:$0xf]
    %v208 = vld [vmem:[#allocation2 + $0x20] sm:$0xf]
    %v209 = vld [vmem:[#allocation2 + $0x24] sm:$0xf]
    %v210 = vld [vmem:[#allocation2 + $0x28] sm:$0xf]
    %v211 = vld [vmem:[#allocation2 + $0x2c] sm:$0xf]
    %v212 = vld [vmem:[#allocation2 + $0x30] sm:$0xf]
    %v213 = vld [vmem:[#allocation2 + $0x34] sm:$0xf]
    %v214 = vld [vmem:[#allocation2 + $0x38] sm:$0xf]
    %v215 = vld [vmem:[#allocation2 + $0x3c] sm:$0xf]
    %v216 = vld [vmem:[#allocation2 + $0x40] sm:$0xf]
    %v217 = vld [vmem:[#allocation2 + $0x44] sm:$0xf]
    %v218 = vld [vmem:[#allocation2 + $0x48] sm:$0xf]
    %v219 = vld [vmem:[#allocation2 + $0x4c] sm:$0xf]
    %v220 = vld [vmem:[#allocation2 + $0x50] sm:$0xf]
    %v221 = vld [vmem:[#allocation2 + $0x54] sm:$0xf]
    %v222 = vld [vmem:[#allocation2 + $0x58] sm:$0xf]
    %v223 = vld [vmem:[#allocation2 + $0x5c] sm:$0xf]
    %v224 = vld [vmem:[#allocation2 + $0x60] sm:$0xf]
    %v225 = vld [vmem:[#allocation2 + $0x64] sm:$0xf]
    %v226 = vld [vmem:[#allocation2 + $0x68] sm:$0xf]
    %v227 = vld [vmem:[#allocation2 + $0x6c] sm:$0xf]
    %v228 = vld [vmem:[#allocation2 + $0x70] sm:$0xf]
    %v229 = vld [vmem:[#allocation2 + $0x74] sm:$0xf]
    %v230 = vld [vmem:[#allocation2 + $0x78] sm:$0xf]
    %v231 = vld [vmem:[#allocation2 + $0x7c] sm:$0xf]
    %v232 = vld [vmem:[#allocation5] sm:$0xff]
    %v233 = vld [vmem:[#allocation5 + $0x8] sm:$0xf]
    %v234 = vld [vmem:[#allocation5 + $0xc] sm:$0xff]
    %v235 = vld [vmem:[#allocation5 + $0x14] sm:$0xf]
    %v236 = vld [vmem:[#allocation5 + $0x18] sm:$0xff]
    %v237 = vld [vmem:[#allocation5 + $0x20] sm:$0xf]
    %v238 = vld [vmem:[#allocation5 + $0x24] sm:$0xff]
    %v239 = vld [vmem:[#allocation5 + $0x2c] sm:$0xf]
    %v240 = vld [vmem:[#allocation5 + $0x30] sm:$0xff]
    %v241 = vld [vmem:[#allocation5 + $0x38] sm:$0xf]
    %v242 = vld [vmem:[#allocation5 + $0x3c] sm:$0xff]
    %v243 = vld [vmem:[#allocation5 + $0x44] sm:$0xf]
    %v244 = vld [vmem:[#allocation5 + $0x48] sm:$0xff]
    %v245 = vld [vmem:[#allocation5 + $0x50] sm:$0xf]
    %v246 = vld [vmem:[#allocation5 + $0x54] sm:$0xff]
    %v247 = vld [vmem:[#allocation5 + $0x5c] sm:$0xf]
    %v248 = vld [vmem:[#allocation5 + $0x60] sm:$0xff]
    %v249 = vld [vmem:[#allocation5 + $0x68] sm:$0xf]
    %v250 = vld [vmem:[#allocation5 + $0x6c] sm:$0xff]
    %v251 = vld [vmem:[#allocation5 + $0x74] sm:$0xf]
    %v252 = vld [vmem:[#allocation5 + $0x78] sm:$0xff]
    %v253 = vld [vmem:[#allocation5 + $0x80] sm:$0xf]
    %v254 = vld [vmem:[#allocation5 + $0x84] sm:$0xff]
    %v255 = vld [vmem:[#allocation5 + $0x8c] sm:$0xf]
    %v256 = vld [vmem:[#allocation5 + $0x90] sm:$0xff]
    %v257 = vld [vmem:[#allocation5 + $0x98] sm:$0xf]
    %v258 = vld [vmem:[#allocation5 + $0x9c] sm:$0xff]
    %v259 = vld [vmem:[#allocation5 + $0xa4] sm:$0xf]
    %v260 = vld [vmem:[#allocation5 + $0xa8] sm:$0xff]
    %v261 = vld [vmem:[#allocation5 + $0xb0] sm:$0xf]
    %v262 = vld [vmem:[#allocation5 + $0xb4] sm:$0xff]
    %v263 = vld [vmem:[#allocation5 + $0xbc] sm:$0xf]
    %v264 = vld [vmem:[#allocation7] sm:$0x7]
    %v266 = vperm.slane %v264, 0
    %v267 = vperm.slane %v264, 1
    %v268 = vperm.slane %v264, 2
    %v304 = vunpack.c.l.b16 %v200
    %v305 = vunpack.c.l.b16 %v201
    %v306 = vunpack.c.l.b16 %v202
    %v307 = vunpack.c.l.b16 %v203
    %v308 = vunpack.c.l.b16 %v204
    %v309 = vunpack.c.l.b16 %v205
    %v310 = vunpack.c.l.b16 %v206
    %v311 = vunpack.c.l.b16 %v207
    %v312 = vunpack.c.l.b16 %v208
    %v313 = vunpack.c.l.b16 %v209
    %v314 = vunpack.c.l.b16 %v210
    %v315 = vunpack.c.l.b16 %v211
    %v316 = vunpack.c.l.b16 %v212
    %v317 = vunpack.c.l.b16 %v213
    %v318 = vunpack.c.l.b16 %v214
    %v319 = vunpack.c.l.b16 %v215
    %v320 = vunpack.c.l.b16 %v216
    %v321 = vunpack.c.l.b16 %v217
    %v322 = vunpack.c.l.b16 %v218
    %v323 = vunpack.c.l.b16 %v219
    %v324 = vunpack.c.l.b16 %v220
    %v325 = vunpack.c.l.b16 %v221
    %v326 = vunpack.c.l.b16 %v222
    %v327 = vunpack.c.l.b16 %v223
    %v328 = vunpack.c.l.b16 %v224
    %v329 = vunpack.c.l.b16 %v225
    %v330 = vunpack.c.l.b16 %v226
    %v331 = vunpack.c.l.b16 %v227
    %v332 = vunpack.c.l.b16 %v228
    %v333 = vunpack.c.l.b16 %v229
    %v334 = vunpack.c.l.b16 %v230
    %v335 = vunpack.c.l.b16 %v231
    %v336 = vpack.c.b16 %v305, %v304
    %v337 = vpack.c.b16 %v307, %v306
    %v338 = vpack.c.b16 %v309, %v308
    %v339 = vpack.c.b16 %v311, %v310
    %v340 = vpack.c.b16 %v313, %v312
    %v341 = vpack.c.b16 %v315, %v314
    %v342 = vpack.c.b16 %v317, %v316
    %v343 = vpack.c.b16 %v319, %v318
    %v344 = vpack.c.b16 %v321, %v320
    %v345 = vpack.c.b16 %v323, %v322
    %v346 = vpack.c.b16 %v325, %v324
    %v347 = vpack.c.b16 %v327, %v326
    %v348 = vpack.c.b16 %v329, %v328
    %v349 = vpack.c.b16 %v331, %v330
    %v350 = vpack.c.b16 %v333, %v332
    %v351 = vpack.c.b16 %v335, %v334
    %v400 = vunpack.c.l.b16 %v232
    %v401 = vunpack.c.h.b16 %v232
    %v402 = vunpack.c.l.b16 %v233
    %v403 = vunpack.c.l.b16 %v234
    %v404 = vunpack.c.h.b16 %v234
    %v405 = vunpack.c.l.b16 %v235
    %v406 = vunpack.c.l.b16 %v236
    %v407 = vunpack.c.h.b16 %v236
    %v408 = vunpack.c.l.b16 %v237
    %v409 = vunpack.c.l.b16 %v238
    %v410 = vunpack.c.h.b16 %v238
    %v411 = vunpack.c.l.b16 %v239
    %v412 = vunpack.c.l.b16 %v240
    %v413 = vunpack.c.h.b16 %v240
    %v414 = vunpack.c.l.b16 %v241
    %v415 = vunpack.c.l.b16 %v242
    %v416 = vunpack.c.h.b16 %v242
    %v417 = vunpack.c.l.b16 %v243
    %v418 = vunpack.c.l.b16 %v244
    %v419 = vunpack.c.h.b16 %v244
    %v420 = vunpack.c.l.b16 %v245
    %v421 = vunpack.c.l.b16 %v246
    %v422 = vunpack.c.h.b16 %v246
    %v423 = vunpack.c.l.b16 %v247
    %v424 = vunpack.c.l.b16 %v248
    %v425 = vunpack.c.h.b16 %v248
    %v426 = vunpack.c.l.b16 %v249
    %v427 = vunpack.c.l.b16 %v250
    %v428 = vunpack.c.h.b16 %v250
    %v429 = vunpack.c.l.b16 %v251
    %v430 = vunpack.c.l.b16 %v252
    %v431 = vunpack.c.h.b16 %v252
    %v432 = vunpack.c.l.b16 %v253
    %v433 = vunpack.c.l.b16 %v254
    %v434 = vunpack.c.h.b16 %v254
    %v435 = vunpack.c.l.b16 %v255
    %v436 = vunpack.c.l.b16 %v256
    %v437 = vunpack.c.h.b16 %v256
    %v438 = vunpack.c.l.b16 %v257
    %v439 = vunpack.c.l.b16 %v258
    %v440 = vunpack.c.h.b16 %v258
    %v441 = vunpack.c.l.b16 %v259
    %v442 = vunpack.c.l.b16 %v260
    %v443 = vunpack.c.h.b16 %v260
    %v444 = vunpack.c.l.b16 %v261
    %v445 = vunpack.c.l.b16 %v262
    %v446 = vunpack.c.h.b16 %v262
    %v447 = vunpack.c.l.b16 %v263
    %v448 = vpack.c.b16 %v403, %v400
    %v449 = vpack.c.b16 %v404, %v401
    %v450 = vpack.c.b16 %v405, %v402
    %v451 = vpack.c.b16 %v409, %v406
    %v452 = vpack.c.b16 %v410, %v407
    %v453 = vpack.c.b16 %v411, %v408
    %v454 = vpack.c.b16 %v415, %v412
    %v455 = vpack.c.b16 %v416, %v413
    %v456 = vpack.c.b16 %v417, %v414
    %v457 = vpack.c.b16 %v421, %v418
    %v458 = vpack.c.b16 %v422, %v419
    %v459 = vpack.c.b16 %v423, %v420
    %v460 = vpack.c.b16 %v427, %v424
    %v461 = vpack.c.b16 %v428, %v425
    %v462 = vpack.c.b16 %v429, %v426
    %v463 = vpack.c.b16 %v433, %v430
    %v464 = vpack.c.b16 %v434, %v431
    %v465 = vpack.c.b16 %v435, %v432
    %v466 = vpack.c.b16 %v439, %v436
    %v467 = vpack.c.b16 %v440, %v437
    %v468 = vpack.c.b16 %v441, %v438
    %v469 = vpack.c.b16 %v445, %v442
    %v470 = vpack.c.b16 %v446, %v443
    %v471 = vpack.c.b16 %v447, %v444
    %496 = vmatpush.bf16.msra.mxu0 %v469
    %497 = vmatpush.bf16.msra.mxu0 %v466
    %498 = vmatpush.bf16.msra.mxu0 %v463
    %499 = vmatpush.bf16.msra.mxu0 %v460
    %500 = vmatpush.bf16.msra.mxu0 %v457
    %501 = vmatpush.bf16.msra.mxu0 %v454
    %502 = vmatpush.bf16.msra.mxu0 %v451
    %503 = vmatpush.bf16.msra.mxu0 %v448
    %504 = vmatmul.bf16.gmra.mxu0 %v336
    %v505 = vpop.f32.mrf.mxu0
    %v506 = vadd.f32 %v266, %v505
    %v507 = vpop.f32.mrf.mxu0
    %v508 = vadd.f32 %v266, %v507
    %509 = vmatmul.bf16.gmra.mxu0 %v337
    %v510 = vpop.f32.mrf.mxu0
    %v511 = vadd.f32 %v266, %v510
    %v512 = vpop.f32.mrf.mxu0
    %v513 = vadd.f32 %v266, %v512
    %514 = vmatmul.bf16.gmra.mxu0 %v338
    %v515 = vpop.f32.mrf.mxu0
    %v516 = vadd.f32 %v266, %v515
    %v517 = vpop.f32.mrf.mxu0
    %v518 = vadd.f32 %v266, %v517
    %519 = vmatmul.bf16.gmra.mxu0 %v339
    %v520 = vpop.f32.mrf.mxu0
    %v521 = vadd.f32 %v266, %v520
    %v522 = vpop.f32.mrf.mxu0
    %v523 = vadd.f32 %v266, %v522
    %524 = vmatmul.bf16.gmra.mxu0 %v340
    %v525 = vpop.f32.mrf.mxu0
    %v526 = vadd.f32 %v266, %v525
    %v527 = vpop.f32.mrf.mxu0
    %v528 = vadd.f32 %v266, %v527
    %529 = vmatmul.bf16.gmra.mxu0 %v341
    %v530 = vpop.f32.mrf.mxu0
    %v531 = vadd.f32 %v266, %v530
    %v532 = vpop.f32.mrf.mxu0
    %v533 = vadd.f32 %v266, %v532
    %534 = vmatmul.bf16.gmra.mxu0 %v342
    %v535 = vpop.f32.mrf.mxu0
    %v536 = vadd.f32 %v266, %v535
    %v537 = vpop.f32.mrf.mxu0
    %v538 = vadd.f32 %v266, %v537
    %539 = vmatmul.bf16.gmra.mxu0 %v343
    %v540 = vpop.f32.mrf.mxu0
    %v541 = vadd.f32 %v266, %v540
    %v542 = vpop.f32.mrf.mxu0
    %v543 = vadd.f32 %v266, %v542
    %544 = vmatmul.bf16.gmra.mxu0 %v344
    %v545 = vpop.f32.mrf.mxu0
    %v546 = vadd.f32 %v266, %v545
    %v547 = vpop.f32.mrf.mxu0
    %v548 = vadd.f32 %v266, %v547
    %549 = vmatmul.bf16.gmra.mxu0 %v345
    %v550 = vpop.f32.mrf.mxu0
    %v551 = vadd.f32 %v266, %v550
    %v552 = vpop.f32.mrf.mxu0
    %v553 = vadd.f32 %v266, %v552
    %554 = vmatmul.bf16.gmra.mxu0 %v346
    %v555 = vpop.f32.mrf.mxu0
    %v556 = vadd.f32 %v266, %v555
    %v557 = vpop.f32.mrf.mxu0
    %v558 = vadd.f32 %v266, %v557
    %559 = vmatmul.bf16.gmra.mxu0 %v347
    %v560 = vpop.f32.mrf.mxu0
    %v561 = vadd.f32 %v266, %v560
    %v562 = vpop.f32.mrf.mxu0
    %v563 = vadd.f32 %v266, %v562
    %564 = vmatmul.bf16.gmra.mxu0 %v348
    %v565 = vpop.f32.mrf.mxu0
    %v566 = vadd.f32 %v266, %v565
    %v567 = vpop.f32.mrf.mxu0
    %v568 = vadd.f32 %v266, %v567
    %569 = vmatmul.bf16.gmra.mxu0 %v349
    %v570 = vpop.f32.mrf.mxu0
    %v571 = vadd.f32 %v266, %v570
    %v572 = vpop.f32.mrf.mxu0
    %v573 = vadd.f32 %v266, %v572
    %574 = vmatmul.bf16.gmra.mxu0 %v350
    %v575 = vpop.f32.mrf.mxu0
    %v576 = vadd.f32 %v266, %v575
    %v577 = vpop.f32.mrf.mxu0
    %v578 = vadd.f32 %v266, %v577
    %579 = vmatmul.bf16.gmra.mxu0 %v351
    %v580 = vpop.f32.mrf.mxu0
    %v581 = vadd.f32 %v266, %v580
    %v582 = vpop.f32.mrf.mxu0
    %v583 = vadd.f32 %v266, %v582
    %584 = vdwg.mxu0
    %585 = vmatpush.bf16.msra.mxu0 %v470
    %586 = vmatpush.bf16.msra.mxu0 %v467
    %587 = vmatpush.bf16.msra.mxu0 %v464
    %588 = vmatpush.bf16.msra.mxu0 %v461
    %589 = vmatpush.bf16.msra.mxu0 %v458
    %590 = vmatpush.bf16.msra.mxu0 %v455
    %591 = vmatpush.bf16.msra.mxu0 %v452
    %592 = vmatpush.bf16.msra.mxu0 %v449
    %593 = vmatmul.bf16.gmra.mxu0 %v336
    %v594 = vpop.f32.mrf.mxu0
    %v595 = vadd.f32 %v267, %v594
    %v596 = vpop.f32.mrf.mxu0
    %v597 = vadd.f32 %v267, %v596
    %598 = vmatmul.bf16.gmra.mxu0 %v337
    %v599 = vpop.f32.mrf.mxu0
    %v600 = vadd.f32 %v267, %v599
    %v601 = vpop.f32.mrf.mxu0
    %v602 = vadd.f32 %v267, %v601
    %603 = vmatmul.bf16.gmra.mxu0 %v338
    %v604 = vpop.f32.mrf.mxu0
    %v605 = vadd.f32 %v267, %v604
    %v606 = vpop.f32.mrf.mxu0
    %v607 = vadd.f32 %v267, %v606
    %608 = vmatmul.bf16.gmra.mxu0 %v339
    %v609 = vpop.f32.mrf.mxu0
    %v610 = vadd.f32 %v267, %v609
    %v611 = vpop.f32.mrf.mxu0
    %v612 = vadd.f32 %v267, %v611
    %613 = vmatmul.bf16.gmra.mxu0 %v340
    %v614 = vpop.f32.mrf.mxu0
    %v615 = vadd.f32 %v267, %v614
    %v616 = vpop.f32.mrf.mxu0
    %v617 = vadd.f32 %v267, %v616
    %618 = vmatmul.bf16.gmra.mxu0 %v341
    %v619 = vpop.f32.mrf.mxu0
    %v620 = vadd.f32 %v267, %v619
    %v621 = vpop.f32.mrf.mxu0
    %v622 = vadd.f32 %v267, %v621
    %623 = vmatmul.bf16.gmra.mxu0 %v342
    %v624 = vpop.f32.mrf.mxu0
    %v625 = vadd.f32 %v267, %v624
    %v626 = vpop.f32.mrf.mxu0
    %v627 = vadd.f32 %v267, %v626
    %628 = vmatmul.bf16.gmra.mxu0 %v343
    %v629 = vpop.f32.mrf.mxu0
    %v630 = vadd.f32 %v267, %v629
    %v631 = vpop.f32.mrf.mxu0
    %v632 = vadd.f32 %v267, %v631
    %633 = vmatmul.bf16.gmra.mxu0 %v344
    %v634 = vpop.f32.mrf.mxu0
    %v635 = vadd.f32 %v267, %v634
    %v636 = vpop.f32.mrf.mxu0
    %v637 = vadd.f32 %v267, %v636
    %638 = vmatmul.bf16.gmra.mxu0 %v345
    %v639 = vpop.f32.mrf.mxu0
    %v640 = vadd.f32 %v267, %v639
    %v641 = vpop.f32.mrf.mxu0
    %v642 = vadd.f32 %v267, %v641
    %643 = vmatmul.bf16.gmra.mxu0 %v346
    %v644 = vpop.f32.mrf.mxu0
    %v645 = vadd.f32 %v267, %v644
    %v646 = vpop.f32.mrf.mxu0
    %v647 = vadd.f32 %v267, %v646
    %648 = vmatmul.bf16.gmra.mxu0 %v347
    %v649 = vpop.f32.mrf.mxu0
    %v650 = vadd.f32 %v267, %v649
    %v651 = vpop.f32.mrf.mxu0
    %v652 = vadd.f32 %v267, %v651
    %653 = vmatmul.bf16.gmra.mxu0 %v348
    %v654 = vpop.f32.mrf.mxu0
    %v655 = vadd.f32 %v267, %v654
    %v656 = vpop.f32.mrf.mxu0
    %v657 = vadd.f32 %v267, %v656
    %658 = vmatmul.bf16.gmra.mxu0 %v349
    %v659 = vpop.f32.mrf.mxu0
    %v660 = vadd.f32 %v267, %v659
    %v661 = vpop.f32.mrf.mxu0
    %v662 = vadd.f32 %v267, %v661
    %663 = vmatmul.bf16.gmra.mxu0 %v350
    %v664 = vpop.f32.mrf.mxu0
    %v665 = vadd.f32 %v267, %v664
    %v666 = vpop.f32.mrf.mxu0
    %v667 = vadd.f32 %v267, %v666
    %668 = vmatmul.bf16.gmra.mxu0 %v351
    %v669 = vpop.f32.mrf.mxu0
    %v670 = vadd.f32 %v267, %v669
    %v671 = vpop.f32.mrf.mxu0
    %v672 = vadd.f32 %v267, %v671
    %673 = vdwg.mxu0
    %674 = vmatpush.bf16.msra.mxu0 %v471
    %675 = vmatpush.bf16.msra.mxu0 %v468
    %676 = vmatpush.bf16.msra.mxu0 %v465
    %677 = vmatpush.bf16.msra.mxu0 %v462
    %678 = vmatpush.bf16.msra.mxu0 %v459
    %679 = vmatpush.bf16.msra.mxu0 %v456
    %680 = vmatpush.bf16.msra.mxu0 %v453
    %681 = vmatpush.bf16.msra.mxu0 %v450
    %682 = vmatmul.bf16.gmra.mxu0 %v336
    %v683 = vpop.f32.mrf.mxu0
    %v684 = vadd.f32 %v268, %v683
    %v685 = vpop.f32.mrf.mxu0
    %v686 = vadd.f32 %v268, %v685
    %687 = vmatmul.bf16.gmra.mxu0 %v337
    %v688 = vpop.f32.mrf.mxu0
    %v689 = vadd.f32 %v268, %v688
    %v690 = vpop.f32.mrf.mxu0
    %v691 = vadd.f32 %v268, %v690
    %692 = vmatmul.bf16.gmra.mxu0 %v338
    %v693 = vpop.f32.mrf.mxu0
    %v694 = vadd.f32 %v268, %v693
    %v695 = vpop.f32.mrf.mxu0
    %v696 = vadd.f32 %v268, %v695
    %697 = vmatmul.bf16.gmra.mxu0 %v339
    %v698 = vpop.f32.mrf.mxu0
    %v699 = vadd.f32 %v268, %v698
    %v700 = vpop.f32.mrf.mxu0
    %v701 = vadd.f32 %v268, %v700
    %702 = vmatmul.bf16.gmra.mxu0 %v340
    %v703 = vpop.f32.mrf.mxu0
    %v704 = vadd.f32 %v268, %v703
    %v705 = vpop.f32.mrf.mxu0
    %v706 = vadd.f32 %v268, %v705
    %707 = vmatmul.bf16.gmra.mxu0 %v341
    %v708 = vpop.f32.mrf.mxu0
    %v709 = vadd.f32 %v268, %v708
    %v710 = vpop.f32.mrf.mxu0
    %v711 = vadd.f32 %v268, %v710
    %712 = vmatmul.bf16.gmra.mxu0 %v342
    %v713 = vpop.f32.mrf.mxu0
    %v714 = vadd.f32 %v268, %v713
    %v715 = vpop.f32.mrf.mxu0
    %v716 = vadd.f32 %v268, %v715
    %717 = vmatmul.bf16.gmra.mxu0 %v343
    %v718 = vpop.f32.mrf.mxu0
    %v719 = vadd.f32 %v268, %v718
    %v720 = vpop.f32.mrf.mxu0
    %v721 = vadd.f32 %v268, %v720
    %722 = vmatmul.bf16.gmra.mxu0 %v344
    %v723 = vpop.f32.mrf.mxu0
    %v724 = vadd.f32 %v268, %v723
    %v725 = vpop.f32.mrf.mxu0
    %v726 = vadd.f32 %v268, %v725
    %727 = vmatmul.bf16.gmra.mxu0 %v345
    %v728 = vpop.f32.mrf.mxu0
    %v729 = vadd.f32 %v268, %v728
    %v730 = vpop.f32.mrf.mxu0
    %v731 = vadd.f32 %v268, %v730
    %732 = vmatmul.bf16.gmra.mxu0 %v346
    %v733 = vpop.f32.mrf.mxu0
    %v734 = vadd.f32 %v268, %v733
    %v735 = vpop.f32.mrf.mxu0
    %v736 = vadd.f32 %v268, %v735
    %737 = vmatmul.bf16.gmra.mxu0 %v347
    %v738 = vpop.f32.mrf.mxu0
    %v739 = vadd.f32 %v268, %v738
    %v740 = vpop.f32.mrf.mxu0
    %v741 = vadd.f32 %v268, %v740
    %742 = vmatmul.bf16.gmra.mxu0 %v348
    %v743 = vpop.f32.mrf.mxu0
    %v744 = vadd.f32 %v268, %v743
    %v745 = vpop.f32.mrf.mxu0
    %v746 = vadd.f32 %v268, %v745
    %747 = vmatmul.bf16.gmra.mxu0 %v349
    %v748 = vpop.f32.mrf.mxu0
    %v749 = vadd.f32 %v268, %v748
    %v750 = vpop.f32.mrf.mxu0
    %v751 = vadd.f32 %v268, %v750
    %752 = vmatmul.bf16.gmra.mxu0 %v350
    %v753 = vpop.f32.mrf.mxu0
    %v754 = vadd.f32 %v268, %v753
    %v755 = vpop.f32.mrf.mxu0
    %v756 = vadd.f32 %v268, %v755
    %757 = vmatmul.bf16.gmra.mxu0 %v351
    %v758 = vpop.f32.mrf.mxu0
    %v759 = vadd.f32 %v268, %v758
    %v760 = vpop.f32.mrf.mxu0
    %v761 = vadd.f32 %v268, %v760
    %762 = vdwg.mxu0
    %v763 = vxor.u32 %v506, 2147483648
    %v764 = vxor.u32 %v508, 2147483648
    %v765 = vxor.u32 %v511, 2147483648
    %v766 = vxor.u32 %v513, 2147483648
    %v767 = vxor.u32 %v516, 2147483648
    %v768 = vxor.u32 %v518, 2147483648
    %v769 = vxor.u32 %v521, 2147483648
    %v770 = vxor.u32 %v523, 2147483648
    %v771 = vxor.u32 %v526, 2147483648
    %v772 = vxor.u32 %v528, 2147483648
    %v773 = vxor.u32 %v531, 2147483648
    %v774 = vxor.u32 %v533, 2147483648
    %v775 = vxor.u32 %v536, 2147483648
    %v776 = vxor.u32 %v538, 2147483648
    %v777 = vxor.u32 %v541, 2147483648
    %v778 = vxor.u32 %v543, 2147483648
    %v779 = vxor.u32 %v546, 2147483648
    %v780 = vxor.u32 %v548, 2147483648
    %v781 = vxor.u32 %v551, 2147483648
    %v782 = vxor.u32 %v553, 2147483648
    %v783 = vxor.u32 %v556, 2147483648
    %v784 = vxor.u32 %v558, 2147483648
    %v785 = vxor.u32 %v561, 2147483648
    %v786 = vxor.u32 %v563, 2147483648
    %v787 = vxor.u32 %v566, 2147483648
    %v788 = vxor.u32 %v568, 2147483648
    %v789 = vxor.u32 %v571, 2147483648
    %v790 = vxor.u32 %v573, 2147483648
    %v791 = vxor.u32 %v576, 2147483648
    %v792 = vxor.u32 %v578, 2147483648
    %v793 = vxor.u32 %v581, 2147483648
    %v794 = vxor.u32 %v583, 2147483648
    %v795 = vmul.f32 %v763, 1.442695
    %v796 = vpow.pop %v795
    %v797 = vmul.f32 %v764, 1.442695
    %v798 = vpow.pop %v797
    %v799 = vmul.f32 %v765, 1.442695
    %v800 = vpow.pop %v799
    %v801 = vmul.f32 %v766, 1.442695
    %v802 = vpow.pop %v801
    %v803 = vmul.f32 %v767, 1.442695
    %v804 = vpow.pop %v803
    %v805 = vmul.f32 %v768, 1.442695
    %v806 = vpow.pop %v805
    %v807 = vmul.f32 %v769, 1.442695
    %v808 = vpow.pop %v807
    %v809 = vmul.f32 %v770, 1.442695
    %v810 = vpow.pop %v809
    %v811 = vmul.f32 %v771, 1.442695
    %v812 = vpow.pop %v811
    %v813 = vmul.f32 %v772, 1.442695
    %v814 = vpow.pop %v813
    %v815 = vmul.f32 %v773, 1.442695
    %v816 = vpow.pop %v815
    %v817 = vmul.f32 %v774, 1.442695
    %v818 = vpow.pop %v817
    %v819 = vmul.f32 %v775, 1.442695
    %v820 = vpow.pop %v819
    %v821 = vmul.f32 %v776, 1.442695
    %v822 = vpow.pop %v821
    %v823 = vmul.f32 %v777, 1.442695
    %v824 = vpow.pop %v823
    %v825 = vmul.f32 %v778, 1.442695
    %v826 = vpow.pop %v825
    %v827 = vmul.f32 %v779, 1.442695
    %v828 = vpow.pop %v827
    %v829 = vmul.f32 %v780, 1.442695
    %v830 = vpow.pop %v829
    %v831 = vmul.f32 %v781, 1.442695
    %v832 = vpow.pop %v831
    %v833 = vmul.f32 %v782, 1.442695
    %v834 = vpow.pop %v833
    %v835 = vmul.f32 %v783, 1.442695
    %v836 = vpow.pop %v835
    %v837 = vmul.f32 %v784, 1.442695
    %v838 = vpow.pop %v837
    %v839 = vmul.f32 %v785, 1.442695
    %v840 = vpow.pop %v839
    %v841 = vmul.f32 %v786, 1.442695
    %v842 = vpow.pop %v841
    %v843 = vmul.f32 %v787, 1.442695
    %v844 = vpow.pop %v843
    %v845 = vmul.f32 %v788, 1.442695
    %v846 = vpow.pop %v845
    %v847 = vmul.f32 %v789, 1.442695
    %v848 = vpow.pop %v847
    %v849 = vmul.f32 %v790, 1.442695
    %v850 = vpow.pop %v849
    %v851 = vmul.f32 %v791, 1.442695
    %v852 = vpow.pop %v851
    %v853 = vmul.f32 %v792, 1.442695
    %v854 = vpow.pop %v853
    %v855 = vmul.f32 %v793, 1.442695
    %v856 = vpow.pop %v855
    %v857 = vmul.f32 %v794, 1.442695
    %v858 = vpow.pop %v857
    %v859 = vadd.f32 %v796, 1.0
    %v860 = vadd.f32 %v798, 1.0
    %v861 = vadd.f32 %v800, 1.0
    %v862 = vadd.f32 %v802, 1.0
    %v863 = vadd.f32 %v804, 1.0
    %v864 = vadd.f32 %v806, 1.0
    %v865 = vadd.f32 %v808, 1.0
    %v866 = vadd.f32 %v810, 1.0
    %v867 = vadd.f32 %v812, 1.0
    %v868 = vadd.f32 %v814, 1.0
    %v869 = vadd.f32 %v816, 1.0
    %v870 = vadd.f32 %v818, 1.0
    %v871 = vadd.f32 %v820, 1.0
    %v872 = vadd.f32 %v822, 1.0
    %v873 = vadd.f32 %v824, 1.0
    %v874 = vadd.f32 %v826, 1.0
    %v875 = vadd.f32 %v828, 1.0
    %v876 = vadd.f32 %v830, 1.0
    %v877 = vadd.f32 %v832, 1.0
    %v878 = vadd.f32 %v834, 1.0
    %v879 = vadd.f32 %v836, 1.0
    %v880 = vadd.f32 %v838, 1.0
    %v881 = vadd.f32 %v840, 1.0
    %v882 = vadd.f32 %v842, 1.0
    %v883 = vadd.f32 %v844, 1.0
    %v884 = vadd.f32 %v846, 1.0
    %v885 = vadd.f32 %v848, 1.0
    %v886 = vadd.f32 %v850, 1.0
    %v887 = vadd.f32 %v852, 1.0
    %v888 = vadd.f32 %v854, 1.0
    %v889 = vadd.f32 %v856, 1.0
    %v890 = vadd.f32 %v858, 1.0
    %v891 = vrcp.pop %v859
    %v892 = vmul.f32 %v859, %v891
    %v893 = vsub.f32 1.0, %v892
    %v894 = vmul.f32 %v891, %v893
    %v895 = vadd.f32 %v891, %v894
    %vm896 = vweird.f32 %v859
    %vm897 = vweird.f32 %v891
    %vm898 = vmor %vm896, %vm897
    %v899 = vsel %vm898, %v891, %v895
    %v900 = vand.u32 2147483647, %v859
    %vm901 = vcmp.eq.f32.partialorder %v900, 8.507059e+37
    %v902 = vand.u32 %v859, 2147483648
    %v903 = vor.u32 1.1754944e-38, %v902
    %v904 = vsel %vm901, %v903, %v899
    %v905 = vmul.f32 1.0, %v904
    %v906 = vrcp.pop %v860
    %v907 = vmul.f32 %v860, %v906
    %v908 = vsub.f32 1.0, %v907
    %v909 = vmul.f32 %v906, %v908
    %v910 = vadd.f32 %v906, %v909
    %vm911 = vweird.f32 %v860
    %vm912 = vweird.f32 %v906
    %vm913 = vmor %vm911, %vm912
    %v914 = vsel %vm913, %v906, %v910
    %v915 = vand.u32 2147483647, %v860
    %vm916 = vcmp.eq.f32.partialorder %v915, 8.507059e+37
    %v917 = vand.u32 %v860, 2147483648
    %v918 = vor.u32 1.1754944e-38, %v917
    %v919 = vsel %vm916, %v918, %v914
    %v920 = vmul.f32 1.0, %v919
    %v921 = vrcp.pop %v861
    %v922 = vmul.f32 %v861, %v921
    %v923 = vsub.f32 1.0, %v922
    %v924 = vmul.f32 %v921, %v923
    %v925 = vadd.f32 %v921, %v924
    %vm926 = vweird.f32 %v861
    %vm927 = vweird.f32 %v921
    %vm928 = vmor %vm926, %vm927
    %v929 = vsel %vm928, %v921, %v925
    %v930 = vand.u32 2147483647, %v861
    %vm931 = vcmp.eq.f32.partialorder %v930, 8.507059e+37
    %v932 = vand.u32 %v861, 2147483648
    %v933 = vor.u32 1.1754944e-38, %v932
    %v934 = vsel %vm931, %v933, %v929
    %v935 = vmul.f32 1.0, %v934
    %v936 = vrcp.pop %v862
    %v937 = vmul.f32 %v862, %v936
    %v938 = vsub.f32 1.0, %v937
    %v939 = vmul.f32 %v936, %v938
    %v940 = vadd.f32 %v936, %v939
    %vm941 = vweird.f32 %v862
    %vm942 = vweird.f32 %v936
    %vm943 = vmor %vm941, %vm942
    %v944 = vsel %vm943, %v936, %v940
    %v945 = vand.u32 2147483647, %v862
    %vm946 = vcmp.eq.f32.partialorder %v945, 8.507059e+37
    %v947 = vand.u32 %v862, 2147483648
    %v948 = vor.u32 1.1754944e-38, %v947
    %v949 = vsel %vm946, %v948, %v944
    %v950 = vmul.f32 1.0, %v949
    %v951 = vrcp.pop %v863
    %v952 = vmul.f32 %v863, %v951
    %v953 = vsub.f32 1.0, %v952
    %v954 = vmul.f32 %v951, %v953
    %v955 = vadd.f32 %v951, %v954
    %vm956 = vweird.f32 %v863
    %vm957 = vweird.f32 %v951
    %vm958 = vmor %vm956, %vm957
    %v959 = vsel %vm958, %v951, %v955
    %v960 = vand.u32 2147483647, %v863
    %vm961 = vcmp.eq.f32.partialorder %v960, 8.507059e+37
    %v962 = vand.u32 %v863, 2147483648
    %v963 = vor.u32 1.1754944e-38, %v962
    %v964 = vsel %vm961, %v963, %v959
    %v965 = vmul.f32 1.0, %v964
    %v966 = vrcp.pop %v864
    %v967 = vmul.f32 %v864, %v966
    %v968 = vsub.f32 1.0, %v967
    %v969 = vmul.f32 %v966, %v968
    %v970 = vadd.f32 %v966, %v969
    %vm971 = vweird.f32 %v864
    %vm972 = vweird.f32 %v966
    %vm973 = vmor %vm971, %vm972
    %v974 = vsel %vm973, %v966, %v970
    %v975 = vand.u32 2147483647, %v864
    %vm976 = vcmp.eq.f32.partialorder %v975, 8.507059e+37
    %v977 = vand.u32 %v864, 2147483648
    %v978 = vor.u32 1.1754944e-38, %v977
    %v979 = vsel %vm976, %v978, %v974
    %v980 = vmul.f32 1.0, %v979
    %v981 = vrcp.pop %v865
    %v982 = vmul.f32 %v865, %v981
    %v983 = vsub.f32 1.0, %v982
    %v984 = vmul.f32 %v981, %v983
    %v985 = vadd.f32 %v981, %v984
    %vm986 = vweird.f32 %v865
    %vm987 = vweird.f32 %v981
    %vm988 = vmor %vm986, %vm987
    %v989 = vsel %vm988, %v981, %v985
    %v990 = vand.u32 2147483647, %v865
    %vm991 = vcmp.eq.f32.partialorder %v990, 8.507059e+37
    %v992 = vand.u32 %v865, 2147483648
    %v993 = vor.u32 1.1754944e-38, %v992
    %v994 = vsel %vm991, %v993, %v989
    %v995 = vmul.f32 1.0, %v994
    %v996 = vrcp.pop %v866
    %v997 = vmul.f32 %v866, %v996
    %v998 = vsub.f32 1.0, %v997
    %v999 = vmul.f32 %v996, %v998
    %v1000 = vadd.f32 %v996, %v999
    %vm1001 = vweird.f32 %v866
    %vm1002 = vweird.f32 %v996
    %vm1003 = vmor %vm1001, %vm1002
    %v1004 = vsel %vm1003, %v996, %v1000
    %v1005 = vand.u32 2147483647, %v866
    %vm1006 = vcmp.eq.f32.partialorder %v1005, 8.507059e+37
    %v1007 = vand.u32 %v866, 2147483648
    %v1008 = vor.u32 1.1754944e-38, %v1007
    %v1009 = vsel %vm1006, %v1008, %v1004
    %v1010 = vmul.f32 1.0, %v1009
    %v1011 = vrcp.pop %v867
    %v1012 = vmul.f32 %v867, %v1011
    %v1013 = vsub.f32 1.0, %v1012
    %v1014 = vmul.f32 %v1011, %v1013
    %v1015 = vadd.f32 %v1011, %v1014
    %vm1016 = vweird.f32 %v867
    %vm1017 = vweird.f32 %v1011
    %vm1018 = vmor %vm1016, %vm1017
    %v1019 = vsel %vm1018, %v1011, %v1015
    %v1020 = vand.u32 2147483647, %v867
    %vm1021 = vcmp.eq.f32.partialorder %v1020, 8.507059e+37
    %v1022 = vand.u32 %v867, 2147483648
    %v1023 = vor.u32 1.1754944e-38, %v1022
    %v1024 = vsel %vm1021, %v1023, %v1019
    %v1025 = vmul.f32 1.0, %v1024
    %v1026 = vrcp.pop %v868
    %v1027 = vmul.f32 %v868, %v1026
    %v1028 = vsub.f32 1.0, %v1027
    %v1029 = vmul.f32 %v1026, %v1028
    %v1030 = vadd.f32 %v1026, %v1029
    %vm1031 = vweird.f32 %v868
    %vm1032 = vweird.f32 %v1026
    %vm1033 = vmor %vm1031, %vm1032
    %v1034 = vsel %vm1033, %v1026, %v1030
    %v1035 = vand.u32 2147483647, %v868
    %vm1036 = vcmp.eq.f32.partialorder %v1035, 8.507059e+37
    %v1037 = vand.u32 %v868, 2147483648
    %v1038 = vor.u32 1.1754944e-38, %v1037
    %v1039 = vsel %vm1036, %v1038, %v1034
    %v1040 = vmul.f32 1.0, %v1039
    %v1041 = vrcp.pop %v869
    %v1042 = vmul.f32 %v869, %v1041
    %v1043 = vsub.f32 1.0, %v1042
    %v1044 = vmul.f32 %v1041, %v1043
    %v1045 = vadd.f32 %v1041, %v1044
    %vm1046 = vweird.f32 %v869
    %vm1047 = vweird.f32 %v1041
    %vm1048 = vmor %vm1046, %vm1047
    %v1049 = vsel %vm1048, %v1041, %v1045
    %v1050 = vand.u32 2147483647, %v869
    %vm1051 = vcmp.eq.f32.partialorder %v1050, 8.507059e+37
    %v1052 = vand.u32 %v869, 2147483648
    %v1053 = vor.u32 1.1754944e-38, %v1052
    %v1054 = vsel %vm1051, %v1053, %v1049
    %v1055 = vmul.f32 1.0, %v1054
    %v1056 = vrcp.pop %v870
    %v1057 = vmul.f32 %v870, %v1056
    %v1058 = vsub.f32 1.0, %v1057
    %v1059 = vmul.f32 %v1056, %v1058
    %v1060 = vadd.f32 %v1056, %v1059
    %vm1061 = vweird.f32 %v870
    %vm1062 = vweird.f32 %v1056
    %vm1063 = vmor %vm1061, %vm1062
    %v1064 = vsel %vm1063, %v1056, %v1060
    %v1065 = vand.u32 2147483647, %v870
    %vm1066 = vcmp.eq.f32.partialorder %v1065, 8.507059e+37
    %v1067 = vand.u32 %v870, 2147483648
    %v1068 = vor.u32 1.1754944e-38, %v1067
    %v1069 = vsel %vm1066, %v1068, %v1064
    %v1070 = vmul.f32 1.0, %v1069
    %v1071 = vrcp.pop %v871
    %v1072 = vmul.f32 %v871, %v1071
    %v1073 = vsub.f32 1.0, %v1072
    %v1074 = vmul.f32 %v1071, %v1073
    %v1075 = vadd.f32 %v1071, %v1074
    %vm1076 = vweird.f32 %v871
    %vm1077 = vweird.f32 %v1071
    %vm1078 = vmor %vm1076, %vm1077
    %v1079 = vsel %vm1078, %v1071, %v1075
    %v1080 = vand.u32 2147483647, %v871
    %vm1081 = vcmp.eq.f32.partialorder %v1080, 8.507059e+37
    %v1082 = vand.u32 %v871, 2147483648
    %v1083 = vor.u32 1.1754944e-38, %v1082
    %v1084 = vsel %vm1081, %v1083, %v1079
    %v1085 = vmul.f32 1.0, %v1084
    %v1086 = vrcp.pop %v872
    %v1087 = vmul.f32 %v872, %v1086
    %v1088 = vsub.f32 1.0, %v1087
    %v1089 = vmul.f32 %v1086, %v1088
    %v1090 = vadd.f32 %v1086, %v1089
    %vm1091 = vweird.f32 %v872
    %vm1092 = vweird.f32 %v1086
    %vm1093 = vmor %vm1091, %vm1092
    %v1094 = vsel %vm1093, %v1086, %v1090
    %v1095 = vand.u32 2147483647, %v872
    %vm1096 = vcmp.eq.f32.partialorder %v1095, 8.507059e+37
    %v1097 = vand.u32 %v872, 2147483648
    %v1098 = vor.u32 1.1754944e-38, %v1097
    %v1099 = vsel %vm1096, %v1098, %v1094
    %v1100 = vmul.f32 1.0, %v1099
    %v1101 = vrcp.pop %v873
    %v1102 = vmul.f32 %v873, %v1101
    %v1103 = vsub.f32 1.0, %v1102
    %v1104 = vmul.f32 %v1101, %v1103
    %v1105 = vadd.f32 %v1101, %v1104
    %vm1106 = vweird.f32 %v873
    %vm1107 = vweird.f32 %v1101
    %vm1108 = vmor %vm1106, %vm1107
    %v1109 = vsel %vm1108, %v1101, %v1105
    %v1110 = vand.u32 2147483647, %v873
    %vm1111 = vcmp.eq.f32.partialorder %v1110, 8.507059e+37
    %v1112 = vand.u32 %v873, 2147483648
    %v1113 = vor.u32 1.1754944e-38, %v1112
    %v1114 = vsel %vm1111, %v1113, %v1109
    %v1115 = vmul.f32 1.0, %v1114
    %v1116 = vrcp.pop %v874
    %v1117 = vmul.f32 %v874, %v1116
    %v1118 = vsub.f32 1.0, %v1117
    %v1119 = vmul.f32 %v1116, %v1118
    %v1120 = vadd.f32 %v1116, %v1119
    %vm1121 = vweird.f32 %v874
    %vm1122 = vweird.f32 %v1116
    %vm1123 = vmor %vm1121, %vm1122
    %v1124 = vsel %vm1123, %v1116, %v1120
    %v1125 = vand.u32 2147483647, %v874
    %vm1126 = vcmp.eq.f32.partialorder %v1125, 8.507059e+37
    %v1127 = vand.u32 %v874, 2147483648
    %v1128 = vor.u32 1.1754944e-38, %v1127
    %v1129 = vsel %vm1126, %v1128, %v1124
    %v1130 = vmul.f32 1.0, %v1129
    %v1131 = vrcp.pop %v875
    %v1132 = vmul.f32 %v875, %v1131
    %v1133 = vsub.f32 1.0, %v1132
    %v1134 = vmul.f32 %v1131, %v1133
    %v1135 = vadd.f32 %v1131, %v1134
    %vm1136 = vweird.f32 %v875
    %vm1137 = vweird.f32 %v1131
    %vm1138 = vmor %vm1136, %vm1137
    %v1139 = vsel %vm1138, %v1131, %v1135
    %v1140 = vand.u32 2147483647, %v875
    %vm1141 = vcmp.eq.f32.partialorder %v1140, 8.507059e+37
    %v1142 = vand.u32 %v875, 2147483648
    %v1143 = vor.u32 1.1754944e-38, %v1142
    %v1144 = vsel %vm1141, %v1143, %v1139
    %v1145 = vmul.f32 1.0, %v1144
    %v1146 = vrcp.pop %v876
    %v1147 = vmul.f32 %v876, %v1146
    %v1148 = vsub.f32 1.0, %v1147
    %v1149 = vmul.f32 %v1146, %v1148
    %v1150 = vadd.f32 %v1146, %v1149
    %vm1151 = vweird.f32 %v876
    %vm1152 = vweird.f32 %v1146
    %vm1153 = vmor %vm1151, %vm1152
    %v1154 = vsel %vm1153, %v1146, %v1150
    %v1155 = vand.u32 2147483647, %v876
    %vm1156 = vcmp.eq.f32.partialorder %v1155, 8.507059e+37
    %v1157 = vand.u32 %v876, 2147483648
    %v1158 = vor.u32 1.1754944e-38, %v1157
    %v1159 = vsel %vm1156, %v1158, %v1154
    %v1160 = vmul.f32 1.0, %v1159
    %v1161 = vrcp.pop %v877
    %v1162 = vmul.f32 %v877, %v1161
    %v1163 = vsub.f32 1.0, %v1162
    %v1164 = vmul.f32 %v1161, %v1163
    %v1165 = vadd.f32 %v1161, %v1164
    %vm1166 = vweird.f32 %v877
    %vm1167 = vweird.f32 %v1161
    %vm1168 = vmor %vm1166, %vm1167
    %v1169 = vsel %vm1168, %v1161, %v1165
    %v1170 = vand.u32 2147483647, %v877
    %vm1171 = vcmp.eq.f32.partialorder %v1170, 8.507059e+37
    %v1172 = vand.u32 %v877, 2147483648
    %v1173 = vor.u32 1.1754944e-38, %v1172
    %v1174 = vsel %vm1171, %v1173, %v1169
    %v1175 = vmul.f32 1.0, %v1174
    %v1176 = vrcp.pop %v878
    %v1177 = vmul.f32 %v878, %v1176
    %v1178 = vsub.f32 1.0, %v1177
    %v1179 = vmul.f32 %v1176, %v1178
    %v1180 = vadd.f32 %v1176, %v1179
    %vm1181 = vweird.f32 %v878
    %vm1182 = vweird.f32 %v1176
    %vm1183 = vmor %vm1181, %vm1182
    %v1184 = vsel %vm1183, %v1176, %v1180
    %v1185 = vand.u32 2147483647, %v878
    %vm1186 = vcmp.eq.f32.partialorder %v1185, 8.507059e+37
    %v1187 = vand.u32 %v878, 2147483648
    %v1188 = vor.u32 1.1754944e-38, %v1187
    %v1189 = vsel %vm1186, %v1188, %v1184
    %v1190 = vmul.f32 1.0, %v1189
    %v1191 = vrcp.pop %v879
    %v1192 = vmul.f32 %v879, %v1191
    %v1193 = vsub.f32 1.0, %v1192
    %v1194 = vmul.f32 %v1191, %v1193
    %v1195 = vadd.f32 %v1191, %v1194
    %vm1196 = vweird.f32 %v879
    %vm1197 = vweird.f32 %v1191
    %vm1198 = vmor %vm1196, %vm1197
    %v1199 = vsel %vm1198, %v1191, %v1195
    %v1200 = vand.u32 2147483647, %v879
    %vm1201 = vcmp.eq.f32.partialorder %v1200, 8.507059e+37
    %v1202 = vand.u32 %v879, 2147483648
    %v1203 = vor.u32 1.1754944e-38, %v1202
    %v1204 = vsel %vm1201, %v1203, %v1199
    %v1205 = vmul.f32 1.0, %v1204
    %v1206 = vrcp.pop %v880
    %v1207 = vmul.f32 %v880, %v1206
    %v1208 = vsub.f32 1.0, %v1207
    %v1209 = vmul.f32 %v1206, %v1208
    %v1210 = vadd.f32 %v1206, %v1209
    %vm1211 = vweird.f32 %v880
    %vm1212 = vweird.f32 %v1206
    %vm1213 = vmor %vm1211, %vm1212
    %v1214 = vsel %vm1213, %v1206, %v1210
    %v1215 = vand.u32 2147483647, %v880
    %vm1216 = vcmp.eq.f32.partialorder %v1215, 8.507059e+37
    %v1217 = vand.u32 %v880, 2147483648
    %v1218 = vor.u32 1.1754944e-38, %v1217
    %v1219 = vsel %vm1216, %v1218, %v1214
    %v1220 = vmul.f32 1.0, %v1219
    %v1221 = vrcp.pop %v881
    %v1222 = vmul.f32 %v881, %v1221
    %v1223 = vsub.f32 1.0, %v1222
    %v1224 = vmul.f32 %v1221, %v1223
    %v1225 = vadd.f32 %v1221, %v1224
    %vm1226 = vweird.f32 %v881
    %vm1227 = vweird.f32 %v1221
    %vm1228 = vmor %vm1226, %vm1227
    %v1229 = vsel %vm1228, %v1221, %v1225
    %v1230 = vand.u32 2147483647, %v881
    %vm1231 = vcmp.eq.f32.partialorder %v1230, 8.507059e+37
    %v1232 = vand.u32 %v881, 2147483648
    %v1233 = vor.u32 1.1754944e-38, %v1232
    %v1234 = vsel %vm1231, %v1233, %v1229
    %v1235 = vmul.f32 1.0, %v1234
    %v1236 = vrcp.pop %v882
    %v1237 = vmul.f32 %v882, %v1236
    %v1238 = vsub.f32 1.0, %v1237
    %v1239 = vmul.f32 %v1236, %v1238
    %v1240 = vadd.f32 %v1236, %v1239
    %vm1241 = vweird.f32 %v882
    %vm1242 = vweird.f32 %v1236
    %vm1243 = vmor %vm1241, %vm1242
    %v1244 = vsel %vm1243, %v1236, %v1240
    %v1245 = vand.u32 2147483647, %v882
    %vm1246 = vcmp.eq.f32.partialorder %v1245, 8.507059e+37
    %v1247 = vand.u32 %v882, 2147483648
    %v1248 = vor.u32 1.1754944e-38, %v1247
    %v1249 = vsel %vm1246, %v1248, %v1244
    %v1250 = vmul.f32 1.0, %v1249
    %v1251 = vrcp.pop %v883
    %v1252 = vmul.f32 %v883, %v1251
    %v1253 = vsub.f32 1.0, %v1252
    %v1254 = vmul.f32 %v1251, %v1253
    %v1255 = vadd.f32 %v1251, %v1254
    %vm1256 = vweird.f32 %v883
    %vm1257 = vweird.f32 %v1251
    %vm1258 = vmor %vm1256, %vm1257
    %v1259 = vsel %vm1258, %v1251, %v1255
    %v1260 = vand.u32 2147483647, %v883
    %vm1261 = vcmp.eq.f32.partialorder %v1260, 8.507059e+37
    %v1262 = vand.u32 %v883, 2147483648
    %v1263 = vor.u32 1.1754944e-38, %v1262
    %v1264 = vsel %vm1261, %v1263, %v1259
    %v1265 = vmul.f32 1.0, %v1264
    %v1266 = vrcp.pop %v884
    %v1267 = vmul.f32 %v884, %v1266
    %v1268 = vsub.f32 1.0, %v1267
    %v1269 = vmul.f32 %v1266, %v1268
    %v1270 = vadd.f32 %v1266, %v1269
    %vm1271 = vweird.f32 %v884
    %vm1272 = vweird.f32 %v1266
    %vm1273 = vmor %vm1271, %vm1272
    %v1274 = vsel %vm1273, %v1266, %v1270
    %v1275 = vand.u32 2147483647, %v884
    %vm1276 = vcmp.eq.f32.partialorder %v1275, 8.507059e+37
    %v1277 = vand.u32 %v884, 2147483648
    %v1278 = vor.u32 1.1754944e-38, %v1277
    %v1279 = vsel %vm1276, %v1278, %v1274
    %v1280 = vmul.f32 1.0, %v1279
    %v1281 = vrcp.pop %v885
    %v1282 = vmul.f32 %v885, %v1281
    %v1283 = vsub.f32 1.0, %v1282
    %v1284 = vmul.f32 %v1281, %v1283
    %v1285 = vadd.f32 %v1281, %v1284
    %vm1286 = vweird.f32 %v885
    %vm1287 = vweird.f32 %v1281
    %vm1288 = vmor %vm1286, %vm1287
    %v1289 = vsel %vm1288, %v1281, %v1285
    %v1290 = vand.u32 2147483647, %v885
    %vm1291 = vcmp.eq.f32.partialorder %v1290, 8.507059e+37
    %v1292 = vand.u32 %v885, 2147483648
    %v1293 = vor.u32 1.1754944e-38, %v1292
    %v1294 = vsel %vm1291, %v1293, %v1289
    %v1295 = vmul.f32 1.0, %v1294
    %v1296 = vrcp.pop %v886
    %v1297 = vmul.f32 %v886, %v1296
    %v1298 = vsub.f32 1.0, %v1297
    %v1299 = vmul.f32 %v1296, %v1298
    %v1300 = vadd.f32 %v1296, %v1299
    %vm1301 = vweird.f32 %v886
    %vm1302 = vweird.f32 %v1296
    %vm1303 = vmor %vm1301, %vm1302
    %v1304 = vsel %vm1303, %v1296, %v1300
    %v1305 = vand.u32 2147483647, %v886
    %vm1306 = vcmp.eq.f32.partialorder %v1305, 8.507059e+37
    %v1307 = vand.u32 %v886, 2147483648
    %v1308 = vor.u32 1.1754944e-38, %v1307
    %v1309 = vsel %vm1306, %v1308, %v1304
    %v1310 = vmul.f32 1.0, %v1309
    %v1311 = vrcp.pop %v887
    %v1312 = vmul.f32 %v887, %v1311
    %v1313 = vsub.f32 1.0, %v1312
    %v1314 = vmul.f32 %v1311, %v1313
    %v1315 = vadd.f32 %v1311, %v1314
    %vm1316 = vweird.f32 %v887
    %vm1317 = vweird.f32 %v1311
    %vm1318 = vmor %vm1316, %vm1317
    %v1319 = vsel %vm1318, %v1311, %v1315
    %v1320 = vand.u32 2147483647, %v887
    %vm1321 = vcmp.eq.f32.partialorder %v1320, 8.507059e+37
    %v1322 = vand.u32 %v887, 2147483648
    %v1323 = vor.u32 1.1754944e-38, %v1322
    %v1324 = vsel %vm1321, %v1323, %v1319
    %v1325 = vmul.f32 1.0, %v1324
    %v1326 = vrcp.pop %v888
    %v1327 = vmul.f32 %v888, %v1326
    %v1328 = vsub.f32 1.0, %v1327
    %v1329 = vmul.f32 %v1326, %v1328
    %v1330 = vadd.f32 %v1326, %v1329
    %vm1331 = vweird.f32 %v888
    %vm1332 = vweird.f32 %v1326
    %vm1333 = vmor %vm1331, %vm1332
    %v1334 = vsel %vm1333, %v1326, %v1330
    %v1335 = vand.u32 2147483647, %v888
    %vm1336 = vcmp.eq.f32.partialorder %v1335, 8.507059e+37
    %v1337 = vand.u32 %v888, 2147483648
    %v1338 = vor.u32 1.1754944e-38, %v1337
    %v1339 = vsel %vm1336, %v1338, %v1334
    %v1340 = vmul.f32 1.0, %v1339
    %v1341 = vrcp.pop %v889
    %v1342 = vmul.f32 %v889, %v1341
    %v1343 = vsub.f32 1.0, %v1342
    %v1344 = vmul.f32 %v1341, %v1343
    %v1345 = vadd.f32 %v1341, %v1344
    %vm1346 = vweird.f32 %v889
    %vm1347 = vweird.f32 %v1341
    %vm1348 = vmor %vm1346, %vm1347
    %v1349 = vsel %vm1348, %v1341, %v1345
    %v1350 = vand.u32 2147483647, %v889
    %vm1351 = vcmp.eq.f32.partialorder %v1350, 8.507059e+37
    %v1352 = vand.u32 %v889, 2147483648
    %v1353 = vor.u32 1.1754944e-38, %v1352
    %v1354 = vsel %vm1351, %v1353, %v1349
    %v1355 = vmul.f32 1.0, %v1354
    %v1356 = vrcp.pop %v890
    %v1357 = vmul.f32 %v890, %v1356
    %v1358 = vsub.f32 1.0, %v1357
    %v1359 = vmul.f32 %v1356, %v1358
    %v1360 = vadd.f32 %v1356, %v1359
    %vm1361 = vweird.f32 %v890
    %vm1362 = vweird.f32 %v1356
    %vm1363 = vmor %vm1361, %vm1362
    %v1364 = vsel %vm1363, %v1356, %v1360
    %v1365 = vand.u32 2147483647, %v890
    %vm1366 = vcmp.eq.f32.partialorder %v1365, 8.507059e+37
    %v1367 = vand.u32 %v890, 2147483648
    %v1368 = vor.u32 1.1754944e-38, %v1367
    %v1369 = vsel %vm1366, %v1368, %v1364
    %v1370 = vmul.f32 1.0, %v1369
    %v1371 = vtanh.pop %v595
    %v1372 = vtanh.pop %v597
    %v1373 = vtanh.pop %v600
    %v1374 = vtanh.pop %v602
    %v1375 = vtanh.pop %v605
    %v1376 = vtanh.pop %v607
    %v1377 = vtanh.pop %v610
    %v1378 = vtanh.pop %v612
    %v1379 = vtanh.pop %v615
    %v1380 = vtanh.pop %v617
    %v1381 = vtanh.pop %v620
    %v1382 = vtanh.pop %v622
    %v1383 = vtanh.pop %v625
    %v1384 = vtanh.pop %v627
    %v1385 = vtanh.pop %v630
    %v1386 = vtanh.pop %v632
    %v1387 = vtanh.pop %v635
    %v1388 = vtanh.pop %v637
    %v1389 = vtanh.pop %v640
    %v1390 = vtanh.pop %v642
    %v1391 = vtanh.pop %v645
    %v1392 = vtanh.pop %v647
    %v1393 = vtanh.pop %v650
    %v1394 = vtanh.pop %v652
    %v1395 = vtanh.pop %v655
    %v1396 = vtanh.pop %v657
    %v1397 = vtanh.pop %v660
    %v1398 = vtanh.pop %v662
    %v1399 = vtanh.pop %v665
    %v1400 = vtanh.pop %v667
    %v1401 = vtanh.pop %v670
    %v1402 = vtanh.pop %v672
    %v1403 = vxor.u32 %v684, 2147483648
    %v1404 = vxor.u32 %v686, 2147483648
    %v1405 = vxor.u32 %v689, 2147483648
    %v1406 = vxor.u32 %v691, 2147483648
    %v1407 = vxor.u32 %v694, 2147483648
    %v1408 = vxor.u32 %v696, 2147483648
    %v1409 = vxor.u32 %v699, 2147483648
    %v1410 = vxor.u32 %v701, 2147483648
    %v1411 = vxor.u32 %v704, 2147483648
    %v1412 = vxor.u32 %v706, 2147483648
    %v1413 = vxor.u32 %v709, 2147483648
    %v1414 = vxor.u32 %v711, 2147483648
    %v1415 = vxor.u32 %v714, 2147483648
    %v1416 = vxor.u32 %v716, 2147483648
    %v1417 = vxor.u32 %v719, 2147483648
    %v1418 = vxor.u32 %v721, 2147483648
    %v1419 = vxor.u32 %v724, 2147483648
    %v1420 = vxor.u32 %v726, 2147483648
    %v1421 = vxor.u32 %v729, 2147483648
    %v1422 = vxor.u32 %v731, 2147483648
    %v1423 = vxor.u32 %v734, 2147483648
    %v1424 = vxor.u32 %v736, 2147483648
    %v1425 = vxor.u32 %v739, 2147483648
    %v1426 = vxor.u32 %v741, 2147483648
    %v1427 = vxor.u32 %v744, 2147483648
    %v1428 = vxor.u32 %v746, 2147483648
    %v1429 = vxor.u32 %v749, 2147483648
    %v1430 = vxor.u32 %v751, 2147483648
    %v1431 = vxor.u32 %v754, 2147483648
    %v1432 = vxor.u32 %v756, 2147483648
    %v1433 = vxor.u32 %v759, 2147483648
    %v1434 = vxor.u32 %v761, 2147483648
    %v1435 = vmul.f32 %v1403, 1.442695
    %v1436 = vpow.pop %v1435
    %v1437 = vmul.f32 %v1404, 1.442695
    %v1438 = vpow.pop %v1437
    %v1439 = vmul.f32 %v1405, 1.442695
    %v1440 = vpow.pop %v1439
    %v1441 = vmul.f32 %v1406, 1.442695
    %v1442 = vpow.pop %v1441
    %v1443 = vmul.f32 %v1407, 1.442695
    %v1444 = vpow.pop %v1443
    %v1445 = vmul.f32 %v1408, 1.442695
    %v1446 = vpow.pop %v1445
    %v1447 = vmul.f32 %v1409, 1.442695
    %v1448 = vpow.pop %v1447
    %v1449 = vmul.f32 %v1410, 1.442695
    %v1450 = vpow.pop %v1449
    %v1451 = vmul.f32 %v1411, 1.442695
    %v1452 = vpow.pop %v1451
    %v1453 = vmul.f32 %v1412, 1.442695
    %v1454 = vpow.pop %v1453
    %v1455 = vmul.f32 %v1413, 1.442695
    %v1456 = vpow.pop %v1455
    %v1457 = vmul.f32 %v1414, 1.442695
    %v1458 = vpow.pop %v1457
    %v1459 = vmul.f32 %v1415, 1.442695
    %v1460 = vpow.pop %v1459
    %v1461 = vmul.f32 %v1416, 1.442695
    %v1462 = vpow.pop %v1461
    %v1463 = vmul.f32 %v1417, 1.442695
    %v1464 = vpow.pop %v1463
    %v1465 = vmul.f32 %v1418, 1.442695
    %v1466 = vpow.pop %v1465
    %v1467 = vmul.f32 %v1419, 1.442695
    %v1468 = vpow.pop %v1467
    %v1469 = vmul.f32 %v1420, 1.442695
    %v1470 = vpow.pop %v1469
    %v1471 = vmul.f32 %v1421, 1.442695
    %v1472 = vpow.pop %v1471
    %v1473 = vmul.f32 %v1422, 1.442695
    %v1474 = vpow.pop %v1473
    %v1475 = vmul.f32 %v1423, 1.442695
    %v1476 = vpow.pop %v1475
    %v1477 = vmul.f32 %v1424, 1.442695
    %v1478 = vpow.pop %v1477
    %v1479 = vmul.f32 %v1425, 1.442695
    %v1480 = vpow.pop %v1479
    %v1481 = vmul.f32 %v1426, 1.442695
    %v1482 = vpow.pop %v1481
    %v1483 = vmul.f32 %v1427, 1.442695
    %v1484 = vpow.pop %v1483
    %v1485 = vmul.f32 %v1428, 1.442695
    %v1486 = vpow.pop %v1485
    %v1487 = vmul.f32 %v1429, 1.442695
    %v1488 = vpow.pop %v1487
    %v1489 = vmul.f32 %v1430, 1.442695
    %v1490 = vpow.pop %v1489
    %v1491 = vmul.f32 %v1431, 1.442695
    %v1492 = vpow.pop %v1491
    %v1493 = vmul.f32 %v1432, 1.442695
    %v1494 = vpow.pop %v1493
    %v1495 = vmul.f32 %v1433, 1.442695
    %v1496 = vpow.pop %v1495
    %v1497 = vmul.f32 %v1434, 1.442695
    %v1498 = vpow.pop %v1497
    %v1499 = vadd.f32 %v1436, 1.0
    %v1500 = vadd.f32 %v1438, 1.0
    %v1501 = vadd.f32 %v1440, 1.0
    %v1502 = vadd.f32 %v1442, 1.0
    %v1503 = vadd.f32 %v1444, 1.0
    %v1504 = vadd.f32 %v1446, 1.0
    %v1505 = vadd.f32 %v1448, 1.0
    %v1506 = vadd.f32 %v1450, 1.0
    %v1507 = vadd.f32 %v1452, 1.0
    %v1508 = vadd.f32 %v1454, 1.0
    %v1509 = vadd.f32 %v1456, 1.0
    %v1510 = vadd.f32 %v1458, 1.0
    %v1511 = vadd.f32 %v1460, 1.0
    %v1512 = vadd.f32 %v1462, 1.0
    %v1513 = vadd.f32 %v1464, 1.0
    %v1514 = vadd.f32 %v1466, 1.0
    %v1515 = vadd.f32 %v1468, 1.0
    %v1516 = vadd.f32 %v1470, 1.0
    %v1517 = vadd.f32 %v1472, 1.0
    %v1518 = vadd.f32 %v1474, 1.0
    %v1519 = vadd.f32 %v1476, 1.0
    %v1520 = vadd.f32 %v1478, 1.0
    %v1521 = vadd.f32 %v1480, 1.0
    %v1522 = vadd.f32 %v1482, 1.0
    %v1523 = vadd.f32 %v1484, 1.0
    %v1524 = vadd.f32 %v1486, 1.0
    %v1525 = vadd.f32 %v1488, 1.0
    %v1526 = vadd.f32 %v1490, 1.0
    %v1527 = vadd.f32 %v1492, 1.0
    %v1528 = vadd.f32 %v1494, 1.0
    %v1529 = vadd.f32 %v1496, 1.0
    %v1530 = vadd.f32 %v1498, 1.0
    %v1531 = vrcp.pop %v1499
    %v1532 = vmul.f32 %v1499, %v1531
    %v1533 = vsub.f32 1.0, %v1532
    %v1534 = vmul.f32 %v1531, %v1533
    %v1535 = vadd.f32 %v1531, %v1534
    %vm1536 = vweird.f32 %v1499
    %vm1537 = vweird.f32 %v1531
    %vm1538 = vmor %vm1536, %vm1537
    %v1539 = vsel %vm1538, %v1531, %v1535
    %v1540 = vand.u32 2147483647, %v1499
    %vm1541 = vcmp.eq.f32.partialorder %v1540, 8.507059e+37
    %v1542 = vand.u32 %v1499, 2147483648
    %v1543 = vor.u32 1.1754944e-38, %v1542
    %v1544 = vsel %vm1541, %v1543, %v1539
    %v1545 = vmul.f32 1.0, %v1544
    %v1546 = vrcp.pop %v1500
    %v1547 = vmul.f32 %v1500, %v1546
    %v1548 = vsub.f32 1.0, %v1547
    %v1549 = vmul.f32 %v1546, %v1548
    %v1550 = vadd.f32 %v1546, %v1549
    %vm1551 = vweird.f32 %v1500
    %vm1552 = vweird.f32 %v1546
    %vm1553 = vmor %vm1551, %vm1552
    %v1554 = vsel %vm1553, %v1546, %v1550
    %v1555 = vand.u32 2147483647, %v1500
    %vm1556 = vcmp.eq.f32.partialorder %v1555, 8.507059e+37
    %v1557 = vand.u32 %v1500, 2147483648
    %v1558 = vor.u32 1.1754944e-38, %v1557
    %v1559 = vsel %vm1556, %v1558, %v1554
    %v1560 = vmul.f32 1.0, %v1559
    %v1561 = vrcp.pop %v1501
    %v1562 = vmul.f32 %v1501, %v1561
    %v1563 = vsub.f32 1.0, %v1562
    %v1564 = vmul.f32 %v1561, %v1563
    %v1565 = vadd.f32 %v1561, %v1564
    %vm1566 = vweird.f32 %v1501
    %vm1567 = vweird.f32 %v1561
    %vm1568 = vmor %vm1566, %vm1567
    %v1569 = vsel %vm1568, %v1561, %v1565
    %v1570 = vand.u32 2147483647, %v1501
    %vm1571 = vcmp.eq.f32.partialorder %v1570, 8.507059e+37
    %v1572 = vand.u32 %v1501, 2147483648
    %v1573 = vor.u32 1.1754944e-38, %v1572
    %v1574 = vsel %vm1571, %v1573, %v1569
    %v1575 = vmul.f32 1.0, %v1574
    %v1576 = vrcp.pop %v1502
    %v1577 = vmul.f32 %v1502, %v1576
    %v1578 = vsub.f32 1.0, %v1577
    %v1579 = vmul.f32 %v1576, %v1578
    %v1580 = vadd.f32 %v1576, %v1579
    %vm1581 = vweird.f32 %v1502
    %vm1582 = vweird.f32 %v1576
    %vm1583 = vmor %vm1581, %vm1582
    %v1584 = vsel %vm1583, %v1576, %v1580
    %v1585 = vand.u32 2147483647, %v1502
    %vm1586 = vcmp.eq.f32.partialorder %v1585, 8.507059e+37
    %v1587 = vand.u32 %v1502, 2147483648
    %v1588 = vor.u32 1.1754944e-38, %v1587
    %v1589 = vsel %vm1586, %v1588, %v1584
    %v1590 = vmul.f32 1.0, %v1589
    %v1591 = vrcp.pop %v1503
    %v1592 = vmul.f32 %v1503, %v1591
    %v1593 = vsub.f32 1.0, %v1592
    %v1594 = vmul.f32 %v1591, %v1593
    %v1595 = vadd.f32 %v1591, %v1594
    %vm1596 = vweird.f32 %v1503
    %vm1597 = vweird.f32 %v1591
    %vm1598 = vmor %vm1596, %vm1597
    %v1599 = vsel %vm1598, %v1591, %v1595
    %v1600 = vand.u32 2147483647, %v1503
    %vm1601 = vcmp.eq.f32.partialorder %v1600, 8.507059e+37
    %v1602 = vand.u32 %v1503, 2147483648
    %v1603 = vor.u32 1.1754944e-38, %v1602
    %v1604 = vsel %vm1601, %v1603, %v1599
    %v1605 = vmul.f32 1.0, %v1604
    %v1606 = vrcp.pop %v1504
    %v1607 = vmul.f32 %v1504, %v1606
    %v1608 = vsub.f32 1.0, %v1607
    %v1609 = vmul.f32 %v1606, %v1608
    %v1610 = vadd.f32 %v1606, %v1609
    %vm1611 = vweird.f32 %v1504
    %vm1612 = vweird.f32 %v1606
    %vm1613 = vmor %vm1611, %vm1612
    %v1614 = vsel %vm1613, %v1606, %v1610
    %v1615 = vand.u32 2147483647, %v1504
    %vm1616 = vcmp.eq.f32.partialorder %v1615, 8.507059e+37
    %v1617 = vand.u32 %v1504, 2147483648
    %v1618 = vor.u32 1.1754944e-38, %v1617
    %v1619 = vsel %vm1616, %v1618, %v1614
    %v1620 = vmul.f32 1.0, %v1619
    %v1621 = vrcp.pop %v1505
    %v1622 = vmul.f32 %v1505, %v1621
    %v1623 = vsub.f32 1.0, %v1622
    %v1624 = vmul.f32 %v1621, %v1623
    %v1625 = vadd.f32 %v1621, %v1624
    %vm1626 = vweird.f32 %v1505
    %vm1627 = vweird.f32 %v1621
    %vm1628 = vmor %vm1626, %vm1627
    %v1629 = vsel %vm1628, %v1621, %v1625
    %v1630 = vand.u32 2147483647, %v1505
    %vm1631 = vcmp.eq.f32.partialorder %v1630, 8.507059e+37
    %v1632 = vand.u32 %v1505, 2147483648
    %v1633 = vor.u32 1.1754944e-38, %v1632
    %v1634 = vsel %vm1631, %v1633, %v1629
    %v1635 = vmul.f32 1.0, %v1634
    %v1636 = vrcp.pop %v1506
    %v1637 = vmul.f32 %v1506, %v1636
    %v1638 = vsub.f32 1.0, %v1637
    %v1639 = vmul.f32 %v1636, %v1638
    %v1640 = vadd.f32 %v1636, %v1639
    %vm1641 = vweird.f32 %v1506
    %vm1642 = vweird.f32 %v1636
    %vm1643 = vmor %vm1641, %vm1642
    %v1644 = vsel %vm1643, %v1636, %v1640
    %v1645 = vand.u32 2147483647, %v1506
    %vm1646 = vcmp.eq.f32.partialorder %v1645, 8.507059e+37
    %v1647 = vand.u32 %v1506, 2147483648
    %v1648 = vor.u32 1.1754944e-38, %v1647
    %v1649 = vsel %vm1646, %v1648, %v1644
    %v1650 = vmul.f32 1.0, %v1649
    %v1651 = vrcp.pop %v1507
    %v1652 = vmul.f32 %v1507, %v1651
    %v1653 = vsub.f32 1.0, %v1652
    %v1654 = vmul.f32 %v1651, %v1653
    %v1655 = vadd.f32 %v1651, %v1654
    %vm1656 = vweird.f32 %v1507
    %vm1657 = vweird.f32 %v1651
    %vm1658 = vmor %vm1656, %vm1657
    %v1659 = vsel %vm1658, %v1651, %v1655
    %v1660 = vand.u32 2147483647, %v1507
    %vm1661 = vcmp.eq.f32.partialorder %v1660, 8.507059e+37
    %v1662 = vand.u32 %v1507, 2147483648
    %v1663 = vor.u32 1.1754944e-38, %v1662
    %v1664 = vsel %vm1661, %v1663, %v1659
    %v1665 = vmul.f32 1.0, %v1664
    %v1666 = vrcp.pop %v1508
    %v1667 = vmul.f32 %v1508, %v1666
    %v1668 = vsub.f32 1.0, %v1667
    %v1669 = vmul.f32 %v1666, %v1668
    %v1670 = vadd.f32 %v1666, %v1669
    %vm1671 = vweird.f32 %v1508
    %vm1672 = vweird.f32 %v1666
    %vm1673 = vmor %vm1671, %vm1672
    %v1674 = vsel %vm1673, %v1666, %v1670
    %v1675 = vand.u32 2147483647, %v1508
    %vm1676 = vcmp.eq.f32.partialorder %v1675, 8.507059e+37
    %v1677 = vand.u32 %v1508, 2147483648
    %v1678 = vor.u32 1.1754944e-38, %v1677
    %v1679 = vsel %vm1676, %v1678, %v1674
    %v1680 = vmul.f32 1.0, %v1679
    %v1681 = vrcp.pop %v1509
    %v1682 = vmul.f32 %v1509, %v1681
    %v1683 = vsub.f32 1.0, %v1682
    %v1684 = vmul.f32 %v1681, %v1683
    %v1685 = vadd.f32 %v1681, %v1684
    %vm1686 = vweird.f32 %v1509
    %vm1687 = vweird.f32 %v1681
    %vm1688 = vmor %vm1686, %vm1687
    %v1689 = vsel %vm1688, %v1681, %v1685
    %v1690 = vand.u32 2147483647, %v1509
    %vm1691 = vcmp.eq.f32.partialorder %v1690, 8.507059e+37
    %v1692 = vand.u32 %v1509, 2147483648
    %v1693 = vor.u32 1.1754944e-38, %v1692
    %v1694 = vsel %vm1691, %v1693, %v1689
    %v1695 = vmul.f32 1.0, %v1694
    %v1696 = vrcp.pop %v1510
    %v1697 = vmul.f32 %v1510, %v1696
    %v1698 = vsub.f32 1.0, %v1697
    %v1699 = vmul.f32 %v1696, %v1698
    %v1700 = vadd.f32 %v1696, %v1699
    %vm1701 = vweird.f32 %v1510
    %vm1702 = vweird.f32 %v1696
    %vm1703 = vmor %vm1701, %vm1702
    %v1704 = vsel %vm1703, %v1696, %v1700
    %v1705 = vand.u32 2147483647, %v1510
    %vm1706 = vcmp.eq.f32.partialorder %v1705, 8.507059e+37
    %v1707 = vand.u32 %v1510, 2147483648
    %v1708 = vor.u32 1.1754944e-38, %v1707
    %v1709 = vsel %vm1706, %v1708, %v1704
    %v1710 = vmul.f32 1.0, %v1709
    %v1711 = vrcp.pop %v1511
    %v1712 = vmul.f32 %v1511, %v1711
    %v1713 = vsub.f32 1.0, %v1712
    %v1714 = vmul.f32 %v1711, %v1713
    %v1715 = vadd.f32 %v1711, %v1714
    %vm1716 = vweird.f32 %v1511
    %vm1717 = vweird.f32 %v1711
    %vm1718 = vmor %vm1716, %vm1717
    %v1719 = vsel %vm1718, %v1711, %v1715
    %v1720 = vand.u32 2147483647, %v1511
    %vm1721 = vcmp.eq.f32.partialorder %v1720, 8.507059e+37
    %v1722 = vand.u32 %v1511, 2147483648
    %v1723 = vor.u32 1.1754944e-38, %v1722
    %v1724 = vsel %vm1721, %v1723, %v1719
    %v1725 = vmul.f32 1.0, %v1724
    %v1726 = vrcp.pop %v1512
    %v1727 = vmul.f32 %v1512, %v1726
    %v1728 = vsub.f32 1.0, %v1727
    %v1729 = vmul.f32 %v1726, %v1728
    %v1730 = vadd.f32 %v1726, %v1729
    %vm1731 = vweird.f32 %v1512
    %vm1732 = vweird.f32 %v1726
    %vm1733 = vmor %vm1731, %vm1732
    %v1734 = vsel %vm1733, %v1726, %v1730
    %v1735 = vand.u32 2147483647, %v1512
    %vm1736 = vcmp.eq.f32.partialorder %v1735, 8.507059e+37
    %v1737 = vand.u32 %v1512, 2147483648
    %v1738 = vor.u32 1.1754944e-38, %v1737
    %v1739 = vsel %vm1736, %v1738, %v1734
    %v1740 = vmul.f32 1.0, %v1739
    %v1741 = vrcp.pop %v1513
    %v1742 = vmul.f32 %v1513, %v1741
    %v1743 = vsub.f32 1.0, %v1742
    %v1744 = vmul.f32 %v1741, %v1743
    %v1745 = vadd.f32 %v1741, %v1744
    %vm1746 = vweird.f32 %v1513
    %vm1747 = vweird.f32 %v1741
    %vm1748 = vmor %vm1746, %vm1747
    %v1749 = vsel %vm1748, %v1741, %v1745
    %v1750 = vand.u32 2147483647, %v1513
    %vm1751 = vcmp.eq.f32.partialorder %v1750, 8.507059e+37
    %v1752 = vand.u32 %v1513, 2147483648
    %v1753 = vor.u32 1.1754944e-38, %v1752
    %v1754 = vsel %vm1751, %v1753, %v1749
    %v1755 = vmul.f32 1.0, %v1754
    %v1756 = vrcp.pop %v1514
    %v1757 = vmul.f32 %v1514, %v1756
    %v1758 = vsub.f32 1.0, %v1757
    %v1759 = vmul.f32 %v1756, %v1758
    %v1760 = vadd.f32 %v1756, %v1759
    %vm1761 = vweird.f32 %v1514
    %vm1762 = vweird.f32 %v1756
    %vm1763 = vmor %vm1761, %vm1762
    %v1764 = vsel %vm1763, %v1756, %v1760
    %v1765 = vand.u32 2147483647, %v1514
    %vm1766 = vcmp.eq.f32.partialorder %v1765, 8.507059e+37
    %v1767 = vand.u32 %v1514, 2147483648
    %v1768 = vor.u32 1.1754944e-38, %v1767
    %v1769 = vsel %vm1766, %v1768, %v1764
    %v1770 = vmul.f32 1.0, %v1769
    %v1771 = vrcp.pop %v1515
    %v1772 = vmul.f32 %v1515, %v1771
    %v1773 = vsub.f32 1.0, %v1772
    %v1774 = vmul.f32 %v1771, %v1773
    %v1775 = vadd.f32 %v1771, %v1774
    %vm1776 = vweird.f32 %v1515
    %vm1777 = vweird.f32 %v1771
    %vm1778 = vmor %vm1776, %vm1777
    %v1779 = vsel %vm1778, %v1771, %v1775
    %v1780 = vand.u32 2147483647, %v1515
    %vm1781 = vcmp.eq.f32.partialorder %v1780, 8.507059e+37
    %v1782 = vand.u32 %v1515, 2147483648
    %v1783 = vor.u32 1.1754944e-38, %v1782
    %v1784 = vsel %vm1781, %v1783, %v1779
    %v1785 = vmul.f32 1.0, %v1784
    %v1786 = vrcp.pop %v1516
    %v1787 = vmul.f32 %v1516, %v1786
    %v1788 = vsub.f32 1.0, %v1787
    %v1789 = vmul.f32 %v1786, %v1788
    %v1790 = vadd.f32 %v1786, %v1789
    %vm1791 = vweird.f32 %v1516
    %vm1792 = vweird.f32 %v1786
    %vm1793 = vmor %vm1791, %vm1792
    %v1794 = vsel %vm1793, %v1786, %v1790
    %v1795 = vand.u32 2147483647, %v1516
    %vm1796 = vcmp.eq.f32.partialorder %v1795, 8.507059e+37
    %v1797 = vand.u32 %v1516, 2147483648
    %v1798 = vor.u32 1.1754944e-38, %v1797
    %v1799 = vsel %vm1796, %v1798, %v1794
    %v1800 = vmul.f32 1.0, %v1799
    %v1801 = vrcp.pop %v1517
    %v1802 = vmul.f32 %v1517, %v1801
    %v1803 = vsub.f32 1.0, %v1802
    %v1804 = vmul.f32 %v1801, %v1803
    %v1805 = vadd.f32 %v1801, %v1804
    %vm1806 = vweird.f32 %v1517
    %vm1807 = vweird.f32 %v1801
    %vm1808 = vmor %vm1806, %vm1807
    %v1809 = vsel %vm1808, %v1801, %v1805
    %v1810 = vand.u32 2147483647, %v1517
    %vm1811 = vcmp.eq.f32.partialorder %v1810, 8.507059e+37
    %v1812 = vand.u32 %v1517, 2147483648
    %v1813 = vor.u32 1.1754944e-38, %v1812
    %v1814 = vsel %vm1811, %v1813, %v1809
    %v1815 = vmul.f32 1.0, %v1814
    %v1816 = vrcp.pop %v1518
    %v1817 = vmul.f32 %v1518, %v1816
    %v1818 = vsub.f32 1.0, %v1817
    %v1819 = vmul.f32 %v1816, %v1818
    %v1820 = vadd.f32 %v1816, %v1819
    %vm1821 = vweird.f32 %v1518
    %vm1822 = vweird.f32 %v1816
    %vm1823 = vmor %vm1821, %vm1822
    %v1824 = vsel %vm1823, %v1816, %v1820
    %v1825 = vand.u32 2147483647, %v1518
    %vm1826 = vcmp.eq.f32.partialorder %v1825, 8.507059e+37
    %v1827 = vand.u32 %v1518, 2147483648
    %v1828 = vor.u32 1.1754944e-38, %v1827
    %v1829 = vsel %vm1826, %v1828, %v1824
    %v1830 = vmul.f32 1.0, %v1829
    %v1831 = vrcp.pop %v1519
    %v1832 = vmul.f32 %v1519, %v1831
    %v1833 = vsub.f32 1.0, %v1832
    %v1834 = vmul.f32 %v1831, %v1833
    %v1835 = vadd.f32 %v1831, %v1834
    %vm1836 = vweird.f32 %v1519
    %vm1837 = vweird.f32 %v1831
    %vm1838 = vmor %vm1836, %vm1837
    %v1839 = vsel %vm1838, %v1831, %v1835
    %v1840 = vand.u32 2147483647, %v1519
    %vm1841 = vcmp.eq.f32.partialorder %v1840, 8.507059e+37
    %v1842 = vand.u32 %v1519, 2147483648
    %v1843 = vor.u32 1.1754944e-38, %v1842
    %v1844 = vsel %vm1841, %v1843, %v1839
    %v1845 = vmul.f32 1.0, %v1844
    %v1846 = vrcp.pop %v1520
    %v1847 = vmul.f32 %v1520, %v1846
    %v1848 = vsub.f32 1.0, %v1847
    %v1849 = vmul.f32 %v1846, %v1848
    %v1850 = vadd.f32 %v1846, %v1849
    %vm1851 = vweird.f32 %v1520
    %vm1852 = vweird.f32 %v1846
    %vm1853 = vmor %vm1851, %vm1852
    %v1854 = vsel %vm1853, %v1846, %v1850
    %v1855 = vand.u32 2147483647, %v1520
    %vm1856 = vcmp.eq.f32.partialorder %v1855, 8.507059e+37
    %v1857 = vand.u32 %v1520, 2147483648
    %v1858 = vor.u32 1.1754944e-38, %v1857
    %v1859 = vsel %vm1856, %v1858, %v1854
    %v1860 = vmul.f32 1.0, %v1859
    %v1861 = vrcp.pop %v1521
    %v1862 = vmul.f32 %v1521, %v1861
    %v1863 = vsub.f32 1.0, %v1862
    %v1864 = vmul.f32 %v1861, %v1863
    %v1865 = vadd.f32 %v1861, %v1864
    %vm1866 = vweird.f32 %v1521
    %vm1867 = vweird.f32 %v1861
    %vm1868 = vmor %vm1866, %vm1867
    %v1869 = vsel %vm1868, %v1861, %v1865
    %v1870 = vand.u32 2147483647, %v1521
    %vm1871 = vcmp.eq.f32.partialorder %v1870, 8.507059e+37
    %v1872 = vand.u32 %v1521, 2147483648
    %v1873 = vor.u32 1.1754944e-38, %v1872
    %v1874 = vsel %vm1871, %v1873, %v1869
    %v1875 = vmul.f32 1.0, %v1874
    %v1876 = vrcp.pop %v1522
    %v1877 = vmul.f32 %v1522, %v1876
    %v1878 = vsub.f32 1.0, %v1877
    %v1879 = vmul.f32 %v1876, %v1878
    %v1880 = vadd.f32 %v1876, %v1879
    %vm1881 = vweird.f32 %v1522
    %vm1882 = vweird.f32 %v1876
    %vm1883 = vmor %vm1881, %vm1882
    %v1884 = vsel %vm1883, %v1876, %v1880
    %v1885 = vand.u32 2147483647, %v1522
    %vm1886 = vcmp.eq.f32.partialorder %v1885, 8.507059e+37
    %v1887 = vand.u32 %v1522, 2147483648
    %v1888 = vor.u32 1.1754944e-38, %v1887
    %v1889 = vsel %vm1886, %v1888, %v1884
    %v1890 = vmul.f32 1.0, %v1889
    %v1891 = vrcp.pop %v1523
    %v1892 = vmul.f32 %v1523, %v1891
    %v1893 = vsub.f32 1.0, %v1892
    %v1894 = vmul.f32 %v1891, %v1893
    %v1895 = vadd.f32 %v1891, %v1894
    %vm1896 = vweird.f32 %v1523
    %vm1897 = vweird.f32 %v1891
    %vm1898 = vmor %vm1896, %vm1897
    %v1899 = vsel %vm1898, %v1891, %v1895
    %v1900 = vand.u32 2147483647, %v1523
    %vm1901 = vcmp.eq.f32.partialorder %v1900, 8.507059e+37
    %v1902 = vand.u32 %v1523, 2147483648
    %v1903 = vor.u32 1.1754944e-38, %v1902
    %v1904 = vsel %vm1901, %v1903, %v1899
    %v1905 = vmul.f32 1.0, %v1904
    %v1906 = vrcp.pop %v1524
    %v1907 = vmul.f32 %v1524, %v1906
    %v1908 = vsub.f32 1.0, %v1907
    %v1909 = vmul.f32 %v1906, %v1908
    %v1910 = vadd.f32 %v1906, %v1909
    %vm1911 = vweird.f32 %v1524
    %vm1912 = vweird.f32 %v1906
    %vm1913 = vmor %vm1911, %vm1912
    %v1914 = vsel %vm1913, %v1906, %v1910
    %v1915 = vand.u32 2147483647, %v1524
    %vm1916 = vcmp.eq.f32.partialorder %v1915, 8.507059e+37
    %v1917 = vand.u32 %v1524, 2147483648
    %v1918 = vor.u32 1.1754944e-38, %v1917
    %v1919 = vsel %vm1916, %v1918, %v1914
    %v1920 = vmul.f32 1.0, %v1919
    %v1921 = vrcp.pop %v1525
    %v1922 = vmul.f32 %v1525, %v1921
    %v1923 = vsub.f32 1.0, %v1922
    %v1924 = vmul.f32 %v1921, %v1923
    %v1925 = vadd.f32 %v1921, %v1924
    %vm1926 = vweird.f32 %v1525
    %vm1927 = vweird.f32 %v1921
    %vm1928 = vmor %vm1926, %vm1927
    %v1929 = vsel %vm1928, %v1921, %v1925
    %v1930 = vand.u32 2147483647, %v1525
    %vm1931 = vcmp.eq.f32.partialorder %v1930, 8.507059e+37
    %v1932 = vand.u32 %v1525, 2147483648
    %v1933 = vor.u32 1.1754944e-38, %v1932
    %v1934 = vsel %vm1931, %v1933, %v1929
    %v1935 = vmul.f32 1.0, %v1934
    %v1936 = vrcp.pop %v1526
    %v1937 = vmul.f32 %v1526, %v1936
    %v1938 = vsub.f32 1.0, %v1937
    %v1939 = vmul.f32 %v1936, %v1938
    %v1940 = vadd.f32 %v1936, %v1939
    %vm1941 = vweird.f32 %v1526
    %vm1942 = vweird.f32 %v1936
    %vm1943 = vmor %vm1941, %vm1942
    %v1944 = vsel %vm1943, %v1936, %v1940
    %v1945 = vand.u32 2147483647, %v1526
    %vm1946 = vcmp.eq.f32.partialorder %v1945, 8.507059e+37
    %v1947 = vand.u32 %v1526, 2147483648
    %v1948 = vor.u32 1.1754944e-38, %v1947
    %v1949 = vsel %vm1946, %v1948, %v1944
    %v1950 = vmul.f32 1.0, %v1949
    %v1951 = vrcp.pop %v1527
    %v1952 = vmul.f32 %v1527, %v1951
    %v1953 = vsub.f32 1.0, %v1952
    %v1954 = vmul.f32 %v1951, %v1953
    %v1955 = vadd.f32 %v1951, %v1954
    %vm1956 = vweird.f32 %v1527
    %vm1957 = vweird.f32 %v1951
    %vm1958 = vmor %vm1956, %vm1957
    %v1959 = vsel %vm1958, %v1951, %v1955
    %v1960 = vand.u32 2147483647, %v1527
    %vm1961 = vcmp.eq.f32.partialorder %v1960, 8.507059e+37
    %v1962 = vand.u32 %v1527, 2147483648
    %v1963 = vor.u32 1.1754944e-38, %v1962
    %v1964 = vsel %vm1961, %v1963, %v1959
    %v1965 = vmul.f32 1.0, %v1964
    %v1966 = vrcp.pop %v1528
    %v1967 = vmul.f32 %v1528, %v1966
    %v1968 = vsub.f32 1.0, %v1967
    %v1969 = vmul.f32 %v1966, %v1968
    %v1970 = vadd.f32 %v1966, %v1969
    %vm1971 = vweird.f32 %v1528
    %vm1972 = vweird.f32 %v1966
    %vm1973 = vmor %vm1971, %vm1972
    %v1974 = vsel %vm1973, %v1966, %v1970
    %v1975 = vand.u32 2147483647, %v1528
    %vm1976 = vcmp.eq.f32.partialorder %v1975, 8.507059e+37
    %v1977 = vand.u32 %v1528, 2147483648
    %v1978 = vor.u32 1.1754944e-38, %v1977
    %v1979 = vsel %vm1976, %v1978, %v1974
    %v1980 = vmul.f32 1.0, %v1979
    %v1981 = vrcp.pop %v1529
    %v1982 = vmul.f32 %v1529, %v1981
    %v1983 = vsub.f32 1.0, %v1982
    %v1984 = vmul.f32 %v1981, %v1983
    %v1985 = vadd.f32 %v1981, %v1984
    %vm1986 = vweird.f32 %v1529
    %vm1987 = vweird.f32 %v1981
    %vm1988 = vmor %vm1986, %vm1987
    %v1989 = vsel %vm1988, %v1981, %v1985
    %v1990 = vand.u32 2147483647, %v1529
    %vm1991 = vcmp.eq.f32.partialorder %v1990, 8.507059e+37
    %v1992 = vand.u32 %v1529, 2147483648
    %v1993 = vor.u32 1.1754944e-38, %v1992
    %v1994 = vsel %vm1991, %v1993, %v1989
    %v1995 = vmul.f32 1.0, %v1994
    %v1996 = vrcp.pop %v1530
    %v1997 = vmul.f32 %v1530, %v1996
    %v1998 = vsub.f32 1.0, %v1997
    %v1999 = vmul.f32 %v1996, %v1998
    %v2000 = vadd.f32 %v1996, %v1999
    %vm2001 = vweird.f32 %v1530
    %vm2002 = vweird.f32 %v1996
    %vm2003 = vmor %vm2001, %vm2002
    %v2004 = vsel %vm2003, %v1996, %v2000
    %v2005 = vand.u32 2147483647, %v1530
    %vm2006 = vcmp.eq.f32.partialorder %v2005, 8.507059e+37
    %v2007 = vand.u32 %v1530, 2147483648
    %v2008 = vor.u32 1.1754944e-38, %v2007
    %v2009 = vsel %vm2006, %v2008, %v2004
    %v2010 = vmul.f32 1.0, %v2009
    %v2011 = vmul.f32 %v905, %v1371
    %v2012 = vmul.f32 %v920, %v1372
    %v2013 = vmul.f32 %v935, %v1373
    %v2014 = vmul.f32 %v950, %v1374
    %v2015 = vmul.f32 %v965, %v1375
    %v2016 = vmul.f32 %v980, %v1376
    %v2017 = vmul.f32 %v995, %v1377
    %v2018 = vmul.f32 %v1010, %v1378
    %v2019 = vmul.f32 %v1025, %v1379
    %v2020 = vmul.f32 %v1040, %v1380
    %v2021 = vmul.f32 %v1055, %v1381
    %v2022 = vmul.f32 %v1070, %v1382
    %v2023 = vmul.f32 %v1085, %v1383
    %v2024 = vmul.f32 %v1100, %v1384
    %v2025 = vmul.f32 %v1115, %v1385
    %v2026 = vmul.f32 %v1130, %v1386
    %v2027 = vmul.f32 %v1145, %v1387
    %v2028 = vmul.f32 %v1160, %v1388
    %v2029 = vmul.f32 %v1175, %v1389
    %v2030 = vmul.f32 %v1190, %v1390
    %v2031 = vmul.f32 %v1205, %v1391
    %v2032 = vmul.f32 %v1220, %v1392
    %v2033 = vmul.f32 %v1235, %v1393
    %v2034 = vmul.f32 %v1250, %v1394
    %v2035 = vmul.f32 %v1265, %v1395
    %v2036 = vmul.f32 %v1280, %v1396
    %v2037 = vmul.f32 %v1295, %v1397
    %v2038 = vmul.f32 %v1310, %v1398
    %v2039 = vmul.f32 %v1325, %v1399
    %v2040 = vmul.f32 %v1340, %v1400
    %v2041 = vmul.f32 %v1355, %v1401
    %v2042 = vmul.f32 %v1370, %v1402
    %v2043 = vtanh.pop %v2011
    %v2044 = vtanh.pop %v2012
    %v2045 = vtanh.pop %v2013
    %v2046 = vtanh.pop %v2014
    %v2047 = vtanh.pop %v2015
    %v2048 = vtanh.pop %v2016
    %v2049 = vtanh.pop %v2017
    %v2050 = vtanh.pop %v2018
    %v2051 = vtanh.pop %v2019
    %v2052 = vtanh.pop %v2020
    %v2053 = vtanh.pop %v2021
    %v2054 = vtanh.pop %v2022
    %v2055 = vtanh.pop %v2023
    %v2056 = vtanh.pop %v2024
    %v2057 = vtanh.pop %v2025
    %v2058 = vtanh.pop %v2026
    %v2059 = vtanh.pop %v2027
    %v2060 = vtanh.pop %v2028
    %v2061 = vtanh.pop %v2029
    %v2062 = vtanh.pop %v2030
    %v2063 = vtanh.pop %v2031
    %v2064 = vtanh.pop %v2032
    %v2065 = vtanh.pop %v2033
    %v2066 = vtanh.pop %v2034
    %v2067 = vtanh.pop %v2035
    %v2068 = vtanh.pop %v2036
    %v2069 = vtanh.pop %v2037
    %v2070 = vtanh.pop %v2038
    %v2071 = vtanh.pop %v2039
    %v2072 = vtanh.pop %v2040
    %v2073 = vtanh.pop %v2041
    %v2074 = vtanh.pop %v2042
    %v2075 = vmul.f32 %v1545, %v2043
    %v2076 = vmul.f32 %v1560, %v2044
    %v2077 = vmul.f32 %v1575, %v2045
    %v2078 = vmul.f32 %v1590, %v2046
    %v2079 = vmul.f32 %v1605, %v2047
    %v2080 = vmul.f32 %v1620, %v2048
    %v2081 = vmul.f32 %v1635, %v2049
    %v2082 = vmul.f32 %v1650, %v2050
    %v2083 = vmul.f32 %v1665, %v2051
    %v2084 = vmul.f32 %v1680, %v2052
    %v2085 = vmul.f32 %v1695, %v2053
    %v2086 = vmul.f32 %v1710, %v2054
    %v2087 = vmul.f32 %v1725, %v2055
    %v2088 = vmul.f32 %v1740, %v2056
    %v2089 = vmul.f32 %v1755, %v2057
    %v2090 = vmul.f32 %v1770, %v2058
    %v2091 = vmul.f32 %v1785, %v2059
    %v2092 = vmul.f32 %v1800, %v2060
    %v2093 = vmul.f32 %v1815, %v2061
    %v2094 = vmul.f32 %v1830, %v2062
    %v2095 = vmul.f32 %v1845, %v2063
    %v2096 = vmul.f32 %v1860, %v2064
    %v2097 = vmul.f32 %v1875, %v2065
    %v2098 = vmul.f32 %v1890, %v2066
    %v2099 = vmul.f32 %v1905, %v2067
    %v2100 = vmul.f32 %v1920, %v2068
    %v2101 = vmul.f32 %v1935, %v2069
    %v2102 = vmul.f32 %v1950, %v2070
    %v2103 = vmul.f32 %v1965, %v2071
    %v2104 = vmul.f32 %v1980, %v2072
    %v2105 = vmul.f32 %v1995, %v2073
    %v2106 = vmul.f32 %v2010, %v2074
    %v2107 = vpack.c.bf16 %v2076, %v2075
    %v2108 = vpack.c.bf16 %v2078, %v2077
    %v2109 = vpack.c.bf16 %v2080, %v2079
    %v2110 = vpack.c.bf16 %v2082, %v2081
    %v2111 = vpack.c.bf16 %v2084, %v2083
    %v2112 = vpack.c.bf16 %v2086, %v2085
    %v2113 = vpack.c.bf16 %v2088, %v2087
    %v2114 = vpack.c.bf16 %v2090, %v2089
    %v2115 = vpack.c.bf16 %v2092, %v2091
    %v2116 = vpack.c.bf16 %v2094, %v2093
    %v2117 = vpack.c.bf16 %v2096, %v2095
    %v2118 = vpack.c.bf16 %v2098, %v2097
    %v2119 = vpack.c.bf16 %v2100, %v2099
    %v2120 = vpack.c.bf16 %v2102, %v2101
    %v2121 = vpack.c.bf16 %v2104, %v2103
    %v2122 = vpack.c.bf16 %v2106, %v2105
    %v2123 = vld [vmem:[#allocation8] sm:$0xff]
    %v2124 = vld [vmem:[#allocation8 + $0x8] sm:$0xff]
    %v2125 = vld [vmem:[#allocation8 + $0x10] sm:$0xff]
    %v2126 = vld [vmem:[#allocation8 + $0x18] sm:$0xff]
    %v2127 = vld [vmem:[#allocation8 + $0x20] sm:$0xf]
    %v2128 = vld [vmem:[#allocation8 + $0x24] sm:$0xff]
    %v2129 = vld [vmem:[#allocation8 + $0x2c] sm:$0xff]
    %v2130 = vld [vmem:[#allocation8 + $0x34] sm:$0xff]
    %v2131 = vld [vmem:[#allocation8 + $0x3c] sm:$0xff]
    %v2132 = vld [vmem:[#allocation8 + $0x44] sm:$0xf]
    %v2133 = vld [vmem:[#allocation8 + $0x48] sm:$0xff]
    %v2134 = vld [vmem:[#allocation8 + $0x50] sm:$0xff]
    %v2135 = vld [vmem:[#allocation8 + $0x58] sm:$0xff]
    %v2136 = vld [vmem:[#allocation8 + $0x60] sm:$0xff]
    %v2137 = vld [vmem:[#allocation8 + $0x68] sm:$0xf]
    %v2138 = vld [vmem:[#allocation8 + $0x6c] sm:$0xff]
    %v2139 = vld [vmem:[#allocation8 + $0x74] sm:$0xff]
    %v2140 = vld [vmem:[#allocation8 + $0x7c] sm:$0xff]
    %v2141 = vld [vmem:[#allocation8 + $0x84] sm:$0xff]
    %v2142 = vld [vmem:[#allocation8 + $0x8c] sm:$0xf]
    %v2143 = vld [vmem:[#allocation8 + $0x90] sm:$0xff]
    %v2144 = vld [vmem:[#allocation8 + $0x98] sm:$0xff]
    %v2145 = vld [vmem:[#allocation8 + $0xa0] sm:$0xff]
    %v2146 = vld [vmem:[#allocation8 + $0xa8] sm:$0xff]
    %v2147 = vld [vmem:[#allocation8 + $0xb0] sm:$0xf]
    %v2148 = vld [vmem:[#allocation8 + $0xb4] sm:$0xff]
    %v2149 = vld [vmem:[#allocation8 + $0xbc] sm:$0xff]
    %v2150 = vld [vmem:[#allocation8 + $0xc4] sm:$0xff]
    %v2151 = vld [vmem:[#allocation8 + $0xcc] sm:$0xff]
    %v2152 = vld [vmem:[#allocation8 + $0xd4] sm:$0xf]
    %v2153 = vld [vmem:[#allocation8 + $0xd8] sm:$0xff]
    %v2154 = vld [vmem:[#allocation8 + $0xe0] sm:$0xff]
    %v2155 = vld [vmem:[#allocation8 + $0xe8] sm:$0xff]
    %v2156 = vld [vmem:[#allocation8 + $0xf0] sm:$0xff]
    %v2157 = vld [vmem:[#allocation8 + $0xf8] sm:$0xf]
    %v2158 = vld [vmem:[#allocation8 + $0xfc] sm:$0xff]
    %v2159 = vld [vmem:[#allocation8 + $0x104] sm:$0xff]
    %v2160 = vld [vmem:[#allocation8 + $0x10c] sm:$0xff]
    %v2161 = vld [vmem:[#allocation8 + $0x114] sm:$0xff]
    %v2162 = vld [vmem:[#allocation8 + $0x11c] sm:$0xf]
    %v2163 = vld [vmem:[#allocation8 + $0x120] sm:$0xff]
    %v2164 = vld [vmem:[#allocation8 + $0x128] sm:$0xff]
    %v2165 = vld [vmem:[#allocation8 + $0x130] sm:$0xff]
    %v2166 = vld [vmem:[#allocation8 + $0x138] sm:$0xff]
    %v2167 = vld [vmem:[#allocation8 + $0x140] sm:$0xf]
    %v2168 = vld [vmem:[#allocation8 + $0x144] sm:$0xff]
    %v2169 = vld [vmem:[#allocation8 + $0x14c] sm:$0xff]
    %v2170 = vld [vmem:[#allocation8 + $0x154] sm:$0xff]
    %v2171 = vld [vmem:[#allocation8 + $0x15c] sm:$0xff]
    %v2172 = vld [vmem:[#allocation8 + $0x164] sm:$0xf]
    %v2173 = vld [vmem:[#allocation8 + $0x168] sm:$0xff]
    %v2174 = vld [vmem:[#allocation8 + $0x170] sm:$0xff]
    %v2175 = vld [vmem:[#allocation8 + $0x178] sm:$0xff]
    %v2176 = vld [vmem:[#allocation8 + $0x180] sm:$0xff]
    %v2177 = vld [vmem:[#allocation8 + $0x188] sm:$0xf]
    %v2178 = vld [vmem:[#allocation8 + $0x18c] sm:$0xff]
    %v2179 = vld [vmem:[#allocation8 + $0x194] sm:$0xff]
    %v2180 = vld [vmem:[#allocation8 + $0x19c] sm:$0xff]
    %v2181 = vld [vmem:[#allocation8 + $0x1a4] sm:$0xff]
    %v2182 = vld [vmem:[#allocation8 + $0x1ac] sm:$0xf]
    %v2183 = vld [vmem:[#allocation8 + $0x1b0] sm:$0xff]
    %v2184 = vld [vmem:[#allocation8 + $0x1b8] sm:$0xff]
    %v2185 = vld [vmem:[#allocation8 + $0x1c0] sm:$0xff]
    %v2186 = vld [vmem:[#allocation8 + $0x1c8] sm:$0xff]
    %v2187 = vld [vmem:[#allocation8 + $0x1d0] sm:$0xf]
    %v2188 = vld [vmem:[#allocation8 + $0x1d4] sm:$0xff]
    %v2189 = vld [vmem:[#allocation8 + $0x1dc] sm:$0xff]
    %v2190 = vld [vmem:[#allocation8 + $0x1e4] sm:$0xff]
    %v2191 = vld [vmem:[#allocation8 + $0x1ec] sm:$0xff]
    %v2192 = vld [vmem:[#allocation8 + $0x1f4] sm:$0xf]
    %v2193 = vld [vmem:[#allocation8 + $0x1f8] sm:$0xff]
    %v2194 = vld [vmem:[#allocation8 + $0x200] sm:$0xff]
    %v2195 = vld [vmem:[#allocation8 + $0x208] sm:$0xff]
    %v2196 = vld [vmem:[#allocation8 + $0x210] sm:$0xff]
    %v2197 = vld [vmem:[#allocation8 + $0x218] sm:$0xf]
    %v2198 = vld [vmem:[#allocation8 + $0x21c] sm:$0xff]
    %v2199 = vld [vmem:[#allocation8 + $0x224] sm:$0xff]
    %v2200 = vld [vmem:[#allocation8 + $0x22c] sm:$0xff]
    %v2201 = vld [vmem:[#allocation8 + $0x234] sm:$0xff]
    %v2202 = vld [vmem:[#allocation8 + $0x23c] sm:$0xf]
    %v2203 = vld [vmem:[#allocation10] sm:$0xff]
    %v2204 = vld [vmem:[#allocation10 + $0x8] sm:$0x1]
    %v2207 = vperm.slane %v2203, 0
    %v2208 = vperm.slane %v2203, 1
    %v2209 = vperm.slane %v2203, 2
    %v2210 = vperm.slane %v2203, 3
    %v2211 = vperm.slane %v2203, 4
    %v2212 = vperm.slane %v2203, 5
    %v2213 = vperm.slane %v2203, 6
    %v2214 = vperm.slane %v2203, 7
    %v2215 = vperm.slane %v2204, 0
    %v2305 = vunpack.c.l.b16 %v2123
    %v2306 = vunpack.c.h.b16 %v2123
    %v2307 = vunpack.c.l.b16 %v2124
    %v2308 = vunpack.c.h.b16 %v2124
    %v2309 = vunpack.c.l.b16 %v2125
    %v2310 = vunpack.c.h.b16 %v2125
    %v2311 = vunpack.c.l.b16 %v2126
    %v2312 = vunpack.c.h.b16 %v2126
    %v2313 = vunpack.c.l.b16 %v2127
    %v2314 = vunpack.c.l.b16 %v2128
    %v2315 = vunpack.c.h.b16 %v2128
    %v2316 = vunpack.c.l.b16 %v2129
    %v2317 = vunpack.c.h.b16 %v2129
    %v2318 = vunpack.c.l.b16 %v2130
    %v2319 = vunpack.c.h.b16 %v2130
    %v2320 = vunpack.c.l.b16 %v2131
    %v2321 = vunpack.c.h.b16 %v2131
    %v2322 = vunpack.c.l.b16 %v2132
    %v2323 = vunpack.c.l.b16 %v2133
    %v2324 = vunpack.c.h.b16 %v2133
    %v2325 = vunpack.c.l.b16 %v2134
    %v2326 = vunpack.c.h.b16 %v2134
    %v2327 = vunpack.c.l.b16 %v2135
    %v2328 = vunpack.c.h.b16 %v2135
    %v2329 = vunpack.c.l.b16 %v2136
    %v2330 = vunpack.c.h.b16 %v2136
    %v2331 = vunpack.c.l.b16 %v2137
    %v2332 = vunpack.c.l.b16 %v2138
    %v2333 = vunpack.c.h.b16 %v2138
    %v2334 = vunpack.c.l.b16 %v2139
    %v2335 = vunpack.c.h.b16 %v2139
    %v2336 = vunpack.c.l.b16 %v2140
    %v2337 = vunpack.c.h.b16 %v2140
    %v2338 = vunpack.c.l.b16 %v2141
    %v2339 = vunpack.c.h.b16 %v2141
    %v2340 = vunpack.c.l.b16 %v2142
    %v2341 = vunpack.c.l.b16 %v2143
    %v2342 = vunpack.c.h.b16 %v2143
    %v2343 = vunpack.c.l.b16 %v2144
    %v2344 = vunpack.c.h.b16 %v2144
    %v2345 = vunpack.c.l.b16 %v2145
    %v2346 = vunpack.c.h.b16 %v2145
    %v2347 = vunpack.c.l.b16 %v2146
    %v2348 = vunpack.c.h.b16 %v2146
    %v2349 = vunpack.c.l.b16 %v2147
    %v2350 = vunpack.c.l.b16 %v2148
    %v2351 = vunpack.c.h.b16 %v2148
    %v2352 = vunpack.c.l.b16 %v2149
    %v2353 = vunpack.c.h.b16 %v2149
    %v2354 = vunpack.c.l.b16 %v2150
    %v2355 = vunpack.c.h.b16 %v2150
    %v2356 = vunpack.c.l.b16 %v2151
    %v2357 = vunpack.c.h.b16 %v2151
    %v2358 = vunpack.c.l.b16 %v2152
    %v2359 = vunpack.c.l.b16 %v2153
    %v2360 = vunpack.c.h.b16 %v2153
    %v2361 = vunpack.c.l.b16 %v2154
    %v2362 = vunpack.c.h.b16 %v2154
    %v2363 = vunpack.c.l.b16 %v2155
    %v2364 = vunpack.c.h.b16 %v2155
    %v2365 = vunpack.c.l.b16 %v2156
    %v2366 = vunpack.c.h.b16 %v2156
    %v2367 = vunpack.c.l.b16 %v2157
    %v2368 = vunpack.c.l.b16 %v2158
    %v2369 = vunpack.c.h.b16 %v2158
    %v2370 = vunpack.c.l.b16 %v2159
    %v2371 = vunpack.c.h.b16 %v2159
    %v2372 = vunpack.c.l.b16 %v2160
    %v2373 = vunpack.c.h.b16 %v2160
    %v2374 = vunpack.c.l.b16 %v2161
    %v2375 = vunpack.c.h.b16 %v2161
    %v2376 = vunpack.c.l.b16 %v2162
    %v2377 = vunpack.c.l.b16 %v2163
    %v2378 = vunpack.c.h.b16 %v2163
    %v2379 = vunpack.c.l.b16 %v2164
    %v2380 = vunpack.c.h.b16 %v2164
    %v2381 = vunpack.c.l.b16 %v2165
    %v2382 = vunpack.c.h.b16 %v2165
    %v2383 = vunpack.c.l.b16 %v2166
    %v2384 = vunpack.c.h.b16 %v2166
    %v2385 = vunpack.c.l.b16 %v2167
    %v2386 = vunpack.c.l.b16 %v2168
    %v2387 = vunpack.c.h.b16 %v2168
    %v2388 = vunpack.c.l.b16 %v2169
    %v2389 = vunpack.c.h.b16 %v2169
    %v2390 = vunpack.c.l.b16 %v2170
    %v2391 = vunpack.c.h.b16 %v2170
    %v2392 = vunpack.c.l.b16 %v2171
    %v2393 = vunpack.c.h.b16 %v2171
    %v2394 = vunpack.c.l.b16 %v2172
    %v2395 = vunpack.c.l.b16 %v2173
    %v2396 = vunpack.c.h.b16 %v2173
    %v2397 = vunpack.c.l.b16 %v2174
    %v2398 = vunpack.c.h.b16 %v2174
    %v2399 = vunpack.c.l.b16 %v2175
    %v2400 = vunpack.c.h.b16 %v2175
    %v2401 = vunpack.c.l.b16 %v2176
    %v2402 = vunpack.c.h.b16 %v2176
    %v2403 = vunpack.c.l.b16 %v2177
    %v2404 = vunpack.c.l.b16 %v2178
    %v2405 = vunpack.c.h.b16 %v2178
    %v2406 = vunpack.c.l.b16 %v2179
    %v2407 = vunpack.c.h.b16 %v2179
    %v2408 = vunpack.c.l.b16 %v2180
    %v2409 = vunpack.c.h.b16 %v2180
    %v2410 = vunpack.c.l.b16 %v2181
    %v2411 = vunpack.c.h.b16 %v2181
    %v2412 = vunpack.c.l.b16 %v2182
    %v2413 = vunpack.c.l.b16 %v2183
    %v2414 = vunpack.c.h.b16 %v2183
    %v2415 = vunpack.c.l.b16 %v2184
    %v2416 = vunpack.c.h.b16 %v2184
    %v2417 = vunpack.c.l.b16 %v2185
    %v2418 = vunpack.c.h.b16 %v2185
    %v2419 = vunpack.c.l.b16 %v2186
    %v2420 = vunpack.c.h.b16 %v2186
    %v2421 = vunpack.c.l.b16 %v2187
    %v2422 = vunpack.c.l.b16 %v2188
    %v2423 = vunpack.c.h.b16 %v2188
    %v2424 = vunpack.c.l.b16 %v2189
    %v2425 = vunpack.c.h.b16 %v2189
    %v2426 = vunpack.c.l.b16 %v2190
    %v2427 = vunpack.c.h.b16 %v2190
    %v2428 = vunpack.c.l.b16 %v2191
    %v2429 = vunpack.c.h.b16 %v2191
    %v2430 = vunpack.c.l.b16 %v2192
    %v2431 = vunpack.c.l.b16 %v2193
    %v2432 = vunpack.c.h.b16 %v2193
    %v2433 = vunpack.c.l.b16 %v2194
    %v2434 = vunpack.c.h.b16 %v2194
    %v2435 = vunpack.c.l.b16 %v2195
    %v2436 = vunpack.c.h.b16 %v2195
    %v2437 = vunpack.c.l.b16 %v2196
    %v2438 = vunpack.c.h.b16 %v2196
    %v2439 = vunpack.c.l.b16 %v2197
    %v2440 = vunpack.c.l.b16 %v2198
    %v2441 = vunpack.c.h.b16 %v2198
    %v2442 = vunpack.c.l.b16 %v2199
    %v2443 = vunpack.c.h.b16 %v2199
    %v2444 = vunpack.c.l.b16 %v2200
    %v2445 = vunpack.c.h.b16 %v2200
    %v2446 = vunpack.c.l.b16 %v2201
    %v2447 = vunpack.c.h.b16 %v2201
    %v2448 = vunpack.c.l.b16 %v2202
    %v2449 = vpack.c.b16 %v2314, %v2305
    %v2450 = vpack.c.b16 %v2315, %v2306
    %v2451 = vpack.c.b16 %v2316, %v2307
    %v2452 = vpack.c.b16 %v2317, %v2308
    %v2453 = vpack.c.b16 %v2318, %v2309
    %v2454 = vpack.c.b16 %v2319, %v2310
    %v2455 = vpack.c.b16 %v2320, %v2311
    %v2456 = vpack.c.b16 %v2321, %v2312
    %v2457 = vpack.c.b16 %v2322, %v2313
    %v2458 = vpack.c.b16 %v2332, %v2323
    %v2459 = vpack.c.b16 %v2333, %v2324
    %v2460 = vpack.c.b16 %v2334, %v2325
    %v2461 = vpack.c.b16 %v2335, %v2326
    %v2462 = vpack.c.b16 %v2336, %v2327
    %v2463 = vpack.c.b16 %v2337, %v2328
    %v2464 = vpack.c.b16 %v2338, %v2329
    %v2465 = vpack.c.b16 %v2339, %v2330
    %v2466 = vpack.c.b16 %v2340, %v2331
    %v2467 = vpack.c.b16 %v2350, %v2341
    %v2468 = vpack.c.b16 %v2351, %v2342
    %v2469 = vpack.c.b16 %v2352, %v2343
    %v2470 = vpack.c.b16 %v2353, %v2344
    %v2471 = vpack.c.b16 %v2354, %v2345
    %v2472 = vpack.c.b16 %v2355, %v2346
    %v2473 = vpack.c.b16 %v2356, %v2347
    %v2474 = vpack.c.b16 %v2357, %v2348
    %v2475 = vpack.c.b16 %v2358, %v2349
    %v2476 = vpack.c.b16 %v2368, %v2359
    %v2477 = vpack.c.b16 %v2369, %v2360
    %v2478 = vpack.c.b16 %v2370, %v2361
    %v2479 = vpack.c.b16 %v2371, %v2362
    %v2480 = vpack.c.b16 %v2372, %v2363
    %v2481 = vpack.c.b16 %v2373, %v2364
    %v2482 = vpack.c.b16 %v2374, %v2365
    %v2483 = vpack.c.b16 %v2375, %v2366
    %v2484 = vpack.c.b16 %v2376, %v2367
    %v2485 = vpack.c.b16 %v2386, %v2377
    %v2486 = vpack.c.b16 %v2387, %v2378
    %v2487 = vpack.c.b16 %v2388, %v2379
    %v2488 = vpack.c.b16 %v2389, %v2380
    %v2489 = vpack.c.b16 %v2390, %v2381
    %v2490 = vpack.c.b16 %v2391, %v2382
    %v2491 = vpack.c.b16 %v2392, %v2383
    %v2492 = vpack.c.b16 %v2393, %v2384
    %v2493 = vpack.c.b16 %v2394, %v2385
    %v2494 = vpack.c.b16 %v2404, %v2395
    %v2495 = vpack.c.b16 %v2405, %v2396
    %v2496 = vpack.c.b16 %v2406, %v2397
    %v2497 = vpack.c.b16 %v2407, %v2398
    %v2498 = vpack.c.b16 %v2408, %v2399
    %v2499 = vpack.c.b16 %v2409, %v2400
    %v2500 = vpack.c.b16 %v2410, %v2401
    %v2501 = vpack.c.b16 %v2411, %v2402
    %v2502 = vpack.c.b16 %v2412, %v2403
    %v2503 = vpack.c.b16 %v2422, %v2413
    %v2504 = vpack.c.b16 %v2423, %v2414
    %v2505 = vpack.c.b16 %v2424, %v2415
    %v2506 = vpack.c.b16 %v2425, %v2416
    %v2507 = vpack.c.b16 %v2426, %v2417
    %v2508 = vpack.c.b16 %v2427, %v2418
    %v2509 = vpack.c.b16 %v2428, %v2419
    %v2510 = vpack.c.b16 %v2429, %v2420
    %v2511 = vpack.c.b16 %v2430, %v2421
    %v2512 = vpack.c.b16 %v2440, %v2431
    %v2513 = vpack.c.b16 %v2441, %v2432
    %v2514 = vpack.c.b16 %v2442, %v2433
    %v2515 = vpack.c.b16 %v2443, %v2434
    %v2516 = vpack.c.b16 %v2444, %v2435
    %v2517 = vpack.c.b16 %v2445, %v2436
    %v2518 = vpack.c.b16 %v2446, %v2437
    %v2519 = vpack.c.b16 %v2447, %v2438
    %v2520 = vpack.c.b16 %v2448, %v2439
    %2593 = vmatpush.bf16.msra.mxu0 %v2512
    %2594 = vmatpush.bf16.msra.mxu0 %v2503
    %2595 = vmatpush.bf16.msra.mxu0 %v2494
    %2596 = vmatpush.bf16.msra.mxu0 %v2485
    %2597 = vmatpush.bf16.msra.mxu0 %v2476
    %2598 = vmatpush.bf16.msra.mxu0 %v2467
    %2599 = vmatpush.bf16.msra.mxu0 %v2458
    %2600 = vmatpush.bf16.msra.mxu0 %v2449
    %2601 = vmatmul.bf16.gmra.mxu0 %v2107
    %v2602 = vpop.f32.mrf.mxu0
    %v2603 = vadd.f32 %v2207, %v2602
    %v2604 = vpop.f32.mrf.mxu0
    %v2605 = vadd.f32 %v2207, %v2604
    %2606 = vmatmul.bf16.gmra.mxu0 %v2108
    %v2607 = vpop.f32.mrf.mxu0
    %v2608 = vadd.f32 %v2207, %v2607
    %v2609 = vpop.f32.mrf.mxu0
    %v2610 = vadd.f32 %v2207, %v2609
    %2611 = vmatmul.bf16.gmra.mxu0 %v2109
    %v2612 = vpop.f32.mrf.mxu0
    %v2613 = vadd.f32 %v2207, %v2612
    %v2614 = vpop.f32.mrf.mxu0
    %v2615 = vadd.f32 %v2207, %v2614
    %2616 = vmatmul.bf16.gmra.mxu0 %v2110
    %v2617 = vpop.f32.mrf.mxu0
    %v2618 = vadd.f32 %v2207, %v2617
    %v2619 = vpop.f32.mrf.mxu0
    %v2620 = vadd.f32 %v2207, %v2619
    %2621 = vmatmul.bf16.gmra.mxu0 %v2111
    %v2622 = vpop.f32.mrf.mxu0
    %v2623 = vadd.f32 %v2207, %v2622
    %v2624 = vpop.f32.mrf.mxu0
    %v2625 = vadd.f32 %v2207, %v2624
    %2626 = vmatmul.bf16.gmra.mxu0 %v2112
    %v2627 = vpop.f32.mrf.mxu0
    %v2628 = vadd.f32 %v2207, %v2627
    %v2629 = vpop.f32.mrf.mxu0
    %v2630 = vadd.f32 %v2207, %v2629
    %2631 = vmatmul.bf16.gmra.mxu0 %v2113
    %v2632 = vpop.f32.mrf.mxu0
    %v2633 = vadd.f32 %v2207, %v2632
    %v2634 = vpop.f32.mrf.mxu0
    %v2635 = vadd.f32 %v2207, %v2634
    %2636 = vmatmul.bf16.gmra.mxu0 %v2114
    %v2637 = vpop.f32.mrf.mxu0
    %v2638 = vadd.f32 %v2207, %v2637
    %v2639 = vpop.f32.mrf.mxu0
    %v2640 = vadd.f32 %v2207, %v2639
    %2641 = vmatmul.bf16.gmra.mxu0 %v2115
    %v2642 = vpop.f32.mrf.mxu0
    %v2643 = vadd.f32 %v2207, %v2642
    %v2644 = vpop.f32.mrf.mxu0
    %v2645 = vadd.f32 %v2207, %v2644
    %2646 = vmatmul.bf16.gmra.mxu0 %v2116
    %v2647 = vpop.f32.mrf.mxu0
    %v2648 = vadd.f32 %v2207, %v2647
    %v2649 = vpop.f32.mrf.mxu0
    %v2650 = vadd.f32 %v2207, %v2649
    %2651 = vmatmul.bf16.gmra.mxu0 %v2117
    %v2652 = vpop.f32.mrf.mxu0
    %v2653 = vadd.f32 %v2207, %v2652
    %v2654 = vpop.f32.mrf.mxu0
    %v2655 = vadd.f32 %v2207, %v2654
    %2656 = vmatmul.bf16.gmra.mxu0 %v2118
    %v2657 = vpop.f32.mrf.mxu0
    %v2658 = vadd.f32 %v2207, %v2657
    %v2659 = vpop.f32.mrf.mxu0
    %v2660 = vadd.f32 %v2207, %v2659
    %2661 = vmatmul.bf16.gmra.mxu0 %v2119
    %v2662 = vpop.f32.mrf.mxu0
    %v2663 = vadd.f32 %v2207, %v2662
    %v2664 = vpop.f32.mrf.mxu0
    %v2665 = vadd.f32 %v2207, %v2664
    %2666 = vmatmul.bf16.gmra.mxu0 %v2120
    %v2667 = vpop.f32.mrf.mxu0
    %v2668 = vadd.f32 %v2207, %v2667
    %v2669 = vpop.f32.mrf.mxu0
    %v2670 = vadd.f32 %v2207, %v2669
    %2671 = vmatmul.bf16.gmra.mxu0 %v2121
    %v2672 = vpop.f32.mrf.mxu0
    %v2673 = vadd.f32 %v2207, %v2672
    %v2674 = vpop.f32.mrf.mxu0
    %v2675 = vadd.f32 %v2207, %v2674
    %2676 = vmatmul.bf16.gmra.mxu0 %v2122
    %v2677 = vpop.f32.mrf.mxu0
    %v2678 = vadd.f32 %v2207, %v2677
    %v2679 = vpop.f32.mrf.mxu0
    %v2680 = vadd.f32 %v2207, %v2679
    %2681 = vdwg.mxu0
    %2682 = vmatpush.bf16.msra.mxu0 %v2513
    %2683 = vmatpush.bf16.msra.mxu0 %v2504
    %2684 = vmatpush.bf16.msra.mxu0 %v2495
    %2685 = vmatpush.bf16.msra.mxu0 %v2486
    %2686 = vmatpush.bf16.msra.mxu0 %v2477
    %2687 = vmatpush.bf16.msra.mxu0 %v2468
    %2688 = vmatpush.bf16.msra.mxu0 %v2459
    %2689 = vmatpush.bf16.msra.mxu0 %v2450
    %2690 = vmatmul.bf16.gmra.mxu0 %v2107
    %v2691 = vpop.f32.mrf.mxu0
    %v2692 = vadd.f32 %v2208, %v2691
    %v2693 = vpop.f32.mrf.mxu0
    %v2694 = vadd.f32 %v2208, %v2693
    %2695 = vmatmul.bf16.gmra.mxu0 %v2108
    %v2696 = vpop.f32.mrf.mxu0
    %v2697 = vadd.f32 %v2208, %v2696
    %v2698 = vpop.f32.mrf.mxu0
    %v2699 = vadd.f32 %v2208, %v2698
    %2700 = vmatmul.bf16.gmra.mxu0 %v2109
    %v2701 = vpop.f32.mrf.mxu0
    %v2702 = vadd.f32 %v2208, %v2701
    %v2703 = vpop.f32.mrf.mxu0
    %v2704 = vadd.f32 %v2208, %v2703
    %2705 = vmatmul.bf16.gmra.mxu0 %v2110
    %v2706 = vpop.f32.mrf.mxu0
    %v2707 = vadd.f32 %v2208, %v2706
    %v2708 = vpop.f32.mrf.mxu0
    %v2709 = vadd.f32 %v2208, %v2708
    %2710 = vmatmul.bf16.gmra.mxu0 %v2111
    %v2711 = vpop.f32.mrf.mxu0
    %v2712 = vadd.f32 %v2208, %v2711
    %v2713 = vpop.f32.mrf.mxu0
    %v2714 = vadd.f32 %v2208, %v2713
    %2715 = vmatmul.bf16.gmra.mxu0 %v2112
    %v2716 = vpop.f32.mrf.mxu0
    %v2717 = vadd.f32 %v2208, %v2716
    %v2718 = vpop.f32.mrf.mxu0
    %v2719 = vadd.f32 %v2208, %v2718
    %2720 = vmatmul.bf16.gmra.mxu0 %v2113
    %v2721 = vpop.f32.mrf.mxu0
    %v2722 = vadd.f32 %v2208, %v2721
    %v2723 = vpop.f32.mrf.mxu0
    %v2724 = vadd.f32 %v2208, %v2723
    %2725 = vmatmul.bf16.gmra.mxu0 %v2114
    %v2726 = vpop.f32.mrf.mxu0
    %v2727 = vadd.f32 %v2208, %v2726
    %v2728 = vpop.f32.mrf.mxu0
    %v2729 = vadd.f32 %v2208, %v2728
    %2730 = vmatmul.bf16.gmra.mxu0 %v2115
    %v2731 = vpop.f32.mrf.mxu0
    %v2732 = vadd.f32 %v2208, %v2731
    %v2733 = vpop.f32.mrf.mxu0
    %v2734 = vadd.f32 %v2208, %v2733
    %2735 = vmatmul.bf16.gmra.mxu0 %v2116
    %v2736 = vpop.f32.mrf.mxu0
    %v2737 = vadd.f32 %v2208, %v2736
    %v2738 = vpop.f32.mrf.mxu0
    %v2739 = vadd.f32 %v2208, %v2738
    %2740 = vmatmul.bf16.gmra.mxu0 %v2117
    %v2741 = vpop.f32.mrf.mxu0
    %v2742 = vadd.f32 %v2208, %v2741
    %v2743 = vpop.f32.mrf.mxu0
    %v2744 = vadd.f32 %v2208, %v2743
    %2745 = vmatmul.bf16.gmra.mxu0 %v2118
    %v2746 = vpop.f32.mrf.mxu0
    %v2747 = vadd.f32 %v2208, %v2746
    %v2748 = vpop.f32.mrf.mxu0
    %v2749 = vadd.f32 %v2208, %v2748
    %2750 = vmatmul.bf16.gmra.mxu0 %v2119
    %v2751 = vpop.f32.mrf.mxu0
    %v2752 = vadd.f32 %v2208, %v2751
    %v2753 = vpop.f32.mrf.mxu0
    %v2754 = vadd.f32 %v2208, %v2753
    %2755 = vmatmul.bf16.gmra.mxu0 %v2120
    %v2756 = vpop.f32.mrf.mxu0
    %v2757 = vadd.f32 %v2208, %v2756
    %v2758 = vpop.f32.mrf.mxu0
    %v2759 = vadd.f32 %v2208, %v2758
    %2760 = vmatmul.bf16.gmra.mxu0 %v2121
    %v2761 = vpop.f32.mrf.mxu0
    %v2762 = vadd.f32 %v2208, %v2761
    %v2763 = vpop.f32.mrf.mxu0
    %v2764 = vadd.f32 %v2208, %v2763
    %2765 = vmatmul.bf16.gmra.mxu0 %v2122
    %v2766 = vpop.f32.mrf.mxu0
    %v2767 = vadd.f32 %v2208, %v2766
    %v2768 = vpop.f32.mrf.mxu0
    %v2769 = vadd.f32 %v2208, %v2768
    %2770 = vdwg.mxu0
    %2771 = vmatpush.bf16.msra.mxu0 %v2514
    %2772 = vmatpush.bf16.msra.mxu0 %v2505
    %2773 = vmatpush.bf16.msra.mxu0 %v2496
    %2774 = vmatpush.bf16.msra.mxu0 %v2487
    %2775 = vmatpush.bf16.msra.mxu0 %v2478
    %2776 = vmatpush.bf16.msra.mxu0 %v2469
    %2777 = vmatpush.bf16.msra.mxu0 %v2460
    %2778 = vmatpush.bf16.msra.mxu0 %v2451
    %2779 = vmatmul.bf16.gmra.mxu0 %v2107
    %v2780 = vpop.f32.mrf.mxu0
    %v2781 = vadd.f32 %v2209, %v2780
    %v2782 = vpop.f32.mrf.mxu0
    %v2783 = vadd.f32 %v2209, %v2782
    %2784 = vmatmul.bf16.gmra.mxu0 %v2108
    %v2785 = vpop.f32.mrf.mxu0
    %v2786 = vadd.f32 %v2209, %v2785
    %v2787 = vpop.f32.mrf.mxu0
    %v2788 = vadd.f32 %v2209, %v2787
    %2789 = vmatmul.bf16.gmra.mxu0 %v2109
    %v2790 = vpop.f32.mrf.mxu0
    %v2791 = vadd.f32 %v2209, %v2790
    %v2792 = vpop.f32.mrf.mxu0
    %v2793 = vadd.f32 %v2209, %v2792
    %2794 = vmatmul.bf16.gmra.mxu0 %v2110
    %v2795 = vpop.f32.mrf.mxu0
    %v2796 = vadd.f32 %v2209, %v2795
    %v2797 = vpop.f32.mrf.mxu0
    %v2798 = vadd.f32 %v2209, %v2797
    %2799 = vmatmul.bf16.gmra.mxu0 %v2111
    %v2800 = vpop.f32.mrf.mxu0
    %v2801 = vadd.f32 %v2209, %v2800
    %v2802 = vpop.f32.mrf.mxu0
    %v2803 = vadd.f32 %v2209, %v2802
    %2804 = vmatmul.bf16.gmra.mxu0 %v2112
    %v2805 = vpop.f32.mrf.mxu0
    %v2806 = vadd.f32 %v2209, %v2805
    %v2807 = vpop.f32.mrf.mxu0
    %v2808 = vadd.f32 %v2209, %v2807
    %2809 = vmatmul.bf16.gmra.mxu0 %v2113
    %v2810 = vpop.f32.mrf.mxu0
    %v2811 = vadd.f32 %v2209, %v2810
    %v2812 = vpop.f32.mrf.mxu0
    %v2813 = vadd.f32 %v2209, %v2812
    %2814 = vmatmul.bf16.gmra.mxu0 %v2114
    %v2815 = vpop.f32.mrf.mxu0
    %v2816 = vadd.f32 %v2209, %v2815
    %v2817 = vpop.f32.mrf.mxu0
    %v2818 = vadd.f32 %v2209, %v2817
    %2819 = vmatmul.bf16.gmra.mxu0 %v2115
    %v2820 = vpop.f32.mrf.mxu0
    %v2821 = vadd.f32 %v2209, %v2820
    %v2822 = vpop.f32.mrf.mxu0
    %v2823 = vadd.f32 %v2209, %v2822
    %2824 = vmatmul.bf16.gmra.mxu0 %v2116
    %v2825 = vpop.f32.mrf.mxu0
    %v2826 = vadd.f32 %v2209, %v2825
    %v2827 = vpop.f32.mrf.mxu0
    %v2828 = vadd.f32 %v2209, %v2827
    %2829 = vmatmul.bf16.gmra.mxu0 %v2117
    %v2830 = vpop.f32.mrf.mxu0
    %v2831 = vadd.f32 %v2209, %v2830
    %v2832 = vpop.f32.mrf.mxu0
    %v2833 = vadd.f32 %v2209, %v2832
    %2834 = vmatmul.bf16.gmra.mxu0 %v2118
    %v2835 = vpop.f32.mrf.mxu0
    %v2836 = vadd.f32 %v2209, %v2835
    %v2837 = vpop.f32.mrf.mxu0
    %v2838 = vadd.f32 %v2209, %v2837
    %2839 = vmatmul.bf16.gmra.mxu0 %v2119
    %v2840 = vpop.f32.mrf.mxu0
    %v2841 = vadd.f32 %v2209, %v2840
    %v2842 = vpop.f32.mrf.mxu0
    %v2843 = vadd.f32 %v2209, %v2842
    %2844 = vmatmul.bf16.gmra.mxu0 %v2120
    %v2845 = vpop.f32.mrf.mxu0
    %v2846 = vadd.f32 %v2209, %v2845
    %v2847 = vpop.f32.mrf.mxu0
    %v2848 = vadd.f32 %v2209, %v2847
    %2849 = vmatmul.bf16.gmra.mxu0 %v2121
    %v2850 = vpop.f32.mrf.mxu0
    %v2851 = vadd.f32 %v2209, %v2850
    %v2852 = vpop.f32.mrf.mxu0
    %v2853 = vadd.f32 %v2209, %v2852
    %2854 = vmatmul.bf16.gmra.mxu0 %v2122
    %v2855 = vpop.f32.mrf.mxu0
    %v2856 = vadd.f32 %v2209, %v2855
    %v2857 = vpop.f32.mrf.mxu0
    %v2858 = vadd.f32 %v2209, %v2857
    %2859 = vdwg.mxu0
    %2860 = vmatpush.bf16.msra.mxu0 %v2515
    %2861 = vmatpush.bf16.msra.mxu0 %v2506
    %2862 = vmatpush.bf16.msra.mxu0 %v2497
    %2863 = vmatpush.bf16.msra.mxu0 %v2488
    %2864 = vmatpush.bf16.msra.mxu0 %v2479
    %2865 = vmatpush.bf16.msra.mxu0 %v2470
    %2866 = vmatpush.bf16.msra.mxu0 %v2461
    %2867 = vmatpush.bf16.msra.mxu0 %v2452
    %2868 = vmatmul.bf16.gmra.mxu0 %v2107
    %v2869 = vpop.f32.mrf.mxu0
    %v2870 = vadd.f32 %v2210, %v2869
    %v2871 = vpop.f32.mrf.mxu0
    %v2872 = vadd.f32 %v2210, %v2871
    %2873 = vmatmul.bf16.gmra.mxu0 %v2108
    %v2874 = vpop.f32.mrf.mxu0
    %v2875 = vadd.f32 %v2210, %v2874
    %v2876 = vpop.f32.mrf.mxu0
    %v2877 = vadd.f32 %v2210, %v2876
    %2878 = vmatmul.bf16.gmra.mxu0 %v2109
    %v2879 = vpop.f32.mrf.mxu0
    %v2880 = vadd.f32 %v2210, %v2879
    %v2881 = vpop.f32.mrf.mxu0
    %v2882 = vadd.f32 %v2210, %v2881
    %2883 = vmatmul.bf16.gmra.mxu0 %v2110
    %v2884 = vpop.f32.mrf.mxu0
    %v2885 = vadd.f32 %v2210, %v2884
    %v2886 = vpop.f32.mrf.mxu0
    %v2887 = vadd.f32 %v2210, %v2886
    %2888 = vmatmul.bf16.gmra.mxu0 %v2111
    %v2889 = vpop.f32.mrf.mxu0
    %v2890 = vadd.f32 %v2210, %v2889
    %v2891 = vpop.f32.mrf.mxu0
    %v2892 = vadd.f32 %v2210, %v2891
    %2893 = vmatmul.bf16.gmra.mxu0 %v2112
    %v2894 = vpop.f32.mrf.mxu0
    %v2895 = vadd.f32 %v2210, %v2894
    %v2896 = vpop.f32.mrf.mxu0
    %v2897 = vadd.f32 %v2210, %v2896
    %2898 = vmatmul.bf16.gmra.mxu0 %v2113
    %v2899 = vpop.f32.mrf.mxu0
    %v2900 = vadd.f32 %v2210, %v2899
    %v2901 = vpop.f32.mrf.mxu0
    %v2902 = vadd.f32 %v2210, %v2901
    %2903 = vmatmul.bf16.gmra.mxu0 %v2114
    %v2904 = vpop.f32.mrf.mxu0
    %v2905 = vadd.f32 %v2210, %v2904
    %v2906 = vpop.f32.mrf.mxu0
    %v2907 = vadd.f32 %v2210, %v2906
    %2908 = vmatmul.bf16.gmra.mxu0 %v2115
    %v2909 = vpop.f32.mrf.mxu0
    %v2910 = vadd.f32 %v2210, %v2909
    %v2911 = vpop.f32.mrf.mxu0
    %v2912 = vadd.f32 %v2210, %v2911
    %2913 = vmatmul.bf16.gmra.mxu0 %v2116
    %v2914 = vpop.f32.mrf.mxu0
    %v2915 = vadd.f32 %v2210, %v2914
    %v2916 = vpop.f32.mrf.mxu0
    %v2917 = vadd.f32 %v2210, %v2916
    %2918 = vmatmul.bf16.gmra.mxu0 %v2117
    %v2919 = vpop.f32.mrf.mxu0
    %v2920 = vadd.f32 %v2210, %v2919
    %v2921 = vpop.f32.mrf.mxu0
    %v2922 = vadd.f32 %v2210, %v2921
    %2923 = vmatmul.bf16.gmra.mxu0 %v2118
    %v2924 = vpop.f32.mrf.mxu0
    %v2925 = vadd.f32 %v2210, %v2924
    %v2926 = vpop.f32.mrf.mxu0
    %v2927 = vadd.f32 %v2210, %v2926
    %2928 = vmatmul.bf16.gmra.mxu0 %v2119
    %v2929 = vpop.f32.mrf.mxu0
    %v2930 = vadd.f32 %v2210, %v2929
    %v2931 = vpop.f32.mrf.mxu0
    %v2932 = vadd.f32 %v2210, %v2931
    %2933 = vmatmul.bf16.gmra.mxu0 %v2120
    %v2934 = vpop.f32.mrf.mxu0
    %v2935 = vadd.f32 %v2210, %v2934
    %v2936 = vpop.f32.mrf.mxu0
    %v2937 = vadd.f32 %v2210, %v2936
    %2938 = vmatmul.bf16.gmra.mxu0 %v2121
    %v2939 = vpop.f32.mrf.mxu0
    %v2940 = vadd.f32 %v2210, %v2939
    %v2941 = vpop.f32.mrf.mxu0
    %v2942 = vadd.f32 %v2210, %v2941
    %2943 = vmatmul.bf16.gmra.mxu0 %v2122
    %v2944 = vpop.f32.mrf.mxu0
    %v2945 = vadd.f32 %v2210, %v2944
    %v2946 = vpop.f32.mrf.mxu0
    %v2947 = vadd.f32 %v2210, %v2946
    %2948 = vdwg.mxu0
    %2949 = vmatpush.bf16.msra.mxu0 %v2516
    %2950 = vmatpush.bf16.msra.mxu0 %v2507
    %2951 = vmatpush.bf16.msra.mxu0 %v2498
    %2952 = vmatpush.bf16.msra.mxu0 %v2489
    %2953 = vmatpush.bf16.msra.mxu0 %v2480
    %2954 = vmatpush.bf16.msra.mxu0 %v2471
    %2955 = vmatpush.bf16.msra.mxu0 %v2462
    %2956 = vmatpush.bf16.msra.mxu0 %v2453
    %2957 = vmatmul.bf16.gmra.mxu0 %v2107
    %v2958 = vpop.f32.mrf.mxu0
    %v2959 = vadd.f32 %v2211, %v2958
    %v2960 = vpop.f32.mrf.mxu0
    %v2961 = vadd.f32 %v2211, %v2960
    %2962 = vmatmul.bf16.gmra.mxu0 %v2108
    %v2963 = vpop.f32.mrf.mxu0
    %v2964 = vadd.f32 %v2211, %v2963
    %v2965 = vpop.f32.mrf.mxu0
    %v2966 = vadd.f32 %v2211, %v2965
    %2967 = vmatmul.bf16.gmra.mxu0 %v2109
    %v2968 = vpop.f32.mrf.mxu0
    %v2969 = vadd.f32 %v2211, %v2968
    %v2970 = vpop.f32.mrf.mxu0
    %v2971 = vadd.f32 %v2211, %v2970
    %2972 = vmatmul.bf16.gmra.mxu0 %v2110
    %v2973 = vpop.f32.mrf.mxu0
    %v2974 = vadd.f32 %v2211, %v2973
    %v2975 = vpop.f32.mrf.mxu0
    %v2976 = vadd.f32 %v2211, %v2975
    %2977 = vmatmul.bf16.gmra.mxu0 %v2111
    %v2978 = vpop.f32.mrf.mxu0
    %v2979 = vadd.f32 %v2211, %v2978
    %v2980 = vpop.f32.mrf.mxu0
    %v2981 = vadd.f32 %v2211, %v2980
    %2982 = vmatmul.bf16.gmra.mxu0 %v2112
    %v2983 = vpop.f32.mrf.mxu0
    %v2984 = vadd.f32 %v2211, %v2983
    %v2985 = vpop.f32.mrf.mxu0
    %v2986 = vadd.f32 %v2211, %v2985
    %2987 = vmatmul.bf16.gmra.mxu0 %v2113
    %v2988 = vpop.f32.mrf.mxu0
    %v2989 = vadd.f32 %v2211, %v2988
    %v2990 = vpop.f32.mrf.mxu0
    %v2991 = vadd.f32 %v2211, %v2990
    %2992 = vmatmul.bf16.gmra.mxu0 %v2114
    %v2993 = vpop.f32.mrf.mxu0
    %v2994 = vadd.f32 %v2211, %v2993
    %v2995 = vpop.f32.mrf.mxu0
    %v2996 = vadd.f32 %v2211, %v2995
    %2997 = vmatmul.bf16.gmra.mxu0 %v2115
    %v2998 = vpop.f32.mrf.mxu0
    %v2999 = vadd.f32 %v2211, %v2998
    %v3000 = vpop.f32.mrf.mxu0
    %v3001 = vadd.f32 %v2211, %v3000
    %3002 = vmatmul.bf16.gmra.mxu0 %v2116
    %v3003 = vpop.f32.mrf.mxu0
    %v3004 = vadd.f32 %v2211, %v3003
    %v3005 = vpop.f32.mrf.mxu0
    %v3006 = vadd.f32 %v2211, %v3005
    %3007 = vmatmul.bf16.gmra.mxu0 %v2117
    %v3008 = vpop.f32.mrf.mxu0
    %v3009 = vadd.f32 %v2211, %v3008
    %v3010 = vpop.f32.mrf.mxu0
    %v3011 = vadd.f32 %v2211, %v3010
    %3012 = vmatmul.bf16.gmra.mxu0 %v2118
    %v3013 = vpop.f32.mrf.mxu0
    %v3014 = vadd.f32 %v2211, %v3013
    %v3015 = vpop.f32.mrf.mxu0
    %v3016 = vadd.f32 %v2211, %v3015
    %3017 = vmatmul.bf16.gmra.mxu0 %v2119
    %v3018 = vpop.f32.mrf.mxu0
    %v3019 = vadd.f32 %v2211, %v3018
    %v3020 = vpop.f32.mrf.mxu0
    %v3021 = vadd.f32 %v2211, %v3020
    %3022 = vmatmul.bf16.gmra.mxu0 %v2120
    %v3023 = vpop.f32.mrf.mxu0
    %v3024 = vadd.f32 %v2211, %v3023
    %v3025 = vpop.f32.mrf.mxu0
    %v3026 = vadd.f32 %v2211, %v3025
    %3027 = vmatmul.bf16.gmra.mxu0 %v2121
    %v3028 = vpop.f32.mrf.mxu0
    %v3029 = vadd.f32 %v2211, %v3028
    %v3030 = vpop.f32.mrf.mxu0
    %v3031 = vadd.f32 %v2211, %v3030
    %3032 = vmatmul.bf16.gmra.mxu0 %v2122
    %v3033 = vpop.f32.mrf.mxu0
    %v3034 = vadd.f32 %v2211, %v3033
    %v3035 = vpop.f32.mrf.mxu0
    %v3036 = vadd.f32 %v2211, %v3035
    %3037 = vdwg.mxu0
    %3038 = vmatpush.bf16.msra.mxu0 %v2517
    %3039 = vmatpush.bf16.msra.mxu0 %v2508
    %3040 = vmatpush.bf16.msra.mxu0 %v2499
    %3041 = vmatpush.bf16.msra.mxu0 %v2490
    %3042 = vmatpush.bf16.msra.mxu0 %v2481
    %3043 = vmatpush.bf16.msra.mxu0 %v2472
    %3044 = vmatpush.bf16.msra.mxu0 %v2463
    %3045 = vmatpush.bf16.msra.mxu0 %v2454
    %3046 = vmatmul.bf16.gmra.mxu0 %v2107
    %v3047 = vpop.f32.mrf.mxu0
    %v3048 = vadd.f32 %v2212, %v3047
    %v3049 = vpop.f32.mrf.mxu0
    %v3050 = vadd.f32 %v2212, %v3049
    %3051 = vmatmul.bf16.gmra.mxu0 %v2108
    %v3052 = vpop.f32.mrf.mxu0
    %v3053 = vadd.f32 %v2212, %v3052
    %v3054 = vpop.f32.mrf.mxu0
    %v3055 = vadd.f32 %v2212, %v3054
    %3056 = vmatmul.bf16.gmra.mxu0 %v2109
    %v3057 = vpop.f32.mrf.mxu0
    %v3058 = vadd.f32 %v2212, %v3057
    %v3059 = vpop.f32.mrf.mxu0
    %v3060 = vadd.f32 %v2212, %v3059
    %3061 = vmatmul.bf16.gmra.mxu0 %v2110
    %v3062 = vpop.f32.mrf.mxu0
    %v3063 = vadd.f32 %v2212, %v3062
    %v3064 = vpop.f32.mrf.mxu0
    %v3065 = vadd.f32 %v2212, %v3064
    %3066 = vmatmul.bf16.gmra.mxu0 %v2111
    %v3067 = vpop.f32.mrf.mxu0
    %v3068 = vadd.f32 %v2212, %v3067
    %v3069 = vpop.f32.mrf.mxu0
    %v3070 = vadd.f32 %v2212, %v3069
    %3071 = vmatmul.bf16.gmra.mxu0 %v2112
    %v3072 = vpop.f32.mrf.mxu0
    %v3073 = vadd.f32 %v2212, %v3072
    %v3074 = vpop.f32.mrf.mxu0
    %v3075 = vadd.f32 %v2212, %v3074
    %3076 = vmatmul.bf16.gmra.mxu0 %v2113
    %v3077 = vpop.f32.mrf.mxu0
    %v3078 = vadd.f32 %v2212, %v3077
    %v3079 = vpop.f32.mrf.mxu0
    %v3080 = vadd.f32 %v2212, %v3079
    %3081 = vmatmul.bf16.gmra.mxu0 %v2114
    %v3082 = vpop.f32.mrf.mxu0
    %v3083 = vadd.f32 %v2212, %v3082
    %v3084 = vpop.f32.mrf.mxu0
    %v3085 = vadd.f32 %v2212, %v3084
    %3086 = vmatmul.bf16.gmra.mxu0 %v2115
    %v3087 = vpop.f32.mrf.mxu0
    %v3088 = vadd.f32 %v2212, %v3087
    %v3089 = vpop.f32.mrf.mxu0
    %v3090 = vadd.f32 %v2212, %v3089
    %3091 = vmatmul.bf16.gmra.mxu0 %v2116
    %v3092 = vpop.f32.mrf.mxu0
    %v3093 = vadd.f32 %v2212, %v3092
    %v3094 = vpop.f32.mrf.mxu0
    %v3095 = vadd.f32 %v2212, %v3094
    %3096 = vmatmul.bf16.gmra.mxu0 %v2117
    %v3097 = vpop.f32.mrf.mxu0
    %v3098 = vadd.f32 %v2212, %v3097
    %v3099 = vpop.f32.mrf.mxu0
    %v3100 = vadd.f32 %v2212, %v3099
    %3101 = vmatmul.bf16.gmra.mxu0 %v2118
    %v3102 = vpop.f32.mrf.mxu0
    %v3103 = vadd.f32 %v2212, %v3102
    %v3104 = vpop.f32.mrf.mxu0
    %v3105 = vadd.f32 %v2212, %v3104
    %3106 = vmatmul.bf16.gmra.mxu0 %v2119
    %v3107 = vpop.f32.mrf.mxu0
    %v3108 = vadd.f32 %v2212, %v3107
    %v3109 = vpop.f32.mrf.mxu0
    %v3110 = vadd.f32 %v2212, %v3109
    %3111 = vmatmul.bf16.gmra.mxu0 %v2120
    %v3112 = vpop.f32.mrf.mxu0
    %v3113 = vadd.f32 %v2212, %v3112
    %v3114 = vpop.f32.mrf.mxu0
    %v3115 = vadd.f32 %v2212, %v3114
    %3116 = vmatmul.bf16.gmra.mxu0 %v2121
    %v3117 = vpop.f32.mrf.mxu0
    %v3118 = vadd.f32 %v2212, %v3117
    %v3119 = vpop.f32.mrf.mxu0
    %v3120 = vadd.f32 %v2212, %v3119
    %3121 = vmatmul.bf16.gmra.mxu0 %v2122
    %v3122 = vpop.f32.mrf.mxu0
    %v3123 = vadd.f32 %v2212, %v3122
    %v3124 = vpop.f32.mrf.mxu0
    %v3125 = vadd.f32 %v2212, %v3124
    %3126 = vdwg.mxu0
    %3127 = vmatpush.bf16.msra.mxu0 %v2518
    %3128 = vmatpush.bf16.msra.mxu0 %v2509
    %3129 = vmatpush.bf16.msra.mxu0 %v2500
    %3130 = vmatpush.bf16.msra.mxu0 %v2491
    %3131 = vmatpush.bf16.msra.mxu0 %v2482
    %3132 = vmatpush.bf16.msra.mxu0 %v2473
    %3133 = vmatpush.bf16.msra.mxu0 %v2464
    %3134 = vmatpush.bf16.msra.mxu0 %v2455
    %3135 = vmatmul.bf16.gmra.mxu0 %v2107
    %v3136 = vpop.f32.mrf.mxu0
    %v3137 = vadd.f32 %v2213, %v3136
    %v3138 = vpop.f32.mrf.mxu0
    %v3139 = vadd.f32 %v2213, %v3138
    %3140 = vmatmul.bf16.gmra.mxu0 %v2108
    %v3141 = vpop.f32.mrf.mxu0
    %v3142 = vadd.f32 %v2213, %v3141
    %v3143 = vpop.f32.mrf.mxu0
    %v3144 = vadd.f32 %v2213, %v3143
    %3145 = vmatmul.bf16.gmra.mxu0 %v2109
    %v3146 = vpop.f32.mrf.mxu0
    %v3147 = vadd.f32 %v2213, %v3146
    %v3148 = vpop.f32.mrf.mxu0
    %v3149 = vadd.f32 %v2213, %v3148
    %3150 = vmatmul.bf16.gmra.mxu0 %v2110
    %v3151 = vpop.f32.mrf.mxu0
    %v3152 = vadd.f32 %v2213, %v3151
    %v3153 = vpop.f32.mrf.mxu0
    %v3154 = vadd.f32 %v2213, %v3153
    %3155 = vmatmul.bf16.gmra.mxu0 %v2111
    %v3156 = vpop.f32.mrf.mxu0
    %v3157 = vadd.f32 %v2213, %v3156
    %v3158 = vpop.f32.mrf.mxu0
    %v3159 = vadd.f32 %v2213, %v3158
    %3160 = vmatmul.bf16.gmra.mxu0 %v2112
    %v3161 = vpop.f32.mrf.mxu0
    %v3162 = vadd.f32 %v2213, %v3161
    %v3163 = vpop.f32.mrf.mxu0
    %v3164 = vadd.f32 %v2213, %v3163
    %3165 = vmatmul.bf16.gmra.mxu0 %v2113
    %v3166 = vpop.f32.mrf.mxu0
    %v3167 = vadd.f32 %v2213, %v3166
    %v3168 = vpop.f32.mrf.mxu0
    %v3169 = vadd.f32 %v2213, %v3168
    %3170 = vmatmul.bf16.gmra.mxu0 %v2114
    %v3171 = vpop.f32.mrf.mxu0
    %v3172 = vadd.f32 %v2213, %v3171
    %v3173 = vpop.f32.mrf.mxu0
    %v3174 = vadd.f32 %v2213, %v3173
    %3175 = vmatmul.bf16.gmra.mxu0 %v2115
    %v3176 = vpop.f32.mrf.mxu0
    %v3177 = vadd.f32 %v2213, %v3176
    %v3178 = vpop.f32.mrf.mxu0
    %v3179 = vadd.f32 %v2213, %v3178
    %3180 = vmatmul.bf16.gmra.mxu0 %v2116
    %v3181 = vpop.f32.mrf.mxu0
    %v3182 = vadd.f32 %v2213, %v3181
    %v3183 = vpop.f32.mrf.mxu0
    %v3184 = vadd.f32 %v2213, %v3183
    %3185 = vmatmul.bf16.gmra.mxu0 %v2117
    %v3186 = vpop.f32.mrf.mxu0
    %v3187 = vadd.f32 %v2213, %v3186
    %v3188 = vpop.f32.mrf.mxu0
    %v3189 = vadd.f32 %v2213, %v3188
    %3190 = vmatmul.bf16.gmra.mxu0 %v2118
    %v3191 = vpop.f32.mrf.mxu0
    %v3192 = vadd.f32 %v2213, %v3191
    %v3193 = vpop.f32.mrf.mxu0
    %v3194 = vadd.f32 %v2213, %v3193
    %3195 = vmatmul.bf16.gmra.mxu0 %v2119
    %v3196 = vpop.f32.mrf.mxu0
    %v3197 = vadd.f32 %v2213, %v3196
    %v3198 = vpop.f32.mrf.mxu0
    %v3199 = vadd.f32 %v2213, %v3198
    %3200 = vmatmul.bf16.gmra.mxu0 %v2120
    %v3201 = vpop.f32.mrf.mxu0
    %v3202 = vadd.f32 %v2213, %v3201
    %v3203 = vpop.f32.mrf.mxu0
    %v3204 = vadd.f32 %v2213, %v3203
    %3205 = vmatmul.bf16.gmra.mxu0 %v2121
    %v3206 = vpop.f32.mrf.mxu0
    %v3207 = vadd.f32 %v2213, %v3206
    %v3208 = vpop.f32.mrf.mxu0
    %v3209 = vadd.f32 %v2213, %v3208
    %3210 = vmatmul.bf16.gmra.mxu0 %v2122
    %v3211 = vpop.f32.mrf.mxu0
    %v3212 = vadd.f32 %v2213, %v3211
    %v3213 = vpop.f32.mrf.mxu0
    %v3214 = vadd.f32 %v2213, %v3213
    %3215 = vdwg.mxu0
    %3216 = vmatpush.bf16.msra.mxu0 %v2519
    %3217 = vmatpush.bf16.msra.mxu0 %v2510
    %3218 = vmatpush.bf16.msra.mxu0 %v2501
    %3219 = vmatpush.bf16.msra.mxu0 %v2492
    %3220 = vmatpush.bf16.msra.mxu0 %v2483
    %3221 = vmatpush.bf16.msra.mxu0 %v2474
    %3222 = vmatpush.bf16.msra.mxu0 %v2465
    %3223 = vmatpush.bf16.msra.mxu0 %v2456
    %3224 = vmatmul.bf16.gmra.mxu0 %v2107
    %v3225 = vpop.f32.mrf.mxu0
    %v3226 = vadd.f32 %v2214, %v3225
    %v3227 = vpop.f32.mrf.mxu0
    %v3228 = vadd.f32 %v2214, %v3227
    %3229 = vmatmul.bf16.gmra.mxu0 %v2108
    %v3230 = vpop.f32.mrf.mxu0
    %v3231 = vadd.f32 %v2214, %v3230
    %v3232 = vpop.f32.mrf.mxu0
    %v3233 = vadd.f32 %v2214, %v3232
    %3234 = vmatmul.bf16.gmra.mxu0 %v2109
    %v3235 = vpop.f32.mrf.mxu0
    %v3236 = vadd.f32 %v2214, %v3235
    %v3237 = vpop.f32.mrf.mxu0
    %v3238 = vadd.f32 %v2214, %v3237
    %3239 = vmatmul.bf16.gmra.mxu0 %v2110
    %v3240 = vpop.f32.mrf.mxu0
    %v3241 = vadd.f32 %v2214, %v3240
    %v3242 = vpop.f32.mrf.mxu0
    %v3243 = vadd.f32 %v2214, %v3242
    %3244 = vmatmul.bf16.gmra.mxu0 %v2111
    %v3245 = vpop.f32.mrf.mxu0
    %v3246 = vadd.f32 %v2214, %v3245
    %v3247 = vpop.f32.mrf.mxu0
    %v3248 = vadd.f32 %v2214, %v3247
    %3249 = vmatmul.bf16.gmra.mxu0 %v2112
    %v3250 = vpop.f32.mrf.mxu0
    %v3251 = vadd.f32 %v2214, %v3250
    %v3252 = vpop.f32.mrf.mxu0
    %v3253 = vadd.f32 %v2214, %v3252
    %3254 = vmatmul.bf16.gmra.mxu0 %v2113
    %v3255 = vpop.f32.mrf.mxu0
    %v3256 = vadd.f32 %v2214, %v3255
    %v3257 = vpop.f32.mrf.mxu0
    %v3258 = vadd.f32 %v2214, %v3257
    %3259 = vmatmul.bf16.gmra.mxu0 %v2114
    %v3260 = vpop.f32.mrf.mxu0
    %v3261 = vadd.f32 %v2214, %v3260
    %v3262 = vpop.f32.mrf.mxu0
    %v3263 = vadd.f32 %v2214, %v3262
    %3264 = vmatmul.bf16.gmra.mxu0 %v2115
    %v3265 = vpop.f32.mrf.mxu0
    %v3266 = vadd.f32 %v2214, %v3265
    %v3267 = vpop.f32.mrf.mxu0
    %v3268 = vadd.f32 %v2214, %v3267
    %3269 = vmatmul.bf16.gmra.mxu0 %v2116
    %v3270 = vpop.f32.mrf.mxu0
    %v3271 = vadd.f32 %v2214, %v3270
    %v3272 = vpop.f32.mrf.mxu0
    %v3273 = vadd.f32 %v2214, %v3272
    %3274 = vmatmul.bf16.gmra.mxu0 %v2117
    %v3275 = vpop.f32.mrf.mxu0
    %v3276 = vadd.f32 %v2214, %v3275
    %v3277 = vpop.f32.mrf.mxu0
    %v3278 = vadd.f32 %v2214, %v3277
    %3279 = vmatmul.bf16.gmra.mxu0 %v2118
    %v3280 = vpop.f32.mrf.mxu0
    %v3281 = vadd.f32 %v2214, %v3280
    %v3282 = vpop.f32.mrf.mxu0
    %v3283 = vadd.f32 %v2214, %v3282
    %3284 = vmatmul.bf16.gmra.mxu0 %v2119
    %v3285 = vpop.f32.mrf.mxu0
    %v3286 = vadd.f32 %v2214, %v3285
    %v3287 = vpop.f32.mrf.mxu0
    %v3288 = vadd.f32 %v2214, %v3287
    %3289 = vmatmul.bf16.gmra.mxu0 %v2120
    %v3290 = vpop.f32.mrf.mxu0
    %v3291 = vadd.f32 %v2214, %v3290
    %v3292 = vpop.f32.mrf.mxu0
    %v3293 = vadd.f32 %v2214, %v3292
    %3294 = vmatmul.bf16.gmra.mxu0 %v2121
    %v3295 = vpop.f32.mrf.mxu0
    %v3296 = vadd.f32 %v2214, %v3295
    %v3297 = vpop.f32.mrf.mxu0
    %v3298 = vadd.f32 %v2214, %v3297
    %3299 = vmatmul.bf16.gmra.mxu0 %v2122
    %v3300 = vpop.f32.mrf.mxu0
    %v3301 = vadd.f32 %v2214, %v3300
    %v3302 = vpop.f32.mrf.mxu0
    %v3303 = vadd.f32 %v2214, %v3302
    %3304 = vdwg.mxu0
    %3305 = vmatpush.bf16.msra.mxu0 %v2520
    %3306 = vmatpush.bf16.msra.mxu0 %v2511
    %3307 = vmatpush.bf16.msra.mxu0 %v2502
    %3308 = vmatpush.bf16.msra.mxu0 %v2493
    %3309 = vmatpush.bf16.msra.mxu0 %v2484
    %3310 = vmatpush.bf16.msra.mxu0 %v2475
    %3311 = vmatpush.bf16.msra.mxu0 %v2466
    %3312 = vmatpush.bf16.msra.mxu0 %v2457
    %3313 = vmatmul.bf16.gmra.mxu0 %v2107
    %v3314 = vpop.f32.mrf.mxu0
    %v3315 = vadd.f32 %v2215, %v3314
    %v3316 = vpop.f32.mrf.mxu0
    %v3317 = vadd.f32 %v2215, %v3316
    %3318 = vmatmul.bf16.gmra.mxu0 %v2108
    %v3319 = vpop.f32.mrf.mxu0
    %v3320 = vadd.f32 %v2215, %v3319
    %v3321 = vpop.f32.mrf.mxu0
    %v3322 = vadd.f32 %v2215, %v3321
    %3323 = vmatmul.bf16.gmra.mxu0 %v2109
    %v3324 = vpop.f32.mrf.mxu0
    %v3325 = vadd.f32 %v2215, %v3324
    %v3326 = vpop.f32.mrf.mxu0
    %v3327 = vadd.f32 %v2215, %v3326
    %3328 = vmatmul.bf16.gmra.mxu0 %v2110
    %v3329 = vpop.f32.mrf.mxu0
    %v3330 = vadd.f32 %v2215, %v3329
    %v3331 = vpop.f32.mrf.mxu0
    %v3332 = vadd.f32 %v2215, %v3331
    %3333 = vmatmul.bf16.gmra.mxu0 %v2111
    %v3334 = vpop.f32.mrf.mxu0
    %v3335 = vadd.f32 %v2215, %v3334
    %v3336 = vpop.f32.mrf.mxu0
    %v3337 = vadd.f32 %v2215, %v3336
    %3338 = vmatmul.bf16.gmra.mxu0 %v2112
    %v3339 = vpop.f32.mrf.mxu0
    %v3340 = vadd.f32 %v2215, %v3339
    %v3341 = vpop.f32.mrf.mxu0
    %v3342 = vadd.f32 %v2215, %v3341
    %3343 = vmatmul.bf16.gmra.mxu0 %v2113
    %v3344 = vpop.f32.mrf.mxu0
    %v3345 = vadd.f32 %v2215, %v3344
    %v3346 = vpop.f32.mrf.mxu0
    %v3347 = vadd.f32 %v2215, %v3346
    %3348 = vmatmul.bf16.gmra.mxu0 %v2114
    %v3349 = vpop.f32.mrf.mxu0
    %v3350 = vadd.f32 %v2215, %v3349
    %v3351 = vpop.f32.mrf.mxu0
    %v3352 = vadd.f32 %v2215, %v3351
    %3353 = vmatmul.bf16.gmra.mxu0 %v2115
    %v3354 = vpop.f32.mrf.mxu0
    %v3355 = vadd.f32 %v2215, %v3354
    %v3356 = vpop.f32.mrf.mxu0
    %v3357 = vadd.f32 %v2215, %v3356
    %3358 = vmatmul.bf16.gmra.mxu0 %v2116
    %v3359 = vpop.f32.mrf.mxu0
    %v3360 = vadd.f32 %v2215, %v3359
    %v3361 = vpop.f32.mrf.mxu0
    %v3362 = vadd.f32 %v2215, %v3361
    %3363 = vmatmul.bf16.gmra.mxu0 %v2117
    %v3364 = vpop.f32.mrf.mxu0
    %v3365 = vadd.f32 %v2215, %v3364
    %v3366 = vpop.f32.mrf.mxu0
    %v3367 = vadd.f32 %v2215, %v3366
    %3368 = vmatmul.bf16.gmra.mxu0 %v2118
    %v3369 = vpop.f32.mrf.mxu0
    %v3370 = vadd.f32 %v2215, %v3369
    %v3371 = vpop.f32.mrf.mxu0
    %v3372 = vadd.f32 %v2215, %v3371
    %3373 = vmatmul.bf16.gmra.mxu0 %v2119
    %v3374 = vpop.f32.mrf.mxu0
    %v3375 = vadd.f32 %v2215, %v3374
    %v3376 = vpop.f32.mrf.mxu0
    %v3377 = vadd.f32 %v2215, %v3376
    %3378 = vmatmul.bf16.gmra.mxu0 %v2120
    %v3379 = vpop.f32.mrf.mxu0
    %v3380 = vadd.f32 %v2215, %v3379
    %v3381 = vpop.f32.mrf.mxu0
    %v3382 = vadd.f32 %v2215, %v3381
    %3383 = vmatmul.bf16.gmra.mxu0 %v2121
    %v3384 = vpop.f32.mrf.mxu0
    %v3385 = vadd.f32 %v2215, %v3384
    %v3386 = vpop.f32.mrf.mxu0
    %v3387 = vadd.f32 %v2215, %v3386
    %3388 = vmatmul.bf16.gmra.mxu0 %v2122
    %v3389 = vpop.f32.mrf.mxu0
    %v3390 = vadd.f32 %v2215, %v3389
    %v3391 = vpop.f32.mrf.mxu0
    %v3392 = vadd.f32 %v2215, %v3391
    %3393 = vdwg.mxu0
    %v3394 = vpack.c.bf16 %v2605, %v2603
    %v3395 = vpack.c.bf16 %v2694, %v2692
    %v3396 = vpack.c.bf16 %v2783, %v2781
    %v3397 = vpack.c.bf16 %v2872, %v2870
    %v3398 = vpack.c.bf16 %v2961, %v2959
    %v3399 = vpack.c.bf16 %v3050, %v3048
    %v3400 = vpack.c.bf16 %v3139, %v3137
    %v3401 = vpack.c.bf16 %v3228, %v3226
    %v3402 = vpack.c.bf16 %v3317, %v3315
    %v3403 = vpack.c.bf16 %v2610, %v2608
    %v3404 = vpack.c.bf16 %v2699, %v2697
    %v3405 = vpack.c.bf16 %v2788, %v2786
    %v3406 = vpack.c.bf16 %v2877, %v2875
    %v3407 = vpack.c.bf16 %v2966, %v2964
    %v3408 = vpack.c.bf16 %v3055, %v3053
    %v3409 = vpack.c.bf16 %v3144, %v3142
    %v3410 = vpack.c.bf16 %v3233, %v3231
    %v3411 = vpack.c.bf16 %v3322, %v3320
    %v3412 = vpack.c.bf16 %v2615, %v2613
    %v3413 = vpack.c.bf16 %v2704, %v2702
    %v3414 = vpack.c.bf16 %v2793, %v2791
    %v3415 = vpack.c.bf16 %v2882, %v2880
    %v3416 = vpack.c.bf16 %v2971, %v2969
    %v3417 = vpack.c.bf16 %v3060, %v3058
    %v3418 = vpack.c.bf16 %v3149, %v3147
    %v3419 = vpack.c.bf16 %v3238, %v3236
    %v3420 = vpack.c.bf16 %v3327, %v3325
    %v3421 = vpack.c.bf16 %v2620, %v2618
    %v3422 = vpack.c.bf16 %v2709, %v2707
    %v3423 = vpack.c.bf16 %v2798, %v2796
    %v3424 = vpack.c.bf16 %v2887, %v2885
    %v3425 = vpack.c.bf16 %v2976, %v2974
    %v3426 = vpack.c.bf16 %v3065, %v3063
    %v3427 = vpack.c.bf16 %v3154, %v3152
    %v3428 = vpack.c.bf16 %v3243, %v3241
    %v3429 = vpack.c.bf16 %v3332, %v3330
    %v3430 = vpack.c.bf16 %v2625, %v2623
    %v3431 = vpack.c.bf16 %v2714, %v2712
    %v3432 = vpack.c.bf16 %v2803, %v2801
    %v3433 = vpack.c.bf16 %v2892, %v2890
    %v3434 = vpack.c.bf16 %v2981, %v2979
    %v3435 = vpack.c.bf16 %v3070, %v3068
    %v3436 = vpack.c.bf16 %v3159, %v3157
    %v3437 = vpack.c.bf16 %v3248, %v3246
    %v3438 = vpack.c.bf16 %v3337, %v3335
    %v3439 = vpack.c.bf16 %v2630, %v2628
    %v3440 = vpack.c.bf16 %v2719, %v2717
    %v3441 = vpack.c.bf16 %v2808, %v2806
    %v3442 = vpack.c.bf16 %v2897, %v2895
    %v3443 = vpack.c.bf16 %v2986, %v2984
    %v3444 = vpack.c.bf16 %v3075, %v3073
    %v3445 = vpack.c.bf16 %v3164, %v3162
    %v3446 = vpack.c.bf16 %v3253, %v3251
    %v3447 = vpack.c.bf16 %v3342, %v3340
    %v3448 = vpack.c.bf16 %v2635, %v2633
    %v3449 = vpack.c.bf16 %v2724, %v2722
    %v3450 = vpack.c.bf16 %v2813, %v2811
    %v3451 = vpack.c.bf16 %v2902, %v2900
    %v3452 = vpack.c.bf16 %v2991, %v2989
    %v3453 = vpack.c.bf16 %v3080, %v3078
    %v3454 = vpack.c.bf16 %v3169, %v3167
    %v3455 = vpack.c.bf16 %v3258, %v3256
    %v3456 = vpack.c.bf16 %v3347, %v3345
    %v3457 = vpack.c.bf16 %v2640, %v2638
    %v3458 = vpack.c.bf16 %v2729, %v2727
    %v3459 = vpack.c.bf16 %v2818, %v2816
    %v3460 = vpack.c.bf16 %v2907, %v2905
    %v3461 = vpack.c.bf16 %v2996, %v2994
    %v3462 = vpack.c.bf16 %v3085, %v3083
    %v3463 = vpack.c.bf16 %v3174, %v3172
    %v3464 = vpack.c.bf16 %v3263, %v3261
    %v3465 = vpack.c.bf16 %v3352, %v3350
    %v3466 = vpack.c.bf16 %v2645, %v2643
    %v3467 = vpack.c.bf16 %v2734, %v2732
    %v3468 = vpack.c.bf16 %v2823, %v2821
    %v3469 = vpack.c.bf16 %v2912, %v2910
    %v3470 = vpack.c.bf16 %v3001, %v2999
    %v3471 = vpack.c.bf16 %v3090, %v3088
    %v3472 = vpack.c.bf16 %v3179, %v3177
    %v3473 = vpack.c.bf16 %v3268, %v3266
    %v3474 = vpack.c.bf16 %v3357, %v3355
    %v3475 = vpack.c.bf16 %v2650, %v2648
    %v3476 = vpack.c.bf16 %v2739, %v2737
    %v3477 = vpack.c.bf16 %v2828, %v2826
    %v3478 = vpack.c.bf16 %v2917, %v2915
    %v3479 = vpack.c.bf16 %v3006, %v3004
    %v3480 = vpack.c.bf16 %v3095, %v3093
    %v3481 = vpack.c.bf16 %v3184, %v3182
    %v3482 = vpack.c.bf16 %v3273, %v3271
    %v3483 = vpack.c.bf16 %v3362, %v3360
    %v3484 = vpack.c.bf16 %v2655, %v2653
    %v3485 = vpack.c.bf16 %v2744, %v2742
    %v3486 = vpack.c.bf16 %v2833, %v2831
    %v3487 = vpack.c.bf16 %v2922, %v2920
    %v3488 = vpack.c.bf16 %v3011, %v3009
    %v3489 = vpack.c.bf16 %v3100, %v3098
    %v3490 = vpack.c.bf16 %v3189, %v3187
    %v3491 = vpack.c.bf16 %v3278, %v3276
    %v3492 = vpack.c.bf16 %v3367, %v3365
    %v3493 = vpack.c.bf16 %v2660, %v2658
    %v3494 = vpack.c.bf16 %v2749, %v2747
    %v3495 = vpack.c.bf16 %v2838, %v2836
    %v3496 = vpack.c.bf16 %v2927, %v2925
    %v3497 = vpack.c.bf16 %v3016, %v3014
    %v3498 = vpack.c.bf16 %v3105, %v3103
    %v3499 = vpack.c.bf16 %v3194, %v3192
    %v3500 = vpack.c.bf16 %v3283, %v3281
    %v3501 = vpack.c.bf16 %v3372, %v3370
    %v3502 = vpack.c.bf16 %v2665, %v2663
    %v3503 = vpack.c.bf16 %v2754, %v2752
    %v3504 = vpack.c.bf16 %v2843, %v2841
    %v3505 = vpack.c.bf16 %v2932, %v2930
    %v3506 = vpack.c.bf16 %v3021, %v3019
    %v3507 = vpack.c.bf16 %v3110, %v3108
    %v3508 = vpack.c.bf16 %v3199, %v3197
    %v3509 = vpack.c.bf16 %v3288, %v3286
    %v3510 = vpack.c.bf16 %v3377, %v3375
    %v3511 = vpack.c.bf16 %v2670, %v2668
    %v3512 = vpack.c.bf16 %v2759, %v2757
    %v3513 = vpack.c.bf16 %v2848, %v2846
    %v3514 = vpack.c.bf16 %v2937, %v2935
    %v3515 = vpack.c.bf16 %v3026, %v3024
    %v3516 = vpack.c.bf16 %v3115, %v3113
    %v3517 = vpack.c.bf16 %v3204, %v3202
    %v3518 = vpack.c.bf16 %v3293, %v3291
    %v3519 = vpack.c.bf16 %v3382, %v3380
    %v3520 = vpack.c.bf16 %v2675, %v2673
    %v3521 = vpack.c.bf16 %v2764, %v2762
    %v3522 = vpack.c.bf16 %v2853, %v2851
    %v3523 = vpack.c.bf16 %v2942, %v2940
    %v3524 = vpack.c.bf16 %v3031, %v3029
    %v3525 = vpack.c.bf16 %v3120, %v3118
    %v3526 = vpack.c.bf16 %v3209, %v3207
    %v3527 = vpack.c.bf16 %v3298, %v3296
    %v3528 = vpack.c.bf16 %v3387, %v3385
    %v3529 = vpack.c.bf16 %v2680, %v2678
    %v3530 = vpack.c.bf16 %v2769, %v2767
    %v3531 = vpack.c.bf16 %v2858, %v2856
    %v3532 = vpack.c.bf16 %v2947, %v2945
    %v3533 = vpack.c.bf16 %v3036, %v3034
    %v3534 = vpack.c.bf16 %v3125, %v3123
    %v3535 = vpack.c.bf16 %v3214, %v3212
    %v3536 = vpack.c.bf16 %v3303, %v3301
    %v3537 = vpack.c.bf16 %v3392, %v3390
    %v3538 = vld [vmem:[#allocation11] sm:$0xff]
    %v3539 = vld [vmem:[#allocation11 + $0x8] sm:$0xff]
    %v3540 = vld [vmem:[#allocation11 + $0x10] sm:$0xff]
    %v3541 = vld [vmem:[#allocation11 + $0x18] sm:$0xff]
    %v3542 = vld [vmem:[#allocation11 + $0x20] sm:$0xff]
    %v3543 = vld [vmem:[#allocation11 + $0x28] sm:$0xff]
    %v3544 = vld [vmem:[#allocation11 + $0x30] sm:$0xff]
    %v3545 = vld [vmem:[#allocation11 + $0x38] sm:$0xff]
    %v3546 = vld [vmem:[#allocation11 + $0x40] sm:$0xff]
    %v3547 = vld [vmem:[#allocation11 + $0x48] sm:$0xff]
    %v3548 = vld [vmem:[#allocation11 + $0x50] sm:$0xff]
    %v3549 = vld [vmem:[#allocation11 + $0x58] sm:$0xff]
    %v3550 = vld [vmem:[#allocation11 + $0x60] sm:$0xff]
    %v3551 = vld [vmem:[#allocation11 + $0x68] sm:$0xff]
    %v3552 = vld [vmem:[#allocation11 + $0x70] sm:$0xff]
    %v3553 = vld [vmem:[#allocation11 + $0x78] sm:$0xff]
    %v3554 = vld [vmem:[#allocation11 + $0x80] sm:$0xff]
    %v3555 = vld [vmem:[#allocation11 + $0x88] sm:$0xff]
    %v3556 = vld [vmem:[#allocation11 + $0x90] sm:$0xff]
    %v3557 = vld [vmem:[#allocation11 + $0x98] sm:$0xff]
    %v3558 = vld [vmem:[#allocation11 + $0xa0] sm:$0xff]
    %v3559 = vld [vmem:[#allocation11 + $0xa8] sm:$0xff]
    %v3560 = vld [vmem:[#allocation11 + $0xb0] sm:$0xff]
    %v3561 = vld [vmem:[#allocation11 + $0xb8] sm:$0xff]
    %v3562 = vld [vmem:[#allocation11 + $0xc0] sm:$0xff]
    %v3563 = vld [vmem:[#allocation11 + $0xc8] sm:$0xff]
    %v3564 = vld [vmem:[#allocation11 + $0xd0] sm:$0xff]
    %v3565 = vld [vmem:[#allocation11 + $0xd8] sm:$0xff]
    %v3566 = vld [vmem:[#allocation11 + $0xe0] sm:$0xff]
    %v3567 = vld [vmem:[#allocation11 + $0xe8] sm:$0xff]
    %v3568 = vld [vmem:[#allocation11 + $0xf0] sm:$0xff]
    %v3569 = vld [vmem:[#allocation11 + $0xf8] sm:$0xff]
    %v3570 = vld [vmem:[#allocation11 + $0x100] sm:$0xff]
    %v3571 = vld [vmem:[#allocation11 + $0x108] sm:$0xff]
    %v3572 = vld [vmem:[#allocation11 + $0x110] sm:$0xff]
    %v3573 = vld [vmem:[#allocation11 + $0x118] sm:$0xff]
    %v3574 = vld [vmem:[#allocation11 + $0x120] sm:$0xff]
    %v3575 = vld [vmem:[#allocation11 + $0x128] sm:$0xff]
    %v3576 = vld [vmem:[#allocation11 + $0x130] sm:$0xff]
    %v3577 = vld [vmem:[#allocation11 + $0x138] sm:$0xff]
    %v3578 = vld [vmem:[#allocation11 + $0x140] sm:$0xff]
    %v3579 = vld [vmem:[#allocation11 + $0x148] sm:$0xff]
    %v3580 = vld [vmem:[#allocation11 + $0x150] sm:$0xff]
    %v3581 = vld [vmem:[#allocation11 + $0x158] sm:$0xff]
    %v3582 = vld [vmem:[#allocation11 + $0x160] sm:$0xff]
    %v3583 = vld [vmem:[#allocation11 + $0x168] sm:$0xff]
    %v3584 = vld [vmem:[#allocation11 + $0x170] sm:$0xff]
    %v3585 = vld [vmem:[#allocation11 + $0x178] sm:$0xff]
    %v3586 = vld [vmem:[#allocation11 + $0x180] sm:$0xff]
    %v3587 = vld [vmem:[#allocation11 + $0x188] sm:$0xff]
    %v3588 = vld [vmem:[#allocation11 + $0x190] sm:$0xff]
    %v3589 = vld [vmem:[#allocation11 + $0x198] sm:$0xff]
    %v3590 = vld [vmem:[#allocation11 + $0x1a0] sm:$0xff]
    %v3591 = vld [vmem:[#allocation11 + $0x1a8] sm:$0xff]
    %v3592 = vld [vmem:[#allocation11 + $0x1b0] sm:$0xff]
    %v3593 = vld [vmem:[#allocation11 + $0x1b8] sm:$0xff]
    %v3594 = vld [vmem:[#allocation11 + $0x1c0] sm:$0xff]
    %v3595 = vld [vmem:[#allocation11 + $0x1c8] sm:$0xff]
    %v3596 = vld [vmem:[#allocation11 + $0x1d0] sm:$0xff]
    %v3597 = vld [vmem:[#allocation11 + $0x1d8] sm:$0xff]
    %v3598 = vld [vmem:[#allocation11 + $0x1e0] sm:$0xff]
    %v3599 = vld [vmem:[#allocation11 + $0x1e8] sm:$0xff]
    %v3600 = vld [vmem:[#allocation11 + $0x1f0] sm:$0xff]
    %v3601 = vld [vmem:[#allocation11 + $0x1f8] sm:$0xff]
    %v3602 = vld [vmem:[#allocation11 + $0x200] sm:$0xff]
    %v3603 = vld [vmem:[#allocation11 + $0x208] sm:$0xff]
    %v3604 = vld [vmem:[#allocation11 + $0x210] sm:$0xff]
    %v3605 = vld [vmem:[#allocation11 + $0x218] sm:$0xff]
    %v3606 = vld [vmem:[#allocation11 + $0x220] sm:$0xff]
    %v3607 = vld [vmem:[#allocation11 + $0x228] sm:$0xff]
    %v3608 = vld [vmem:[#allocation11 + $0x230] sm:$0xff]
    %v3609 = vld [vmem:[#allocation11 + $0x238] sm:$0xff]
    %v3610 = vld [vmem:[#allocation11 + $0x240] sm:$0xff]
    %v3611 = vld [vmem:[#allocation11 + $0x248] sm:$0xff]
    %v3612 = vld [vmem:[#allocation11 + $0x250] sm:$0xff]
    %v3613 = vld [vmem:[#allocation11 + $0x258] sm:$0xff]
    %v3614 = vld [vmem:[#allocation11 + $0x260] sm:$0xff]
    %v3615 = vld [vmem:[#allocation11 + $0x268] sm:$0xff]
    %v3616 = vld [vmem:[#allocation11 + $0x270] sm:$0xff]
    %v3617 = vld [vmem:[#allocation11 + $0x278] sm:$0xff]
    %v3618 = vld [vmem:[#allocation11 + $0x280] sm:$0xff]
    %v3619 = vld [vmem:[#allocation11 + $0x288] sm:$0xff]
    %v3620 = vld [vmem:[#allocation11 + $0x290] sm:$0xff]
    %v3621 = vld [vmem:[#allocation11 + $0x298] sm:$0xff]
    %v3622 = vld [vmem:[#allocation11 + $0x2a0] sm:$0xff]
    %v3623 = vld [vmem:[#allocation11 + $0x2a8] sm:$0xff]
    %v3624 = vld [vmem:[#allocation11 + $0x2b0] sm:$0xff]
    %v3625 = vld [vmem:[#allocation11 + $0x2b8] sm:$0xff]
    %v3626 = vld [vmem:[#allocation11 + $0x2c0] sm:$0xff]
    %v3627 = vld [vmem:[#allocation11 + $0x2c8] sm:$0xff]
    %v3628 = vld [vmem:[#allocation11 + $0x2d0] sm:$0xff]
    %v3629 = vld [vmem:[#allocation11 + $0x2d8] sm:$0xff]
    %v3630 = vld [vmem:[#allocation11 + $0x2e0] sm:$0xff]
    %v3631 = vld [vmem:[#allocation11 + $0x2e8] sm:$0xff]
    %v3632 = vld [vmem:[#allocation11 + $0x2f0] sm:$0xff]
    %v3633 = vld [vmem:[#allocation11 + $0x2f8] sm:$0xff]
    %v3634 = vld [vmem:[#allocation11 + $0x300] sm:$0xff]
    %v3635 = vld [vmem:[#allocation11 + $0x308] sm:$0xff]
    %v3636 = vld [vmem:[#allocation11 + $0x310] sm:$0xff]
    %v3637 = vld [vmem:[#allocation11 + $0x318] sm:$0xff]
    %v3638 = vld [vmem:[#allocation11 + $0x320] sm:$0xff]
    %v3639 = vld [vmem:[#allocation11 + $0x328] sm:$0xff]
    %v3640 = vld [vmem:[#allocation11 + $0x330] sm:$0xff]
    %v3641 = vld [vmem:[#allocation11 + $0x338] sm:$0xff]
    %v3642 = vld [vmem:[#allocation11 + $0x340] sm:$0xff]
    %v3643 = vld [vmem:[#allocation11 + $0x348] sm:$0xff]
    %v3644 = vld [vmem:[#allocation11 + $0x350] sm:$0xff]
    %v3645 = vld [vmem:[#allocation11 + $0x358] sm:$0xff]
    %v3646 = vld [vmem:[#allocation11 + $0x360] sm:$0xff]
    %v3647 = vld [vmem:[#allocation11 + $0x368] sm:$0xff]
    %v3648 = vld [vmem:[#allocation11 + $0x370] sm:$0xff]
    %v3649 = vld [vmem:[#allocation11 + $0x378] sm:$0xff]
    %v3650 = vld [vmem:[#allocation11 + $0x380] sm:$0xff]
    %v3651 = vld [vmem:[#allocation11 + $0x388] sm:$0xff]
    %v3652 = vld [vmem:[#allocation11 + $0x390] sm:$0xff]
    %v3653 = vld [vmem:[#allocation11 + $0x398] sm:$0xff]
    %v3654 = vld [vmem:[#allocation11 + $0x3a0] sm:$0xff]
    %v3655 = vld [vmem:[#allocation11 + $0x3a8] sm:$0xff]
    %v3656 = vld [vmem:[#allocation11 + $0x3b0] sm:$0xff]
    %v3657 = vld [vmem:[#allocation11 + $0x3b8] sm:$0xff]
    %v3658 = vld [vmem:[#allocation11 + $0x3c0] sm:$0xff]
    %v3659 = vld [vmem:[#allocation11 + $0x3c8] sm:$0xff]
    %v3660 = vld [vmem:[#allocation11 + $0x3d0] sm:$0xff]
    %v3661 = vld [vmem:[#allocation11 + $0x3d8] sm:$0xff]
    %v3662 = vld [vmem:[#allocation11 + $0x3e0] sm:$0xff]
    %v3663 = vld [vmem:[#allocation11 + $0x3e8] sm:$0xff]
    %v3664 = vld [vmem:[#allocation11 + $0x3f0] sm:$0xff]
    %v3665 = vld [vmem:[#allocation11 + $0x3f8] sm:$0xff]
    %v3666 = vld [vmem:[#allocation11 + $0x400] sm:$0xff]
    %v3667 = vld [vmem:[#allocation11 + $0x408] sm:$0xff]
    %v3668 = vld [vmem:[#allocation11 + $0x410] sm:$0xff]
    %v3669 = vld [vmem:[#allocation11 + $0x418] sm:$0xff]
    %v3670 = vld [vmem:[#allocation11 + $0x420] sm:$0xff]
    %v3671 = vld [vmem:[#allocation11 + $0x428] sm:$0xff]
    %v3672 = vld [vmem:[#allocation11 + $0x430] sm:$0xff]
    %v3673 = vld [vmem:[#allocation11 + $0x438] sm:$0xff]
    %v3674 = vld [vmem:[#allocation11 + $0x440] sm:$0xff]
    %v3675 = vld [vmem:[#allocation11 + $0x448] sm:$0xff]
    %v3676 = vld [vmem:[#allocation11 + $0x450] sm:$0xff]
    %v3677 = vld [vmem:[#allocation11 + $0x458] sm:$0xff]
    %v3678 = vld [vmem:[#allocation11 + $0x460] sm:$0xff]
    %v3679 = vld [vmem:[#allocation11 + $0x468] sm:$0xff]
    %v3680 = vld [vmem:[#allocation11 + $0x470] sm:$0xff]
    %v3681 = vld [vmem:[#allocation11 + $0x478] sm:$0xff]
    %v3682 = vld [vmem:[#allocation11 + $0x480] sm:$0xff]
    %v3683 = vld [vmem:[#allocation11 + $0x488] sm:$0xff]
    %v3684 = vld [vmem:[#allocation11 + $0x490] sm:$0xff]
    %v3685 = vld [vmem:[#allocation11 + $0x498] sm:$0xff]
    %v3686 = vld [vmem:[#allocation11 + $0x4a0] sm:$0xff]
    %v3687 = vld [vmem:[#allocation11 + $0x4a8] sm:$0xff]
    %v3688 = vld [vmem:[#allocation11 + $0x4b0] sm:$0xff]
    %v3689 = vld [vmem:[#allocation11 + $0x4b8] sm:$0xff]
    %v3690 = vld [vmem:[#allocation11 + $0x4c0] sm:$0xff]
    %v3691 = vld [vmem:[#allocation11 + $0x4c8] sm:$0xff]
    %v3692 = vld [vmem:[#allocation11 + $0x4d0] sm:$0xff]
    %v3693 = vld [vmem:[#allocation11 + $0x4d8] sm:$0xff]
    %v3694 = vld [vmem:[#allocation11 + $0x4e0] sm:$0xff]
    %v3695 = vld [vmem:[#allocation11 + $0x4e8] sm:$0xff]
    %v3696 = vld [vmem:[#allocation11 + $0x4f0] sm:$0xff]
    %v3697 = vld [vmem:[#allocation11 + $0x4f8] sm:$0xff]
    %v3698 = vld [vmem:[#allocation11 + $0x500] sm:$0xff]
    %v3699 = vld [vmem:[#allocation11 + $0x508] sm:$0xff]
    %v3700 = vld [vmem:[#allocation11 + $0x510] sm:$0xff]
    %v3701 = vld [vmem:[#allocation11 + $0x518] sm:$0xff]
    %v3702 = vld [vmem:[#allocation11 + $0x520] sm:$0xff]
    %v3703 = vld [vmem:[#allocation11 + $0x528] sm:$0xff]
    %v3704 = vld [vmem:[#allocation11 + $0x530] sm:$0xff]
    %v3705 = vld [vmem:[#allocation11 + $0x538] sm:$0xff]
    %v3706 = vld [vmem:[#allocation11 + $0x540] sm:$0xff]
    %v3707 = vld [vmem:[#allocation11 + $0x548] sm:$0xff]
    %v3708 = vld [vmem:[#allocation11 + $0x550] sm:$0xff]
    %v3709 = vld [vmem:[#allocation11 + $0x558] sm:$0xff]
    %v3710 = vld [vmem:[#allocation11 + $0x560] sm:$0xff]
    %v3711 = vld [vmem:[#allocation11 + $0x568] sm:$0xff]
    %v3712 = vld [vmem:[#allocation11 + $0x570] sm:$0xff]
    %v3713 = vld [vmem:[#allocation11 + $0x578] sm:$0xff]
    %v3714 = vld [vmem:[#allocation11 + $0x580] sm:$0xff]
    %v3715 = vld [vmem:[#allocation11 + $0x588] sm:$0xff]
    %v3716 = vld [vmem:[#allocation11 + $0x590] sm:$0xff]
    %v3717 = vld [vmem:[#allocation11 + $0x598] sm:$0xff]
    %v3718 = vld [vmem:[#allocation11 + $0x5a0] sm:$0xff]
    %v3719 = vld [vmem:[#allocation11 + $0x5a8] sm:$0xff]
    %v3720 = vld [vmem:[#allocation11 + $0x5b0] sm:$0xff]
    %v3721 = vld [vmem:[#allocation11 + $0x5b8] sm:$0xff]
    %v3722 = vld [vmem:[#allocation11 + $0x5c0] sm:$0xff]
    %v3723 = vld [vmem:[#allocation11 + $0x5c8] sm:$0xff]
    %v3724 = vld [vmem:[#allocation11 + $0x5d0] sm:$0xff]
    %v3725 = vld [vmem:[#allocation11 + $0x5d8] sm:$0xff]
    %v3726 = vld [vmem:[#allocation11 + $0x5e0] sm:$0xff]
    %v3727 = vld [vmem:[#allocation11 + $0x5e8] sm:$0xff]
    %v3728 = vld [vmem:[#allocation11 + $0x5f0] sm:$0xff]
    %v3729 = vld [vmem:[#allocation11 + $0x5f8] sm:$0xff]
    %v3730 = vld [vmem:[#allocation11 + $0x600] sm:$0xff]
    %v3731 = vld [vmem:[#allocation11 + $0x608] sm:$0xff]
    %v3732 = vld [vmem:[#allocation11 + $0x610] sm:$0xff]
    %v3733 = vld [vmem:[#allocation11 + $0x618] sm:$0xff]
    %v3734 = vld [vmem:[#allocation11 + $0x620] sm:$0xff]
    %v3735 = vld [vmem:[#allocation11 + $0x628] sm:$0xff]
    %v3736 = vld [vmem:[#allocation11 + $0x630] sm:$0xff]
    %v3737 = vld [vmem:[#allocation11 + $0x638] sm:$0xff]
    %v3738 = vld [vmem:[#allocation11 + $0x640] sm:$0xff]
    %v3739 = vld [vmem:[#allocation11 + $0x648] sm:$0xff]
    %v3740 = vld [vmem:[#allocation11 + $0x650] sm:$0xff]
    %v3741 = vld [vmem:[#allocation11 + $0x658] sm:$0xff]
    %v3742 = vld [vmem:[#allocation11 + $0x660] sm:$0xff]
    %v3743 = vld [vmem:[#allocation11 + $0x668] sm:$0xff]
    %v3744 = vld [vmem:[#allocation11 + $0x670] sm:$0xff]
    %v3745 = vld [vmem:[#allocation11 + $0x678] sm:$0xff]
    %v3746 = vld [vmem:[#allocation11 + $0x680] sm:$0xff]
    %v3747 = vld [vmem:[#allocation11 + $0x688] sm:$0xff]
    %v3748 = vld [vmem:[#allocation11 + $0x690] sm:$0xff]
    %v3749 = vld [vmem:[#allocation11 + $0x698] sm:$0xff]
    %v3750 = vld [vmem:[#allocation11 + $0x6a0] sm:$0xff]
    %v3751 = vld [vmem:[#allocation11 + $0x6a8] sm:$0xff]
    %v3752 = vld [vmem:[#allocation11 + $0x6b0] sm:$0xff]
    %v3753 = vld [vmem:[#allocation11 + $0x6b8] sm:$0xff]
    %v3754 = vld [vmem:[#allocation11 + $0x6c0] sm:$0xff]
    %v3755 = vld [vmem:[#allocation11 + $0x6c8] sm:$0xff]
    %v3756 = vld [vmem:[#allocation11 + $0x6d0] sm:$0xff]
    %v3757 = vld [vmem:[#allocation11 + $0x6d8] sm:$0xff]
    %v3758 = vld [vmem:[#allocation11 + $0x6e0] sm:$0xff]
    %v3759 = vld [vmem:[#allocation11 + $0x6e8] sm:$0xff]
    %v3760 = vld [vmem:[#allocation11 + $0x6f0] sm:$0xff]
    %v3761 = vld [vmem:[#allocation11 + $0x6f8] sm:$0xff]
    %v3762 = vld [vmem:[#allocation11 + $0x700] sm:$0xff]
    %v3763 = vld [vmem:[#allocation11 + $0x708] sm:$0xff]
    %v3764 = vld [vmem:[#allocation11 + $0x710] sm:$0xff]
    %v3765 = vld [vmem:[#allocation11 + $0x718] sm:$0xff]
    %v3766 = vld [vmem:[#allocation11 + $0x720] sm:$0xff]
    %v3767 = vld [vmem:[#allocation11 + $0x728] sm:$0xff]
    %v3768 = vld [vmem:[#allocation11 + $0x730] sm:$0xff]
    %v3769 = vld [vmem:[#allocation11 + $0x738] sm:$0xff]
    %v3770 = vld [vmem:[#allocation11 + $0x740] sm:$0xff]
    %v3771 = vld [vmem:[#allocation11 + $0x748] sm:$0xff]
    %v3772 = vld [vmem:[#allocation11 + $0x750] sm:$0xff]
    %v3773 = vld [vmem:[#allocation11 + $0x758] sm:$0xff]
    %v3774 = vld [vmem:[#allocation11 + $0x760] sm:$0xff]
    %v3775 = vld [vmem:[#allocation11 + $0x768] sm:$0xff]
    %v3776 = vld [vmem:[#allocation11 + $0x770] sm:$0xff]
    %v3777 = vld [vmem:[#allocation11 + $0x778] sm:$0xff]
    %v3778 = vld [vmem:[#allocation11 + $0x780] sm:$0xff]
    %v3779 = vld [vmem:[#allocation11 + $0x788] sm:$0xff]
    %v3780 = vld [vmem:[#allocation11 + $0x790] sm:$0xff]
    %v3781 = vld [vmem:[#allocation11 + $0x798] sm:$0xff]
    %v3782 = vld [vmem:[#allocation11 + $0x7a0] sm:$0xff]
    %v3783 = vld [vmem:[#allocation11 + $0x7a8] sm:$0xff]
    %v3784 = vld [vmem:[#allocation11 + $0x7b0] sm:$0xff]
    %v3785 = vld [vmem:[#allocation11 + $0x7b8] sm:$0xff]
    %v3786 = vld [vmem:[#allocation11 + $0x7c0] sm:$0xff]
    %v3787 = vld [vmem:[#allocation11 + $0x7c8] sm:$0xff]
    %v3788 = vld [vmem:[#allocation11 + $0x7d0] sm:$0xff]
    %v3789 = vld [vmem:[#allocation11 + $0x7d8] sm:$0xff]
    %v3790 = vld [vmem:[#allocation11 + $0x7e0] sm:$0xff]
    %v3791 = vld [vmem:[#allocation11 + $0x7e8] sm:$0xff]
    %v3792 = vld [vmem:[#allocation11 + $0x7f0] sm:$0xff]
    %v3793 = vld [vmem:[#allocation11 + $0x7f8] sm:$0xff]
    %v3794 = vld [vmem:[#allocation11 + $0x800] sm:$0xff]
    %v3795 = vld [vmem:[#allocation11 + $0x808] sm:$0xff]
    %v3796 = vld [vmem:[#allocation11 + $0x810] sm:$0xff]
    %v3797 = vld [vmem:[#allocation11 + $0x818] sm:$0xff]
    %v3798 = vld [vmem:[#allocation11 + $0x820] sm:$0xff]
    %v3799 = vld [vmem:[#allocation11 + $0x828] sm:$0xff]
    %v3800 = vld [vmem:[#allocation11 + $0x830] sm:$0xff]
    %v3801 = vld [vmem:[#allocation11 + $0x838] sm:$0xff]
    %v3802 = vld [vmem:[#allocation11 + $0x840] sm:$0xff]
    %v3803 = vld [vmem:[#allocation11 + $0x848] sm:$0xff]
    %v3804 = vld [vmem:[#allocation11 + $0x850] sm:$0xff]
    %v3805 = vld [vmem:[#allocation11 + $0x858] sm:$0xff]
    %v3806 = vld [vmem:[#allocation11 + $0x860] sm:$0xff]
    %v3807 = vld [vmem:[#allocation11 + $0x868] sm:$0xff]
    %v3808 = vld [vmem:[#allocation11 + $0x870] sm:$0xff]
    %v3809 = vld [vmem:[#allocation11 + $0x878] sm:$0xff]
    %v3810 = vld [vmem:[#allocation11 + $0x880] sm:$0xff]
    %v3811 = vld [vmem:[#allocation11 + $0x888] sm:$0xff]
    %v3812 = vld [vmem:[#allocation11 + $0x890] sm:$0xff]
    %v3813 = vld [vmem:[#allocation11 + $0x898] sm:$0xff]
    %v3814 = vld [vmem:[#allocation11 + $0x8a0] sm:$0xff]
    %v3815 = vld [vmem:[#allocation11 + $0x8a8] sm:$0xff]
    %v3816 = vld [vmem:[#allocation11 + $0x8b0] sm:$0xff]
    %v3817 = vld [vmem:[#allocation11 + $0x8b8] sm:$0xff]
    %v3818 = vld [vmem:[#allocation11 + $0x8c0] sm:$0xff]
    %v3819 = vld [vmem:[#allocation11 + $0x8c8] sm:$0xff]
    %v3820 = vld [vmem:[#allocation11 + $0x8d0] sm:$0xff]
    %v3821 = vld [vmem:[#allocation11 + $0x8d8] sm:$0xff]
    %v3822 = vld [vmem:[#allocation11 + $0x8e0] sm:$0xff]
    %v3823 = vld [vmem:[#allocation11 + $0x8e8] sm:$0xff]
    %v3824 = vld [vmem:[#allocation11 + $0x8f0] sm:$0xff]
    %v3825 = vld [vmem:[#allocation11 + $0x8f8] sm:$0xff]
    %v3826 = vld [vmem:[#allocation13] sm:$0xf]
    %v3828 = vperm.slane %v3826, 0
    %v3829 = vperm.slane %v3826, 1
    %v3830 = vperm.slane %v3826, 2
    %v3831 = vperm.slane %v3826, 3
    %v4124 = vunpack.c.l.b16 %v3538
    %v4125 = vunpack.c.h.b16 %v3538
    %v4126 = vunpack.c.l.b16 %v3539
    %v4127 = vunpack.c.h.b16 %v3539
    %v4128 = vunpack.c.l.b16 %v3540
    %v4129 = vunpack.c.h.b16 %v3540
    %v4130 = vunpack.c.l.b16 %v3541
    %v4131 = vunpack.c.h.b16 %v3541
    %v4132 = vunpack.c.l.b16 %v3542
    %v4133 = vunpack.c.h.b16 %v3542
    %v4134 = vunpack.c.l.b16 %v3543
    %v4135 = vunpack.c.h.b16 %v3543
    %v4136 = vunpack.c.l.b16 %v3544
    %v4137 = vunpack.c.h.b16 %v3544
    %v4138 = vunpack.c.l.b16 %v3545
    %v4139 = vunpack.c.h.b16 %v3545
    %v4140 = vunpack.c.l.b16 %v3546
    %v4141 = vunpack.c.h.b16 %v3546
    %v4142 = vunpack.c.l.b16 %v3547
    %v4143 = vunpack.c.h.b16 %v3547
    %v4144 = vunpack.c.l.b16 %v3548
    %v4145 = vunpack.c.h.b16 %v3548
    %v4146 = vunpack.c.l.b16 %v3549
    %v4147 = vunpack.c.h.b16 %v3549
    %v4148 = vunpack.c.l.b16 %v3550
    %v4149 = vunpack.c.h.b16 %v3550
    %v4150 = vunpack.c.l.b16 %v3551
    %v4151 = vunpack.c.h.b16 %v3551
    %v4152 = vunpack.c.l.b16 %v3552
    %v4153 = vunpack.c.h.b16 %v3552
    %v4154 = vunpack.c.l.b16 %v3553
    %v4155 = vunpack.c.h.b16 %v3553
    %v4156 = vunpack.c.l.b16 %v3554
    %v4157 = vunpack.c.h.b16 %v3554
    %v4158 = vunpack.c.l.b16 %v3555
    %v4159 = vunpack.c.h.b16 %v3555
    %v4160 = vunpack.c.l.b16 %v3556
    %v4161 = vunpack.c.h.b16 %v3556
    %v4162 = vunpack.c.l.b16 %v3557
    %v4163 = vunpack.c.h.b16 %v3557
    %v4164 = vunpack.c.l.b16 %v3558
    %v4165 = vunpack.c.h.b16 %v3558
    %v4166 = vunpack.c.l.b16 %v3559
    %v4167 = vunpack.c.h.b16 %v3559
    %v4168 = vunpack.c.l.b16 %v3560
    %v4169 = vunpack.c.h.b16 %v3560
    %v4170 = vunpack.c.l.b16 %v3561
    %v4171 = vunpack.c.h.b16 %v3561
    %v4172 = vunpack.c.l.b16 %v3562
    %v4173 = vunpack.c.h.b16 %v3562
    %v4174 = vunpack.c.l.b16 %v3563
    %v4175 = vunpack.c.h.b16 %v3563
    %v4176 = vunpack.c.l.b16 %v3564
    %v4177 = vunpack.c.h.b16 %v3564
    %v4178 = vunpack.c.l.b16 %v3565
    %v4179 = vunpack.c.h.b16 %v3565
    %v4180 = vunpack.c.l.b16 %v3566
    %v4181 = vunpack.c.h.b16 %v3566
    %v4182 = vunpack.c.l.b16 %v3567
    %v4183 = vunpack.c.h.b16 %v3567
    %v4184 = vunpack.c.l.b16 %v3568
    %v4185 = vunpack.c.h.b16 %v3568
    %v4186 = vunpack.c.l.b16 %v3569
    %v4187 = vunpack.c.h.b16 %v3569
    %v4188 = vunpack.c.l.b16 %v3570
    %v4189 = vunpack.c.h.b16 %v3570
    %v4190 = vunpack.c.l.b16 %v3571
    %v4191 = vunpack.c.h.b16 %v3571
    %v4192 = vunpack.c.l.b16 %v3572
    %v4193 = vunpack.c.h.b16 %v3572
    %v4194 = vunpack.c.l.b16 %v3573
    %v4195 = vunpack.c.h.b16 %v3573
    %v4196 = vunpack.c.l.b16 %v3574
    %v4197 = vunpack.c.h.b16 %v3574
    %v4198 = vunpack.c.l.b16 %v3575
    %v4199 = vunpack.c.h.b16 %v3575
    %v4200 = vunpack.c.l.b16 %v3576
    %v4201 = vunpack.c.h.b16 %v3576
    %v4202 = vunpack.c.l.b16 %v3577
    %v4203 = vunpack.c.h.b16 %v3577
    %v4204 = vunpack.c.l.b16 %v3578
    %v4205 = vunpack.c.h.b16 %v3578
    %v4206 = vunpack.c.l.b16 %v3579
    %v4207 = vunpack.c.h.b16 %v3579
    %v4208 = vunpack.c.l.b16 %v3580
    %v4209 = vunpack.c.h.b16 %v3580
    %v4210 = vunpack.c.l.b16 %v3581
    %v4211 = vunpack.c.h.b16 %v3581
    %v4212 = vunpack.c.l.b16 %v3582
    %v4213 = vunpack.c.h.b16 %v3582
    %v4214 = vunpack.c.l.b16 %v3583
    %v4215 = vunpack.c.h.b16 %v3583
    %v4216 = vunpack.c.l.b16 %v3584
    %v4217 = vunpack.c.h.b16 %v3584
    %v4218 = vunpack.c.l.b16 %v3585
    %v4219 = vunpack.c.h.b16 %v3585
    %v4220 = vunpack.c.l.b16 %v3586
    %v4221 = vunpack.c.h.b16 %v3586
    %v4222 = vunpack.c.l.b16 %v3587
    %v4223 = vunpack.c.h.b16 %v3587
    %v4224 = vunpack.c.l.b16 %v3588
    %v4225 = vunpack.c.h.b16 %v3588
    %v4226 = vunpack.c.l.b16 %v3589
    %v4227 = vunpack.c.h.b16 %v3589
    %v4228 = vunpack.c.l.b16 %v3590
    %v4229 = vunpack.c.h.b16 %v3590
    %v4230 = vunpack.c.l.b16 %v3591
    %v4231 = vunpack.c.h.b16 %v3591
    %v4232 = vunpack.c.l.b16 %v3592
    %v4233 = vunpack.c.h.b16 %v3592
    %v4234 = vunpack.c.l.b16 %v3593
    %v4235 = vunpack.c.h.b16 %v3593
    %v4236 = vunpack.c.l.b16 %v3594
    %v4237 = vunpack.c.h.b16 %v3594
    %v4238 = vunpack.c.l.b16 %v3595
    %v4239 = vunpack.c.h.b16 %v3595
    %v4240 = vunpack.c.l.b16 %v3596
    %v4241 = vunpack.c.h.b16 %v3596
    %v4242 = vunpack.c.l.b16 %v3597
    %v4243 = vunpack.c.h.b16 %v3597
    %v4244 = vunpack.c.l.b16 %v3598
    %v4245 = vunpack.c.h.b16 %v3598
    %v4246 = vunpack.c.l.b16 %v3599
    %v4247 = vunpack.c.h.b16 %v3599
    %v4248 = vunpack.c.l.b16 %v3600
    %v4249 = vunpack.c.h.b16 %v3600
    %v4250 = vunpack.c.l.b16 %v3601
    %v4251 = vunpack.c.h.b16 %v3601
    %v4252 = vunpack.c.l.b16 %v3602
    %v4253 = vunpack.c.h.b16 %v3602
    %v4254 = vunpack.c.l.b16 %v3603
    %v4255 = vunpack.c.h.b16 %v3603
    %v4256 = vunpack.c.l.b16 %v3604
    %v4257 = vunpack.c.h.b16 %v3604
    %v4258 = vunpack.c.l.b16 %v3605
    %v4259 = vunpack.c.h.b16 %v3605
    %v4260 = vunpack.c.l.b16 %v3606
    %v4261 = vunpack.c.h.b16 %v3606
    %v4262 = vunpack.c.l.b16 %v3607
    %v4263 = vunpack.c.h.b16 %v3607
    %v4264 = vunpack.c.l.b16 %v3608
    %v4265 = vunpack.c.h.b16 %v3608
    %v4266 = vunpack.c.l.b16 %v3609
    %v4267 = vunpack.c.h.b16 %v3609
    %v4268 = vunpack.c.l.b16 %v3610
    %v4269 = vunpack.c.h.b16 %v3610
    %v4270 = vunpack.c.l.b16 %v3611
    %v4271 = vunpack.c.h.b16 %v3611
    %v4272 = vunpack.c.l.b16 %v3612
    %v4273 = vunpack.c.h.b16 %v3612
    %v4274 = vunpack.c.l.b16 %v3613
    %v4275 = vunpack.c.h.b16 %v3613
    %v4276 = vunpack.c.l.b16 %v3614
    %v4277 = vunpack.c.h.b16 %v3614
    %v4278 = vunpack.c.l.b16 %v3615
    %v4279 = vunpack.c.h.b16 %v3615
    %v4280 = vunpack.c.l.b16 %v3616
    %v4281 = vunpack.c.h.b16 %v3616
    %v4282 = vunpack.c.l.b16 %v3617
    %v4283 = vunpack.c.h.b16 %v3617
    %v4284 = vunpack.c.l.b16 %v3618
    %v4285 = vunpack.c.h.b16 %v3618
    %v4286 = vunpack.c.l.b16 %v3619
    %v4287 = vunpack.c.h.b16 %v3619
    %v4288 = vunpack.c.l.b16 %v3620
    %v4289 = vunpack.c.h.b16 %v3620
    %v4290 = vunpack.c.l.b16 %v3621
    %v4291 = vunpack.c.h.b16 %v3621
    %v4292 = vunpack.c.l.b16 %v3622
    %v4293 = vunpack.c.h.b16 %v3622
    %v4294 = vunpack.c.l.b16 %v3623
    %v4295 = vunpack.c.h.b16 %v3623
    %v4296 = vunpack.c.l.b16 %v3624
    %v4297 = vunpack.c.h.b16 %v3624
    %v4298 = vunpack.c.l.b16 %v3625
    %v4299 = vunpack.c.h.b16 %v3625
    %v4300 = vunpack.c.l.b16 %v3626
    %v4301 = vunpack.c.h.b16 %v3626
    %v4302 = vunpack.c.l.b16 %v3627
    %v4303 = vunpack.c.h.b16 %v3627
    %v4304 = vunpack.c.l.b16 %v3628
    %v4305 = vunpack.c.h.b16 %v3628
    %v4306 = vunpack.c.l.b16 %v3629
    %v4307 = vunpack.c.h.b16 %v3629
    %v4308 = vunpack.c.l.b16 %v3630
    %v4309 = vunpack.c.h.b16 %v3630
    %v4310 = vunpack.c.l.b16 %v3631
    %v4311 = vunpack.c.h.b16 %v3631
    %v4312 = vunpack.c.l.b16 %v3632
    %v4313 = vunpack.c.h.b16 %v3632
    %v4314 = vunpack.c.l.b16 %v3633
    %v4315 = vunpack.c.h.b16 %v3633
    %v4316 = vunpack.c.l.b16 %v3634
    %v4317 = vunpack.c.h.b16 %v3634
    %v4318 = vunpack.c.l.b16 %v3635
    %v4319 = vunpack.c.h.b16 %v3635
    %v4320 = vunpack.c.l.b16 %v3636
    %v4321 = vunpack.c.h.b16 %v3636
    %v4322 = vunpack.c.l.b16 %v3637
    %v4323 = vunpack.c.h.b16 %v3637
    %v4324 = vunpack.c.l.b16 %v3638
    %v4325 = vunpack.c.h.b16 %v3638
    %v4326 = vunpack.c.l.b16 %v3639
    %v4327 = vunpack.c.h.b16 %v3639
    %v4328 = vunpack.c.l.b16 %v3640
    %v4329 = vunpack.c.h.b16 %v3640
    %v4330 = vunpack.c.l.b16 %v3641
    %v4331 = vunpack.c.h.b16 %v3641
    %v4332 = vunpack.c.l.b16 %v3642
    %v4333 = vunpack.c.h.b16 %v3642
    %v4334 = vunpack.c.l.b16 %v3643
    %v4335 = vunpack.c.h.b16 %v3643
    %v4336 = vunpack.c.l.b16 %v3644
    %v4337 = vunpack.c.h.b16 %v3644
    %v4338 = vunpack.c.l.b16 %v3645
    %v4339 = vunpack.c.h.b16 %v3645
    %v4340 = vunpack.c.l.b16 %v3646
    %v4341 = vunpack.c.h.b16 %v3646
    %v4342 = vunpack.c.l.b16 %v3647
    %v4343 = vunpack.c.h.b16 %v3647
    %v4344 = vunpack.c.l.b16 %v3648
    %v4345 = vunpack.c.h.b16 %v3648
    %v4346 = vunpack.c.l.b16 %v3649
    %v4347 = vunpack.c.h.b16 %v3649
    %v4348 = vunpack.c.l.b16 %v3650
    %v4349 = vunpack.c.h.b16 %v3650
    %v4350 = vunpack.c.l.b16 %v3651
    %v4351 = vunpack.c.h.b16 %v3651
    %v4352 = vunpack.c.l.b16 %v3652
    %v4353 = vunpack.c.h.b16 %v3652
    %v4354 = vunpack.c.l.b16 %v3653
    %v4355 = vunpack.c.h.b16 %v3653
    %v4356 = vunpack.c.l.b16 %v3654
    %v4357 = vunpack.c.h.b16 %v3654
    %v4358 = vunpack.c.l.b16 %v3655
    %v4359 = vunpack.c.h.b16 %v3655
    %v4360 = vunpack.c.l.b16 %v3656
    %v4361 = vunpack.c.h.b16 %v3656
    %v4362 = vunpack.c.l.b16 %v3657
    %v4363 = vunpack.c.h.b16 %v3657
    %v4364 = vunpack.c.l.b16 %v3658
    %v4365 = vunpack.c.h.b16 %v3658
    %v4366 = vunpack.c.l.b16 %v3659
    %v4367 = vunpack.c.h.b16 %v3659
    %v4368 = vunpack.c.l.b16 %v3660
    %v4369 = vunpack.c.h.b16 %v3660
    %v4370 = vunpack.c.l.b16 %v3661
    %v4371 = vunpack.c.h.b16 %v3661
    %v4372 = vunpack.c.l.b16 %v3662
    %v4373 = vunpack.c.h.b16 %v3662
    %v4374 = vunpack.c.l.b16 %v3663
    %v4375 = vunpack.c.h.b16 %v3663
    %v4376 = vunpack.c.l.b16 %v3664
    %v4377 = vunpack.c.h.b16 %v3664
    %v4378 = vunpack.c.l.b16 %v3665
    %v4379 = vunpack.c.h.b16 %v3665
    %v4380 = vunpack.c.l.b16 %v3666
    %v4381 = vunpack.c.h.b16 %v3666
    %v4382 = vunpack.c.l.b16 %v3667
    %v4383 = vunpack.c.h.b16 %v3667
    %v4384 = vunpack.c.l.b16 %v3668
    %v4385 = vunpack.c.h.b16 %v3668
    %v4386 = vunpack.c.l.b16 %v3669
    %v4387 = vunpack.c.h.b16 %v3669
    %v4388 = vunpack.c.l.b16 %v3670
    %v4389 = vunpack.c.h.b16 %v3670
    %v4390 = vunpack.c.l.b16 %v3671
    %v4391 = vunpack.c.h.b16 %v3671
    %v4392 = vunpack.c.l.b16 %v3672
    %v4393 = vunpack.c.h.b16 %v3672
    %v4394 = vunpack.c.l.b16 %v3673
    %v4395 = vunpack.c.h.b16 %v3673
    %v4396 = vunpack.c.l.b16 %v3674
    %v4397 = vunpack.c.h.b16 %v3674
    %v4398 = vunpack.c.l.b16 %v3675
    %v4399 = vunpack.c.h.b16 %v3675
    %v4400 = vunpack.c.l.b16 %v3676
    %v4401 = vunpack.c.h.b16 %v3676
    %v4402 = vunpack.c.l.b16 %v3677
    %v4403 = vunpack.c.h.b16 %v3677
    %v4404 = vunpack.c.l.b16 %v3678
    %v4405 = vunpack.c.h.b16 %v3678
    %v4406 = vunpack.c.l.b16 %v3679
    %v4407 = vunpack.c.h.b16 %v3679
    %v4408 = vunpack.c.l.b16 %v3680
    %v4409 = vunpack.c.h.b16 %v3680
    %v4410 = vunpack.c.l.b16 %v3681
    %v4411 = vunpack.c.h.b16 %v3681
    %v4412 = vunpack.c.l.b16 %v3682
    %v4413 = vunpack.c.h.b16 %v3682
    %v4414 = vunpack.c.l.b16 %v3683
    %v4415 = vunpack.c.h.b16 %v3683
    %v4416 = vunpack.c.l.b16 %v3684
    %v4417 = vunpack.c.h.b16 %v3684
    %v4418 = vunpack.c.l.b16 %v3685
    %v4419 = vunpack.c.h.b16 %v3685
    %v4420 = vunpack.c.l.b16 %v3686
    %v4421 = vunpack.c.h.b16 %v3686
    %v4422 = vunpack.c.l.b16 %v3687
    %v4423 = vunpack.c.h.b16 %v3687
    %v4424 = vunpack.c.l.b16 %v3688
    %v4425 = vunpack.c.h.b16 %v3688
    %v4426 = vunpack.c.l.b16 %v3689
    %v4427 = vunpack.c.h.b16 %v3689
    %v4428 = vunpack.c.l.b16 %v3690
    %v4429 = vunpack.c.h.b16 %v3690
    %v4430 = vunpack.c.l.b16 %v3691
    %v4431 = vunpack.c.h.b16 %v3691
    %v4432 = vunpack.c.l.b16 %v3692
    %v4433 = vunpack.c.h.b16 %v3692
    %v4434 = vunpack.c.l.b16 %v3693
    %v4435 = vunpack.c.h.b16 %v3693
    %v4436 = vunpack.c.l.b16 %v3694
    %v4437 = vunpack.c.h.b16 %v3694
    %v4438 = vunpack.c.l.b16 %v3695
    %v4439 = vunpack.c.h.b16 %v3695
    %v4440 = vunpack.c.l.b16 %v3696
    %v4441 = vunpack.c.h.b16 %v3696
    %v4442 = vunpack.c.l.b16 %v3697
    %v4443 = vunpack.c.h.b16 %v3697
    %v4444 = vunpack.c.l.b16 %v3698
    %v4445 = vunpack.c.h.b16 %v3698
    %v4446 = vunpack.c.l.b16 %v3699
    %v4447 = vunpack.c.h.b16 %v3699
    %v4448 = vunpack.c.l.b16 %v3700
    %v4449 = vunpack.c.h.b16 %v3700
    %v4450 = vunpack.c.l.b16 %v3701
    %v4451 = vunpack.c.h.b16 %v3701
    %v4452 = vunpack.c.l.b16 %v3702
    %v4453 = vunpack.c.h.b16 %v3702
    %v4454 = vunpack.c.l.b16 %v3703
    %v4455 = vunpack.c.h.b16 %v3703
    %v4456 = vunpack.c.l.b16 %v3704
    %v4457 = vunpack.c.h.b16 %v3704
    %v4458 = vunpack.c.l.b16 %v3705
    %v4459 = vunpack.c.h.b16 %v3705
    %v4460 = vunpack.c.l.b16 %v3706
    %v4461 = vunpack.c.h.b16 %v3706
    %v4462 = vunpack.c.l.b16 %v3707
    %v4463 = vunpack.c.h.b16 %v3707
    %v4464 = vunpack.c.l.b16 %v3708
    %v4465 = vunpack.c.h.b16 %v3708
    %v4466 = vunpack.c.l.b16 %v3709
    %v4467 = vunpack.c.h.b16 %v3709
    %v4468 = vunpack.c.l.b16 %v3710
    %v4469 = vunpack.c.h.b16 %v3710
    %v4470 = vunpack.c.l.b16 %v3711
    %v4471 = vunpack.c.h.b16 %v3711
    %v4472 = vunpack.c.l.b16 %v3712
    %v4473 = vunpack.c.h.b16 %v3712
    %v4474 = vunpack.c.l.b16 %v3713
    %v4475 = vunpack.c.h.b16 %v3713
    %v4476 = vunpack.c.l.b16 %v3714
    %v4477 = vunpack.c.h.b16 %v3714
    %v4478 = vunpack.c.l.b16 %v3715
    %v4479 = vunpack.c.h.b16 %v3715
    %v4480 = vunpack.c.l.b16 %v3716
    %v4481 = vunpack.c.h.b16 %v3716
    %v4482 = vunpack.c.l.b16 %v3717
    %v4483 = vunpack.c.h.b16 %v3717
    %v4484 = vunpack.c.l.b16 %v3718
    %v4485 = vunpack.c.h.b16 %v3718
    %v4486 = vunpack.c.l.b16 %v3719
    %v4487 = vunpack.c.h.b16 %v3719
    %v4488 = vunpack.c.l.b16 %v3720
    %v4489 = vunpack.c.h.b16 %v3720
    %v4490 = vunpack.c.l.b16 %v3721
    %v4491 = vunpack.c.h.b16 %v3721
    %v4492 = vunpack.c.l.b16 %v3722
    %v4493 = vunpack.c.h.b16 %v3722
    %v4494 = vunpack.c.l.b16 %v3723
    %v4495 = vunpack.c.h.b16 %v3723
    %v4496 = vunpack.c.l.b16 %v3724
    %v4497 = vunpack.c.h.b16 %v3724
    %v4498 = vunpack.c.l.b16 %v3725
    %v4499 = vunpack.c.h.b16 %v3725
    %v4500 = vunpack.c.l.b16 %v3726
    %v4501 = vunpack.c.h.b16 %v3726
    %v4502 = vunpack.c.l.b16 %v3727
    %v4503 = vunpack.c.h.b16 %v3727
    %v4504 = vunpack.c.l.b16 %v3728
    %v4505 = vunpack.c.h.b16 %v3728
    %v4506 = vunpack.c.l.b16 %v3729
    %v4507 = vunpack.c.h.b16 %v3729
    %v4508 = vunpack.c.l.b16 %v3730
    %v4509 = vunpack.c.h.b16 %v3730
    %v4510 = vunpack.c.l.b16 %v3731
    %v4511 = vunpack.c.h.b16 %v3731
    %v4512 = vunpack.c.l.b16 %v3732
    %v4513 = vunpack.c.h.b16 %v3732
    %v4514 = vunpack.c.l.b16 %v3733
    %v4515 = vunpack.c.h.b16 %v3733
    %v4516 = vunpack.c.l.b16 %v3734
    %v4517 = vunpack.c.h.b16 %v3734
    %v4518 = vunpack.c.l.b16 %v3735
    %v4519 = vunpack.c.h.b16 %v3735
    %v4520 = vunpack.c.l.b16 %v3736
    %v4521 = vunpack.c.h.b16 %v3736
    %v4522 = vunpack.c.l.b16 %v3737
    %v4523 = vunpack.c.h.b16 %v3737
    %v4524 = vunpack.c.l.b16 %v3738
    %v4525 = vunpack.c.h.b16 %v3738
    %v4526 = vunpack.c.l.b16 %v3739
    %v4527 = vunpack.c.h.b16 %v3739
    %v4528 = vunpack.c.l.b16 %v3740
    %v4529 = vunpack.c.h.b16 %v3740
    %v4530 = vunpack.c.l.b16 %v3741
    %v4531 = vunpack.c.h.b16 %v3741
    %v4532 = vunpack.c.l.b16 %v3742
    %v4533 = vunpack.c.h.b16 %v3742
    %v4534 = vunpack.c.l.b16 %v3743
    %v4535 = vunpack.c.h.b16 %v3743
    %v4536 = vunpack.c.l.b16 %v3744
    %v4537 = vunpack.c.h.b16 %v3744
    %v4538 = vunpack.c.l.b16 %v3745
    %v4539 = vunpack.c.h.b16 %v3745
    %v4540 = vunpack.c.l.b16 %v3746
    %v4541 = vunpack.c.h.b16 %v3746
    %v4542 = vunpack.c.l.b16 %v3747
    %v4543 = vunpack.c.h.b16 %v3747
    %v4544 = vunpack.c.l.b16 %v3748
    %v4545 = vunpack.c.h.b16 %v3748
    %v4546 = vunpack.c.l.b16 %v3749
    %v4547 = vunpack.c.h.b16 %v3749
    %v4548 = vunpack.c.l.b16 %v3750
    %v4549 = vunpack.c.h.b16 %v3750
    %v4550 = vunpack.c.l.b16 %v3751
    %v4551 = vunpack.c.h.b16 %v3751
    %v4552 = vunpack.c.l.b16 %v3752
    %v4553 = vunpack.c.h.b16 %v3752
    %v4554 = vunpack.c.l.b16 %v3753
    %v4555 = vunpack.c.h.b16 %v3753
    %v4556 = vunpack.c.l.b16 %v3754
    %v4557 = vunpack.c.h.b16 %v3754
    %v4558 = vunpack.c.l.b16 %v3755
    %v4559 = vunpack.c.h.b16 %v3755
    %v4560 = vunpack.c.l.b16 %v3756
    %v4561 = vunpack.c.h.b16 %v3756
    %v4562 = vunpack.c.l.b16 %v3757
    %v4563 = vunpack.c.h.b16 %v3757
    %v4564 = vunpack.c.l.b16 %v3758
    %v4565 = vunpack.c.h.b16 %v3758
    %v4566 = vunpack.c.l.b16 %v3759
    %v4567 = vunpack.c.h.b16 %v3759
    %v4568 = vunpack.c.l.b16 %v3760
    %v4569 = vunpack.c.h.b16 %v3760
    %v4570 = vunpack.c.l.b16 %v3761
    %v4571 = vunpack.c.h.b16 %v3761
    %v4572 = vunpack.c.l.b16 %v3762
    %v4573 = vunpack.c.h.b16 %v3762
    %v4574 = vunpack.c.l.b16 %v3763
    %v4575 = vunpack.c.h.b16 %v3763
    %v4576 = vunpack.c.l.b16 %v3764
    %v4577 = vunpack.c.h.b16 %v3764
    %v4578 = vunpack.c.l.b16 %v3765
    %v4579 = vunpack.c.h.b16 %v3765
    %v4580 = vunpack.c.l.b16 %v3766
    %v4581 = vunpack.c.h.b16 %v3766
    %v4582 = vunpack.c.l.b16 %v3767
    %v4583 = vunpack.c.h.b16 %v3767
    %v4584 = vunpack.c.l.b16 %v3768
    %v4585 = vunpack.c.h.b16 %v3768
    %v4586 = vunpack.c.l.b16 %v3769
    %v4587 = vunpack.c.h.b16 %v3769
    %v4588 = vunpack.c.l.b16 %v3770
    %v4589 = vunpack.c.h.b16 %v3770
    %v4590 = vunpack.c.l.b16 %v3771
    %v4591 = vunpack.c.h.b16 %v3771
    %v4592 = vunpack.c.l.b16 %v3772
    %v4593 = vunpack.c.h.b16 %v3772
    %v4594 = vunpack.c.l.b16 %v3773
    %v4595 = vunpack.c.h.b16 %v3773
    %v4596 = vunpack.c.l.b16 %v3774
    %v4597 = vunpack.c.h.b16 %v3774
    %v4598 = vunpack.c.l.b16 %v3775
    %v4599 = vunpack.c.h.b16 %v3775
    %v4600 = vunpack.c.l.b16 %v3776
    %v4601 = vunpack.c.h.b16 %v3776
    %v4602 = vunpack.c.l.b16 %v3777
    %v4603 = vunpack.c.h.b16 %v3777
    %v4604 = vunpack.c.l.b16 %v3778
    %v4605 = vunpack.c.h.b16 %v3778
    %v4606 = vunpack.c.l.b16 %v3779
    %v4607 = vunpack.c.h.b16 %v3779
    %v4608 = vunpack.c.l.b16 %v3780
    %v4609 = vunpack.c.h.b16 %v3780
    %v4610 = vunpack.c.l.b16 %v3781
    %v4611 = vunpack.c.h.b16 %v3781
    %v4612 = vunpack.c.l.b16 %v3782
    %v4613 = vunpack.c.h.b16 %v3782
    %v4614 = vunpack.c.l.b16 %v3783
    %v4615 = vunpack.c.h.b16 %v3783
    %v4616 = vunpack.c.l.b16 %v3784
    %v4617 = vunpack.c.h.b16 %v3784
    %v4618 = vunpack.c.l.b16 %v3785
    %v4619 = vunpack.c.h.b16 %v3785
    %v4620 = vunpack.c.l.b16 %v3786
    %v4621 = vunpack.c.h.b16 %v3786
    %v4622 = vunpack.c.l.b16 %v3787
    %v4623 = vunpack.c.h.b16 %v3787
    %v4624 = vunpack.c.l.b16 %v3788
    %v4625 = vunpack.c.h.b16 %v3788
    %v4626 = vunpack.c.l.b16 %v3789
    %v4627 = vunpack.c.h.b16 %v3789
    %v4628 = vunpack.c.l.b16 %v3790
    %v4629 = vunpack.c.h.b16 %v3790
    %v4630 = vunpack.c.l.b16 %v3791
    %v4631 = vunpack.c.h.b16 %v3791
    %v4632 = vunpack.c.l.b16 %v3792
    %v4633 = vunpack.c.h.b16 %v3792
    %v4634 = vunpack.c.l.b16 %v3793
    %v4635 = vunpack.c.h.b16 %v3793
    %v4636 = vunpack.c.l.b16 %v3794
    %v4637 = vunpack.c.h.b16 %v3794
    %v4638 = vunpack.c.l.b16 %v3795
    %v4639 = vunpack.c.h.b16 %v3795
    %v4640 = vunpack.c.l.b16 %v3796
    %v4641 = vunpack.c.h.b16 %v3796
    %v4642 = vunpack.c.l.b16 %v3797
    %v4643 = vunpack.c.h.b16 %v3797
    %v4644 = vunpack.c.l.b16 %v3798
    %v4645 = vunpack.c.h.b16 %v3798
    %v4646 = vunpack.c.l.b16 %v3799
    %v4647 = vunpack.c.h.b16 %v3799
    %v4648 = vunpack.c.l.b16 %v3800
    %v4649 = vunpack.c.h.b16 %v3800
    %v4650 = vunpack.c.l.b16 %v3801
    %v4651 = vunpack.c.h.b16 %v3801
    %v4652 = vunpack.c.l.b16 %v3802
    %v4653 = vunpack.c.h.b16 %v3802
    %v4654 = vunpack.c.l.b16 %v3803
    %v4655 = vunpack.c.h.b16 %v3803
    %v4656 = vunpack.c.l.b16 %v3804
    %v4657 = vunpack.c.h.b16 %v3804
    %v4658 = vunpack.c.l.b16 %v3805
    %v4659 = vunpack.c.h.b16 %v3805
    %v4660 = vunpack.c.l.b16 %v3806
    %v4661 = vunpack.c.h.b16 %v3806
    %v4662 = vunpack.c.l.b16 %v3807
    %v4663 = vunpack.c.h.b16 %v3807
    %v4664 = vunpack.c.l.b16 %v3808
    %v4665 = vunpack.c.h.b16 %v3808
    %v4666 = vunpack.c.l.b16 %v3809
    %v4667 = vunpack.c.h.b16 %v3809
    %v4668 = vunpack.c.l.b16 %v3810
    %v4669 = vunpack.c.h.b16 %v3810
    %v4670 = vunpack.c.l.b16 %v3811
    %v4671 = vunpack.c.h.b16 %v3811
    %v4672 = vunpack.c.l.b16 %v3812
    %v4673 = vunpack.c.h.b16 %v3812
    %v4674 = vunpack.c.l.b16 %v3813
    %v4675 = vunpack.c.h.b16 %v3813
    %v4676 = vunpack.c.l.b16 %v3814
    %v4677 = vunpack.c.h.b16 %v3814
    %v4678 = vunpack.c.l.b16 %v3815
    %v4679 = vunpack.c.h.b16 %v3815
    %v4680 = vunpack.c.l.b16 %v3816
    %v4681 = vunpack.c.h.b16 %v3816
    %v4682 = vunpack.c.l.b16 %v3817
    %v4683 = vunpack.c.h.b16 %v3817
    %v4684 = vunpack.c.l.b16 %v3818
    %v4685 = vunpack.c.h.b16 %v3818
    %v4686 = vunpack.c.l.b16 %v3819
    %v4687 = vunpack.c.h.b16 %v3819
    %v4688 = vunpack.c.l.b16 %v3820
    %v4689 = vunpack.c.h.b16 %v3820
    %v4690 = vunpack.c.l.b16 %v3821
    %v4691 = vunpack.c.h.b16 %v3821
    %v4692 = vunpack.c.l.b16 %v3822
    %v4693 = vunpack.c.h.b16 %v3822
    %v4694 = vunpack.c.l.b16 %v3823
    %v4695 = vunpack.c.h.b16 %v3823
    %v4696 = vunpack.c.l.b16 %v3824
    %v4697 = vunpack.c.h.b16 %v3824
    %v4698 = vunpack.c.l.b16 %v3825
    %v4699 = vunpack.c.h.b16 %v3825
    %v4700 = vpack.c.b16 %v4128, %v4124
    %v4701 = vpack.c.b16 %v4129, %v4125
    %v4702 = vpack.c.b16 %v4130, %v4126
    %v4703 = vpack.c.b16 %v4131, %v4127
    %v4704 = vpack.c.b16 %v4136, %v4132
    %v4705 = vpack.c.b16 %v4137, %v4133
    %v4706 = vpack.c.b16 %v4138, %v4134
    %v4707 = vpack.c.b16 %v4139, %v4135
    %v4708 = vpack.c.b16 %v4144, %v4140
    %v4709 = vpack.c.b16 %v4145, %v4141
    %v4710 = vpack.c.b16 %v4146, %v4142
    %v4711 = vpack.c.b16 %v4147, %v4143
    %v4712 = vpack.c.b16 %v4152, %v4148
    %v4713 = vpack.c.b16 %v4153, %v4149
    %v4714 = vpack.c.b16 %v4154, %v4150
    %v4715 = vpack.c.b16 %v4155, %v4151
    %v4716 = vpack.c.b16 %v4160, %v4156
    %v4717 = vpack.c.b16 %v4161, %v4157
    %v4718 = vpack.c.b16 %v4162, %v4158
    %v4719 = vpack.c.b16 %v4163, %v4159
    %v4720 = vpack.c.b16 %v4168, %v4164
    %v4721 = vpack.c.b16 %v4169, %v4165
    %v4722 = vpack.c.b16 %v4170, %v4166
    %v4723 = vpack.c.b16 %v4171, %v4167
    %v4724 = vpack.c.b16 %v4176, %v4172
    %v4725 = vpack.c.b16 %v4177, %v4173
    %v4726 = vpack.c.b16 %v4178, %v4174
    %v4727 = vpack.c.b16 %v4179, %v4175
    %v4728 = vpack.c.b16 %v4184, %v4180
    %v4729 = vpack.c.b16 %v4185, %v4181
    %v4730 = vpack.c.b16 %v4186, %v4182
    %v4731 = vpack.c.b16 %v4187, %v4183
    %v4732 = vpack.c.b16 %v4192, %v4188
    %v4733 = vpack.c.b16 %v4193, %v4189
    %v4734 = vpack.c.b16 %v4194, %v4190
    %v4735 = vpack.c.b16 %v4195, %v4191
    %v4736 = vpack.c.b16 %v4200, %v4196
    %v4737 = vpack.c.b16 %v4201, %v4197
    %v4738 = vpack.c.b16 %v4202, %v4198
    %v4739 = vpack.c.b16 %v4203, %v4199
    %v4740 = vpack.c.b16 %v4208, %v4204
    %v4741 = vpack.c.b16 %v4209, %v4205
    %v4742 = vpack.c.b16 %v4210, %v4206
    %v4743 = vpack.c.b16 %v4211, %v4207
    %v4744 = vpack.c.b16 %v4216, %v4212
    %v4745 = vpack.c.b16 %v4217, %v4213
    %v4746 = vpack.c.b16 %v4218, %v4214
    %v4747 = vpack.c.b16 %v4219, %v4215
    %v4748 = vpack.c.b16 %v4224, %v4220
    %v4749 = vpack.c.b16 %v4225, %v4221
    %v4750 = vpack.c.b16 %v4226, %v4222
    %v4751 = vpack.c.b16 %v4227, %v4223
    %v4752 = vpack.c.b16 %v4232, %v4228
    %v4753 = vpack.c.b16 %v4233, %v4229
    %v4754 = vpack.c.b16 %v4234, %v4230
    %v4755 = vpack.c.b16 %v4235, %v4231
    %v4756 = vpack.c.b16 %v4240, %v4236
    %v4757 = vpack.c.b16 %v4241, %v4237
    %v4758 = vpack.c.b16 %v4242, %v4238
    %v4759 = vpack.c.b16 %v4243, %v4239
    %v4760 = vpack.c.b16 %v4248, %v4244
    %v4761 = vpack.c.b16 %v4249, %v4245
    %v4762 = vpack.c.b16 %v4250, %v4246
    %v4763 = vpack.c.b16 %v4251, %v4247
    %v4764 = vpack.c.b16 %v4256, %v4252
    %v4765 = vpack.c.b16 %v4257, %v4253
    %v4766 = vpack.c.b16 %v4258, %v4254
    %v4767 = vpack.c.b16 %v4259, %v4255
    %v4768 = vpack.c.b16 %v4264, %v4260
    %v4769 = vpack.c.b16 %v4265, %v4261
    %v4770 = vpack.c.b16 %v4266, %v4262
    %v4771 = vpack.c.b16 %v4267, %v4263
    %v4772 = vpack.c.b16 %v4272, %v4268
    %v4773 = vpack.c.b16 %v4273, %v4269
    %v4774 = vpack.c.b16 %v4274, %v4270
    %v4775 = vpack.c.b16 %v4275, %v4271
    %v4776 = vpack.c.b16 %v4280, %v4276
    %v4777 = vpack.c.b16 %v4281, %v4277
    %v4778 = vpack.c.b16 %v4282, %v4278
    %v4779 = vpack.c.b16 %v4283, %v4279
    %v4780 = vpack.c.b16 %v4288, %v4284
    %v4781 = vpack.c.b16 %v4289, %v4285
    %v4782 = vpack.c.b16 %v4290, %v4286
    %v4783 = vpack.c.b16 %v4291, %v4287
    %v4784 = vpack.c.b16 %v4296, %v4292
    %v4785 = vpack.c.b16 %v4297, %v4293
    %v4786 = vpack.c.b16 %v4298, %v4294
    %v4787 = vpack.c.b16 %v4299, %v4295
    %v4788 = vpack.c.b16 %v4304, %v4300
    %v4789 = vpack.c.b16 %v4305, %v4301
    %v4790 = vpack.c.b16 %v4306, %v4302
    %v4791 = vpack.c.b16 %v4307, %v4303
    %v4792 = vpack.c.b16 %v4312, %v4308
    %v4793 = vpack.c.b16 %v4313, %v4309
    %v4794 = vpack.c.b16 %v4314, %v4310
    %v4795 = vpack.c.b16 %v4315, %v4311
    %v4796 = vpack.c.b16 %v4320, %v4316
    %v4797 = vpack.c.b16 %v4321, %v4317
    %v4798 = vpack.c.b16 %v4322, %v4318
    %v4799 = vpack.c.b16 %v4323, %v4319
    %v4800 = vpack.c.b16 %v4328, %v4324
    %v4801 = vpack.c.b16 %v4329, %v4325
    %v4802 = vpack.c.b16 %v4330, %v4326
    %v4803 = vpack.c.b16 %v4331, %v4327
    %v4804 = vpack.c.b16 %v4336, %v4332
    %v4805 = vpack.c.b16 %v4337, %v4333
    %v4806 = vpack.c.b16 %v4338, %v4334
    %v4807 = vpack.c.b16 %v4339, %v4335
    %v4808 = vpack.c.b16 %v4344, %v4340
    %v4809 = vpack.c.b16 %v4345, %v4341
    %v4810 = vpack.c.b16 %v4346, %v4342
    %v4811 = vpack.c.b16 %v4347, %v4343
    %v4812 = vpack.c.b16 %v4352, %v4348
    %v4813 = vpack.c.b16 %v4353, %v4349
    %v4814 = vpack.c.b16 %v4354, %v4350
    %v4815 = vpack.c.b16 %v4355, %v4351
    %v4816 = vpack.c.b16 %v4360, %v4356
    %v4817 = vpack.c.b16 %v4361, %v4357
    %v4818 = vpack.c.b16 %v4362, %v4358
    %v4819 = vpack.c.b16 %v4363, %v4359
    %v4820 = vpack.c.b16 %v4368, %v4364
    %v4821 = vpack.c.b16 %v4369, %v4365
    %v4822 = vpack.c.b16 %v4370, %v4366
    %v4823 = vpack.c.b16 %v4371, %v4367
    %v4824 = vpack.c.b16 %v4376, %v4372
    %v4825 = vpack.c.b16 %v4377, %v4373
    %v4826 = vpack.c.b16 %v4378, %v4374
    %v4827 = vpack.c.b16 %v4379, %v4375
    %v4828 = vpack.c.b16 %v4384, %v4380
    %v4829 = vpack.c.b16 %v4385, %v4381
    %v4830 = vpack.c.b16 %v4386, %v4382
    %v4831 = vpack.c.b16 %v4387, %v4383
    %v4832 = vpack.c.b16 %v4392, %v4388
    %v4833 = vpack.c.b16 %v4393, %v4389
    %v4834 = vpack.c.b16 %v4394, %v4390
    %v4835 = vpack.c.b16 %v4395, %v4391
    %v4836 = vpack.c.b16 %v4400, %v4396
    %v4837 = vpack.c.b16 %v4401, %v4397
    %v4838 = vpack.c.b16 %v4402, %v4398
    %v4839 = vpack.c.b16 %v4403, %v4399
    %v4840 = vpack.c.b16 %v4408, %v4404
    %v4841 = vpack.c.b16 %v4409, %v4405
    %v4842 = vpack.c.b16 %v4410, %v4406
    %v4843 = vpack.c.b16 %v4411, %v4407
    %v4844 = vpack.c.b16 %v4416, %v4412
    %v4845 = vpack.c.b16 %v4417, %v4413
    %v4846 = vpack.c.b16 %v4418, %v4414
    %v4847 = vpack.c.b16 %v4419, %v4415
    %v4848 = vpack.c.b16 %v4424, %v4420
    %v4849 = vpack.c.b16 %v4425, %v4421
    %v4850 = vpack.c.b16 %v4426, %v4422
    %v4851 = vpack.c.b16 %v4427, %v4423
    %v4852 = vpack.c.b16 %v4432, %v4428
    %v4853 = vpack.c.b16 %v4433, %v4429
    %v4854 = vpack.c.b16 %v4434, %v4430
    %v4855 = vpack.c.b16 %v4435, %v4431
    %v4856 = vpack.c.b16 %v4440, %v4436
    %v4857 = vpack.c.b16 %v4441, %v4437
    %v4858 = vpack.c.b16 %v4442, %v4438
    %v4859 = vpack.c.b16 %v4443, %v4439
    %v4860 = vpack.c.b16 %v4448, %v4444
    %v4861 = vpack.c.b16 %v4449, %v4445
    %v4862 = vpack.c.b16 %v4450, %v4446
    %v4863 = vpack.c.b16 %v4451, %v4447
    %v4864 = vpack.c.b16 %v4456, %v4452
    %v4865 = vpack.c.b16 %v4457, %v4453
    %v4866 = vpack.c.b16 %v4458, %v4454
    %v4867 = vpack.c.b16 %v4459, %v4455
    %v4868 = vpack.c.b16 %v4464, %v4460
    %v4869 = vpack.c.b16 %v4465, %v4461
    %v4870 = vpack.c.b16 %v4466, %v4462
    %v4871 = vpack.c.b16 %v4467, %v4463
    %v4872 = vpack.c.b16 %v4472, %v4468
    %v4873 = vpack.c.b16 %v4473, %v4469
    %v4874 = vpack.c.b16 %v4474, %v4470
    %v4875 = vpack.c.b16 %v4475, %v4471
    %v4876 = vpack.c.b16 %v4480, %v4476
    %v4877 = vpack.c.b16 %v4481, %v4477
    %v4878 = vpack.c.b16 %v4482, %v4478
    %v4879 = vpack.c.b16 %v4483, %v4479
    %v4880 = vpack.c.b16 %v4488, %v4484
    %v4881 = vpack.c.b16 %v4489, %v4485
    %v4882 = vpack.c.b16 %v4490, %v4486
    %v4883 = vpack.c.b16 %v4491, %v4487
    %v4884 = vpack.c.b16 %v4496, %v4492
    %v4885 = vpack.c.b16 %v4497, %v4493
    %v4886 = vpack.c.b16 %v4498, %v4494
    %v4887 = vpack.c.b16 %v4499, %v4495
    %v4888 = vpack.c.b16 %v4504, %v4500
    %v4889 = vpack.c.b16 %v4505, %v4501
    %v4890 = vpack.c.b16 %v4506, %v4502
    %v4891 = vpack.c.b16 %v4507, %v4503
    %v4892 = vpack.c.b16 %v4512, %v4508
    %v4893 = vpack.c.b16 %v4513, %v4509
    %v4894 = vpack.c.b16 %v4514, %v4510
    %v4895 = vpack.c.b16 %v4515, %v4511
    %v4896 = vpack.c.b16 %v4520, %v4516
    %v4897 = vpack.c.b16 %v4521, %v4517
    %v4898 = vpack.c.b16 %v4522, %v4518
    %v4899 = vpack.c.b16 %v4523, %v4519
    %v4900 = vpack.c.b16 %v4528, %v4524
    %v4901 = vpack.c.b16 %v4529, %v4525
    %v4902 = vpack.c.b16 %v4530, %v4526
    %v4903 = vpack.c.b16 %v4531, %v4527
    %v4904 = vpack.c.b16 %v4536, %v4532
    %v4905 = vpack.c.b16 %v4537, %v4533
    %v4906 = vpack.c.b16 %v4538, %v4534
    %v4907 = vpack.c.b16 %v4539, %v4535
    %v4908 = vpack.c.b16 %v4544, %v4540
    %v4909 = vpack.c.b16 %v4545, %v4541
    %v4910 = vpack.c.b16 %v4546, %v4542
    %v4911 = vpack.c.b16 %v4547, %v4543
    %v4912 = vpack.c.b16 %v4552, %v4548
    %v4913 = vpack.c.b16 %v4553, %v4549
    %v4914 = vpack.c.b16 %v4554, %v4550
    %v4915 = vpack.c.b16 %v4555, %v4551
    %v4916 = vpack.c.b16 %v4560, %v4556
    %v4917 = vpack.c.b16 %v4561, %v4557
    %v4918 = vpack.c.b16 %v4562, %v4558
    %v4919 = vpack.c.b16 %v4563, %v4559
    %v4920 = vpack.c.b16 %v4568, %v4564
    %v4921 = vpack.c.b16 %v4569, %v4565
    %v4922 = vpack.c.b16 %v4570, %v4566
    %v4923 = vpack.c.b16 %v4571, %v4567
    %v4924 = vpack.c.b16 %v4576, %v4572
    %v4925 = vpack.c.b16 %v4577, %v4573
    %v4926 = vpack.c.b16 %v4578, %v4574
    %v4927 = vpack.c.b16 %v4579, %v4575
    %v4928 = vpack.c.b16 %v4584, %v4580
    %v4929 = vpack.c.b16 %v4585, %v4581
    %v4930 = vpack.c.b16 %v4586, %v4582
    %v4931 = vpack.c.b16 %v4587, %v4583
    %v4932 = vpack.c.b16 %v4592, %v4588
    %v4933 = vpack.c.b16 %v4593, %v4589
    %v4934 = vpack.c.b16 %v4594, %v4590
    %v4935 = vpack.c.b16 %v4595, %v4591
    %v4936 = vpack.c.b16 %v4600, %v4596
    %v4937 = vpack.c.b16 %v4601, %v4597
    %v4938 = vpack.c.b16 %v4602, %v4598
    %v4939 = vpack.c.b16 %v4603, %v4599
    %v4940 = vpack.c.b16 %v4608, %v4604
    %v4941 = vpack.c.b16 %v4609, %v4605
    %v4942 = vpack.c.b16 %v4610, %v4606
    %v4943 = vpack.c.b16 %v4611, %v4607
    %v4944 = vpack.c.b16 %v4616, %v4612
    %v4945 = vpack.c.b16 %v4617, %v4613
    %v4946 = vpack.c.b16 %v4618, %v4614
    %v4947 = vpack.c.b16 %v4619, %v4615
    %v4948 = vpack.c.b16 %v4624, %v4620
    %v4949 = vpack.c.b16 %v4625, %v4621
    %v4950 = vpack.c.b16 %v4626, %v4622
    %v4951 = vpack.c.b16 %v4627, %v4623
    %v4952 = vpack.c.b16 %v4632, %v4628
    %v4953 = vpack.c.b16 %v4633, %v4629
    %v4954 = vpack.c.b16 %v4634, %v4630
    %v4955 = vpack.c.b16 %v4635, %v4631
    %v4956 = vpack.c.b16 %v4640, %v4636
    %v4957 = vpack.c.b16 %v4641, %v4637
    %v4958 = vpack.c.b16 %v4642, %v4638
    %v4959 = vpack.c.b16 %v4643, %v4639
    %v4960 = vpack.c.b16 %v4648, %v4644
    %v4961 = vpack.c.b16 %v4649, %v4645
    %v4962 = vpack.c.b16 %v4650, %v4646
    %v4963 = vpack.c.b16 %v4651, %v4647
    %v4964 = vpack.c.b16 %v4656, %v4652
    %v4965 = vpack.c.b16 %v4657, %v4653
    %v4966 = vpack.c.b16 %v4658, %v4654
    %v4967 = vpack.c.b16 %v4659, %v4655
    %v4968 = vpack.c.b16 %v4664, %v4660
    %v4969 = vpack.c.b16 %v4665, %v4661
    %v4970 = vpack.c.b16 %v4666, %v4662
    %v4971 = vpack.c.b16 %v4667, %v4663
    %v4972 = vpack.c.b16 %v4672, %v4668
    %v4973 = vpack.c.b16 %v4673, %v4669
    %v4974 = vpack.c.b16 %v4674, %v4670
    %v4975 = vpack.c.b16 %v4675, %v4671
    %v4976 = vpack.c.b16 %v4680, %v4676
    %v4977 = vpack.c.b16 %v4681, %v4677
    %v4978 = vpack.c.b16 %v4682, %v4678
    %v4979 = vpack.c.b16 %v4683, %v4679
    %v4980 = vpack.c.b16 %v4688, %v4684
    %v4981 = vpack.c.b16 %v4689, %v4685
    %v4982 = vpack.c.b16 %v4690, %v4686
    %v4983 = vpack.c.b16 %v4691, %v4687
    %v4984 = vpack.c.b16 %v4696, %v4692
    %v4985 = vpack.c.b16 %v4697, %v4693
    %v4986 = vpack.c.b16 %v4698, %v4694
    %v4987 = vpack.c.b16 %v4699, %v4695
    %5276 = vmatpush.bf16.msra.mxu0 %v4728
    %5277 = vmatpush.bf16.msra.mxu0 %v4724
    %5278 = vmatpush.bf16.msra.mxu0 %v4720
    %5279 = vmatpush.bf16.msra.mxu0 %v4716
    %5280 = vmatpush.bf16.msra.mxu0 %v4712
    %5281 = vmatpush.bf16.msra.mxu0 %v4708
    %5282 = vmatpush.bf16.msra.mxu0 %v4704
    %5283 = vmatpush.bf16.msra.mxu0 %v4700
    %5284 = vmatmul.bf16.gmra.mxu0 %v3394
    %v5285 = vpop.f32.mrf.mxu0
    %v5286 = vadd.f32 %v3828, %v5285
    %v5287 = vpop.f32.mrf.mxu0
    %v5288 = vadd.f32 %v3828, %v5287
    %5289 = vmatmul.bf16.gmra.mxu0 %v3403
    %v5290 = vpop.f32.mrf.mxu0
    %v5291 = vadd.f32 %v3828, %v5290
    %v5292 = vpop.f32.mrf.mxu0
    %v5293 = vadd.f32 %v3828, %v5292
    %5294 = vmatmul.bf16.gmra.mxu0 %v3412
    %v5295 = vpop.f32.mrf.mxu0
    %v5296 = vadd.f32 %v3828, %v5295
    %v5297 = vpop.f32.mrf.mxu0
    %v5298 = vadd.f32 %v3828, %v5297
    %5299 = vmatmul.bf16.gmra.mxu0 %v3421
    %v5300 = vpop.f32.mrf.mxu0
    %v5301 = vadd.f32 %v3828, %v5300
    %v5302 = vpop.f32.mrf.mxu0
    %v5303 = vadd.f32 %v3828, %v5302
    %5304 = vmatmul.bf16.gmra.mxu0 %v3430
    %v5305 = vpop.f32.mrf.mxu0
    %v5306 = vadd.f32 %v3828, %v5305
    %v5307 = vpop.f32.mrf.mxu0
    %v5308 = vadd.f32 %v3828, %v5307
    %5309 = vmatmul.bf16.gmra.mxu0 %v3439
    %v5310 = vpop.f32.mrf.mxu0
    %v5311 = vadd.f32 %v3828, %v5310
    %v5312 = vpop.f32.mrf.mxu0
    %v5313 = vadd.f32 %v3828, %v5312
    %5314 = vmatmul.bf16.gmra.mxu0 %v3448
    %v5315 = vpop.f32.mrf.mxu0
    %v5316 = vadd.f32 %v3828, %v5315
    %v5317 = vpop.f32.mrf.mxu0
    %v5318 = vadd.f32 %v3828, %v5317
    %5319 = vmatmul.bf16.gmra.mxu0 %v3457
    %v5320 = vpop.f32.mrf.mxu0
    %v5321 = vadd.f32 %v3828, %v5320
    %v5322 = vpop.f32.mrf.mxu0
    %v5323 = vadd.f32 %v3828, %v5322
    %5324 = vmatmul.bf16.gmra.mxu0 %v3466
    %v5325 = vpop.f32.mrf.mxu0
    %v5326 = vadd.f32 %v3828, %v5325
    %v5327 = vpop.f32.mrf.mxu0
    %v5328 = vadd.f32 %v3828, %v5327
    %5329 = vmatmul.bf16.gmra.mxu0 %v3475
    %v5330 = vpop.f32.mrf.mxu0
    %v5331 = vadd.f32 %v3828, %v5330
    %v5332 = vpop.f32.mrf.mxu0
    %v5333 = vadd.f32 %v3828, %v5332
    %5334 = vmatmul.bf16.gmra.mxu0 %v3484
    %v5335 = vpop.f32.mrf.mxu0
    %v5336 = vadd.f32 %v3828, %v5335
    %v5337 = vpop.f32.mrf.mxu0
    %v5338 = vadd.f32 %v3828, %v5337
    %5339 = vmatmul.bf16.gmra.mxu0 %v3493
    %v5340 = vpop.f32.mrf.mxu0
    %v5341 = vadd.f32 %v3828, %v5340
    %v5342 = vpop.f32.mrf.mxu0
    %v5343 = vadd.f32 %v3828, %v5342
    %5344 = vmatmul.bf16.gmra.mxu0 %v3502
    %v5345 = vpop.f32.mrf.mxu0
    %v5346 = vadd.f32 %v3828, %v5345
    %v5347 = vpop.f32.mrf.mxu0
    %v5348 = vadd.f32 %v3828, %v5347
    %5349 = vmatmul.bf16.gmra.mxu0 %v3511
    %v5350 = vpop.f32.mrf.mxu0
    %v5351 = vadd.f32 %v3828, %v5350
    %v5352 = vpop.f32.mrf.mxu0
    %v5353 = vadd.f32 %v3828, %v5352
    %5354 = vmatmul.bf16.gmra.mxu0 %v3520
    %v5355 = vpop.f32.mrf.mxu0
    %v5356 = vadd.f32 %v3828, %v5355
    %v5357 = vpop.f32.mrf.mxu0
    %v5358 = vadd.f32 %v3828, %v5357
    %5359 = vmatmul.bf16.gmra.mxu0 %v3529
    %v5360 = vpop.f32.mrf.mxu0
    %v5361 = vadd.f32 %v3828, %v5360
    %v5362 = vpop.f32.mrf.mxu0
    %v5363 = vadd.f32 %v3828, %v5362
    %5364 = vdwg.mxu0
    %5365 = vmatpush.bf16.msra.mxu0 %v4760
    %5366 = vmatpush.bf16.msra.mxu0 %v4756
    %5367 = vmatpush.bf16.msra.mxu0 %v4752
    %5368 = vmatpush.bf16.msra.mxu0 %v4748
    %5369 = vmatpush.bf16.msra.mxu0 %v4744
    %5370 = vmatpush.bf16.msra.mxu0 %v4740
    %5371 = vmatpush.bf16.msra.mxu0 %v4736
    %5372 = vmatpush.bf16.msra.mxu0 %v4732
    %5373 = vmatmul.bf16.gmra.mxu0 %v3395
    %v5374 = vpop.f32.mrf.mxu0
    %v5375 = vadd.f32 %v5286, %v5374
    %v5376 = vpop.f32.mrf.mxu0
    %v5377 = vadd.f32 %v5288, %v5376
    %5378 = vmatmul.bf16.gmra.mxu0 %v3404
    %v5379 = vpop.f32.mrf.mxu0
    %v5380 = vadd.f32 %v5291, %v5379
    %v5381 = vpop.f32.mrf.mxu0
    %v5382 = vadd.f32 %v5293, %v5381
    %5383 = vmatmul.bf16.gmra.mxu0 %v3413
    %v5384 = vpop.f32.mrf.mxu0
    %v5385 = vadd.f32 %v5296, %v5384
    %v5386 = vpop.f32.mrf.mxu0
    %v5387 = vadd.f32 %v5298, %v5386
    %5388 = vmatmul.bf16.gmra.mxu0 %v3422
    %v5389 = vpop.f32.mrf.mxu0
    %v5390 = vadd.f32 %v5301, %v5389
    %v5391 = vpop.f32.mrf.mxu0
    %v5392 = vadd.f32 %v5303, %v5391
    %5393 = vmatmul.bf16.gmra.mxu0 %v3431
    %v5394 = vpop.f32.mrf.mxu0
    %v5395 = vadd.f32 %v5306, %v5394
    %v5396 = vpop.f32.mrf.mxu0
    %v5397 = vadd.f32 %v5308, %v5396
    %5398 = vmatmul.bf16.gmra.mxu0 %v3440
    %v5399 = vpop.f32.mrf.mxu0
    %v5400 = vadd.f32 %v5311, %v5399
    %v5401 = vpop.f32.mrf.mxu0
    %v5402 = vadd.f32 %v5313, %v5401
    %5403 = vmatmul.bf16.gmra.mxu0 %v3449
    %v5404 = vpop.f32.mrf.mxu0
    %v5405 = vadd.f32 %v5316, %v5404
    %v5406 = vpop.f32.mrf.mxu0
    %v5407 = vadd.f32 %v5318, %v5406
    %5408 = vmatmul.bf16.gmra.mxu0 %v3458
    %v5409 = vpop.f32.mrf.mxu0
    %v5410 = vadd.f32 %v5321, %v5409
    %v5411 = vpop.f32.mrf.mxu0
    %v5412 = vadd.f32 %v5323, %v5411
    %5413 = vmatmul.bf16.gmra.mxu0 %v3467
    %v5414 = vpop.f32.mrf.mxu0
    %v5415 = vadd.f32 %v5326, %v5414
    %v5416 = vpop.f32.mrf.mxu0
    %v5417 = vadd.f32 %v5328, %v5416
    %5418 = vmatmul.bf16.gmra.mxu0 %v3476
    %v5419 = vpop.f32.mrf.mxu0
    %v5420 = vadd.f32 %v5331, %v5419
    %v5421 = vpop.f32.mrf.mxu0
    %v5422 = vadd.f32 %v5333, %v5421
    %5423 = vmatmul.bf16.gmra.mxu0 %v3485
    %v5424 = vpop.f32.mrf.mxu0
    %v5425 = vadd.f32 %v5336, %v5424
    %v5426 = vpop.f32.mrf.mxu0
    %v5427 = vadd.f32 %v5338, %v5426
    %5428 = vmatmul.bf16.gmra.mxu0 %v3494
    %v5429 = vpop.f32.mrf.mxu0
    %v5430 = vadd.f32 %v5341, %v5429
    %v5431 = vpop.f32.mrf.mxu0
    %v5432 = vadd.f32 %v5343, %v5431
    %5433 = vmatmul.bf16.gmra.mxu0 %v3503
    %v5434 = vpop.f32.mrf.mxu0
    %v5435 = vadd.f32 %v5346, %v5434
    %v5436 = vpop.f32.mrf.mxu0
    %v5437 = vadd.f32 %v5348, %v5436
    %5438 = vmatmul.bf16.gmra.mxu0 %v3512
    %v5439 = vpop.f32.mrf.mxu0
    %v5440 = vadd.f32 %v5351, %v5439
    %v5441 = vpop.f32.mrf.mxu0
    %v5442 = vadd.f32 %v5353, %v5441
    %5443 = vmatmul.bf16.gmra.mxu0 %v3521
    %v5444 = vpop.f32.mrf.mxu0
    %v5445 = vadd.f32 %v5356, %v5444
    %v5446 = vpop.f32.mrf.mxu0
    %v5447 = vadd.f32 %v5358, %v5446
    %5448 = vmatmul.bf16.gmra.mxu0 %v3530
    %v5449 = vpop.f32.mrf.mxu0
    %v5450 = vadd.f32 %v5361, %v5449
    %v5451 = vpop.f32.mrf.mxu0
    %v5452 = vadd.f32 %v5363, %v5451
    %5453 = vdwg.mxu0
    %5454 = vmatpush.bf16.msra.mxu0 %v4792
    %5455 = vmatpush.bf16.msra.mxu0 %v4788
    %5456 = vmatpush.bf16.msra.mxu0 %v4784
    %5457 = vmatpush.bf16.msra.mxu0 %v4780
    %5458 = vmatpush.bf16.msra.mxu0 %v4776
    %5459 = vmatpush.bf16.msra.mxu0 %v4772
    %5460 = vmatpush.bf16.msra.mxu0 %v4768
    %5461 = vmatpush.bf16.msra.mxu0 %v4764
    %5462 = vmatmul.bf16.gmra.mxu0 %v3396
    %v5463 = vpop.f32.mrf.mxu0
    %v5464 = vadd.f32 %v5375, %v5463
    %v5465 = vpop.f32.mrf.mxu0
    %v5466 = vadd.f32 %v5377, %v5465
    %5467 = vmatmul.bf16.gmra.mxu0 %v3405
    %v5468 = vpop.f32.mrf.mxu0
    %v5469 = vadd.f32 %v5380, %v5468
    %v5470 = vpop.f32.mrf.mxu0
    %v5471 = vadd.f32 %v5382, %v5470
    %5472 = vmatmul.bf16.gmra.mxu0 %v3414
    %v5473 = vpop.f32.mrf.mxu0
    %v5474 = vadd.f32 %v5385, %v5473
    %v5475 = vpop.f32.mrf.mxu0
    %v5476 = vadd.f32 %v5387, %v5475
    %5477 = vmatmul.bf16.gmra.mxu0 %v3423
    %v5478 = vpop.f32.mrf.mxu0
    %v5479 = vadd.f32 %v5390, %v5478
    %v5480 = vpop.f32.mrf.mxu0
    %v5481 = vadd.f32 %v5392, %v5480
    %5482 = vmatmul.bf16.gmra.mxu0 %v3432
    %v5483 = vpop.f32.mrf.mxu0
    %v5484 = vadd.f32 %v5395, %v5483
    %v5485 = vpop.f32.mrf.mxu0
    %v5486 = vadd.f32 %v5397, %v5485
    %5487 = vmatmul.bf16.gmra.mxu0 %v3441
    %v5488 = vpop.f32.mrf.mxu0
    %v5489 = vadd.f32 %v5400, %v5488
    %v5490 = vpop.f32.mrf.mxu0
    %v5491 = vadd.f32 %v5402, %v5490
    %5492 = vmatmul.bf16.gmra.mxu0 %v3450
    %v5493 = vpop.f32.mrf.mxu0
    %v5494 = vadd.f32 %v5405, %v5493
    %v5495 = vpop.f32.mrf.mxu0
    %v5496 = vadd.f32 %v5407, %v5495
    %5497 = vmatmul.bf16.gmra.mxu0 %v3459
    %v5498 = vpop.f32.mrf.mxu0
    %v5499 = vadd.f32 %v5410, %v5498
    %v5500 = vpop.f32.mrf.mxu0
    %v5501 = vadd.f32 %v5412, %v5500
    %5502 = vmatmul.bf16.gmra.mxu0 %v3468
    %v5503 = vpop.f32.mrf.mxu0
    %v5504 = vadd.f32 %v5415, %v5503
    %v5505 = vpop.f32.mrf.mxu0
    %v5506 = vadd.f32 %v5417, %v5505
    %5507 = vmatmul.bf16.gmra.mxu0 %v3477
    %v5508 = vpop.f32.mrf.mxu0
    %v5509 = vadd.f32 %v5420, %v5508
    %v5510 = vpop.f32.mrf.mxu0
    %v5511 = vadd.f32 %v5422, %v5510
    %5512 = vmatmul.bf16.gmra.mxu0 %v3486
    %v5513 = vpop.f32.mrf.mxu0
    %v5514 = vadd.f32 %v5425, %v5513
    %v5515 = vpop.f32.mrf.mxu0
    %v5516 = vadd.f32 %v5427, %v5515
    %5517 = vmatmul.bf16.gmra.mxu0 %v3495
    %v5518 = vpop.f32.mrf.mxu0
    %v5519 = vadd.f32 %v5430, %v5518
    %v5520 = vpop.f32.mrf.mxu0
    %v5521 = vadd.f32 %v5432, %v5520
    %5522 = vmatmul.bf16.gmra.mxu0 %v3504
    %v5523 = vpop.f32.mrf.mxu0
    %v5524 = vadd.f32 %v5435, %v5523
    %v5525 = vpop.f32.mrf.mxu0
    %v5526 = vadd.f32 %v5437, %v5525
    %5527 = vmatmul.bf16.gmra.mxu0 %v3513
    %v5528 = vpop.f32.mrf.mxu0
    %v5529 = vadd.f32 %v5440, %v5528
    %v5530 = vpop.f32.mrf.mxu0
    %v5531 = vadd.f32 %v5442, %v5530
    %5532 = vmatmul.bf16.gmra.mxu0 %v3522
    %v5533 = vpop.f32.mrf.mxu0
    %v5534 = vadd.f32 %v5445, %v5533
    %v5535 = vpop.f32.mrf.mxu0
    %v5536 = vadd.f32 %v5447, %v5535
    %5537 = vmatmul.bf16.gmra.mxu0 %v3531
    %v5538 = vpop.f32.mrf.mxu0
    %v5539 = vadd.f32 %v5450, %v5538
    %v5540 = vpop.f32.mrf.mxu0
    %v5541 = vadd.f32 %v5452, %v5540
    %5542 = vdwg.mxu0
    %5543 = vmatpush.bf16.msra.mxu0 %v4824
    %5544 = vmatpush.bf16.msra.mxu0 %v4820
    %5545 = vmatpush.bf16.msra.mxu0 %v4816
    %5546 = vmatpush.bf16.msra.mxu0 %v4812
    %5547 = vmatpush.bf16.msra.mxu0 %v4808
    %5548 = vmatpush.bf16.msra.mxu0 %v4804
    %5549 = vmatpush.bf16.msra.mxu0 %v4800
    %5550 = vmatpush.bf16.msra.mxu0 %v4796
    %5551 = vmatmul.bf16.gmra.mxu0 %v3397
    %v5552 = vpop.f32.mrf.mxu0
    %v5553 = vadd.f32 %v5464, %v5552
    %v5554 = vpop.f32.mrf.mxu0
    %v5555 = vadd.f32 %v5466, %v5554
    %5556 = vmatmul.bf16.gmra.mxu0 %v3406
    %v5557 = vpop.f32.mrf.mxu0
    %v5558 = vadd.f32 %v5469, %v5557
    %v5559 = vpop.f32.mrf.mxu0
    %v5560 = vadd.f32 %v5471, %v5559
    %5561 = vmatmul.bf16.gmra.mxu0 %v3415
    %v5562 = vpop.f32.mrf.mxu0
    %v5563 = vadd.f32 %v5474, %v5562
    %v5564 = vpop.f32.mrf.mxu0
    %v5565 = vadd.f32 %v5476, %v5564
    %5566 = vmatmul.bf16.gmra.mxu0 %v3424
    %v5567 = vpop.f32.mrf.mxu0
    %v5568 = vadd.f32 %v5479, %v5567
    %v5569 = vpop.f32.mrf.mxu0
    %v5570 = vadd.f32 %v5481, %v5569
    %5571 = vmatmul.bf16.gmra.mxu0 %v3433
    %v5572 = vpop.f32.mrf.mxu0
    %v5573 = vadd.f32 %v5484, %v5572
    %v5574 = vpop.f32.mrf.mxu0
    %v5575 = vadd.f32 %v5486, %v5574
    %5576 = vmatmul.bf16.gmra.mxu0 %v3442
    %v5577 = vpop.f32.mrf.mxu0
    %v5578 = vadd.f32 %v5489, %v5577
    %v5579 = vpop.f32.mrf.mxu0
    %v5580 = vadd.f32 %v5491, %v5579
    %5581 = vmatmul.bf16.gmra.mxu0 %v3451
    %v5582 = vpop.f32.mrf.mxu0
    %v5583 = vadd.f32 %v5494, %v5582
    %v5584 = vpop.f32.mrf.mxu0
    %v5585 = vadd.f32 %v5496, %v5584
    %5586 = vmatmul.bf16.gmra.mxu0 %v3460
    %v5587 = vpop.f32.mrf.mxu0
    %v5588 = vadd.f32 %v5499, %v5587
    %v5589 = vpop.f32.mrf.mxu0
    %v5590 = vadd.f32 %v5501, %v5589
    %5591 = vmatmul.bf16.gmra.mxu0 %v3469
    %v5592 = vpop.f32.mrf.mxu0
    %v5593 = vadd.f32 %v5504, %v5592
    %v5594 = vpop.f32.mrf.mxu0
    %v5595 = vadd.f32 %v5506, %v5594
    %5596 = vmatmul.bf16.gmra.mxu0 %v3478
    %v5597 = vpop.f32.mrf.mxu0
    %v5598 = vadd.f32 %v5509, %v5597
    %v5599 = vpop.f32.mrf.mxu0
    %v5600 = vadd.f32 %v5511, %v5599
    %5601 = vmatmul.bf16.gmra.mxu0 %v3487
    %v5602 = vpop.f32.mrf.mxu0
    %v5603 = vadd.f32 %v5514, %v5602
    %v5604 = vpop.f32.mrf.mxu0
    %v5605 = vadd.f32 %v5516, %v5604
    %5606 = vmatmul.bf16.gmra.mxu0 %v3496
    %v5607 = vpop.f32.mrf.mxu0
    %v5608 = vadd.f32 %v5519, %v5607
    %v5609 = vpop.f32.mrf.mxu0
    %v5610 = vadd.f32 %v5521, %v5609
    %5611 = vmatmul.bf16.gmra.mxu0 %v3505
    %v5612 = vpop.f32.mrf.mxu0
    %v5613 = vadd.f32 %v5524, %v5612
    %v5614 = vpop.f32.mrf.mxu0
    %v5615 = vadd.f32 %v5526, %v5614
    %5616 = vmatmul.bf16.gmra.mxu0 %v3514
    %v5617 = vpop.f32.mrf.mxu0
    %v5618 = vadd.f32 %v5529, %v5617
    %v5619 = vpop.f32.mrf.mxu0
    %v5620 = vadd.f32 %v5531, %v5619
    %5621 = vmatmul.bf16.gmra.mxu0 %v3523
    %v5622 = vpop.f32.mrf.mxu0
    %v5623 = vadd.f32 %v5534, %v5622
    %v5624 = vpop.f32.mrf.mxu0
    %v5625 = vadd.f32 %v5536, %v5624
    %5626 = vmatmul.bf16.gmra.mxu0 %v3532
    %v5627 = vpop.f32.mrf.mxu0
    %v5628 = vadd.f32 %v5539, %v5627
    %v5629 = vpop.f32.mrf.mxu0
    %v5630 = vadd.f32 %v5541, %v5629
    %5631 = vdwg.mxu0
    %5632 = vmatpush.bf16.msra.mxu0 %v4856
    %5633 = vmatpush.bf16.msra.mxu0 %v4852
    %5634 = vmatpush.bf16.msra.mxu0 %v4848
    %5635 = vmatpush.bf16.msra.mxu0 %v4844
    %5636 = vmatpush.bf16.msra.mxu0 %v4840
    %5637 = vmatpush.bf16.msra.mxu0 %v4836
    %5638 = vmatpush.bf16.msra.mxu0 %v4832
    %5639 = vmatpush.bf16.msra.mxu0 %v4828
    %5640 = vmatmul.bf16.gmra.mxu0 %v3398
    %v5641 = vpop.f32.mrf.mxu0
    %v5642 = vadd.f32 %v5553, %v5641
    %v5643 = vpop.f32.mrf.mxu0
    %v5644 = vadd.f32 %v5555, %v5643
    %5645 = vmatmul.bf16.gmra.mxu0 %v3407
    %v5646 = vpop.f32.mrf.mxu0
    %v5647 = vadd.f32 %v5558, %v5646
    %v5648 = vpop.f32.mrf.mxu0
    %v5649 = vadd.f32 %v5560, %v5648
    %5650 = vmatmul.bf16.gmra.mxu0 %v3416
    %v5651 = vpop.f32.mrf.mxu0
    %v5652 = vadd.f32 %v5563, %v5651
    %v5653 = vpop.f32.mrf.mxu0
    %v5654 = vadd.f32 %v5565, %v5653
    %5655 = vmatmul.bf16.gmra.mxu0 %v3425
    %v5656 = vpop.f32.mrf.mxu0
    %v5657 = vadd.f32 %v5568, %v5656
    %v5658 = vpop.f32.mrf.mxu0
    %v5659 = vadd.f32 %v5570, %v5658
    %5660 = vmatmul.bf16.gmra.mxu0 %v3434
    %v5661 = vpop.f32.mrf.mxu0
    %v5662 = vadd.f32 %v5573, %v5661
    %v5663 = vpop.f32.mrf.mxu0
    %v5664 = vadd.f32 %v5575, %v5663
    %5665 = vmatmul.bf16.gmra.mxu0 %v3443
    %v5666 = vpop.f32.mrf.mxu0
    %v5667 = vadd.f32 %v5578, %v5666
    %v5668 = vpop.f32.mrf.mxu0
    %v5669 = vadd.f32 %v5580, %v5668
    %5670 = vmatmul.bf16.gmra.mxu0 %v3452
    %v5671 = vpop.f32.mrf.mxu0
    %v5672 = vadd.f32 %v5583, %v5671
    %v5673 = vpop.f32.mrf.mxu0
    %v5674 = vadd.f32 %v5585, %v5673
    %5675 = vmatmul.bf16.gmra.mxu0 %v3461
    %v5676 = vpop.f32.mrf.mxu0
    %v5677 = vadd.f32 %v5588, %v5676
    %v5678 = vpop.f32.mrf.mxu0
    %v5679 = vadd.f32 %v5590, %v5678
    %5680 = vmatmul.bf16.gmra.mxu0 %v3470
    %v5681 = vpop.f32.mrf.mxu0
    %v5682 = vadd.f32 %v5593, %v5681
    %v5683 = vpop.f32.mrf.mxu0
    %v5684 = vadd.f32 %v5595, %v5683
    %5685 = vmatmul.bf16.gmra.mxu0 %v3479
    %v5686 = vpop.f32.mrf.mxu0
    %v5687 = vadd.f32 %v5598, %v5686
    %v5688 = vpop.f32.mrf.mxu0
    %v5689 = vadd.f32 %v5600, %v5688
    %5690 = vmatmul.bf16.gmra.mxu0 %v3488
    %v5691 = vpop.f32.mrf.mxu0
    %v5692 = vadd.f32 %v5603, %v5691
    %v5693 = vpop.f32.mrf.mxu0
    %v5694 = vadd.f32 %v5605, %v5693
    %5695 = vmatmul.bf16.gmra.mxu0 %v3497
    %v5696 = vpop.f32.mrf.mxu0
    %v5697 = vadd.f32 %v5608, %v5696
    %v5698 = vpop.f32.mrf.mxu0
    %v5699 = vadd.f32 %v5610, %v5698
    %5700 = vmatmul.bf16.gmra.mxu0 %v3506
    %v5701 = vpop.f32.mrf.mxu0
    %v5702 = vadd.f32 %v5613, %v5701
    %v5703 = vpop.f32.mrf.mxu0
    %v5704 = vadd.f32 %v5615, %v5703
    %5705 = vmatmul.bf16.gmra.mxu0 %v3515
    %v5706 = vpop.f32.mrf.mxu0
    %v5707 = vadd.f32 %v5618, %v5706
    %v5708 = vpop.f32.mrf.mxu0
    %v5709 = vadd.f32 %v5620, %v5708
    %5710 = vmatmul.bf16.gmra.mxu0 %v3524
    %v5711 = vpop.f32.mrf.mxu0
    %v5712 = vadd.f32 %v5623, %v5711
    %v5713 = vpop.f32.mrf.mxu0
    %v5714 = vadd.f32 %v5625, %v5713
    %5715 = vmatmul.bf16.gmra.mxu0 %v3533
    %v5716 = vpop.f32.mrf.mxu0
    %v5717 = vadd.f32 %v5628, %v5716
    %v5718 = vpop.f32.mrf.mxu0
    %v5719 = vadd.f32 %v5630, %v5718
    %5720 = vdwg.mxu0
    %5721 = vmatpush.bf16.msra.mxu0 %v4888
    %5722 = vmatpush.bf16.msra.mxu0 %v4884
    %5723 = vmatpush.bf16.msra.mxu0 %v4880
    %5724 = vmatpush.bf16.msra.mxu0 %v4876
    %5725 = vmatpush.bf16.msra.mxu0 %v4872
    %5726 = vmatpush.bf16.msra.mxu0 %v4868
    %5727 = vmatpush.bf16.msra.mxu0 %v4864
    %5728 = vmatpush.bf16.msra.mxu0 %v4860
    %5729 = vmatmul.bf16.gmra.mxu0 %v3399
    %v5730 = vpop.f32.mrf.mxu0
    %v5731 = vadd.f32 %v5642, %v5730
    %v5732 = vpop.f32.mrf.mxu0
    %v5733 = vadd.f32 %v5644, %v5732
    %5734 = vmatmul.bf16.gmra.mxu0 %v3408
    %v5735 = vpop.f32.mrf.mxu0
    %v5736 = vadd.f32 %v5647, %v5735
    %v5737 = vpop.f32.mrf.mxu0
    %v5738 = vadd.f32 %v5649, %v5737
    %5739 = vmatmul.bf16.gmra.mxu0 %v3417
    %v5740 = vpop.f32.mrf.mxu0
    %v5741 = vadd.f32 %v5652, %v5740
    %v5742 = vpop.f32.mrf.mxu0
    %v5743 = vadd.f32 %v5654, %v5742
    %5744 = vmatmul.bf16.gmra.mxu0 %v3426
    %v5745 = vpop.f32.mrf.mxu0
    %v5746 = vadd.f32 %v5657, %v5745
    %v5747 = vpop.f32.mrf.mxu0
    %v5748 = vadd.f32 %v5659, %v5747
    %5749 = vmatmul.bf16.gmra.mxu0 %v3435
    %v5750 = vpop.f32.mrf.mxu0
    %v5751 = vadd.f32 %v5662, %v5750
    %v5752 = vpop.f32.mrf.mxu0
    %v5753 = vadd.f32 %v5664, %v5752
    %5754 = vmatmul.bf16.gmra.mxu0 %v3444
    %v5755 = vpop.f32.mrf.mxu0
    %v5756 = vadd.f32 %v5667, %v5755
    %v5757 = vpop.f32.mrf.mxu0
    %v5758 = vadd.f32 %v5669, %v5757
    %5759 = vmatmul.bf16.gmra.mxu0 %v3453
    %v5760 = vpop.f32.mrf.mxu0
    %v5761 = vadd.f32 %v5672, %v5760
    %v5762 = vpop.f32.mrf.mxu0
    %v5763 = vadd.f32 %v5674, %v5762
    %5764 = vmatmul.bf16.gmra.mxu0 %v3462
    %v5765 = vpop.f32.mrf.mxu0
    %v5766 = vadd.f32 %v5677, %v5765
    %v5767 = vpop.f32.mrf.mxu0
    %v5768 = vadd.f32 %v5679, %v5767
    %5769 = vmatmul.bf16.gmra.mxu0 %v3471
    %v5770 = vpop.f32.mrf.mxu0
    %v5771 = vadd.f32 %v5682, %v5770
    %v5772 = vpop.f32.mrf.mxu0
    %v5773 = vadd.f32 %v5684, %v5772
    %5774 = vmatmul.bf16.gmra.mxu0 %v3480
    %v5775 = vpop.f32.mrf.mxu0
    %v5776 = vadd.f32 %v5687, %v5775
    %v5777 = vpop.f32.mrf.mxu0
    %v5778 = vadd.f32 %v5689, %v5777
    %5779 = vmatmul.bf16.gmra.mxu0 %v3489
    %v5780 = vpop.f32.mrf.mxu0
    %v5781 = vadd.f32 %v5692, %v5780
    %v5782 = vpop.f32.mrf.mxu0
    %v5783 = vadd.f32 %v5694, %v5782
    %5784 = vmatmul.bf16.gmra.mxu0 %v3498
    %v5785 = vpop.f32.mrf.mxu0
    %v5786 = vadd.f32 %v5697, %v5785
    %v5787 = vpop.f32.mrf.mxu0
    %v5788 = vadd.f32 %v5699, %v5787
    %5789 = vmatmul.bf16.gmra.mxu0 %v3507
    %v5790 = vpop.f32.mrf.mxu0
    %v5791 = vadd.f32 %v5702, %v5790
    %v5792 = vpop.f32.mrf.mxu0
    %v5793 = vadd.f32 %v5704, %v5792
    %5794 = vmatmul.bf16.gmra.mxu0 %v3516
    %v5795 = vpop.f32.mrf.mxu0
    %v5796 = vadd.f32 %v5707, %v5795
    %v5797 = vpop.f32.mrf.mxu0
    %v5798 = vadd.f32 %v5709, %v5797
    %5799 = vmatmul.bf16.gmra.mxu0 %v3525
    %v5800 = vpop.f32.mrf.mxu0
    %v5801 = vadd.f32 %v5712, %v5800
    %v5802 = vpop.f32.mrf.mxu0
    %v5803 = vadd.f32 %v5714, %v5802
    %5804 = vmatmul.bf16.gmra.mxu0 %v3534
    %v5805 = vpop.f32.mrf.mxu0
    %v5806 = vadd.f32 %v5717, %v5805
    %v5807 = vpop.f32.mrf.mxu0
    %v5808 = vadd.f32 %v5719, %v5807
    %5809 = vdwg.mxu0
    %5810 = vmatpush.bf16.msra.mxu0 %v4920
    %5811 = vmatpush.bf16.msra.mxu0 %v4916
    %5812 = vmatpush.bf16.msra.mxu0 %v4912
    %5813 = vmatpush.bf16.msra.mxu0 %v4908
    %5814 = vmatpush.bf16.msra.mxu0 %v4904
    %5815 = vmatpush.bf16.msra.mxu0 %v4900
    %5816 = vmatpush.bf16.msra.mxu0 %v4896
    %5817 = vmatpush.bf16.msra.mxu0 %v4892
    %5818 = vmatmul.bf16.gmra.mxu0 %v3400
    %v5819 = vpop.f32.mrf.mxu0
    %v5820 = vadd.f32 %v5731, %v5819
    %v5821 = vpop.f32.mrf.mxu0
    %v5822 = vadd.f32 %v5733, %v5821
    %5823 = vmatmul.bf16.gmra.mxu0 %v3409
    %v5824 = vpop.f32.mrf.mxu0
    %v5825 = vadd.f32 %v5736, %v5824
    %v5826 = vpop.f32.mrf.mxu0
    %v5827 = vadd.f32 %v5738, %v5826
    %5828 = vmatmul.bf16.gmra.mxu0 %v3418
    %v5829 = vpop.f32.mrf.mxu0
    %v5830 = vadd.f32 %v5741, %v5829
    %v5831 = vpop.f32.mrf.mxu0
    %v5832 = vadd.f32 %v5743, %v5831
    %5833 = vmatmul.bf16.gmra.mxu0 %v3427
    %v5834 = vpop.f32.mrf.mxu0
    %v5835 = vadd.f32 %v5746, %v5834
    %v5836 = vpop.f32.mrf.mxu0
    %v5837 = vadd.f32 %v5748, %v5836
    %5838 = vmatmul.bf16.gmra.mxu0 %v3436
    %v5839 = vpop.f32.mrf.mxu0
    %v5840 = vadd.f32 %v5751, %v5839
    %v5841 = vpop.f32.mrf.mxu0
    %v5842 = vadd.f32 %v5753, %v5841
    %5843 = vmatmul.bf16.gmra.mxu0 %v3445
    %v5844 = vpop.f32.mrf.mxu0
    %v5845 = vadd.f32 %v5756, %v5844
    %v5846 = vpop.f32.mrf.mxu0
    %v5847 = vadd.f32 %v5758, %v5846
    %5848 = vmatmul.bf16.gmra.mxu0 %v3454
    %v5849 = vpop.f32.mrf.mxu0
    %v5850 = vadd.f32 %v5761, %v5849
    %v5851 = vpop.f32.mrf.mxu0
    %v5852 = vadd.f32 %v5763, %v5851
    %5853 = vmatmul.bf16.gmra.mxu0 %v3463
    %v5854 = vpop.f32.mrf.mxu0
    %v5855 = vadd.f32 %v5766, %v5854
    %v5856 = vpop.f32.mrf.mxu0
    %v5857 = vadd.f32 %v5768, %v5856
    %5858 = vmatmul.bf16.gmra.mxu0 %v3472
    %v5859 = vpop.f32.mrf.mxu0
    %v5860 = vadd.f32 %v5771, %v5859
    %v5861 = vpop.f32.mrf.mxu0
    %v5862 = vadd.f32 %v5773, %v5861
    %5863 = vmatmul.bf16.gmra.mxu0 %v3481
    %v5864 = vpop.f32.mrf.mxu0
    %v5865 = vadd.f32 %v5776, %v5864
    %v5866 = vpop.f32.mrf.mxu0
    %v5867 = vadd.f32 %v5778, %v5866
    %5868 = vmatmul.bf16.gmra.mxu0 %v3490
    %v5869 = vpop.f32.mrf.mxu0
    %v5870 = vadd.f32 %v5781, %v5869
    %v5871 = vpop.f32.mrf.mxu0
    %v5872 = vadd.f32 %v5783, %v5871
    %5873 = vmatmul.bf16.gmra.mxu0 %v3499
    %v5874 = vpop.f32.mrf.mxu0
    %v5875 = vadd.f32 %v5786, %v5874
    %v5876 = vpop.f32.mrf.mxu0
    %v5877 = vadd.f32 %v5788, %v5876
    %5878 = vmatmul.bf16.gmra.mxu0 %v3508
    %v5879 = vpop.f32.mrf.mxu0
    %v5880 = vadd.f32 %v5791, %v5879
    %v5881 = vpop.f32.mrf.mxu0
    %v5882 = vadd.f32 %v5793, %v5881
    %5883 = vmatmul.bf16.gmra.mxu0 %v3517
    %v5884 = vpop.f32.mrf.mxu0
    %v5885 = vadd.f32 %v5796, %v5884
    %v5886 = vpop.f32.mrf.mxu0
    %v5887 = vadd.f32 %v5798, %v5886
    %5888 = vmatmul.bf16.gmra.mxu0 %v3526
    %v5889 = vpop.f32.mrf.mxu0
    %v5890 = vadd.f32 %v5801, %v5889
    %v5891 = vpop.f32.mrf.mxu0
    %v5892 = vadd.f32 %v5803, %v5891
    %5893 = vmatmul.bf16.gmra.mxu0 %v3535
    %v5894 = vpop.f32.mrf.mxu0
    %v5895 = vadd.f32 %v5806, %v5894
    %v5896 = vpop.f32.mrf.mxu0
    %v5897 = vadd.f32 %v5808, %v5896
    %5898 = vdwg.mxu0
    %5899 = vmatpush.bf16.msra.mxu0 %v4952
    %5900 = vmatpush.bf16.msra.mxu0 %v4948
    %5901 = vmatpush.bf16.msra.mxu0 %v4944
    %5902 = vmatpush.bf16.msra.mxu0 %v4940
    %5903 = vmatpush.bf16.msra.mxu0 %v4936
    %5904 = vmatpush.bf16.msra.mxu0 %v4932
    %5905 = vmatpush.bf16.msra.mxu0 %v4928
    %5906 = vmatpush.bf16.msra.mxu0 %v4924
    %5907 = vmatmul.bf16.gmra.mxu0 %v3401
    %v5908 = vpop.f32.mrf.mxu0
    %v5909 = vadd.f32 %v5820, %v5908
    %v5910 = vpop.f32.mrf.mxu0
    %v5911 = vadd.f32 %v5822, %v5910
    %5912 = vmatmul.bf16.gmra.mxu0 %v3410
    %v5913 = vpop.f32.mrf.mxu0
    %v5914 = vadd.f32 %v5825, %v5913
    %v5915 = vpop.f32.mrf.mxu0
    %v5916 = vadd.f32 %v5827, %v5915
    %5917 = vmatmul.bf16.gmra.mxu0 %v3419
    %v5918 = vpop.f32.mrf.mxu0
    %v5919 = vadd.f32 %v5830, %v5918
    %v5920 = vpop.f32.mrf.mxu0
    %v5921 = vadd.f32 %v5832, %v5920
    %5922 = vmatmul.bf16.gmra.mxu0 %v3428
    %v5923 = vpop.f32.mrf.mxu0
    %v5924 = vadd.f32 %v5835, %v5923
    %v5925 = vpop.f32.mrf.mxu0
    %v5926 = vadd.f32 %v5837, %v5925
    %5927 = vmatmul.bf16.gmra.mxu0 %v3437
    %v5928 = vpop.f32.mrf.mxu0
    %v5929 = vadd.f32 %v5840, %v5928
    %v5930 = vpop.f32.mrf.mxu0
    %v5931 = vadd.f32 %v5842, %v5930
    %5932 = vmatmul.bf16.gmra.mxu0 %v3446
    %v5933 = vpop.f32.mrf.mxu0
    %v5934 = vadd.f32 %v5845, %v5933
    %v5935 = vpop.f32.mrf.mxu0
    %v5936 = vadd.f32 %v5847, %v5935
    %5937 = vmatmul.bf16.gmra.mxu0 %v3455
    %v5938 = vpop.f32.mrf.mxu0
    %v5939 = vadd.f32 %v5850, %v5938
    %v5940 = vpop.f32.mrf.mxu0
    %v5941 = vadd.f32 %v5852, %v5940
    %5942 = vmatmul.bf16.gmra.mxu0 %v3464
    %v5943 = vpop.f32.mrf.mxu0
    %v5944 = vadd.f32 %v5855, %v5943
    %v5945 = vpop.f32.mrf.mxu0
    %v5946 = vadd.f32 %v5857, %v5945
    %5947 = vmatmul.bf16.gmra.mxu0 %v3473
    %v5948 = vpop.f32.mrf.mxu0
    %v5949 = vadd.f32 %v5860, %v5948
    %v5950 = vpop.f32.mrf.mxu0
    %v5951 = vadd.f32 %v5862, %v5950
    %5952 = vmatmul.bf16.gmra.mxu0 %v3482
    %v5953 = vpop.f32.mrf.mxu0
    %v5954 = vadd.f32 %v5865, %v5953
    %v5955 = vpop.f32.mrf.mxu0
    %v5956 = vadd.f32 %v5867, %v5955
    %5957 = vmatmul.bf16.gmra.mxu0 %v3491
    %v5958 = vpop.f32.mrf.mxu0
    %v5959 = vadd.f32 %v5870, %v5958
    %v5960 = vpop.f32.mrf.mxu0
    %v5961 = vadd.f32 %v5872, %v5960
    %5962 = vmatmul.bf16.gmra.mxu0 %v3500
    %v5963 = vpop.f32.mrf.mxu0
    %v5964 = vadd.f32 %v5875, %v5963
    %v5965 = vpop.f32.mrf.mxu0
    %v5966 = vadd.f32 %v5877, %v5965
    %5967 = vmatmul.bf16.gmra.mxu0 %v3509
    %v5968 = vpop.f32.mrf.mxu0
    %v5969 = vadd.f32 %v5880, %v5968
    %v5970 = vpop.f32.mrf.mxu0
    %v5971 = vadd.f32 %v5882, %v5970
    %5972 = vmatmul.bf16.gmra.mxu0 %v3518
    %v5973 = vpop.f32.mrf.mxu0
    %v5974 = vadd.f32 %v5885, %v5973
    %v5975 = vpop.f32.mrf.mxu0
    %v5976 = vadd.f32 %v5887, %v5975
    %5977 = vmatmul.bf16.gmra.mxu0 %v3527
    %v5978 = vpop.f32.mrf.mxu0
    %v5979 = vadd.f32 %v5890, %v5978
    %v5980 = vpop.f32.mrf.mxu0
    %v5981 = vadd.f32 %v5892, %v5980
    %5982 = vmatmul.bf16.gmra.mxu0 %v3536
    %v5983 = vpop.f32.mrf.mxu0
    %v5984 = vadd.f32 %v5895, %v5983
    %v5985 = vpop.f32.mrf.mxu0
    %v5986 = vadd.f32 %v5897, %v5985
    %5987 = vdwg.mxu0
    %5988 = vmatpush.bf16.msra.mxu0 %v4984
    %5989 = vmatpush.bf16.msra.mxu0 %v4980
    %5990 = vmatpush.bf16.msra.mxu0 %v4976
    %5991 = vmatpush.bf16.msra.mxu0 %v4972
    %5992 = vmatpush.bf16.msra.mxu0 %v4968
    %5993 = vmatpush.bf16.msra.mxu0 %v4964
    %5994 = vmatpush.bf16.msra.mxu0 %v4960
    %5995 = vmatpush.bf16.msra.mxu0 %v4956
    %5996 = vmatmul.bf16.gmra.mxu0 %v3402
    %v5997 = vpop.f32.mrf.mxu0
    %v5998 = vadd.f32 %v5909, %v5997
    %v5999 = vpop.f32.mrf.mxu0
    %v6000 = vadd.f32 %v5911, %v5999
    %6001 = vmatmul.bf16.gmra.mxu0 %v3411
    %v6002 = vpop.f32.mrf.mxu0
    %v6003 = vadd.f32 %v5914, %v6002
    %v6004 = vpop.f32.mrf.mxu0
    %v6005 = vadd.f32 %v5916, %v6004
    %6006 = vmatmul.bf16.gmra.mxu0 %v3420
    %v6007 = vpop.f32.mrf.mxu0
    %v6008 = vadd.f32 %v5919, %v6007
    %v6009 = vpop.f32.mrf.mxu0
    %v6010 = vadd.f32 %v5921, %v6009
    %6011 = vmatmul.bf16.gmra.mxu0 %v3429
    %v6012 = vpop.f32.mrf.mxu0
    %v6013 = vadd.f32 %v5924, %v6012
    %v6014 = vpop.f32.mrf.mxu0
    %v6015 = vadd.f32 %v5926, %v6014
    %6016 = vmatmul.bf16.gmra.mxu0 %v3438
    %v6017 = vpop.f32.mrf.mxu0
    %v6018 = vadd.f32 %v5929, %v6017
    %v6019 = vpop.f32.mrf.mxu0
    %v6020 = vadd.f32 %v5931, %v6019
    %6021 = vmatmul.bf16.gmra.mxu0 %v3447
    %v6022 = vpop.f32.mrf.mxu0
    %v6023 = vadd.f32 %v5934, %v6022
    %v6024 = vpop.f32.mrf.mxu0
    %v6025 = vadd.f32 %v5936, %v6024
    %6026 = vmatmul.bf16.gmra.mxu0 %v3456
    %v6027 = vpop.f32.mrf.mxu0
    %v6028 = vadd.f32 %v5939, %v6027
    %v6029 = vpop.f32.mrf.mxu0
    %v6030 = vadd.f32 %v5941, %v6029
    %6031 = vmatmul.bf16.gmra.mxu0 %v3465
    %v6032 = vpop.f32.mrf.mxu0
    %v6033 = vadd.f32 %v5944, %v6032
    %v6034 = vpop.f32.mrf.mxu0
    %v6035 = vadd.f32 %v5946, %v6034
    %6036 = vmatmul.bf16.gmra.mxu0 %v3474
    %v6037 = vpop.f32.mrf.mxu0
    %v6038 = vadd.f32 %v5949, %v6037
    %v6039 = vpop.f32.mrf.mxu0
    %v6040 = vadd.f32 %v5951, %v6039
    %6041 = vmatmul.bf16.gmra.mxu0 %v3483
    %v6042 = vpop.f32.mrf.mxu0
    %v6043 = vadd.f32 %v5954, %v6042
    %v6044 = vpop.f32.mrf.mxu0
    %v6045 = vadd.f32 %v5956, %v6044
    %6046 = vmatmul.bf16.gmra.mxu0 %v3492
    %v6047 = vpop.f32.mrf.mxu0
    %v6048 = vadd.f32 %v5959, %v6047
    %v6049 = vpop.f32.mrf.mxu0
    %v6050 = vadd.f32 %v5961, %v6049
    %6051 = vmatmul.bf16.gmra.mxu0 %v3501
    %v6052 = vpop.f32.mrf.mxu0
    %v6053 = vadd.f32 %v5964, %v6052
    %v6054 = vpop.f32.mrf.mxu0
    %v6055 = vadd.f32 %v5966, %v6054
    %6056 = vmatmul.bf16.gmra.mxu0 %v3510
    %v6057 = vpop.f32.mrf.mxu0
    %v6058 = vadd.f32 %v5969, %v6057
    %v6059 = vpop.f32.mrf.mxu0
    %v6060 = vadd.f32 %v5971, %v6059
    %6061 = vmatmul.bf16.gmra.mxu0 %v3519
    %v6062 = vpop.f32.mrf.mxu0
    %v6063 = vadd.f32 %v5974, %v6062
    %v6064 = vpop.f32.mrf.mxu0
    %v6065 = vadd.f32 %v5976, %v6064
    %6066 = vmatmul.bf16.gmra.mxu0 %v3528
    %v6067 = vpop.f32.mrf.mxu0
    %v6068 = vadd.f32 %v5979, %v6067
    %v6069 = vpop.f32.mrf.mxu0
    %v6070 = vadd.f32 %v5981, %v6069
    %6071 = vmatmul.bf16.gmra.mxu0 %v3537
    %v6072 = vpop.f32.mrf.mxu0
    %v6073 = vadd.f32 %v5984, %v6072
    %v6074 = vpop.f32.mrf.mxu0
    %v6075 = vadd.f32 %v5986, %v6074
    %6076 = vdwg.mxu0
    %6077 = vmatpush.bf16.msra.mxu0 %v4729
    %6078 = vmatpush.bf16.msra.mxu0 %v4725
    %6079 = vmatpush.bf16.msra.mxu0 %v4721
    %6080 = vmatpush.bf16.msra.mxu0 %v4717
    %6081 = vmatpush.bf16.msra.mxu0 %v4713
    %6082 = vmatpush.bf16.msra.mxu0 %v4709
    %6083 = vmatpush.bf16.msra.mxu0 %v4705
    %6084 = vmatpush.bf16.msra.mxu0 %v4701
    %6085 = vmatmul.bf16.gmra.mxu0 %v3394
    %v6086 = vpop.f32.mrf.mxu0
    %v6087 = vadd.f32 %v3829, %v6086
    %v6088 = vpop.f32.mrf.mxu0
    %v6089 = vadd.f32 %v3829, %v6088
    %6090 = vmatmul.bf16.gmra.mxu0 %v3403
    %v6091 = vpop.f32.mrf.mxu0
    %v6092 = vadd.f32 %v3829, %v6091
    %v6093 = vpop.f32.mrf.mxu0
    %v6094 = vadd.f32 %v3829, %v6093
    %6095 = vmatmul.bf16.gmra.mxu0 %v3412
    %v6096 = vpop.f32.mrf.mxu0
    %v6097 = vadd.f32 %v3829, %v6096
    %v6098 = vpop.f32.mrf.mxu0
    %v6099 = vadd.f32 %v3829, %v6098
    %6100 = vmatmul.bf16.gmra.mxu0 %v3421
    %v6101 = vpop.f32.mrf.mxu0
    %v6102 = vadd.f32 %v3829, %v6101
    %v6103 = vpop.f32.mrf.mxu0
    %v6104 = vadd.f32 %v3829, %v6103
    %6105 = vmatmul.bf16.gmra.mxu0 %v3430
    %v6106 = vpop.f32.mrf.mxu0
    %v6107 = vadd.f32 %v3829, %v6106
    %v6108 = vpop.f32.mrf.mxu0
    %v6109 = vadd.f32 %v3829, %v6108
    %6110 = vmatmul.bf16.gmra.mxu0 %v3439
    %v6111 = vpop.f32.mrf.mxu0
    %v6112 = vadd.f32 %v3829, %v6111
    %v6113 = vpop.f32.mrf.mxu0
    %v6114 = vadd.f32 %v3829, %v6113
    %6115 = vmatmul.bf16.gmra.mxu0 %v3448
    %v6116 = vpop.f32.mrf.mxu0
    %v6117 = vadd.f32 %v3829, %v6116
    %v6118 = vpop.f32.mrf.mxu0
    %v6119 = vadd.f32 %v3829, %v6118
    %6120 = vmatmul.bf16.gmra.mxu0 %v3457
    %v6121 = vpop.f32.mrf.mxu0
    %v6122 = vadd.f32 %v3829, %v6121
    %v6123 = vpop.f32.mrf.mxu0
    %v6124 = vadd.f32 %v3829, %v6123
    %6125 = vmatmul.bf16.gmra.mxu0 %v3466
    %v6126 = vpop.f32.mrf.mxu0
    %v6127 = vadd.f32 %v3829, %v6126
    %v6128 = vpop.f32.mrf.mxu0
    %v6129 = vadd.f32 %v3829, %v6128
    %6130 = vmatmul.bf16.gmra.mxu0 %v3475
    %v6131 = vpop.f32.mrf.mxu0
    %v6132 = vadd.f32 %v3829, %v6131
    %v6133 = vpop.f32.mrf.mxu0
    %v6134 = vadd.f32 %v3829, %v6133
    %6135 = vmatmul.bf16.gmra.mxu0 %v3484
    %v6136 = vpop.f32.mrf.mxu0
    %v6137 = vadd.f32 %v3829, %v6136
    %v6138 = vpop.f32.mrf.mxu0
    %v6139 = vadd.f32 %v3829, %v6138
    %6140 = vmatmul.bf16.gmra.mxu0 %v3493
    %v6141 = vpop.f32.mrf.mxu0
    %v6142 = vadd.f32 %v3829, %v6141
    %v6143 = vpop.f32.mrf.mxu0
    %v6144 = vadd.f32 %v3829, %v6143
    %6145 = vmatmul.bf16.gmra.mxu0 %v3502
    %v6146 = vpop.f32.mrf.mxu0
    %v6147 = vadd.f32 %v3829, %v6146
    %v6148 = vpop.f32.mrf.mxu0
    %v6149 = vadd.f32 %v3829, %v6148
    %6150 = vmatmul.bf16.gmra.mxu0 %v3511
    %v6151 = vpop.f32.mrf.mxu0
    %v6152 = vadd.f32 %v3829, %v6151
    %v6153 = vpop.f32.mrf.mxu0
    %v6154 = vadd.f32 %v3829, %v6153
    %6155 = vmatmul.bf16.gmra.mxu0 %v3520
    %v6156 = vpop.f32.mrf.mxu0
    %v6157 = vadd.f32 %v3829, %v6156
    %v6158 = vpop.f32.mrf.mxu0
    %v6159 = vadd.f32 %v3829, %v6158
    %6160 = vmatmul.bf16.gmra.mxu0 %v3529
    %v6161 = vpop.f32.mrf.mxu0
    %v6162 = vadd.f32 %v3829, %v6161
    %v6163 = vpop.f32.mrf.mxu0
    %v6164 = vadd.f32 %v3829, %v6163
    %6165 = vdwg.mxu0
    %6166 = vmatpush.bf16.msra.mxu0 %v4761
    %6167 = vmatpush.bf16.msra.mxu0 %v4757
    %6168 = vmatpush.bf16.msra.mxu0 %v4753
    %6169 = vmatpush.bf16.msra.mxu0 %v4749
    %6170 = vmatpush.bf16.msra.mxu0 %v4745
    %6171 = vmatpush.bf16.msra.mxu0 %v4741
    %6172 = vmatpush.bf16.msra.mxu0 %v4737
    %6173 = vmatpush.bf16.msra.mxu0 %v4733
    %6174 = vmatmul.bf16.gmra.mxu0 %v3395
    %v6175 = vpop.f32.mrf.mxu0
    %v6176 = vadd.f32 %v6087, %v6175
    %v6177 = vpop.f32.mrf.mxu0
    %v6178 = vadd.f32 %v6089, %v6177
    %6179 = vmatmul.bf16.gmra.mxu0 %v3404
    %v6180 = vpop.f32.mrf.mxu0
    %v6181 = vadd.f32 %v6092, %v6180
    %v6182 = vpop.f32.mrf.mxu0
    %v6183 = vadd.f32 %v6094, %v6182
    %6184 = vmatmul.bf16.gmra.mxu0 %v3413
    %v6185 = vpop.f32.mrf.mxu0
    %v6186 = vadd.f32 %v6097, %v6185
    %v6187 = vpop.f32.mrf.mxu0
    %v6188 = vadd.f32 %v6099, %v6187
    %6189 = vmatmul.bf16.gmra.mxu0 %v3422
    %v6190 = vpop.f32.mrf.mxu0
    %v6191 = vadd.f32 %v6102, %v6190
    %v6192 = vpop.f32.mrf.mxu0
    %v6193 = vadd.f32 %v6104, %v6192
    %6194 = vmatmul.bf16.gmra.mxu0 %v3431
    %v6195 = vpop.f32.mrf.mxu0
    %v6196 = vadd.f32 %v6107, %v6195
    %v6197 = vpop.f32.mrf.mxu0
    %v6198 = vadd.f32 %v6109, %v6197
    %6199 = vmatmul.bf16.gmra.mxu0 %v3440
    %v6200 = vpop.f32.mrf.mxu0
    %v6201 = vadd.f32 %v6112, %v6200
    %v6202 = vpop.f32.mrf.mxu0
    %v6203 = vadd.f32 %v6114, %v6202
    %6204 = vmatmul.bf16.gmra.mxu0 %v3449
    %v6205 = vpop.f32.mrf.mxu0
    %v6206 = vadd.f32 %v6117, %v6205
    %v6207 = vpop.f32.mrf.mxu0
    %v6208 = vadd.f32 %v6119, %v6207
    %6209 = vmatmul.bf16.gmra.mxu0 %v3458
    %v6210 = vpop.f32.mrf.mxu0
    %v6211 = vadd.f32 %v6122, %v6210
    %v6212 = vpop.f32.mrf.mxu0
    %v6213 = vadd.f32 %v6124, %v6212
    %6214 = vmatmul.bf16.gmra.mxu0 %v3467
    %v6215 = vpop.f32.mrf.mxu0
    %v6216 = vadd.f32 %v6127, %v6215
    %v6217 = vpop.f32.mrf.mxu0
    %v6218 = vadd.f32 %v6129, %v6217
    %6219 = vmatmul.bf16.gmra.mxu0 %v3476
    %v6220 = vpop.f32.mrf.mxu0
    %v6221 = vadd.f32 %v6132, %v6220
    %v6222 = vpop.f32.mrf.mxu0
    %v6223 = vadd.f32 %v6134, %v6222
    %6224 = vmatmul.bf16.gmra.mxu0 %v3485
    %v6225 = vpop.f32.mrf.mxu0
    %v6226 = vadd.f32 %v6137, %v6225
    %v6227 = vpop.f32.mrf.mxu0
    %v6228 = vadd.f32 %v6139, %v6227
    %6229 = vmatmul.bf16.gmra.mxu0 %v3494
    %v6230 = vpop.f32.mrf.mxu0
    %v6231 = vadd.f32 %v6142, %v6230
    %v6232 = vpop.f32.mrf.mxu0
    %v6233 = vadd.f32 %v6144, %v6232
    %6234 = vmatmul.bf16.gmra.mxu0 %v3503
    %v6235 = vpop.f32.mrf.mxu0
    %v6236 = vadd.f32 %v6147, %v6235
    %v6237 = vpop.f32.mrf.mxu0
    %v6238 = vadd.f32 %v6149, %v6237
    %6239 = vmatmul.bf16.gmra.mxu0 %v3512
    %v6240 = vpop.f32.mrf.mxu0
    %v6241 = vadd.f32 %v6152, %v6240
    %v6242 = vpop.f32.mrf.mxu0
    %v6243 = vadd.f32 %v6154, %v6242
    %6244 = vmatmul.bf16.gmra.mxu0 %v3521
    %v6245 = vpop.f32.mrf.mxu0
    %v6246 = vadd.f32 %v6157, %v6245
    %v6247 = vpop.f32.mrf.mxu0
    %v6248 = vadd.f32 %v6159, %v6247
    %6249 = vmatmul.bf16.gmra.mxu0 %v3530
    %v6250 = vpop.f32.mrf.mxu0
    %v6251 = vadd.f32 %v6162, %v6250
    %v6252 = vpop.f32.mrf.mxu0
    %v6253 = vadd.f32 %v6164, %v6252
    %6254 = vdwg.mxu0
    %6255 = vmatpush.bf16.msra.mxu0 %v4793
    %6256 = vmatpush.bf16.msra.mxu0 %v4789
    %6257 = vmatpush.bf16.msra.mxu0 %v4785
    %6258 = vmatpush.bf16.msra.mxu0 %v4781
    %6259 = vmatpush.bf16.msra.mxu0 %v4777
    %6260 = vmatpush.bf16.msra.mxu0 %v4773
    %6261 = vmatpush.bf16.msra.mxu0 %v4769
    %6262 = vmatpush.bf16.msra.mxu0 %v4765
    %6263 = vmatmul.bf16.gmra.mxu0 %v3396
    %v6264 = vpop.f32.mrf.mxu0
    %v6265 = vadd.f32 %v6176, %v6264
    %v6266 = vpop.f32.mrf.mxu0
    %v6267 = vadd.f32 %v6178, %v6266
    %6268 = vmatmul.bf16.gmra.mxu0 %v3405
    %v6269 = vpop.f32.mrf.mxu0
    %v6270 = vadd.f32 %v6181, %v6269
    %v6271 = vpop.f32.mrf.mxu0
    %v6272 = vadd.f32 %v6183, %v6271
    %6273 = vmatmul.bf16.gmra.mxu0 %v3414
    %v6274 = vpop.f32.mrf.mxu0
    %v6275 = vadd.f32 %v6186, %v6274
    %v6276 = vpop.f32.mrf.mxu0
    %v6277 = vadd.f32 %v6188, %v6276
    %6278 = vmatmul.bf16.gmra.mxu0 %v3423
    %v6279 = vpop.f32.mrf.mxu0
    %v6280 = vadd.f32 %v6191, %v6279
    %v6281 = vpop.f32.mrf.mxu0
    %v6282 = vadd.f32 %v6193, %v6281
    %6283 = vmatmul.bf16.gmra.mxu0 %v3432
    %v6284 = vpop.f32.mrf.mxu0
    %v6285 = vadd.f32 %v6196, %v6284
    %v6286 = vpop.f32.mrf.mxu0
    %v6287 = vadd.f32 %v6198, %v6286
    %6288 = vmatmul.bf16.gmra.mxu0 %v3441
    %v6289 = vpop.f32.mrf.mxu0
    %v6290 = vadd.f32 %v6201, %v6289
    %v6291 = vpop.f32.mrf.mxu0
    %v6292 = vadd.f32 %v6203, %v6291
    %6293 = vmatmul.bf16.gmra.mxu0 %v3450
    %v6294 = vpop.f32.mrf.mxu0
    %v6295 = vadd.f32 %v6206, %v6294
    %v6296 = vpop.f32.mrf.mxu0
    %v6297 = vadd.f32 %v6208, %v6296
    %6298 = vmatmul.bf16.gmra.mxu0 %v3459
    %v6299 = vpop.f32.mrf.mxu0
    %v6300 = vadd.f32 %v6211, %v6299
    %v6301 = vpop.f32.mrf.mxu0
    %v6302 = vadd.f32 %v6213, %v6301
    %6303 = vmatmul.bf16.gmra.mxu0 %v3468
    %v6304 = vpop.f32.mrf.mxu0
    %v6305 = vadd.f32 %v6216, %v6304
    %v6306 = vpop.f32.mrf.mxu0
    %v6307 = vadd.f32 %v6218, %v6306
    %6308 = vmatmul.bf16.gmra.mxu0 %v3477
    %v6309 = vpop.f32.mrf.mxu0
    %v6310 = vadd.f32 %v6221, %v6309
    %v6311 = vpop.f32.mrf.mxu0
    %v6312 = vadd.f32 %v6223, %v6311
    %6313 = vmatmul.bf16.gmra.mxu0 %v3486
    %v6314 = vpop.f32.mrf.mxu0
    %v6315 = vadd.f32 %v6226, %v6314
    %v6316 = vpop.f32.mrf.mxu0
    %v6317 = vadd.f32 %v6228, %v6316
    %6318 = vmatmul.bf16.gmra.mxu0 %v3495
    %v6319 = vpop.f32.mrf.mxu0
    %v6320 = vadd.f32 %v6231, %v6319
    %v6321 = vpop.f32.mrf.mxu0
    %v6322 = vadd.f32 %v6233, %v6321
    %6323 = vmatmul.bf16.gmra.mxu0 %v3504
    %v6324 = vpop.f32.mrf.mxu0
    %v6325 = vadd.f32 %v6236, %v6324
    %v6326 = vpop.f32.mrf.mxu0
    %v6327 = vadd.f32 %v6238, %v6326
    %6328 = vmatmul.bf16.gmra.mxu0 %v3513
    %v6329 = vpop.f32.mrf.mxu0
    %v6330 = vadd.f32 %v6241, %v6329
    %v6331 = vpop.f32.mrf.mxu0
    %v6332 = vadd.f32 %v6243, %v6331
    %6333 = vmatmul.bf16.gmra.mxu0 %v3522
    %v6334 = vpop.f32.mrf.mxu0
    %v6335 = vadd.f32 %v6246, %v6334
    %v6336 = vpop.f32.mrf.mxu0
    %v6337 = vadd.f32 %v6248, %v6336
    %6338 = vmatmul.bf16.gmra.mxu0 %v3531
    %v6339 = vpop.f32.mrf.mxu0
    %v6340 = vadd.f32 %v6251, %v6339
    %v6341 = vpop.f32.mrf.mxu0
    %v6342 = vadd.f32 %v6253, %v6341
    %6343 = vdwg.mxu0
    %6344 = vmatpush.bf16.msra.mxu0 %v4825
    %6345 = vmatpush.bf16.msra.mxu0 %v4821
    %6346 = vmatpush.bf16.msra.mxu0 %v4817
    %6347 = vmatpush.bf16.msra.mxu0 %v4813
    %6348 = vmatpush.bf16.msra.mxu0 %v4809
    %6349 = vmatpush.bf16.msra.mxu0 %v4805
    %6350 = vmatpush.bf16.msra.mxu0 %v4801
    %6351 = vmatpush.bf16.msra.mxu0 %v4797
    %6352 = vmatmul.bf16.gmra.mxu0 %v3397
    %v6353 = vpop.f32.mrf.mxu0
    %v6354 = vadd.f32 %v6265, %v6353
    %v6355 = vpop.f32.mrf.mxu0
    %v6356 = vadd.f32 %v6267, %v6355
    %6357 = vmatmul.bf16.gmra.mxu0 %v3406
    %v6358 = vpop.f32.mrf.mxu0
    %v6359 = vadd.f32 %v6270, %v6358
    %v6360 = vpop.f32.mrf.mxu0
    %v6361 = vadd.f32 %v6272, %v6360
    %6362 = vmatmul.bf16.gmra.mxu0 %v3415
    %v6363 = vpop.f32.mrf.mxu0
    %v6364 = vadd.f32 %v6275, %v6363
    %v6365 = vpop.f32.mrf.mxu0
    %v6366 = vadd.f32 %v6277, %v6365
    %6367 = vmatmul.bf16.gmra.mxu0 %v3424
    %v6368 = vpop.f32.mrf.mxu0
    %v6369 = vadd.f32 %v6280, %v6368
    %v6370 = vpop.f32.mrf.mxu0
    %v6371 = vadd.f32 %v6282, %v6370
    %6372 = vmatmul.bf16.gmra.mxu0 %v3433
    %v6373 = vpop.f32.mrf.mxu0
    %v6374 = vadd.f32 %v6285, %v6373
    %v6375 = vpop.f32.mrf.mxu0
    %v6376 = vadd.f32 %v6287, %v6375
    %6377 = vmatmul.bf16.gmra.mxu0 %v3442
    %v6378 = vpop.f32.mrf.mxu0
    %v6379 = vadd.f32 %v6290, %v6378
    %v6380 = vpop.f32.mrf.mxu0
    %v6381 = vadd.f32 %v6292, %v6380
    %6382 = vmatmul.bf16.gmra.mxu0 %v3451
    %v6383 = vpop.f32.mrf.mxu0
    %v6384 = vadd.f32 %v6295, %v6383
    %v6385 = vpop.f32.mrf.mxu0
    %v6386 = vadd.f32 %v6297, %v6385
    %6387 = vmatmul.bf16.gmra.mxu0 %v3460
    %v6388 = vpop.f32.mrf.mxu0
    %v6389 = vadd.f32 %v6300, %v6388
    %v6390 = vpop.f32.mrf.mxu0
    %v6391 = vadd.f32 %v6302, %v6390
    %6392 = vmatmul.bf16.gmra.mxu0 %v3469
    %v6393 = vpop.f32.mrf.mxu0
    %v6394 = vadd.f32 %v6305, %v6393
    %v6395 = vpop.f32.mrf.mxu0
    %v6396 = vadd.f32 %v6307, %v6395
    %6397 = vmatmul.bf16.gmra.mxu0 %v3478
    %v6398 = vpop.f32.mrf.mxu0
    %v6399 = vadd.f32 %v6310, %v6398
    %v6400 = vpop.f32.mrf.mxu0
    %v6401 = vadd.f32 %v6312, %v6400
    %6402 = vmatmul.bf16.gmra.mxu0 %v3487
    %v6403 = vpop.f32.mrf.mxu0
    %v6404 = vadd.f32 %v6315, %v6403
    %v6405 = vpop.f32.mrf.mxu0
    %v6406 = vadd.f32 %v6317, %v6405
    %6407 = vmatmul.bf16.gmra.mxu0 %v3496
    %v6408 = vpop.f32.mrf.mxu0
    %v6409 = vadd.f32 %v6320, %v6408
    %v6410 = vpop.f32.mrf.mxu0
    %v6411 = vadd.f32 %v6322, %v6410
    %6412 = vmatmul.bf16.gmra.mxu0 %v3505
    %v6413 = vpop.f32.mrf.mxu0
    %v6414 = vadd.f32 %v6325, %v6413
    %v6415 = vpop.f32.mrf.mxu0
    %v6416 = vadd.f32 %v6327, %v6415
    %6417 = vmatmul.bf16.gmra.mxu0 %v3514
    %v6418 = vpop.f32.mrf.mxu0
    %v6419 = vadd.f32 %v6330, %v6418
    %v6420 = vpop.f32.mrf.mxu0
    %v6421 = vadd.f32 %v6332, %v6420
    %6422 = vmatmul.bf16.gmra.mxu0 %v3523
    %v6423 = vpop.f32.mrf.mxu0
    %v6424 = vadd.f32 %v6335, %v6423
    %v6425 = vpop.f32.mrf.mxu0
    %v6426 = vadd.f32 %v6337, %v6425
    %6427 = vmatmul.bf16.gmra.mxu0 %v3532
    %v6428 = vpop.f32.mrf.mxu0
    %v6429 = vadd.f32 %v6340, %v6428
    %v6430 = vpop.f32.mrf.mxu0
    %v6431 = vadd.f32 %v6342, %v6430
    %6432 = vdwg.mxu0
    %6433 = vmatpush.bf16.msra.mxu0 %v4857
    %6434 = vmatpush.bf16.msra.mxu0 %v4853
    %6435 = vmatpush.bf16.msra.mxu0 %v4849
    %6436 = vmatpush.bf16.msra.mxu0 %v4845
    %6437 = vmatpush.bf16.msra.mxu0 %v4841
    %6438 = vmatpush.bf16.msra.mxu0 %v4837
    %6439 = vmatpush.bf16.msra.mxu0 %v4833
    %6440 = vmatpush.bf16.msra.mxu0 %v4829
    %6441 = vmatmul.bf16.gmra.mxu0 %v3398
    %v6442 = vpop.f32.mrf.mxu0
    %v6443 = vadd.f32 %v6354, %v6442
    %v6444 = vpop.f32.mrf.mxu0
    %v6445 = vadd.f32 %v6356, %v6444
    %6446 = vmatmul.bf16.gmra.mxu0 %v3407
    %v6447 = vpop.f32.mrf.mxu0
    %v6448 = vadd.f32 %v6359, %v6447
    %v6449 = vpop.f32.mrf.mxu0
    %v6450 = vadd.f32 %v6361, %v6449
    %6451 = vmatmul.bf16.gmra.mxu0 %v3416
    %v6452 = vpop.f32.mrf.mxu0
    %v6453 = vadd.f32 %v6364, %v6452
    %v6454 = vpop.f32.mrf.mxu0
    %v6455 = vadd.f32 %v6366, %v6454
    %6456 = vmatmul.bf16.gmra.mxu0 %v3425
    %v6457 = vpop.f32.mrf.mxu0
    %v6458 = vadd.f32 %v6369, %v6457
    %v6459 = vpop.f32.mrf.mxu0
    %v6460 = vadd.f32 %v6371, %v6459
    %6461 = vmatmul.bf16.gmra.mxu0 %v3434
    %v6462 = vpop.f32.mrf.mxu0
    %v6463 = vadd.f32 %v6374, %v6462
    %v6464 = vpop.f32.mrf.mxu0
    %v6465 = vadd.f32 %v6376, %v6464
    %6466 = vmatmul.bf16.gmra.mxu0 %v3443
    %v6467 = vpop.f32.mrf.mxu0
    %v6468 = vadd.f32 %v6379, %v6467
    %v6469 = vpop.f32.mrf.mxu0
    %v6470 = vadd.f32 %v6381, %v6469
    %6471 = vmatmul.bf16.gmra.mxu0 %v3452
    %v6472 = vpop.f32.mrf.mxu0
    %v6473 = vadd.f32 %v6384, %v6472
    %v6474 = vpop.f32.mrf.mxu0
    %v6475 = vadd.f32 %v6386, %v6474
    %6476 = vmatmul.bf16.gmra.mxu0 %v3461
    %v6477 = vpop.f32.mrf.mxu0
    %v6478 = vadd.f32 %v6389, %v6477
    %v6479 = vpop.f32.mrf.mxu0
    %v6480 = vadd.f32 %v6391, %v6479
    %6481 = vmatmul.bf16.gmra.mxu0 %v3470
    %v6482 = vpop.f32.mrf.mxu0
    %v6483 = vadd.f32 %v6394, %v6482
    %v6484 = vpop.f32.mrf.mxu0
    %v6485 = vadd.f32 %v6396, %v6484
    %6486 = vmatmul.bf16.gmra.mxu0 %v3479
    %v6487 = vpop.f32.mrf.mxu0
    %v6488 = vadd.f32 %v6399, %v6487
    %v6489 = vpop.f32.mrf.mxu0
    %v6490 = vadd.f32 %v6401, %v6489
    %6491 = vmatmul.bf16.gmra.mxu0 %v3488
    %v6492 = vpop.f32.mrf.mxu0
    %v6493 = vadd.f32 %v6404, %v6492
    %v6494 = vpop.f32.mrf.mxu0
    %v6495 = vadd.f32 %v6406, %v6494
    %6496 = vmatmul.bf16.gmra.mxu0 %v3497
    %v6497 = vpop.f32.mrf.mxu0
    %v6498 = vadd.f32 %v6409, %v6497
    %v6499 = vpop.f32.mrf.mxu0
    %v6500 = vadd.f32 %v6411, %v6499
    %6501 = vmatmul.bf16.gmra.mxu0 %v3506
    %v6502 = vpop.f32.mrf.mxu0
    %v6503 = vadd.f32 %v6414, %v6502
    %v6504 = vpop.f32.mrf.mxu0
    %v6505 = vadd.f32 %v6416, %v6504
    %6506 = vmatmul.bf16.gmra.mxu0 %v3515
    %v6507 = vpop.f32.mrf.mxu0
    %v6508 = vadd.f32 %v6419, %v6507
    %v6509 = vpop.f32.mrf.mxu0
    %v6510 = vadd.f32 %v6421, %v6509
    %6511 = vmatmul.bf16.gmra.mxu0 %v3524
    %v6512 = vpop.f32.mrf.mxu0
    %v6513 = vadd.f32 %v6424, %v6512
    %v6514 = vpop.f32.mrf.mxu0
    %v6515 = vadd.f32 %v6426, %v6514
    %6516 = vmatmul.bf16.gmra.mxu0 %v3533
    %v6517 = vpop.f32.mrf.mxu0
    %v6518 = vadd.f32 %v6429, %v6517
    %v6519 = vpop.f32.mrf.mxu0
    %v6520 = vadd.f32 %v6431, %v6519
    %6521 = vdwg.mxu0
    %6522 = vmatpush.bf16.msra.mxu0 %v4889
    %6523 = vmatpush.bf16.msra.mxu0 %v4885
    %6524 = vmatpush.bf16.msra.mxu0 %v4881
    %6525 = vmatpush.bf16.msra.mxu0 %v4877
    %6526 = vmatpush.bf16.msra.mxu0 %v4873
    %6527 = vmatpush.bf16.msra.mxu0 %v4869
    %6528 = vmatpush.bf16.msra.mxu0 %v4865
    %6529 = vmatpush.bf16.msra.mxu0 %v4861
    %6530 = vmatmul.bf16.gmra.mxu0 %v3399
    %v6531 = vpop.f32.mrf.mxu0
    %v6532 = vadd.f32 %v6443, %v6531
    %v6533 = vpop.f32.mrf.mxu0
    %v6534 = vadd.f32 %v6445, %v6533
    %6535 = vmatmul.bf16.gmra.mxu0 %v3408
    %v6536 = vpop.f32.mrf.mxu0
    %v6537 = vadd.f32 %v6448, %v6536
    %v6538 = vpop.f32.mrf.mxu0
    %v6539 = vadd.f32 %v6450, %v6538
    %6540 = vmatmul.bf16.gmra.mxu0 %v3417
    %v6541 = vpop.f32.mrf.mxu0
    %v6542 = vadd.f32 %v6453, %v6541
    %v6543 = vpop.f32.mrf.mxu0
    %v6544 = vadd.f32 %v6455, %v6543
    %6545 = vmatmul.bf16.gmra.mxu0 %v3426
    %v6546 = vpop.f32.mrf.mxu0
    %v6547 = vadd.f32 %v6458, %v6546
    %v6548 = vpop.f32.mrf.mxu0
    %v6549 = vadd.f32 %v6460, %v6548
    %6550 = vmatmul.bf16.gmra.mxu0 %v3435
    %v6551 = vpop.f32.mrf.mxu0
    %v6552 = vadd.f32 %v6463, %v6551
    %v6553 = vpop.f32.mrf.mxu0
    %v6554 = vadd.f32 %v6465, %v6553
    %6555 = vmatmul.bf16.gmra.mxu0 %v3444
    %v6556 = vpop.f32.mrf.mxu0
    %v6557 = vadd.f32 %v6468, %v6556
    %v6558 = vpop.f32.mrf.mxu0
    %v6559 = vadd.f32 %v6470, %v6558
    %6560 = vmatmul.bf16.gmra.mxu0 %v3453
    %v6561 = vpop.f32.mrf.mxu0
    %v6562 = vadd.f32 %v6473, %v6561
    %v6563 = vpop.f32.mrf.mxu0
    %v6564 = vadd.f32 %v6475, %v6563
    %6565 = vmatmul.bf16.gmra.mxu0 %v3462
    %v6566 = vpop.f32.mrf.mxu0
    %v6567 = vadd.f32 %v6478, %v6566
    %v6568 = vpop.f32.mrf.mxu0
    %v6569 = vadd.f32 %v6480, %v6568
    %6570 = vmatmul.bf16.gmra.mxu0 %v3471
    %v6571 = vpop.f32.mrf.mxu0
    %v6572 = vadd.f32 %v6483, %v6571
    %v6573 = vpop.f32.mrf.mxu0
    %v6574 = vadd.f32 %v6485, %v6573
    %6575 = vmatmul.bf16.gmra.mxu0 %v3480
    %v6576 = vpop.f32.mrf.mxu0
    %v6577 = vadd.f32 %v6488, %v6576
    %v6578 = vpop.f32.mrf.mxu0
    %v6579 = vadd.f32 %v6490, %v6578
    %6580 = vmatmul.bf16.gmra.mxu0 %v3489
    %v6581 = vpop.f32.mrf.mxu0
    %v6582 = vadd.f32 %v6493, %v6581
    %v6583 = vpop.f32.mrf.mxu0
    %v6584 = vadd.f32 %v6495, %v6583
    %6585 = vmatmul.bf16.gmra.mxu0 %v3498
    %v6586 = vpop.f32.mrf.mxu0
    %v6587 = vadd.f32 %v6498, %v6586
    %v6588 = vpop.f32.mrf.mxu0
    %v6589 = vadd.f32 %v6500, %v6588
    %6590 = vmatmul.bf16.gmra.mxu0 %v3507
    %v6591 = vpop.f32.mrf.mxu0
    %v6592 = vadd.f32 %v6503, %v6591
    %v6593 = vpop.f32.mrf.mxu0
    %v6594 = vadd.f32 %v6505, %v6593
    %6595 = vmatmul.bf16.gmra.mxu0 %v3516
    %v6596 = vpop.f32.mrf.mxu0
    %v6597 = vadd.f32 %v6508, %v6596
    %v6598 = vpop.f32.mrf.mxu0
    %v6599 = vadd.f32 %v6510, %v6598
    %6600 = vmatmul.bf16.gmra.mxu0 %v3525
    %v6601 = vpop.f32.mrf.mxu0
    %v6602 = vadd.f32 %v6513, %v6601
    %v6603 = vpop.f32.mrf.mxu0
    %v6604 = vadd.f32 %v6515, %v6603
    %6605 = vmatmul.bf16.gmra.mxu0 %v3534
    %v6606 = vpop.f32.mrf.mxu0
    %v6607 = vadd.f32 %v6518, %v6606
    %v6608 = vpop.f32.mrf.mxu0
    %v6609 = vadd.f32 %v6520, %v6608
    %6610 = vdwg.mxu0
    %6611 = vmatpush.bf16.msra.mxu0 %v4921
    %6612 = vmatpush.bf16.msra.mxu0 %v4917
    %6613 = vmatpush.bf16.msra.mxu0 %v4913
    %6614 = vmatpush.bf16.msra.mxu0 %v4909
    %6615 = vmatpush.bf16.msra.mxu0 %v4905
    %6616 = vmatpush.bf16.msra.mxu0 %v4901
    %6617 = vmatpush.bf16.msra.mxu0 %v4897
    %6618 = vmatpush.bf16.msra.mxu0 %v4893
    %6619 = vmatmul.bf16.gmra.mxu0 %v3400
    %v6620 = vpop.f32.mrf.mxu0
    %v6621 = vadd.f32 %v6532, %v6620
    %v6622 = vpop.f32.mrf.mxu0
    %v6623 = vadd.f32 %v6534, %v6622
    %6624 = vmatmul.bf16.gmra.mxu0 %v3409
    %v6625 = vpop.f32.mrf.mxu0
    %v6626 = vadd.f32 %v6537, %v6625
    %v6627 = vpop.f32.mrf.mxu0
    %v6628 = vadd.f32 %v6539, %v6627
    %6629 = vmatmul.bf16.gmra.mxu0 %v3418
    %v6630 = vpop.f32.mrf.mxu0
    %v6631 = vadd.f32 %v6542, %v6630
    %v6632 = vpop.f32.mrf.mxu0
    %v6633 = vadd.f32 %v6544, %v6632
    %6634 = vmatmul.bf16.gmra.mxu0 %v3427
    %v6635 = vpop.f32.mrf.mxu0
    %v6636 = vadd.f32 %v6547, %v6635
    %v6637 = vpop.f32.mrf.mxu0
    %v6638 = vadd.f32 %v6549, %v6637
    %6639 = vmatmul.bf16.gmra.mxu0 %v3436
    %v6640 = vpop.f32.mrf.mxu0
    %v6641 = vadd.f32 %v6552, %v6640
    %v6642 = vpop.f32.mrf.mxu0
    %v6643 = vadd.f32 %v6554, %v6642
    %6644 = vmatmul.bf16.gmra.mxu0 %v3445
    %v6645 = vpop.f32.mrf.mxu0
    %v6646 = vadd.f32 %v6557, %v6645
    %v6647 = vpop.f32.mrf.mxu0
    %v6648 = vadd.f32 %v6559, %v6647
    %6649 = vmatmul.bf16.gmra.mxu0 %v3454
    %v6650 = vpop.f32.mrf.mxu0
    %v6651 = vadd.f32 %v6562, %v6650
    %v6652 = vpop.f32.mrf.mxu0
    %v6653 = vadd.f32 %v6564, %v6652
    %6654 = vmatmul.bf16.gmra.mxu0 %v3463
    %v6655 = vpop.f32.mrf.mxu0
    %v6656 = vadd.f32 %v6567, %v6655
    %v6657 = vpop.f32.mrf.mxu0
    %v6658 = vadd.f32 %v6569, %v6657
    %6659 = vmatmul.bf16.gmra.mxu0 %v3472
    %v6660 = vpop.f32.mrf.mxu0
    %v6661 = vadd.f32 %v6572, %v6660
    %v6662 = vpop.f32.mrf.mxu0
    %v6663 = vadd.f32 %v6574, %v6662
    %6664 = vmatmul.bf16.gmra.mxu0 %v3481
    %v6665 = vpop.f32.mrf.mxu0
    %v6666 = vadd.f32 %v6577, %v6665
    %v6667 = vpop.f32.mrf.mxu0
    %v6668 = vadd.f32 %v6579, %v6667
    %6669 = vmatmul.bf16.gmra.mxu0 %v3490
    %v6670 = vpop.f32.mrf.mxu0
    %v6671 = vadd.f32 %v6582, %v6670
    %v6672 = vpop.f32.mrf.mxu0
    %v6673 = vadd.f32 %v6584, %v6672
    %6674 = vmatmul.bf16.gmra.mxu0 %v3499
    %v6675 = vpop.f32.mrf.mxu0
    %v6676 = vadd.f32 %v6587, %v6675
    %v6677 = vpop.f32.mrf.mxu0
    %v6678 = vadd.f32 %v6589, %v6677
    %6679 = vmatmul.bf16.gmra.mxu0 %v3508
    %v6680 = vpop.f32.mrf.mxu0
    %v6681 = vadd.f32 %v6592, %v6680
    %v6682 = vpop.f32.mrf.mxu0
    %v6683 = vadd.f32 %v6594, %v6682
    %6684 = vmatmul.bf16.gmra.mxu0 %v3517
    %v6685 = vpop.f32.mrf.mxu0
    %v6686 = vadd.f32 %v6597, %v6685
    %v6687 = vpop.f32.mrf.mxu0
    %v6688 = vadd.f32 %v6599, %v6687
    %6689 = vmatmul.bf16.gmra.mxu0 %v3526
    %v6690 = vpop.f32.mrf.mxu0
    %v6691 = vadd.f32 %v6602, %v6690
    %v6692 = vpop.f32.mrf.mxu0
    %v6693 = vadd.f32 %v6604, %v6692
    %6694 = vmatmul.bf16.gmra.mxu0 %v3535
    %v6695 = vpop.f32.mrf.mxu0
    %v6696 = vadd.f32 %v6607, %v6695
    %v6697 = vpop.f32.mrf.mxu0
    %v6698 = vadd.f32 %v6609, %v6697
    %6699 = vdwg.mxu0
    %6700 = vmatpush.bf16.msra.mxu0 %v4953
    %6701 = vmatpush.bf16.msra.mxu0 %v4949
    %6702 = vmatpush.bf16.msra.mxu0 %v4945
    %6703 = vmatpush.bf16.msra.mxu0 %v4941
    %6704 = vmatpush.bf16.msra.mxu0 %v4937
    %6705 = vmatpush.bf16.msra.mxu0 %v4933
    %6706 = vmatpush.bf16.msra.mxu0 %v4929
    %6707 = vmatpush.bf16.msra.mxu0 %v4925
    %6708 = vmatmul.bf16.gmra.mxu0 %v3401
    %v6709 = vpop.f32.mrf.mxu0
    %v6710 = vadd.f32 %v6621, %v6709
    %v6711 = vpop.f32.mrf.mxu0
    %v6712 = vadd.f32 %v6623, %v6711
    %6713 = vmatmul.bf16.gmra.mxu0 %v3410
    %v6714 = vpop.f32.mrf.mxu0
    %v6715 = vadd.f32 %v6626, %v6714
    %v6716 = vpop.f32.mrf.mxu0
    %v6717 = vadd.f32 %v6628, %v6716
    %6718 = vmatmul.bf16.gmra.mxu0 %v3419
    %v6719 = vpop.f32.mrf.mxu0
    %v6720 = vadd.f32 %v6631, %v6719
    %v6721 = vpop.f32.mrf.mxu0
    %v6722 = vadd.f32 %v6633, %v6721
    %6723 = vmatmul.bf16.gmra.mxu0 %v3428
    %v6724 = vpop.f32.mrf.mxu0
    %v6725 = vadd.f32 %v6636, %v6724
    %v6726 = vpop.f32.mrf.mxu0
    %v6727 = vadd.f32 %v6638, %v6726
    %6728 = vmatmul.bf16.gmra.mxu0 %v3437
    %v6729 = vpop.f32.mrf.mxu0
    %v6730 = vadd.f32 %v6641, %v6729
    %v6731 = vpop.f32.mrf.mxu0
    %v6732 = vadd.f32 %v6643, %v6731
    %6733 = vmatmul.bf16.gmra.mxu0 %v3446
    %v6734 = vpop.f32.mrf.mxu0
    %v6735 = vadd.f32 %v6646, %v6734
    %v6736 = vpop.f32.mrf.mxu0
    %v6737 = vadd.f32 %v6648, %v6736
    %6738 = vmatmul.bf16.gmra.mxu0 %v3455
    %v6739 = vpop.f32.mrf.mxu0
    %v6740 = vadd.f32 %v6651, %v6739
    %v6741 = vpop.f32.mrf.mxu0
    %v6742 = vadd.f32 %v6653, %v6741
    %6743 = vmatmul.bf16.gmra.mxu0 %v3464
    %v6744 = vpop.f32.mrf.mxu0
    %v6745 = vadd.f32 %v6656, %v6744
    %v6746 = vpop.f32.mrf.mxu0
    %v6747 = vadd.f32 %v6658, %v6746
    %6748 = vmatmul.bf16.gmra.mxu0 %v3473
    %v6749 = vpop.f32.mrf.mxu0
    %v6750 = vadd.f32 %v6661, %v6749
    %v6751 = vpop.f32.mrf.mxu0
    %v6752 = vadd.f32 %v6663, %v6751
    %6753 = vmatmul.bf16.gmra.mxu0 %v3482
    %v6754 = vpop.f32.mrf.mxu0
    %v6755 = vadd.f32 %v6666, %v6754
    %v6756 = vpop.f32.mrf.mxu0
    %v6757 = vadd.f32 %v6668, %v6756
    %6758 = vmatmul.bf16.gmra.mxu0 %v3491
    %v6759 = vpop.f32.mrf.mxu0
    %v6760 = vadd.f32 %v6671, %v6759
    %v6761 = vpop.f32.mrf.mxu0
    %v6762 = vadd.f32 %v6673, %v6761
    %6763 = vmatmul.bf16.gmra.mxu0 %v3500
    %v6764 = vpop.f32.mrf.mxu0
    %v6765 = vadd.f32 %v6676, %v6764
    %v6766 = vpop.f32.mrf.mxu0
    %v6767 = vadd.f32 %v6678, %v6766
    %6768 = vmatmul.bf16.gmra.mxu0 %v3509
    %v6769 = vpop.f32.mrf.mxu0
    %v6770 = vadd.f32 %v6681, %v6769
    %v6771 = vpop.f32.mrf.mxu0
    %v6772 = vadd.f32 %v6683, %v6771
    %6773 = vmatmul.bf16.gmra.mxu0 %v3518
    %v6774 = vpop.f32.mrf.mxu0
    %v6775 = vadd.f32 %v6686, %v6774
    %v6776 = vpop.f32.mrf.mxu0
    %v6777 = vadd.f32 %v6688, %v6776
    %6778 = vmatmul.bf16.gmra.mxu0 %v3527
    %v6779 = vpop.f32.mrf.mxu0
    %v6780 = vadd.f32 %v6691, %v6779
    %v6781 = vpop.f32.mrf.mxu0
    %v6782 = vadd.f32 %v6693, %v6781
    %6783 = vmatmul.bf16.gmra.mxu0 %v3536
    %v6784 = vpop.f32.mrf.mxu0
    %v6785 = vadd.f32 %v6696, %v6784
    %v6786 = vpop.f32.mrf.mxu0
    %v6787 = vadd.f32 %v6698, %v6786
    %6788 = vdwg.mxu0
    %6789 = vmatpush.bf16.msra.mxu0 %v4985
    %6790 = vmatpush.bf16.msra.mxu0 %v4981
    %6791 = vmatpush.bf16.msra.mxu0 %v4977
    %6792 = vmatpush.bf16.msra.mxu0 %v4973
    %6793 = vmatpush.bf16.msra.mxu0 %v4969
    %6794 = vmatpush.bf16.msra.mxu0 %v4965
    %6795 = vmatpush.bf16.msra.mxu0 %v4961
    %6796 = vmatpush.bf16.msra.mxu0 %v4957
    %6797 = vmatmul.bf16.gmra.mxu0 %v3402
    %v6798 = vpop.f32.mrf.mxu0
    %v6799 = vadd.f32 %v6710, %v6798
    %v6800 = vpop.f32.mrf.mxu0
    %v6801 = vadd.f32 %v6712, %v6800
    %6802 = vmatmul.bf16.gmra.mxu0 %v3411
    %v6803 = vpop.f32.mrf.mxu0
    %v6804 = vadd.f32 %v6715, %v6803
    %v6805 = vpop.f32.mrf.mxu0
    %v6806 = vadd.f32 %v6717, %v6805
    %6807 = vmatmul.bf16.gmra.mxu0 %v3420
    %v6808 = vpop.f32.mrf.mxu0
    %v6809 = vadd.f32 %v6720, %v6808
    %v6810 = vpop.f32.mrf.mxu0
    %v6811 = vadd.f32 %v6722, %v6810
    %6812 = vmatmul.bf16.gmra.mxu0 %v3429
    %v6813 = vpop.f32.mrf.mxu0
    %v6814 = vadd.f32 %v6725, %v6813
    %v6815 = vpop.f32.mrf.mxu0
    %v6816 = vadd.f32 %v6727, %v6815
    %6817 = vmatmul.bf16.gmra.mxu0 %v3438
    %v6818 = vpop.f32.mrf.mxu0
    %v6819 = vadd.f32 %v6730, %v6818
    %v6820 = vpop.f32.mrf.mxu0
    %v6821 = vadd.f32 %v6732, %v6820
    %6822 = vmatmul.bf16.gmra.mxu0 %v3447
    %v6823 = vpop.f32.mrf.mxu0
    %v6824 = vadd.f32 %v6735, %v6823
    %v6825 = vpop.f32.mrf.mxu0
    %v6826 = vadd.f32 %v6737, %v6825
    %6827 = vmatmul.bf16.gmra.mxu0 %v3456
    %v6828 = vpop.f32.mrf.mxu0
    %v6829 = vadd.f32 %v6740, %v6828
    %v6830 = vpop.f32.mrf.mxu0
    %v6831 = vadd.f32 %v6742, %v6830
    %6832 = vmatmul.bf16.gmra.mxu0 %v3465
    %v6833 = vpop.f32.mrf.mxu0
    %v6834 = vadd.f32 %v6745, %v6833
    %v6835 = vpop.f32.mrf.mxu0
    %v6836 = vadd.f32 %v6747, %v6835
    %6837 = vmatmul.bf16.gmra.mxu0 %v3474
    %v6838 = vpop.f32.mrf.mxu0
    %v6839 = vadd.f32 %v6750, %v6838
    %v6840 = vpop.f32.mrf.mxu0
    %v6841 = vadd.f32 %v6752, %v6840
    %6842 = vmatmul.bf16.gmra.mxu0 %v3483
    %v6843 = vpop.f32.mrf.mxu0
    %v6844 = vadd.f32 %v6755, %v6843
    %v6845 = vpop.f32.mrf.mxu0
    %v6846 = vadd.f32 %v6757, %v6845
    %6847 = vmatmul.bf16.gmra.mxu0 %v3492
    %v6848 = vpop.f32.mrf.mxu0
    %v6849 = vadd.f32 %v6760, %v6848
    %v6850 = vpop.f32.mrf.mxu0
    %v6851 = vadd.f32 %v6762, %v6850
    %6852 = vmatmul.bf16.gmra.mxu0 %v3501
    %v6853 = vpop.f32.mrf.mxu0
    %v6854 = vadd.f32 %v6765, %v6853
    %v6855 = vpop.f32.mrf.mxu0
    %v6856 = vadd.f32 %v6767, %v6855
    %6857 = vmatmul.bf16.gmra.mxu0 %v3510
    %v6858 = vpop.f32.mrf.mxu0
    %v6859 = vadd.f32 %v6770, %v6858
    %v6860 = vpop.f32.mrf.mxu0
    %v6861 = vadd.f32 %v6772, %v6860
    %6862 = vmatmul.bf16.gmra.mxu0 %v3519
    %v6863 = vpop.f32.mrf.mxu0
    %v6864 = vadd.f32 %v6775, %v6863
    %v6865 = vpop.f32.mrf.mxu0
    %v6866 = vadd.f32 %v6777, %v6865
    %6867 = vmatmul.bf16.gmra.mxu0 %v3528
    %v6868 = vpop.f32.mrf.mxu0
    %v6869 = vadd.f32 %v6780, %v6868
    %v6870 = vpop.f32.mrf.mxu0
    %v6871 = vadd.f32 %v6782, %v6870
    %6872 = vmatmul.bf16.gmra.mxu0 %v3537
    %v6873 = vpop.f32.mrf.mxu0
    %v6874 = vadd.f32 %v6785, %v6873
    %v6875 = vpop.f32.mrf.mxu0
    %v6876 = vadd.f32 %v6787, %v6875
    %6877 = vdwg.mxu0
    %6878 = vmatpush.bf16.msra.mxu0 %v4730
    %6879 = vmatpush.bf16.msra.mxu0 %v4726
    %6880 = vmatpush.bf16.msra.mxu0 %v4722
    %6881 = vmatpush.bf16.msra.mxu0 %v4718
    %6882 = vmatpush.bf16.msra.mxu0 %v4714
    %6883 = vmatpush.bf16.msra.mxu0 %v4710
    %6884 = vmatpush.bf16.msra.mxu0 %v4706
    %6885 = vmatpush.bf16.msra.mxu0 %v4702
    %6886 = vmatmul.bf16.gmra.mxu0 %v3394
    %v6887 = vpop.f32.mrf.mxu0
    %v6888 = vadd.f32 %v3830, %v6887
    %v6889 = vpop.f32.mrf.mxu0
    %v6890 = vadd.f32 %v3830, %v6889
    %6891 = vmatmul.bf16.gmra.mxu0 %v3403
    %v6892 = vpop.f32.mrf.mxu0
    %v6893 = vadd.f32 %v3830, %v6892
    %v6894 = vpop.f32.mrf.mxu0
    %v6895 = vadd.f32 %v3830, %v6894
    %6896 = vmatmul.bf16.gmra.mxu0 %v3412
    %v6897 = vpop.f32.mrf.mxu0
    %v6898 = vadd.f32 %v3830, %v6897
    %v6899 = vpop.f32.mrf.mxu0
    %v6900 = vadd.f32 %v3830, %v6899
    %6901 = vmatmul.bf16.gmra.mxu0 %v3421
    %v6902 = vpop.f32.mrf.mxu0
    %v6903 = vadd.f32 %v3830, %v6902
    %v6904 = vpop.f32.mrf.mxu0
    %v6905 = vadd.f32 %v3830, %v6904
    %6906 = vmatmul.bf16.gmra.mxu0 %v3430
    %v6907 = vpop.f32.mrf.mxu0
    %v6908 = vadd.f32 %v3830, %v6907
    %v6909 = vpop.f32.mrf.mxu0
    %v6910 = vadd.f32 %v3830, %v6909
    %6911 = vmatmul.bf16.gmra.mxu0 %v3439
    %v6912 = vpop.f32.mrf.mxu0
    %v6913 = vadd.f32 %v3830, %v6912
    %v6914 = vpop.f32.mrf.mxu0
    %v6915 = vadd.f32 %v3830, %v6914
    %6916 = vmatmul.bf16.gmra.mxu0 %v3448
    %v6917 = vpop.f32.mrf.mxu0
    %v6918 = vadd.f32 %v3830, %v6917
    %v6919 = vpop.f32.mrf.mxu0
    %v6920 = vadd.f32 %v3830, %v6919
    %6921 = vmatmul.bf16.gmra.mxu0 %v3457
    %v6922 = vpop.f32.mrf.mxu0
    %v6923 = vadd.f32 %v3830, %v6922
    %v6924 = vpop.f32.mrf.mxu0
    %v6925 = vadd.f32 %v3830, %v6924
    %6926 = vmatmul.bf16.gmra.mxu0 %v3466
    %v6927 = vpop.f32.mrf.mxu0
    %v6928 = vadd.f32 %v3830, %v6927
    %v6929 = vpop.f32.mrf.mxu0
    %v6930 = vadd.f32 %v3830, %v6929
    %6931 = vmatmul.bf16.gmra.mxu0 %v3475
    %v6932 = vpop.f32.mrf.mxu0
    %v6933 = vadd.f32 %v3830, %v6932
    %v6934 = vpop.f32.mrf.mxu0
    %v6935 = vadd.f32 %v3830, %v6934
    %6936 = vmatmul.bf16.gmra.mxu0 %v3484
    %v6937 = vpop.f32.mrf.mxu0
    %v6938 = vadd.f32 %v3830, %v6937
    %v6939 = vpop.f32.mrf.mxu0
    %v6940 = vadd.f32 %v3830, %v6939
    %6941 = vmatmul.bf16.gmra.mxu0 %v3493
    %v6942 = vpop.f32.mrf.mxu0
    %v6943 = vadd.f32 %v3830, %v6942
    %v6944 = vpop.f32.mrf.mxu0
    %v6945 = vadd.f32 %v3830, %v6944
    %6946 = vmatmul.bf16.gmra.mxu0 %v3502
    %v6947 = vpop.f32.mrf.mxu0
    %v6948 = vadd.f32 %v3830, %v6947
    %v6949 = vpop.f32.mrf.mxu0
    %v6950 = vadd.f32 %v3830, %v6949
    %6951 = vmatmul.bf16.gmra.mxu0 %v3511
    %v6952 = vpop.f32.mrf.mxu0
    %v6953 = vadd.f32 %v3830, %v6952
    %v6954 = vpop.f32.mrf.mxu0
    %v6955 = vadd.f32 %v3830, %v6954
    %6956 = vmatmul.bf16.gmra.mxu0 %v3520
    %v6957 = vpop.f32.mrf.mxu0
    %v6958 = vadd.f32 %v3830, %v6957
    %v6959 = vpop.f32.mrf.mxu0
    %v6960 = vadd.f32 %v3830, %v6959
    %6961 = vmatmul.bf16.gmra.mxu0 %v3529
    %v6962 = vpop.f32.mrf.mxu0
    %v6963 = vadd.f32 %v3830, %v6962
    %v6964 = vpop.f32.mrf.mxu0
    %v6965 = vadd.f32 %v3830, %v6964
    %6966 = vdwg.mxu0
    %6967 = vmatpush.bf16.msra.mxu0 %v4762
    %6968 = vmatpush.bf16.msra.mxu0 %v4758
    %6969 = vmatpush.bf16.msra.mxu0 %v4754
    %6970 = vmatpush.bf16.msra.mxu0 %v4750
    %6971 = vmatpush.bf16.msra.mxu0 %v4746
    %6972 = vmatpush.bf16.msra.mxu0 %v4742
    %6973 = vmatpush.bf16.msra.mxu0 %v4738
    %6974 = vmatpush.bf16.msra.mxu0 %v4734
    %6975 = vmatmul.bf16.gmra.mxu0 %v3395
    %v6976 = vpop.f32.mrf.mxu0
    %v6977 = vadd.f32 %v6888, %v6976
    %v6978 = vpop.f32.mrf.mxu0
    %v6979 = vadd.f32 %v6890, %v6978
    %6980 = vmatmul.bf16.gmra.mxu0 %v3404
    %v6981 = vpop.f32.mrf.mxu0
    %v6982 = vadd.f32 %v6893, %v6981
    %v6983 = vpop.f32.mrf.mxu0
    %v6984 = vadd.f32 %v6895, %v6983
    %6985 = vmatmul.bf16.gmra.mxu0 %v3413
    %v6986 = vpop.f32.mrf.mxu0
    %v6987 = vadd.f32 %v6898, %v6986
    %v6988 = vpop.f32.mrf.mxu0
    %v6989 = vadd.f32 %v6900, %v6988
    %6990 = vmatmul.bf16.gmra.mxu0 %v3422
    %v6991 = vpop.f32.mrf.mxu0
    %v6992 = vadd.f32 %v6903, %v6991
    %v6993 = vpop.f32.mrf.mxu0
    %v6994 = vadd.f32 %v6905, %v6993
    %6995 = vmatmul.bf16.gmra.mxu0 %v3431
    %v6996 = vpop.f32.mrf.mxu0
    %v6997 = vadd.f32 %v6908, %v6996
    %v6998 = vpop.f32.mrf.mxu0
    %v6999 = vadd.f32 %v6910, %v6998
    %7000 = vmatmul.bf16.gmra.mxu0 %v3440
    %v7001 = vpop.f32.mrf.mxu0
    %v7002 = vadd.f32 %v6913, %v7001
    %v7003 = vpop.f32.mrf.mxu0
    %v7004 = vadd.f32 %v6915, %v7003
    %7005 = vmatmul.bf16.gmra.mxu0 %v3449
    %v7006 = vpop.f32.mrf.mxu0
    %v7007 = vadd.f32 %v6918, %v7006
    %v7008 = vpop.f32.mrf.mxu0
    %v7009 = vadd.f32 %v6920, %v7008
    %7010 = vmatmul.bf16.gmra.mxu0 %v3458
    %v7011 = vpop.f32.mrf.mxu0
    %v7012 = vadd.f32 %v6923, %v7011
    %v7013 = vpop.f32.mrf.mxu0
    %v7014 = vadd.f32 %v6925, %v7013
    %7015 = vmatmul.bf16.gmra.mxu0 %v3467
    %v7016 = vpop.f32.mrf.mxu0
    %v7017 = vadd.f32 %v6928, %v7016
    %v7018 = vpop.f32.mrf.mxu0
    %v7019 = vadd.f32 %v6930, %v7018
    %7020 = vmatmul.bf16.gmra.mxu0 %v3476
    %v7021 = vpop.f32.mrf.mxu0
    %v7022 = vadd.f32 %v6933, %v7021
    %v7023 = vpop.f32.mrf.mxu0
    %v7024 = vadd.f32 %v6935, %v7023
    %7025 = vmatmul.bf16.gmra.mxu0 %v3485
    %v7026 = vpop.f32.mrf.mxu0
    %v7027 = vadd.f32 %v6938, %v7026
    %v7028 = vpop.f32.mrf.mxu0
    %v7029 = vadd.f32 %v6940, %v7028
    %7030 = vmatmul.bf16.gmra.mxu0 %v3494
    %v7031 = vpop.f32.mrf.mxu0
    %v7032 = vadd.f32 %v6943, %v7031
    %v7033 = vpop.f32.mrf.mxu0
    %v7034 = vadd.f32 %v6945, %v7033
    %7035 = vmatmul.bf16.gmra.mxu0 %v3503
    %v7036 = vpop.f32.mrf.mxu0
    %v7037 = vadd.f32 %v6948, %v7036
    %v7038 = vpop.f32.mrf.mxu0
    %v7039 = vadd.f32 %v6950, %v7038
    %7040 = vmatmul.bf16.gmra.mxu0 %v3512
    %v7041 = vpop.f32.mrf.mxu0
    %v7042 = vadd.f32 %v6953, %v7041
    %v7043 = vpop.f32.mrf.mxu0
    %v7044 = vadd.f32 %v6955, %v7043
    %7045 = vmatmul.bf16.gmra.mxu0 %v3521
    %v7046 = vpop.f32.mrf.mxu0
    %v7047 = vadd.f32 %v6958, %v7046
    %v7048 = vpop.f32.mrf.mxu0
    %v7049 = vadd.f32 %v6960, %v7048
    %7050 = vmatmul.bf16.gmra.mxu0 %v3530
    %v7051 = vpop.f32.mrf.mxu0
    %v7052 = vadd.f32 %v6963, %v7051
    %v7053 = vpop.f32.mrf.mxu0
    %v7054 = vadd.f32 %v6965, %v7053
    %7055 = vdwg.mxu0
    %7056 = vmatpush.bf16.msra.mxu0 %v4794
    %7057 = vmatpush.bf16.msra.mxu0 %v4790
    %7058 = vmatpush.bf16.msra.mxu0 %v4786
    %7059 = vmatpush.bf16.msra.mxu0 %v4782
    %7060 = vmatpush.bf16.msra.mxu0 %v4778
    %7061 = vmatpush.bf16.msra.mxu0 %v4774
    %7062 = vmatpush.bf16.msra.mxu0 %v4770
    %7063 = vmatpush.bf16.msra.mxu0 %v4766
    %7064 = vmatmul.bf16.gmra.mxu0 %v3396
    %v7065 = vpop.f32.mrf.mxu0
    %v7066 = vadd.f32 %v6977, %v7065
    %v7067 = vpop.f32.mrf.mxu0
    %v7068 = vadd.f32 %v6979, %v7067
    %7069 = vmatmul.bf16.gmra.mxu0 %v3405
    %v7070 = vpop.f32.mrf.mxu0
    %v7071 = vadd.f32 %v6982, %v7070
    %v7072 = vpop.f32.mrf.mxu0
    %v7073 = vadd.f32 %v6984, %v7072
    %7074 = vmatmul.bf16.gmra.mxu0 %v3414
    %v7075 = vpop.f32.mrf.mxu0
    %v7076 = vadd.f32 %v6987, %v7075
    %v7077 = vpop.f32.mrf.mxu0
    %v7078 = vadd.f32 %v6989, %v7077
    %7079 = vmatmul.bf16.gmra.mxu0 %v3423
    %v7080 = vpop.f32.mrf.mxu0
    %v7081 = vadd.f32 %v6992, %v7080
    %v7082 = vpop.f32.mrf.mxu0
    %v7083 = vadd.f32 %v6994, %v7082
    %7084 = vmatmul.bf16.gmra.mxu0 %v3432
    %v7085 = vpop.f32.mrf.mxu0
    %v7086 = vadd.f32 %v6997, %v7085
    %v7087 = vpop.f32.mrf.mxu0
    %v7088 = vadd.f32 %v6999, %v7087
    %7089 = vmatmul.bf16.gmra.mxu0 %v3441
    %v7090 = vpop.f32.mrf.mxu0
    %v7091 = vadd.f32 %v7002, %v7090
    %v7092 = vpop.f32.mrf.mxu0
    %v7093 = vadd.f32 %v7004, %v7092
    %7094 = vmatmul.bf16.gmra.mxu0 %v3450
    %v7095 = vpop.f32.mrf.mxu0
    %v7096 = vadd.f32 %v7007, %v7095
    %v7097 = vpop.f32.mrf.mxu0
    %v7098 = vadd.f32 %v7009, %v7097
    %7099 = vmatmul.bf16.gmra.mxu0 %v3459
    %v7100 = vpop.f32.mrf.mxu0
    %v7101 = vadd.f32 %v7012, %v7100
    %v7102 = vpop.f32.mrf.mxu0
    %v7103 = vadd.f32 %v7014, %v7102
    %7104 = vmatmul.bf16.gmra.mxu0 %v3468
    %v7105 = vpop.f32.mrf.mxu0
    %v7106 = vadd.f32 %v7017, %v7105
    %v7107 = vpop.f32.mrf.mxu0
    %v7108 = vadd.f32 %v7019, %v7107
    %7109 = vmatmul.bf16.gmra.mxu0 %v3477
    %v7110 = vpop.f32.mrf.mxu0
    %v7111 = vadd.f32 %v7022, %v7110
    %v7112 = vpop.f32.mrf.mxu0
    %v7113 = vadd.f32 %v7024, %v7112
    %7114 = vmatmul.bf16.gmra.mxu0 %v3486
    %v7115 = vpop.f32.mrf.mxu0
    %v7116 = vadd.f32 %v7027, %v7115
    %v7117 = vpop.f32.mrf.mxu0
    %v7118 = vadd.f32 %v7029, %v7117
    %7119 = vmatmul.bf16.gmra.mxu0 %v3495
    %v7120 = vpop.f32.mrf.mxu0
    %v7121 = vadd.f32 %v7032, %v7120
    %v7122 = vpop.f32.mrf.mxu0
    %v7123 = vadd.f32 %v7034, %v7122
    %7124 = vmatmul.bf16.gmra.mxu0 %v3504
    %v7125 = vpop.f32.mrf.mxu0
    %v7126 = vadd.f32 %v7037, %v7125
    %v7127 = vpop.f32.mrf.mxu0
    %v7128 = vadd.f32 %v7039, %v7127
    %7129 = vmatmul.bf16.gmra.mxu0 %v3513
    %v7130 = vpop.f32.mrf.mxu0
    %v7131 = vadd.f32 %v7042, %v7130
    %v7132 = vpop.f32.mrf.mxu0
    %v7133 = vadd.f32 %v7044, %v7132
    %7134 = vmatmul.bf16.gmra.mxu0 %v3522
    %v7135 = vpop.f32.mrf.mxu0
    %v7136 = vadd.f32 %v7047, %v7135
    %v7137 = vpop.f32.mrf.mxu0
    %v7138 = vadd.f32 %v7049, %v7137
    %7139 = vmatmul.bf16.gmra.mxu0 %v3531
    %v7140 = vpop.f32.mrf.mxu0
    %v7141 = vadd.f32 %v7052, %v7140
    %v7142 = vpop.f32.mrf.mxu0
    %v7143 = vadd.f32 %v7054, %v7142
    %7144 = vdwg.mxu0
    %7145 = vmatpush.bf16.msra.mxu0 %v4826
    %7146 = vmatpush.bf16.msra.mxu0 %v4822
    %7147 = vmatpush.bf16.msra.mxu0 %v4818
    %7148 = vmatpush.bf16.msra.mxu0 %v4814
    %7149 = vmatpush.bf16.msra.mxu0 %v4810
    %7150 = vmatpush.bf16.msra.mxu0 %v4806
    %7151 = vmatpush.bf16.msra.mxu0 %v4802
    %7152 = vmatpush.bf16.msra.mxu0 %v4798
    %7153 = vmatmul.bf16.gmra.mxu0 %v3397
    %v7154 = vpop.f32.mrf.mxu0
    %v7155 = vadd.f32 %v7066, %v7154
    %v7156 = vpop.f32.mrf.mxu0
    %v7157 = vadd.f32 %v7068, %v7156
    %7158 = vmatmul.bf16.gmra.mxu0 %v3406
    %v7159 = vpop.f32.mrf.mxu0
    %v7160 = vadd.f32 %v7071, %v7159
    %v7161 = vpop.f32.mrf.mxu0
    %v7162 = vadd.f32 %v7073, %v7161
    %7163 = vmatmul.bf16.gmra.mxu0 %v3415
    %v7164 = vpop.f32.mrf.mxu0
    %v7165 = vadd.f32 %v7076, %v7164
    %v7166 = vpop.f32.mrf.mxu0
    %v7167 = vadd.f32 %v7078, %v7166
    %7168 = vmatmul.bf16.gmra.mxu0 %v3424
    %v7169 = vpop.f32.mrf.mxu0
    %v7170 = vadd.f32 %v7081, %v7169
    %v7171 = vpop.f32.mrf.mxu0
    %v7172 = vadd.f32 %v7083, %v7171
    %7173 = vmatmul.bf16.gmra.mxu0 %v3433
    %v7174 = vpop.f32.mrf.mxu0
    %v7175 = vadd.f32 %v7086, %v7174
    %v7176 = vpop.f32.mrf.mxu0
    %v7177 = vadd.f32 %v7088, %v7176
    %7178 = vmatmul.bf16.gmra.mxu0 %v3442
    %v7179 = vpop.f32.mrf.mxu0
    %v7180 = vadd.f32 %v7091, %v7179
    %v7181 = vpop.f32.mrf.mxu0
    %v7182 = vadd.f32 %v7093, %v7181
    %7183 = vmatmul.bf16.gmra.mxu0 %v3451
    %v7184 = vpop.f32.mrf.mxu0
    %v7185 = vadd.f32 %v7096, %v7184
    %v7186 = vpop.f32.mrf.mxu0
    %v7187 = vadd.f32 %v7098, %v7186
    %7188 = vmatmul.bf16.gmra.mxu0 %v3460
    %v7189 = vpop.f32.mrf.mxu0
    %v7190 = vadd.f32 %v7101, %v7189
    %v7191 = vpop.f32.mrf.mxu0
    %v7192 = vadd.f32 %v7103, %v7191
    %7193 = vmatmul.bf16.gmra.mxu0 %v3469
    %v7194 = vpop.f32.mrf.mxu0
    %v7195 = vadd.f32 %v7106, %v7194
    %v7196 = vpop.f32.mrf.mxu0
    %v7197 = vadd.f32 %v7108, %v7196
    %7198 = vmatmul.bf16.gmra.mxu0 %v3478
    %v7199 = vpop.f32.mrf.mxu0
    %v7200 = vadd.f32 %v7111, %v7199
    %v7201 = vpop.f32.mrf.mxu0
    %v7202 = vadd.f32 %v7113, %v7201
    %7203 = vmatmul.bf16.gmra.mxu0 %v3487
    %v7204 = vpop.f32.mrf.mxu0
    %v7205 = vadd.f32 %v7116, %v7204
    %v7206 = vpop.f32.mrf.mxu0
    %v7207 = vadd.f32 %v7118, %v7206
    %7208 = vmatmul.bf16.gmra.mxu0 %v3496
    %v7209 = vpop.f32.mrf.mxu0
    %v7210 = vadd.f32 %v7121, %v7209
    %v7211 = vpop.f32.mrf.mxu0
    %v7212 = vadd.f32 %v7123, %v7211
    %7213 = vmatmul.bf16.gmra.mxu0 %v3505
    %v7214 = vpop.f32.mrf.mxu0
    %v7215 = vadd.f32 %v7126, %v7214
    %v7216 = vpop.f32.mrf.mxu0
    %v7217 = vadd.f32 %v7128, %v7216
    %7218 = vmatmul.bf16.gmra.mxu0 %v3514
    %v7219 = vpop.f32.mrf.mxu0
    %v7220 = vadd.f32 %v7131, %v7219
    %v7221 = vpop.f32.mrf.mxu0
    %v7222 = vadd.f32 %v7133, %v7221
    %7223 = vmatmul.bf16.gmra.mxu0 %v3523
    %v7224 = vpop.f32.mrf.mxu0
    %v7225 = vadd.f32 %v7136, %v7224
    %v7226 = vpop.f32.mrf.mxu0
    %v7227 = vadd.f32 %v7138, %v7226
    %7228 = vmatmul.bf16.gmra.mxu0 %v3532
    %v7229 = vpop.f32.mrf.mxu0
    %v7230 = vadd.f32 %v7141, %v7229
    %v7231 = vpop.f32.mrf.mxu0
    %v7232 = vadd.f32 %v7143, %v7231
    %7233 = vdwg.mxu0
    %7234 = vmatpush.bf16.msra.mxu0 %v4858
    %7235 = vmatpush.bf16.msra.mxu0 %v4854
    %7236 = vmatpush.bf16.msra.mxu0 %v4850
    %7237 = vmatpush.bf16.msra.mxu0 %v4846
    %7238 = vmatpush.bf16.msra.mxu0 %v4842
    %7239 = vmatpush.bf16.msra.mxu0 %v4838
    %7240 = vmatpush.bf16.msra.mxu0 %v4834
    %7241 = vmatpush.bf16.msra.mxu0 %v4830
    %7242 = vmatmul.bf16.gmra.mxu0 %v3398
    %v7243 = vpop.f32.mrf.mxu0
    %v7244 = vadd.f32 %v7155, %v7243
    %v7245 = vpop.f32.mrf.mxu0
    %v7246 = vadd.f32 %v7157, %v7245
    %7247 = vmatmul.bf16.gmra.mxu0 %v3407
    %v7248 = vpop.f32.mrf.mxu0
    %v7249 = vadd.f32 %v7160, %v7248
    %v7250 = vpop.f32.mrf.mxu0
    %v7251 = vadd.f32 %v7162, %v7250
    %7252 = vmatmul.bf16.gmra.mxu0 %v3416
    %v7253 = vpop.f32.mrf.mxu0
    %v7254 = vadd.f32 %v7165, %v7253
    %v7255 = vpop.f32.mrf.mxu0
    %v7256 = vadd.f32 %v7167, %v7255
    %7257 = vmatmul.bf16.gmra.mxu0 %v3425
    %v7258 = vpop.f32.mrf.mxu0
    %v7259 = vadd.f32 %v7170, %v7258
    %v7260 = vpop.f32.mrf.mxu0
    %v7261 = vadd.f32 %v7172, %v7260
    %7262 = vmatmul.bf16.gmra.mxu0 %v3434
    %v7263 = vpop.f32.mrf.mxu0
    %v7264 = vadd.f32 %v7175, %v7263
    %v7265 = vpop.f32.mrf.mxu0
    %v7266 = vadd.f32 %v7177, %v7265
    %7267 = vmatmul.bf16.gmra.mxu0 %v3443
    %v7268 = vpop.f32.mrf.mxu0
    %v7269 = vadd.f32 %v7180, %v7268
    %v7270 = vpop.f32.mrf.mxu0
    %v7271 = vadd.f32 %v7182, %v7270
    %7272 = vmatmul.bf16.gmra.mxu0 %v3452
    %v7273 = vpop.f32.mrf.mxu0
    %v7274 = vadd.f32 %v7185, %v7273
    %v7275 = vpop.f32.mrf.mxu0
    %v7276 = vadd.f32 %v7187, %v7275
    %7277 = vmatmul.bf16.gmra.mxu0 %v3461
    %v7278 = vpop.f32.mrf.mxu0
    %v7279 = vadd.f32 %v7190, %v7278
    %v7280 = vpop.f32.mrf.mxu0
    %v7281 = vadd.f32 %v7192, %v7280
    %7282 = vmatmul.bf16.gmra.mxu0 %v3470
    %v7283 = vpop.f32.mrf.mxu0
    %v7284 = vadd.f32 %v7195, %v7283
    %v7285 = vpop.f32.mrf.mxu0
    %v7286 = vadd.f32 %v7197, %v7285
    %7287 = vmatmul.bf16.gmra.mxu0 %v3479
    %v7288 = vpop.f32.mrf.mxu0
    %v7289 = vadd.f32 %v7200, %v7288
    %v7290 = vpop.f32.mrf.mxu0
    %v7291 = vadd.f32 %v7202, %v7290
    %7292 = vmatmul.bf16.gmra.mxu0 %v3488
    %v7293 = vpop.f32.mrf.mxu0
    %v7294 = vadd.f32 %v7205, %v7293
    %v7295 = vpop.f32.mrf.mxu0
    %v7296 = vadd.f32 %v7207, %v7295
    %7297 = vmatmul.bf16.gmra.mxu0 %v3497
    %v7298 = vpop.f32.mrf.mxu0
    %v7299 = vadd.f32 %v7210, %v7298
    %v7300 = vpop.f32.mrf.mxu0
    %v7301 = vadd.f32 %v7212, %v7300
    %7302 = vmatmul.bf16.gmra.mxu0 %v3506
    %v7303 = vpop.f32.mrf.mxu0
    %v7304 = vadd.f32 %v7215, %v7303
    %v7305 = vpop.f32.mrf.mxu0
    %v7306 = vadd.f32 %v7217, %v7305
    %7307 = vmatmul.bf16.gmra.mxu0 %v3515
    %v7308 = vpop.f32.mrf.mxu0
    %v7309 = vadd.f32 %v7220, %v7308
    %v7310 = vpop.f32.mrf.mxu0
    %v7311 = vadd.f32 %v7222, %v7310
    %7312 = vmatmul.bf16.gmra.mxu0 %v3524
    %v7313 = vpop.f32.mrf.mxu0
    %v7314 = vadd.f32 %v7225, %v7313
    %v7315 = vpop.f32.mrf.mxu0
    %v7316 = vadd.f32 %v7227, %v7315
    %7317 = vmatmul.bf16.gmra.mxu0 %v3533
    %v7318 = vpop.f32.mrf.mxu0
    %v7319 = vadd.f32 %v7230, %v7318
    %v7320 = vpop.f32.mrf.mxu0
    %v7321 = vadd.f32 %v7232, %v7320
    %7322 = vdwg.mxu0
    %7323 = vmatpush.bf16.msra.mxu0 %v4890
    %7324 = vmatpush.bf16.msra.mxu0 %v4886
    %7325 = vmatpush.bf16.msra.mxu0 %v4882
    %7326 = vmatpush.bf16.msra.mxu0 %v4878
    %7327 = vmatpush.bf16.msra.mxu0 %v4874
    %7328 = vmatpush.bf16.msra.mxu0 %v4870
    %7329 = vmatpush.bf16.msra.mxu0 %v4866
    %7330 = vmatpush.bf16.msra.mxu0 %v4862
    %7331 = vmatmul.bf16.gmra.mxu0 %v3399
    %v7332 = vpop.f32.mrf.mxu0
    %v7333 = vadd.f32 %v7244, %v7332
    %v7334 = vpop.f32.mrf.mxu0
    %v7335 = vadd.f32 %v7246, %v7334
    %7336 = vmatmul.bf16.gmra.mxu0 %v3408
    %v7337 = vpop.f32.mrf.mxu0
    %v7338 = vadd.f32 %v7249, %v7337
    %v7339 = vpop.f32.mrf.mxu0
    %v7340 = vadd.f32 %v7251, %v7339
    %7341 = vmatmul.bf16.gmra.mxu0 %v3417
    %v7342 = vpop.f32.mrf.mxu0
    %v7343 = vadd.f32 %v7254, %v7342
    %v7344 = vpop.f32.mrf.mxu0
    %v7345 = vadd.f32 %v7256, %v7344
    %7346 = vmatmul.bf16.gmra.mxu0 %v3426
    %v7347 = vpop.f32.mrf.mxu0
    %v7348 = vadd.f32 %v7259, %v7347
    %v7349 = vpop.f32.mrf.mxu0
    %v7350 = vadd.f32 %v7261, %v7349
    %7351 = vmatmul.bf16.gmra.mxu0 %v3435
    %v7352 = vpop.f32.mrf.mxu0
    %v7353 = vadd.f32 %v7264, %v7352
    %v7354 = vpop.f32.mrf.mxu0
    %v7355 = vadd.f32 %v7266, %v7354
    %7356 = vmatmul.bf16.gmra.mxu0 %v3444
    %v7357 = vpop.f32.mrf.mxu0
    %v7358 = vadd.f32 %v7269, %v7357
    %v7359 = vpop.f32.mrf.mxu0
    %v7360 = vadd.f32 %v7271, %v7359
    %7361 = vmatmul.bf16.gmra.mxu0 %v3453
    %v7362 = vpop.f32.mrf.mxu0
    %v7363 = vadd.f32 %v7274, %v7362
    %v7364 = vpop.f32.mrf.mxu0
    %v7365 = vadd.f32 %v7276, %v7364
    %7366 = vmatmul.bf16.gmra.mxu0 %v3462
    %v7367 = vpop.f32.mrf.mxu0
    %v7368 = vadd.f32 %v7279, %v7367
    %v7369 = vpop.f32.mrf.mxu0
    %v7370 = vadd.f32 %v7281, %v7369
    %7371 = vmatmul.bf16.gmra.mxu0 %v3471
    %v7372 = vpop.f32.mrf.mxu0
    %v7373 = vadd.f32 %v7284, %v7372
    %v7374 = vpop.f32.mrf.mxu0
    %v7375 = vadd.f32 %v7286, %v7374
    %7376 = vmatmul.bf16.gmra.mxu0 %v3480
    %v7377 = vpop.f32.mrf.mxu0
    %v7378 = vadd.f32 %v7289, %v7377
    %v7379 = vpop.f32.mrf.mxu0
    %v7380 = vadd.f32 %v7291, %v7379
    %7381 = vmatmul.bf16.gmra.mxu0 %v3489
    %v7382 = vpop.f32.mrf.mxu0
    %v7383 = vadd.f32 %v7294, %v7382
    %v7384 = vpop.f32.mrf.mxu0
    %v7385 = vadd.f32 %v7296, %v7384
    %7386 = vmatmul.bf16.gmra.mxu0 %v3498
    %v7387 = vpop.f32.mrf.mxu0
    %v7388 = vadd.f32 %v7299, %v7387
    %v7389 = vpop.f32.mrf.mxu0
    %v7390 = vadd.f32 %v7301, %v7389
    %7391 = vmatmul.bf16.gmra.mxu0 %v3507
    %v7392 = vpop.f32.mrf.mxu0
    %v7393 = vadd.f32 %v7304, %v7392
    %v7394 = vpop.f32.mrf.mxu0
    %v7395 = vadd.f32 %v7306, %v7394
    %7396 = vmatmul.bf16.gmra.mxu0 %v3516
    %v7397 = vpop.f32.mrf.mxu0
    %v7398 = vadd.f32 %v7309, %v7397
    %v7399 = vpop.f32.mrf.mxu0
    %v7400 = vadd.f32 %v7311, %v7399
    %7401 = vmatmul.bf16.gmra.mxu0 %v3525
    %v7402 = vpop.f32.mrf.mxu0
    %v7403 = vadd.f32 %v7314, %v7402
    %v7404 = vpop.f32.mrf.mxu0
    %v7405 = vadd.f32 %v7316, %v7404
    %7406 = vmatmul.bf16.gmra.mxu0 %v3534
    %v7407 = vpop.f32.mrf.mxu0
    %v7408 = vadd.f32 %v7319, %v7407
    %v7409 = vpop.f32.mrf.mxu0
    %v7410 = vadd.f32 %v7321, %v7409
    %7411 = vdwg.mxu0
    %7412 = vmatpush.bf16.msra.mxu0 %v4922
    %7413 = vmatpush.bf16.msra.mxu0 %v4918
    %7414 = vmatpush.bf16.msra.mxu0 %v4914
    %7415 = vmatpush.bf16.msra.mxu0 %v4910
    %7416 = vmatpush.bf16.msra.mxu0 %v4906
    %7417 = vmatpush.bf16.msra.mxu0 %v4902
    %7418 = vmatpush.bf16.msra.mxu0 %v4898
    %7419 = vmatpush.bf16.msra.mxu0 %v4894
    %7420 = vmatmul.bf16.gmra.mxu0 %v3400
    %v7421 = vpop.f32.mrf.mxu0
    %v7422 = vadd.f32 %v7333, %v7421
    %v7423 = vpop.f32.mrf.mxu0
    %v7424 = vadd.f32 %v7335, %v7423
    %7425 = vmatmul.bf16.gmra.mxu0 %v3409
    %v7426 = vpop.f32.mrf.mxu0
    %v7427 = vadd.f32 %v7338, %v7426
    %v7428 = vpop.f32.mrf.mxu0
    %v7429 = vadd.f32 %v7340, %v7428
    %7430 = vmatmul.bf16.gmra.mxu0 %v3418
    %v7431 = vpop.f32.mrf.mxu0
    %v7432 = vadd.f32 %v7343, %v7431
    %v7433 = vpop.f32.mrf.mxu0
    %v7434 = vadd.f32 %v7345, %v7433
    %7435 = vmatmul.bf16.gmra.mxu0 %v3427
    %v7436 = vpop.f32.mrf.mxu0
    %v7437 = vadd.f32 %v7348, %v7436
    %v7438 = vpop.f32.mrf.mxu0
    %v7439 = vadd.f32 %v7350, %v7438
    %7440 = vmatmul.bf16.gmra.mxu0 %v3436
    %v7441 = vpop.f32.mrf.mxu0
    %v7442 = vadd.f32 %v7353, %v7441
    %v7443 = vpop.f32.mrf.mxu0
    %v7444 = vadd.f32 %v7355, %v7443
    %7445 = vmatmul.bf16.gmra.mxu0 %v3445
    %v7446 = vpop.f32.mrf.mxu0
    %v7447 = vadd.f32 %v7358, %v7446
    %v7448 = vpop.f32.mrf.mxu0
    %v7449 = vadd.f32 %v7360, %v7448
    %7450 = vmatmul.bf16.gmra.mxu0 %v3454
    %v7451 = vpop.f32.mrf.mxu0
    %v7452 = vadd.f32 %v7363, %v7451
    %v7453 = vpop.f32.mrf.mxu0
    %v7454 = vadd.f32 %v7365, %v7453
    %7455 = vmatmul.bf16.gmra.mxu0 %v3463
    %v7456 = vpop.f32.mrf.mxu0
    %v7457 = vadd.f32 %v7368, %v7456
    %v7458 = vpop.f32.mrf.mxu0
    %v7459 = vadd.f32 %v7370, %v7458
    %7460 = vmatmul.bf16.gmra.mxu0 %v3472
    %v7461 = vpop.f32.mrf.mxu0
    %v7462 = vadd.f32 %v7373, %v7461
    %v7463 = vpop.f32.mrf.mxu0
    %v7464 = vadd.f32 %v7375, %v7463
    %7465 = vmatmul.bf16.gmra.mxu0 %v3481
    %v7466 = vpop.f32.mrf.mxu0
    %v7467 = vadd.f32 %v7378, %v7466
    %v7468 = vpop.f32.mrf.mxu0
    %v7469 = vadd.f32 %v7380, %v7468
    %7470 = vmatmul.bf16.gmra.mxu0 %v3490
    %v7471 = vpop.f32.mrf.mxu0
    %v7472 = vadd.f32 %v7383, %v7471
    %v7473 = vpop.f32.mrf.mxu0
    %v7474 = vadd.f32 %v7385, %v7473
    %7475 = vmatmul.bf16.gmra.mxu0 %v3499
    %v7476 = vpop.f32.mrf.mxu0
    %v7477 = vadd.f32 %v7388, %v7476
    %v7478 = vpop.f32.mrf.mxu0
    %v7479 = vadd.f32 %v7390, %v7478
    %7480 = vmatmul.bf16.gmra.mxu0 %v3508
    %v7481 = vpop.f32.mrf.mxu0
    %v7482 = vadd.f32 %v7393, %v7481
    %v7483 = vpop.f32.mrf.mxu0
    %v7484 = vadd.f32 %v7395, %v7483
    %7485 = vmatmul.bf16.gmra.mxu0 %v3517
    %v7486 = vpop.f32.mrf.mxu0
    %v7487 = vadd.f32 %v7398, %v7486
    %v7488 = vpop.f32.mrf.mxu0
    %v7489 = vadd.f32 %v7400, %v7488
    %7490 = vmatmul.bf16.gmra.mxu0 %v3526
    %v7491 = vpop.f32.mrf.mxu0
    %v7492 = vadd.f32 %v7403, %v7491
    %v7493 = vpop.f32.mrf.mxu0
    %v7494 = vadd.f32 %v7405, %v7493
    %7495 = vmatmul.bf16.gmra.mxu0 %v3535
    %v7496 = vpop.f32.mrf.mxu0
    %v7497 = vadd.f32 %v7408, %v7496
    %v7498 = vpop.f32.mrf.mxu0
    %v7499 = vadd.f32 %v7410, %v7498
    %7500 = vdwg.mxu0
    %7501 = vmatpush.bf16.msra.mxu0 %v4954
    %7502 = vmatpush.bf16.msra.mxu0 %v4950
    %7503 = vmatpush.bf16.msra.mxu0 %v4946
    %7504 = vmatpush.bf16.msra.mxu0 %v4942
    %7505 = vmatpush.bf16.msra.mxu0 %v4938
    %7506 = vmatpush.bf16.msra.mxu0 %v4934
    %7507 = vmatpush.bf16.msra.mxu0 %v4930
    %7508 = vmatpush.bf16.msra.mxu0 %v4926
    %7509 = vmatmul.bf16.gmra.mxu0 %v3401
    %v7510 = vpop.f32.mrf.mxu0
    %v7511 = vadd.f32 %v7422, %v7510
    %v7512 = vpop.f32.mrf.mxu0
    %v7513 = vadd.f32 %v7424, %v7512
    %7514 = vmatmul.bf16.gmra.mxu0 %v3410
    %v7515 = vpop.f32.mrf.mxu0
    %v7516 = vadd.f32 %v7427, %v7515
    %v7517 = vpop.f32.mrf.mxu0
    %v7518 = vadd.f32 %v7429, %v7517
    %7519 = vmatmul.bf16.gmra.mxu0 %v3419
    %v7520 = vpop.f32.mrf.mxu0
    %v7521 = vadd.f32 %v7432, %v7520
    %v7522 = vpop.f32.mrf.mxu0
    %v7523 = vadd.f32 %v7434, %v7522
    %7524 = vmatmul.bf16.gmra.mxu0 %v3428
    %v7525 = vpop.f32.mrf.mxu0
    %v7526 = vadd.f32 %v7437, %v7525
    %v7527 = vpop.f32.mrf.mxu0
    %v7528 = vadd.f32 %v7439, %v7527
    %7529 = vmatmul.bf16.gmra.mxu0 %v3437
    %v7530 = vpop.f32.mrf.mxu0
    %v7531 = vadd.f32 %v7442, %v7530
    %v7532 = vpop.f32.mrf.mxu0
    %v7533 = vadd.f32 %v7444, %v7532
    %7534 = vmatmul.bf16.gmra.mxu0 %v3446
    %v7535 = vpop.f32.mrf.mxu0
    %v7536 = vadd.f32 %v7447, %v7535
    %v7537 = vpop.f32.mrf.mxu0
    %v7538 = vadd.f32 %v7449, %v7537
    %7539 = vmatmul.bf16.gmra.mxu0 %v3455
    %v7540 = vpop.f32.mrf.mxu0
    %v7541 = vadd.f32 %v7452, %v7540
    %v7542 = vpop.f32.mrf.mxu0
    %v7543 = vadd.f32 %v7454, %v7542
    %7544 = vmatmul.bf16.gmra.mxu0 %v3464
    %v7545 = vpop.f32.mrf.mxu0
    %v7546 = vadd.f32 %v7457, %v7545
    %v7547 = vpop.f32.mrf.mxu0
    %v7548 = vadd.f32 %v7459, %v7547
    %7549 = vmatmul.bf16.gmra.mxu0 %v3473
    %v7550 = vpop.f32.mrf.mxu0
    %v7551 = vadd.f32 %v7462, %v7550
    %v7552 = vpop.f32.mrf.mxu0
    %v7553 = vadd.f32 %v7464, %v7552
    %7554 = vmatmul.bf16.gmra.mxu0 %v3482
    %v7555 = vpop.f32.mrf.mxu0
    %v7556 = vadd.f32 %v7467, %v7555
    %v7557 = vpop.f32.mrf.mxu0
    %v7558 = vadd.f32 %v7469, %v7557
    %7559 = vmatmul.bf16.gmra.mxu0 %v3491
    %v7560 = vpop.f32.mrf.mxu0
    %v7561 = vadd.f32 %v7472, %v7560
    %v7562 = vpop.f32.mrf.mxu0
    %v7563 = vadd.f32 %v7474, %v7562
    %7564 = vmatmul.bf16.gmra.mxu0 %v3500
    %v7565 = vpop.f32.mrf.mxu0
    %v7566 = vadd.f32 %v7477, %v7565
    %v7567 = vpop.f32.mrf.mxu0
    %v7568 = vadd.f32 %v7479, %v7567
    %7569 = vmatmul.bf16.gmra.mxu0 %v3509
    %v7570 = vpop.f32.mrf.mxu0
    %v7571 = vadd.f32 %v7482, %v7570
    %v7572 = vpop.f32.mrf.mxu0
    %v7573 = vadd.f32 %v7484, %v7572
    %7574 = vmatmul.bf16.gmra.mxu0 %v3518
    %v7575 = vpop.f32.mrf.mxu0
    %v7576 = vadd.f32 %v7487, %v7575
    %v7577 = vpop.f32.mrf.mxu0
    %v7578 = vadd.f32 %v7489, %v7577
    %7579 = vmatmul.bf16.gmra.mxu0 %v3527
    %v7580 = vpop.f32.mrf.mxu0
    %v7581 = vadd.f32 %v7492, %v7580
    %v7582 = vpop.f32.mrf.mxu0
    %v7583 = vadd.f32 %v7494, %v7582
    %7584 = vmatmul.bf16.gmra.mxu0 %v3536
    %v7585 = vpop.f32.mrf.mxu0
    %v7586 = vadd.f32 %v7497, %v7585
    %v7587 = vpop.f32.mrf.mxu0
    %v7588 = vadd.f32 %v7499, %v7587
    %7589 = vdwg.mxu0
    %7590 = vmatpush.bf16.msra.mxu0 %v4986
    %7591 = vmatpush.bf16.msra.mxu0 %v4982
    %7592 = vmatpush.bf16.msra.mxu0 %v4978
    %7593 = vmatpush.bf16.msra.mxu0 %v4974
    %7594 = vmatpush.bf16.msra.mxu0 %v4970
    %7595 = vmatpush.bf16.msra.mxu0 %v4966
    %7596 = vmatpush.bf16.msra.mxu0 %v4962
    %7597 = vmatpush.bf16.msra.mxu0 %v4958
    %7598 = vmatmul.bf16.gmra.mxu0 %v3402
    %v7599 = vpop.f32.mrf.mxu0
    %v7600 = vadd.f32 %v7511, %v7599
    %v7601 = vpop.f32.mrf.mxu0
    %v7602 = vadd.f32 %v7513, %v7601
    %7603 = vmatmul.bf16.gmra.mxu0 %v3411
    %v7604 = vpop.f32.mrf.mxu0
    %v7605 = vadd.f32 %v7516, %v7604
    %v7606 = vpop.f32.mrf.mxu0
    %v7607 = vadd.f32 %v7518, %v7606
    %7608 = vmatmul.bf16.gmra.mxu0 %v3420
    %v7609 = vpop.f32.mrf.mxu0
    %v7610 = vadd.f32 %v7521, %v7609
    %v7611 = vpop.f32.mrf.mxu0
    %v7612 = vadd.f32 %v7523, %v7611
    %7613 = vmatmul.bf16.gmra.mxu0 %v3429
    %v7614 = vpop.f32.mrf.mxu0
    %v7615 = vadd.f32 %v7526, %v7614
    %v7616 = vpop.f32.mrf.mxu0
    %v7617 = vadd.f32 %v7528, %v7616
    %7618 = vmatmul.bf16.gmra.mxu0 %v3438
    %v7619 = vpop.f32.mrf.mxu0
    %v7620 = vadd.f32 %v7531, %v7619
    %v7621 = vpop.f32.mrf.mxu0
    %v7622 = vadd.f32 %v7533, %v7621
    %7623 = vmatmul.bf16.gmra.mxu0 %v3447
    %v7624 = vpop.f32.mrf.mxu0
    %v7625 = vadd.f32 %v7536, %v7624
    %v7626 = vpop.f32.mrf.mxu0
    %v7627 = vadd.f32 %v7538, %v7626
    %7628 = vmatmul.bf16.gmra.mxu0 %v3456
    %v7629 = vpop.f32.mrf.mxu0
    %v7630 = vadd.f32 %v7541, %v7629
    %v7631 = vpop.f32.mrf.mxu0
    %v7632 = vadd.f32 %v7543, %v7631
    %7633 = vmatmul.bf16.gmra.mxu0 %v3465
    %v7634 = vpop.f32.mrf.mxu0
    %v7635 = vadd.f32 %v7546, %v7634
    %v7636 = vpop.f32.mrf.mxu0
    %v7637 = vadd.f32 %v7548, %v7636
    %7638 = vmatmul.bf16.gmra.mxu0 %v3474
    %v7639 = vpop.f32.mrf.mxu0
    %v7640 = vadd.f32 %v7551, %v7639
    %v7641 = vpop.f32.mrf.mxu0
    %v7642 = vadd.f32 %v7553, %v7641
    %7643 = vmatmul.bf16.gmra.mxu0 %v3483
    %v7644 = vpop.f32.mrf.mxu0
    %v7645 = vadd.f32 %v7556, %v7644
    %v7646 = vpop.f32.mrf.mxu0
    %v7647 = vadd.f32 %v7558, %v7646
    %7648 = vmatmul.bf16.gmra.mxu0 %v3492
    %v7649 = vpop.f32.mrf.mxu0
    %v7650 = vadd.f32 %v7561, %v7649
    %v7651 = vpop.f32.mrf.mxu0
    %v7652 = vadd.f32 %v7563, %v7651
    %7653 = vmatmul.bf16.gmra.mxu0 %v3501
    %v7654 = vpop.f32.mrf.mxu0
    %v7655 = vadd.f32 %v7566, %v7654
    %v7656 = vpop.f32.mrf.mxu0
    %v7657 = vadd.f32 %v7568, %v7656
    %7658 = vmatmul.bf16.gmra.mxu0 %v3510
    %v7659 = vpop.f32.mrf.mxu0
    %v7660 = vadd.f32 %v7571, %v7659
    %v7661 = vpop.f32.mrf.mxu0
    %v7662 = vadd.f32 %v7573, %v7661
    %7663 = vmatmul.bf16.gmra.mxu0 %v3519
    %v7664 = vpop.f32.mrf.mxu0
    %v7665 = vadd.f32 %v7576, %v7664
    %v7666 = vpop.f32.mrf.mxu0
    %v7667 = vadd.f32 %v7578, %v7666
    %7668 = vmatmul.bf16.gmra.mxu0 %v3528
    %v7669 = vpop.f32.mrf.mxu0
    %v7670 = vadd.f32 %v7581, %v7669
    %v7671 = vpop.f32.mrf.mxu0
    %v7672 = vadd.f32 %v7583, %v7671
    %7673 = vmatmul.bf16.gmra.mxu0 %v3537
    %v7674 = vpop.f32.mrf.mxu0
    %v7675 = vadd.f32 %v7586, %v7674
    %v7676 = vpop.f32.mrf.mxu0
    %v7677 = vadd.f32 %v7588, %v7676
    %7678 = vdwg.mxu0
    %7679 = vmatpush.bf16.msra.mxu0 %v4731
    %7680 = vmatpush.bf16.msra.mxu0 %v4727
    %7681 = vmatpush.bf16.msra.mxu0 %v4723
    %7682 = vmatpush.bf16.msra.mxu0 %v4719
    %7683 = vmatpush.bf16.msra.mxu0 %v4715
    %7684 = vmatpush.bf16.msra.mxu0 %v4711
    %7685 = vmatpush.bf16.msra.mxu0 %v4707
    %7686 = vmatpush.bf16.msra.mxu0 %v4703
    %7687 = vmatmul.bf16.gmra.mxu0 %v3394
    %v7688 = vpop.f32.mrf.mxu0
    %v7689 = vadd.f32 %v3831, %v7688
    %v7690 = vpop.f32.mrf.mxu0
    %v7691 = vadd.f32 %v3831, %v7690
    %7692 = vmatmul.bf16.gmra.mxu0 %v3403
    %v7693 = vpop.f32.mrf.mxu0
    %v7694 = vadd.f32 %v3831, %v7693
    %v7695 = vpop.f32.mrf.mxu0
    %v7696 = vadd.f32 %v3831, %v7695
    %7697 = vmatmul.bf16.gmra.mxu0 %v3412
    %v7698 = vpop.f32.mrf.mxu0
    %v7699 = vadd.f32 %v3831, %v7698
    %v7700 = vpop.f32.mrf.mxu0
    %v7701 = vadd.f32 %v3831, %v7700
    %7702 = vmatmul.bf16.gmra.mxu0 %v3421
    %v7703 = vpop.f32.mrf.mxu0
    %v7704 = vadd.f32 %v3831, %v7703
    %v7705 = vpop.f32.mrf.mxu0
    %v7706 = vadd.f32 %v3831, %v7705
    %7707 = vmatmul.bf16.gmra.mxu0 %v3430
    %v7708 = vpop.f32.mrf.mxu0
    %v7709 = vadd.f32 %v3831, %v7708
    %v7710 = vpop.f32.mrf.mxu0
    %v7711 = vadd.f32 %v3831, %v7710
    %7712 = vmatmul.bf16.gmra.mxu0 %v3439
    %v7713 = vpop.f32.mrf.mxu0
    %v7714 = vadd.f32 %v3831, %v7713
    %v7715 = vpop.f32.mrf.mxu0
    %v7716 = vadd.f32 %v3831, %v7715
    %7717 = vmatmul.bf16.gmra.mxu0 %v3448
    %v7718 = vpop.f32.mrf.mxu0
    %v7719 = vadd.f32 %v3831, %v7718
    %v7720 = vpop.f32.mrf.mxu0
    %v7721 = vadd.f32 %v3831, %v7720
    %7722 = vmatmul.bf16.gmra.mxu0 %v3457
    %v7723 = vpop.f32.mrf.mxu0
    %v7724 = vadd.f32 %v3831, %v7723
    %v7725 = vpop.f32.mrf.mxu0
    %v7726 = vadd.f32 %v3831, %v7725
    %7727 = vmatmul.bf16.gmra.mxu0 %v3466
    %v7728 = vpop.f32.mrf.mxu0
    %v7729 = vadd.f32 %v3831, %v7728
    %v7730 = vpop.f32.mrf.mxu0
    %v7731 = vadd.f32 %v3831, %v7730
    %7732 = vmatmul.bf16.gmra.mxu0 %v3475
    %v7733 = vpop.f32.mrf.mxu0
    %v7734 = vadd.f32 %v3831, %v7733
    %v7735 = vpop.f32.mrf.mxu0
    %v7736 = vadd.f32 %v3831, %v7735
    %7737 = vmatmul.bf16.gmra.mxu0 %v3484
    %v7738 = vpop.f32.mrf.mxu0
    %v7739 = vadd.f32 %v3831, %v7738
    %v7740 = vpop.f32.mrf.mxu0
    %v7741 = vadd.f32 %v3831, %v7740
    %7742 = vmatmul.bf16.gmra.mxu0 %v3493
    %v7743 = vpop.f32.mrf.mxu0
    %v7744 = vadd.f32 %v3831, %v7743
    %v7745 = vpop.f32.mrf.mxu0
    %v7746 = vadd.f32 %v3831, %v7745
    %7747 = vmatmul.bf16.gmra.mxu0 %v3502
    %v7748 = vpop.f32.mrf.mxu0
    %v7749 = vadd.f32 %v3831, %v7748
    %v7750 = vpop.f32.mrf.mxu0
    %v7751 = vadd.f32 %v3831, %v7750
    %7752 = vmatmul.bf16.gmra.mxu0 %v3511
    %v7753 = vpop.f32.mrf.mxu0
    %v7754 = vadd.f32 %v3831, %v7753
    %v7755 = vpop.f32.mrf.mxu0
    %v7756 = vadd.f32 %v3831, %v7755
    %7757 = vmatmul.bf16.gmra.mxu0 %v3520
    %v7758 = vpop.f32.mrf.mxu0
    %v7759 = vadd.f32 %v3831, %v7758
    %v7760 = vpop.f32.mrf.mxu0
    %v7761 = vadd.f32 %v3831, %v7760
    %7762 = vmatmul.bf16.gmra.mxu0 %v3529
    %v7763 = vpop.f32.mrf.mxu0
    %v7764 = vadd.f32 %v3831, %v7763
    %v7765 = vpop.f32.mrf.mxu0
    %v7766 = vadd.f32 %v3831, %v7765
    %7767 = vdwg.mxu0
    %7768 = vmatpush.bf16.msra.mxu0 %v4763
    %7769 = vmatpush.bf16.msra.mxu0 %v4759
    %7770 = vmatpush.bf16.msra.mxu0 %v4755
    %7771 = vmatpush.bf16.msra.mxu0 %v4751
    %7772 = vmatpush.bf16.msra.mxu0 %v4747
    %7773 = vmatpush.bf16.msra.mxu0 %v4743
    %7774 = vmatpush.bf16.msra.mxu0 %v4739
    %7775 = vmatpush.bf16.msra.mxu0 %v4735
    %7776 = vmatmul.bf16.gmra.mxu0 %v3395
    %v7777 = vpop.f32.mrf.mxu0
    %v7778 = vadd.f32 %v7689, %v7777
    %v7779 = vpop.f32.mrf.mxu0
    %v7780 = vadd.f32 %v7691, %v7779
    %7781 = vmatmul.bf16.gmra.mxu0 %v3404
    %v7782 = vpop.f32.mrf.mxu0
    %v7783 = vadd.f32 %v7694, %v7782
    %v7784 = vpop.f32.mrf.mxu0
    %v7785 = vadd.f32 %v7696, %v7784
    %7786 = vmatmul.bf16.gmra.mxu0 %v3413
    %v7787 = vpop.f32.mrf.mxu0
    %v7788 = vadd.f32 %v7699, %v7787
    %v7789 = vpop.f32.mrf.mxu0
    %v7790 = vadd.f32 %v7701, %v7789
    %7791 = vmatmul.bf16.gmra.mxu0 %v3422
    %v7792 = vpop.f32.mrf.mxu0
    %v7793 = vadd.f32 %v7704, %v7792
    %v7794 = vpop.f32.mrf.mxu0
    %v7795 = vadd.f32 %v7706, %v7794
    %7796 = vmatmul.bf16.gmra.mxu0 %v3431
    %v7797 = vpop.f32.mrf.mxu0
    %v7798 = vadd.f32 %v7709, %v7797
    %v7799 = vpop.f32.mrf.mxu0
    %v7800 = vadd.f32 %v7711, %v7799
    %7801 = vmatmul.bf16.gmra.mxu0 %v3440
    %v7802 = vpop.f32.mrf.mxu0
    %v7803 = vadd.f32 %v7714, %v7802
    %v7804 = vpop.f32.mrf.mxu0
    %v7805 = vadd.f32 %v7716, %v7804
    %7806 = vmatmul.bf16.gmra.mxu0 %v3449
    %v7807 = vpop.f32.mrf.mxu0
    %v7808 = vadd.f32 %v7719, %v7807
    %v7809 = vpop.f32.mrf.mxu0
    %v7810 = vadd.f32 %v7721, %v7809
    %7811 = vmatmul.bf16.gmra.mxu0 %v3458
    %v7812 = vpop.f32.mrf.mxu0
    %v7813 = vadd.f32 %v7724, %v7812
    %v7814 = vpop.f32.mrf.mxu0
    %v7815 = vadd.f32 %v7726, %v7814
    %7816 = vmatmul.bf16.gmra.mxu0 %v3467
    %v7817 = vpop.f32.mrf.mxu0
    %v7818 = vadd.f32 %v7729, %v7817
    %v7819 = vpop.f32.mrf.mxu0
    %v7820 = vadd.f32 %v7731, %v7819
    %7821 = vmatmul.bf16.gmra.mxu0 %v3476
    %v7822 = vpop.f32.mrf.mxu0
    %v7823 = vadd.f32 %v7734, %v7822
    %v7824 = vpop.f32.mrf.mxu0
    %v7825 = vadd.f32 %v7736, %v7824
    %7826 = vmatmul.bf16.gmra.mxu0 %v3485
    %v7827 = vpop.f32.mrf.mxu0
    %v7828 = vadd.f32 %v7739, %v7827
    %v7829 = vpop.f32.mrf.mxu0
    %v7830 = vadd.f32 %v7741, %v7829
    %7831 = vmatmul.bf16.gmra.mxu0 %v3494
    %v7832 = vpop.f32.mrf.mxu0
    %v7833 = vadd.f32 %v7744, %v7832
    %v7834 = vpop.f32.mrf.mxu0
    %v7835 = vadd.f32 %v7746, %v7834
    %7836 = vmatmul.bf16.gmra.mxu0 %v3503
    %v7837 = vpop.f32.mrf.mxu0
    %v7838 = vadd.f32 %v7749, %v7837
    %v7839 = vpop.f32.mrf.mxu0
    %v7840 = vadd.f32 %v7751, %v7839
    %7841 = vmatmul.bf16.gmra.mxu0 %v3512
    %v7842 = vpop.f32.mrf.mxu0
    %v7843 = vadd.f32 %v7754, %v7842
    %v7844 = vpop.f32.mrf.mxu0
    %v7845 = vadd.f32 %v7756, %v7844
    %7846 = vmatmul.bf16.gmra.mxu0 %v3521
    %v7847 = vpop.f32.mrf.mxu0
    %v7848 = vadd.f32 %v7759, %v7847
    %v7849 = vpop.f32.mrf.mxu0
    %v7850 = vadd.f32 %v7761, %v7849
    %7851 = vmatmul.bf16.gmra.mxu0 %v3530
    %v7852 = vpop.f32.mrf.mxu0
    %v7853 = vadd.f32 %v7764, %v7852
    %v7854 = vpop.f32.mrf.mxu0
    %v7855 = vadd.f32 %v7766, %v7854
    %7856 = vdwg.mxu0
    %7857 = vmatpush.bf16.msra.mxu0 %v4795
    %7858 = vmatpush.bf16.msra.mxu0 %v4791
    %7859 = vmatpush.bf16.msra.mxu0 %v4787
    %7860 = vmatpush.bf16.msra.mxu0 %v4783
    %7861 = vmatpush.bf16.msra.mxu0 %v4779
    %7862 = vmatpush.bf16.msra.mxu0 %v4775
    %7863 = vmatpush.bf16.msra.mxu0 %v4771
    %7864 = vmatpush.bf16.msra.mxu0 %v4767
    %7865 = vmatmul.bf16.gmra.mxu0 %v3396
    %v7866 = vpop.f32.mrf.mxu0
    %v7867 = vadd.f32 %v7778, %v7866
    %v7868 = vpop.f32.mrf.mxu0
    %v7869 = vadd.f32 %v7780, %v7868
    %7870 = vmatmul.bf16.gmra.mxu0 %v3405
    %v7871 = vpop.f32.mrf.mxu0
    %v7872 = vadd.f32 %v7783, %v7871
    %v7873 = vpop.f32.mrf.mxu0
    %v7874 = vadd.f32 %v7785, %v7873
    %7875 = vmatmul.bf16.gmra.mxu0 %v3414
    %v7876 = vpop.f32.mrf.mxu0
    %v7877 = vadd.f32 %v7788, %v7876
    %v7878 = vpop.f32.mrf.mxu0
    %v7879 = vadd.f32 %v7790, %v7878
    %7880 = vmatmul.bf16.gmra.mxu0 %v3423
    %v7881 = vpop.f32.mrf.mxu0
    %v7882 = vadd.f32 %v7793, %v7881
    %v7883 = vpop.f32.mrf.mxu0
    %v7884 = vadd.f32 %v7795, %v7883
    %7885 = vmatmul.bf16.gmra.mxu0 %v3432
    %v7886 = vpop.f32.mrf.mxu0
    %v7887 = vadd.f32 %v7798, %v7886
    %v7888 = vpop.f32.mrf.mxu0
    %v7889 = vadd.f32 %v7800, %v7888
    %7890 = vmatmul.bf16.gmra.mxu0 %v3441
    %v7891 = vpop.f32.mrf.mxu0
    %v7892 = vadd.f32 %v7803, %v7891
    %v7893 = vpop.f32.mrf.mxu0
    %v7894 = vadd.f32 %v7805, %v7893
    %7895 = vmatmul.bf16.gmra.mxu0 %v3450
    %v7896 = vpop.f32.mrf.mxu0
    %v7897 = vadd.f32 %v7808, %v7896
    %v7898 = vpop.f32.mrf.mxu0
    %v7899 = vadd.f32 %v7810, %v7898
    %7900 = vmatmul.bf16.gmra.mxu0 %v3459
    %v7901 = vpop.f32.mrf.mxu0
    %v7902 = vadd.f32 %v7813, %v7901
    %v7903 = vpop.f32.mrf.mxu0
    %v7904 = vadd.f32 %v7815, %v7903
    %7905 = vmatmul.bf16.gmra.mxu0 %v3468
    %v7906 = vpop.f32.mrf.mxu0
    %v7907 = vadd.f32 %v7818, %v7906
    %v7908 = vpop.f32.mrf.mxu0
    %v7909 = vadd.f32 %v7820, %v7908
    %7910 = vmatmul.bf16.gmra.mxu0 %v3477
    %v7911 = vpop.f32.mrf.mxu0
    %v7912 = vadd.f32 %v7823, %v7911
    %v7913 = vpop.f32.mrf.mxu0
    %v7914 = vadd.f32 %v7825, %v7913
    %7915 = vmatmul.bf16.gmra.mxu0 %v3486
    %v7916 = vpop.f32.mrf.mxu0
    %v7917 = vadd.f32 %v7828, %v7916
    %v7918 = vpop.f32.mrf.mxu0
    %v7919 = vadd.f32 %v7830, %v7918
    %7920 = vmatmul.bf16.gmra.mxu0 %v3495
    %v7921 = vpop.f32.mrf.mxu0
    %v7922 = vadd.f32 %v7833, %v7921
    %v7923 = vpop.f32.mrf.mxu0
    %v7924 = vadd.f32 %v7835, %v7923
    %7925 = vmatmul.bf16.gmra.mxu0 %v3504
    %v7926 = vpop.f32.mrf.mxu0
    %v7927 = vadd.f32 %v7838, %v7926
    %v7928 = vpop.f32.mrf.mxu0
    %v7929 = vadd.f32 %v7840, %v7928
    %7930 = vmatmul.bf16.gmra.mxu0 %v3513
    %v7931 = vpop.f32.mrf.mxu0
    %v7932 = vadd.f32 %v7843, %v7931
    %v7933 = vpop.f32.mrf.mxu0
    %v7934 = vadd.f32 %v7845, %v7933
    %7935 = vmatmul.bf16.gmra.mxu0 %v3522
    %v7936 = vpop.f32.mrf.mxu0
    %v7937 = vadd.f32 %v7848, %v7936
    %v7938 = vpop.f32.mrf.mxu0
    %v7939 = vadd.f32 %v7850, %v7938
    %7940 = vmatmul.bf16.gmra.mxu0 %v3531
    %v7941 = vpop.f32.mrf.mxu0
    %v7942 = vadd.f32 %v7853, %v7941
    %v7943 = vpop.f32.mrf.mxu0
    %v7944 = vadd.f32 %v7855, %v7943
    %7945 = vdwg.mxu0
    %7946 = vmatpush.bf16.msra.mxu0 %v4827
    %7947 = vmatpush.bf16.msra.mxu0 %v4823
    %7948 = vmatpush.bf16.msra.mxu0 %v4819
    %7949 = vmatpush.bf16.msra.mxu0 %v4815
    %7950 = vmatpush.bf16.msra.mxu0 %v4811
    %7951 = vmatpush.bf16.msra.mxu0 %v4807
    %7952 = vmatpush.bf16.msra.mxu0 %v4803
    %7953 = vmatpush.bf16.msra.mxu0 %v4799
    %7954 = vmatmul.bf16.gmra.mxu0 %v3397
    %v7955 = vpop.f32.mrf.mxu0
    %v7956 = vadd.f32 %v7867, %v7955
    %v7957 = vpop.f32.mrf.mxu0
    %v7958 = vadd.f32 %v7869, %v7957
    %7959 = vmatmul.bf16.gmra.mxu0 %v3406
    %v7960 = vpop.f32.mrf.mxu0
    %v7961 = vadd.f32 %v7872, %v7960
    %v7962 = vpop.f32.mrf.mxu0
    %v7963 = vadd.f32 %v7874, %v7962
    %7964 = vmatmul.bf16.gmra.mxu0 %v3415
    %v7965 = vpop.f32.mrf.mxu0
    %v7966 = vadd.f32 %v7877, %v7965
    %v7967 = vpop.f32.mrf.mxu0
    %v7968 = vadd.f32 %v7879, %v7967
    %7969 = vmatmul.bf16.gmra.mxu0 %v3424
    %v7970 = vpop.f32.mrf.mxu0
    %v7971 = vadd.f32 %v7882, %v7970
    %v7972 = vpop.f32.mrf.mxu0
    %v7973 = vadd.f32 %v7884, %v7972
    %7974 = vmatmul.bf16.gmra.mxu0 %v3433
    %v7975 = vpop.f32.mrf.mxu0
    %v7976 = vadd.f32 %v7887, %v7975
    %v7977 = vpop.f32.mrf.mxu0
    %v7978 = vadd.f32 %v7889, %v7977
    %7979 = vmatmul.bf16.gmra.mxu0 %v3442
    %v7980 = vpop.f32.mrf.mxu0
    %v7981 = vadd.f32 %v7892, %v7980
    %v7982 = vpop.f32.mrf.mxu0
    %v7983 = vadd.f32 %v7894, %v7982
    %7984 = vmatmul.bf16.gmra.mxu0 %v3451
    %v7985 = vpop.f32.mrf.mxu0
    %v7986 = vadd.f32 %v7897, %v7985
    %v7987 = vpop.f32.mrf.mxu0
    %v7988 = vadd.f32 %v7899, %v7987
    %7989 = vmatmul.bf16.gmra.mxu0 %v3460
    %v7990 = vpop.f32.mrf.mxu0
    %v7991 = vadd.f32 %v7902, %v7990
    %v7992 = vpop.f32.mrf.mxu0
    %v7993 = vadd.f32 %v7904, %v7992
    %7994 = vmatmul.bf16.gmra.mxu0 %v3469
    %v7995 = vpop.f32.mrf.mxu0
    %v7996 = vadd.f32 %v7907, %v7995
    %v7997 = vpop.f32.mrf.mxu0
    %v7998 = vadd.f32 %v7909, %v7997
    %7999 = vmatmul.bf16.gmra.mxu0 %v3478
    %v8000 = vpop.f32.mrf.mxu0
    %v8001 = vadd.f32 %v7912, %v8000
    %v8002 = vpop.f32.mrf.mxu0
    %v8003 = vadd.f32 %v7914, %v8002
    %8004 = vmatmul.bf16.gmra.mxu0 %v3487
    %v8005 = vpop.f32.mrf.mxu0
    %v8006 = vadd.f32 %v7917, %v8005
    %v8007 = vpop.f32.mrf.mxu0
    %v8008 = vadd.f32 %v7919, %v8007
    %8009 = vmatmul.bf16.gmra.mxu0 %v3496
    %v8010 = vpop.f32.mrf.mxu0
    %v8011 = vadd.f32 %v7922, %v8010
    %v8012 = vpop.f32.mrf.mxu0
    %v8013 = vadd.f32 %v7924, %v8012
    %8014 = vmatmul.bf16.gmra.mxu0 %v3505
    %v8015 = vpop.f32.mrf.mxu0
    %v8016 = vadd.f32 %v7927, %v8015
    %v8017 = vpop.f32.mrf.mxu0
    %v8018 = vadd.f32 %v7929, %v8017
    %8019 = vmatmul.bf16.gmra.mxu0 %v3514
    %v8020 = vpop.f32.mrf.mxu0
    %v8021 = vadd.f32 %v7932, %v8020
    %v8022 = vpop.f32.mrf.mxu0
    %v8023 = vadd.f32 %v7934, %v8022
    %8024 = vmatmul.bf16.gmra.mxu0 %v3523
    %v8025 = vpop.f32.mrf.mxu0
    %v8026 = vadd.f32 %v7937, %v8025
    %v8027 = vpop.f32.mrf.mxu0
    %v8028 = vadd.f32 %v7939, %v8027
    %8029 = vmatmul.bf16.gmra.mxu0 %v3532
    %v8030 = vpop.f32.mrf.mxu0
    %v8031 = vadd.f32 %v7942, %v8030
    %v8032 = vpop.f32.mrf.mxu0
    %v8033 = vadd.f32 %v7944, %v8032
    %8034 = vdwg.mxu0
    %8035 = vmatpush.bf16.msra.mxu0 %v4859
    %8036 = vmatpush.bf16.msra.mxu0 %v4855
    %8037 = vmatpush.bf16.msra.mxu0 %v4851
    %8038 = vmatpush.bf16.msra.mxu0 %v4847
    %8039 = vmatpush.bf16.msra.mxu0 %v4843
    %8040 = vmatpush.bf16.msra.mxu0 %v4839
    %8041 = vmatpush.bf16.msra.mxu0 %v4835
    %8042 = vmatpush.bf16.msra.mxu0 %v4831
    %8043 = vmatmul.bf16.gmra.mxu0 %v3398
    %v8044 = vpop.f32.mrf.mxu0
    %v8045 = vadd.f32 %v7956, %v8044
    %v8046 = vpop.f32.mrf.mxu0
    %v8047 = vadd.f32 %v7958, %v8046
    %8048 = vmatmul.bf16.gmra.mxu0 %v3407
    %v8049 = vpop.f32.mrf.mxu0
    %v8050 = vadd.f32 %v7961, %v8049
    %v8051 = vpop.f32.mrf.mxu0
    %v8052 = vadd.f32 %v7963, %v8051
    %8053 = vmatmul.bf16.gmra.mxu0 %v3416
    %v8054 = vpop.f32.mrf.mxu0
    %v8055 = vadd.f32 %v7966, %v8054
    %v8056 = vpop.f32.mrf.mxu0
    %v8057 = vadd.f32 %v7968, %v8056
    %8058 = vmatmul.bf16.gmra.mxu0 %v3425
    %v8059 = vpop.f32.mrf.mxu0
    %v8060 = vadd.f32 %v7971, %v8059
    %v8061 = vpop.f32.mrf.mxu0
    %v8062 = vadd.f32 %v7973, %v8061
    %8063 = vmatmul.bf16.gmra.mxu0 %v3434
    %v8064 = vpop.f32.mrf.mxu0
    %v8065 = vadd.f32 %v7976, %v8064
    %v8066 = vpop.f32.mrf.mxu0
    %v8067 = vadd.f32 %v7978, %v8066
    %8068 = vmatmul.bf16.gmra.mxu0 %v3443
    %v8069 = vpop.f32.mrf.mxu0
    %v8070 = vadd.f32 %v7981, %v8069
    %v8071 = vpop.f32.mrf.mxu0
    %v8072 = vadd.f32 %v7983, %v8071
    %8073 = vmatmul.bf16.gmra.mxu0 %v3452
    %v8074 = vpop.f32.mrf.mxu0
    %v8075 = vadd.f32 %v7986, %v8074
    %v8076 = vpop.f32.mrf.mxu0
    %v8077 = vadd.f32 %v7988, %v8076
    %8078 = vmatmul.bf16.gmra.mxu0 %v3461
    %v8079 = vpop.f32.mrf.mxu0
    %v8080 = vadd.f32 %v7991, %v8079
    %v8081 = vpop.f32.mrf.mxu0
    %v8082 = vadd.f32 %v7993, %v8081
    %8083 = vmatmul.bf16.gmra.mxu0 %v3470
    %v8084 = vpop.f32.mrf.mxu0
    %v8085 = vadd.f32 %v7996, %v8084
    %v8086 = vpop.f32.mrf.mxu0
    %v8087 = vadd.f32 %v7998, %v8086
    %8088 = vmatmul.bf16.gmra.mxu0 %v3479
    %v8089 = vpop.f32.mrf.mxu0
    %v8090 = vadd.f32 %v8001, %v8089
    %v8091 = vpop.f32.mrf.mxu0
    %v8092 = vadd.f32 %v8003, %v8091
    %8093 = vmatmul.bf16.gmra.mxu0 %v3488
    %v8094 = vpop.f32.mrf.mxu0
    %v8095 = vadd.f32 %v8006, %v8094
    %v8096 = vpop.f32.mrf.mxu0
    %v8097 = vadd.f32 %v8008, %v8096
    %8098 = vmatmul.bf16.gmra.mxu0 %v3497
    %v8099 = vpop.f32.mrf.mxu0
    %v8100 = vadd.f32 %v8011, %v8099
    %v8101 = vpop.f32.mrf.mxu0
    %v8102 = vadd.f32 %v8013, %v8101
    %8103 = vmatmul.bf16.gmra.mxu0 %v3506
    %v8104 = vpop.f32.mrf.mxu0
    %v8105 = vadd.f32 %v8016, %v8104
    %v8106 = vpop.f32.mrf.mxu0
    %v8107 = vadd.f32 %v8018, %v8106
    %8108 = vmatmul.bf16.gmra.mxu0 %v3515
    %v8109 = vpop.f32.mrf.mxu0
    %v8110 = vadd.f32 %v8021, %v8109
    %v8111 = vpop.f32.mrf.mxu0
    %v8112 = vadd.f32 %v8023, %v8111
    %8113 = vmatmul.bf16.gmra.mxu0 %v3524
    %v8114 = vpop.f32.mrf.mxu0
    %v8115 = vadd.f32 %v8026, %v8114
    %v8116 = vpop.f32.mrf.mxu0
    %v8117 = vadd.f32 %v8028, %v8116
    %8118 = vmatmul.bf16.gmra.mxu0 %v3533
    %v8119 = vpop.f32.mrf.mxu0
    %v8120 = vadd.f32 %v8031, %v8119
    %v8121 = vpop.f32.mrf.mxu0
    %v8122 = vadd.f32 %v8033, %v8121
    %8123 = vdwg.mxu0
    %8124 = vmatpush.bf16.msra.mxu0 %v4891
    %8125 = vmatpush.bf16.msra.mxu0 %v4887
    %8126 = vmatpush.bf16.msra.mxu0 %v4883
    %8127 = vmatpush.bf16.msra.mxu0 %v4879
    %8128 = vmatpush.bf16.msra.mxu0 %v4875
    %8129 = vmatpush.bf16.msra.mxu0 %v4871
    %8130 = vmatpush.bf16.msra.mxu0 %v4867
    %8131 = vmatpush.bf16.msra.mxu0 %v4863
    %8132 = vmatmul.bf16.gmra.mxu0 %v3399
    %v8133 = vpop.f32.mrf.mxu0
    %v8134 = vadd.f32 %v8045, %v8133
    %v8135 = vpop.f32.mrf.mxu0
    %v8136 = vadd.f32 %v8047, %v8135
    %8137 = vmatmul.bf16.gmra.mxu0 %v3408
    %v8138 = vpop.f32.mrf.mxu0
    %v8139 = vadd.f32 %v8050, %v8138
    %v8140 = vpop.f32.mrf.mxu0
    %v8141 = vadd.f32 %v8052, %v8140
    %8142 = vmatmul.bf16.gmra.mxu0 %v3417
    %v8143 = vpop.f32.mrf.mxu0
    %v8144 = vadd.f32 %v8055, %v8143
    %v8145 = vpop.f32.mrf.mxu0
    %v8146 = vadd.f32 %v8057, %v8145
    %8147 = vmatmul.bf16.gmra.mxu0 %v3426
    %v8148 = vpop.f32.mrf.mxu0
    %v8149 = vadd.f32 %v8060, %v8148
    %v8150 = vpop.f32.mrf.mxu0
    %v8151 = vadd.f32 %v8062, %v8150
    %8152 = vmatmul.bf16.gmra.mxu0 %v3435
    %v8153 = vpop.f32.mrf.mxu0
    %v8154 = vadd.f32 %v8065, %v8153
    %v8155 = vpop.f32.mrf.mxu0
    %v8156 = vadd.f32 %v8067, %v8155
    %8157 = vmatmul.bf16.gmra.mxu0 %v3444
    %v8158 = vpop.f32.mrf.mxu0
    %v8159 = vadd.f32 %v8070, %v8158
    %v8160 = vpop.f32.mrf.mxu0
    %v8161 = vadd.f32 %v8072, %v8160
    %8162 = vmatmul.bf16.gmra.mxu0 %v3453
    %v8163 = vpop.f32.mrf.mxu0
    %v8164 = vadd.f32 %v8075, %v8163
    %v8165 = vpop.f32.mrf.mxu0
    %v8166 = vadd.f32 %v8077, %v8165
    %8167 = vmatmul.bf16.gmra.mxu0 %v3462
    %v8168 = vpop.f32.mrf.mxu0
    %v8169 = vadd.f32 %v8080, %v8168
    %v8170 = vpop.f32.mrf.mxu0
    %v8171 = vadd.f32 %v8082, %v8170
    %8172 = vmatmul.bf16.gmra.mxu0 %v3471
    %v8173 = vpop.f32.mrf.mxu0
    %v8174 = vadd.f32 %v8085, %v8173
    %v8175 = vpop.f32.mrf.mxu0
    %v8176 = vadd.f32 %v8087, %v8175
    %8177 = vmatmul.bf16.gmra.mxu0 %v3480
    %v8178 = vpop.f32.mrf.mxu0
    %v8179 = vadd.f32 %v8090, %v8178
    %v8180 = vpop.f32.mrf.mxu0
    %v8181 = vadd.f32 %v8092, %v8180
    %8182 = vmatmul.bf16.gmra.mxu0 %v3489
    %v8183 = vpop.f32.mrf.mxu0
    %v8184 = vadd.f32 %v8095, %v8183
    %v8185 = vpop.f32.mrf.mxu0
    %v8186 = vadd.f32 %v8097, %v8185
    %8187 = vmatmul.bf16.gmra.mxu0 %v3498
    %v8188 = vpop.f32.mrf.mxu0
    %v8189 = vadd.f32 %v8100, %v8188
    %v8190 = vpop.f32.mrf.mxu0
    %v8191 = vadd.f32 %v8102, %v8190
    %8192 = vmatmul.bf16.gmra.mxu0 %v3507
    %v8193 = vpop.f32.mrf.mxu0
    %v8194 = vadd.f32 %v8105, %v8193
    %v8195 = vpop.f32.mrf.mxu0
    %v8196 = vadd.f32 %v8107, %v8195
    %8197 = vmatmul.bf16.gmra.mxu0 %v3516
    %v8198 = vpop.f32.mrf.mxu0
    %v8199 = vadd.f32 %v8110, %v8198
    %v8200 = vpop.f32.mrf.mxu0
    %v8201 = vadd.f32 %v8112, %v8200
    %8202 = vmatmul.bf16.gmra.mxu0 %v3525
    %v8203 = vpop.f32.mrf.mxu0
    %v8204 = vadd.f32 %v8115, %v8203
    %v8205 = vpop.f32.mrf.mxu0
    %v8206 = vadd.f32 %v8117, %v8205
    %8207 = vmatmul.bf16.gmra.mxu0 %v3534
    %v8208 = vpop.f32.mrf.mxu0
    %v8209 = vadd.f32 %v8120, %v8208
    %v8210 = vpop.f32.mrf.mxu0
    %v8211 = vadd.f32 %v8122, %v8210
    %8212 = vdwg.mxu0
    %8213 = vmatpush.bf16.msra.mxu0 %v4923
    %8214 = vmatpush.bf16.msra.mxu0 %v4919
    %8215 = vmatpush.bf16.msra.mxu0 %v4915
    %8216 = vmatpush.bf16.msra.mxu0 %v4911
    %8217 = vmatpush.bf16.msra.mxu0 %v4907
    %8218 = vmatpush.bf16.msra.mxu0 %v4903
    %8219 = vmatpush.bf16.msra.mxu0 %v4899
    %8220 = vmatpush.bf16.msra.mxu0 %v4895
    %8221 = vmatmul.bf16.gmra.mxu0 %v3400
    %v8222 = vpop.f32.mrf.mxu0
    %v8223 = vadd.f32 %v8134, %v8222
    %v8224 = vpop.f32.mrf.mxu0
    %v8225 = vadd.f32 %v8136, %v8224
    %8226 = vmatmul.bf16.gmra.mxu0 %v3409
    %v8227 = vpop.f32.mrf.mxu0
    %v8228 = vadd.f32 %v8139, %v8227
    %v8229 = vpop.f32.mrf.mxu0
    %v8230 = vadd.f32 %v8141, %v8229
    %8231 = vmatmul.bf16.gmra.mxu0 %v3418
    %v8232 = vpop.f32.mrf.mxu0
    %v8233 = vadd.f32 %v8144, %v8232
    %v8234 = vpop.f32.mrf.mxu0
    %v8235 = vadd.f32 %v8146, %v8234
    %8236 = vmatmul.bf16.gmra.mxu0 %v3427
    %v8237 = vpop.f32.mrf.mxu0
    %v8238 = vadd.f32 %v8149, %v8237
    %v8239 = vpop.f32.mrf.mxu0
    %v8240 = vadd.f32 %v8151, %v8239
    %8241 = vmatmul.bf16.gmra.mxu0 %v3436
    %v8242 = vpop.f32.mrf.mxu0
    %v8243 = vadd.f32 %v8154, %v8242
    %v8244 = vpop.f32.mrf.mxu0
    %v8245 = vadd.f32 %v8156, %v8244
    %8246 = vmatmul.bf16.gmra.mxu0 %v3445
    %v8247 = vpop.f32.mrf.mxu0
    %v8248 = vadd.f32 %v8159, %v8247
    %v8249 = vpop.f32.mrf.mxu0
    %v8250 = vadd.f32 %v8161, %v8249
    %8251 = vmatmul.bf16.gmra.mxu0 %v3454
    %v8252 = vpop.f32.mrf.mxu0
    %v8253 = vadd.f32 %v8164, %v8252
    %v8254 = vpop.f32.mrf.mxu0
    %v8255 = vadd.f32 %v8166, %v8254
    %8256 = vmatmul.bf16.gmra.mxu0 %v3463
    %v8257 = vpop.f32.mrf.mxu0
    %v8258 = vadd.f32 %v8169, %v8257
    %v8259 = vpop.f32.mrf.mxu0
    %v8260 = vadd.f32 %v8171, %v8259
    %8261 = vmatmul.bf16.gmra.mxu0 %v3472
    %v8262 = vpop.f32.mrf.mxu0
    %v8263 = vadd.f32 %v8174, %v8262
    %v8264 = vpop.f32.mrf.mxu0
    %v8265 = vadd.f32 %v8176, %v8264
    %8266 = vmatmul.bf16.gmra.mxu0 %v3481
    %v8267 = vpop.f32.mrf.mxu0
    %v8268 = vadd.f32 %v8179, %v8267
    %v8269 = vpop.f32.mrf.mxu0
    %v8270 = vadd.f32 %v8181, %v8269
    %8271 = vmatmul.bf16.gmra.mxu0 %v3490
    %v8272 = vpop.f32.mrf.mxu0
    %v8273 = vadd.f32 %v8184, %v8272
    %v8274 = vpop.f32.mrf.mxu0
    %v8275 = vadd.f32 %v8186, %v8274
    %8276 = vmatmul.bf16.gmra.mxu0 %v3499
    %v8277 = vpop.f32.mrf.mxu0
    %v8278 = vadd.f32 %v8189, %v8277
    %v8279 = vpop.f32.mrf.mxu0
    %v8280 = vadd.f32 %v8191, %v8279
    %8281 = vmatmul.bf16.gmra.mxu0 %v3508
    %v8282 = vpop.f32.mrf.mxu0
    %v8283 = vadd.f32 %v8194, %v8282
    %v8284 = vpop.f32.mrf.mxu0
    %v8285 = vadd.f32 %v8196, %v8284
    %8286 = vmatmul.bf16.gmra.mxu0 %v3517
    %v8287 = vpop.f32.mrf.mxu0
    %v8288 = vadd.f32 %v8199, %v8287
    %v8289 = vpop.f32.mrf.mxu0
    %v8290 = vadd.f32 %v8201, %v8289
    %8291 = vmatmul.bf16.gmra.mxu0 %v3526
    %v8292 = vpop.f32.mrf.mxu0
    %v8293 = vadd.f32 %v8204, %v8292
    %v8294 = vpop.f32.mrf.mxu0
    %v8295 = vadd.f32 %v8206, %v8294
    %8296 = vmatmul.bf16.gmra.mxu0 %v3535
    %v8297 = vpop.f32.mrf.mxu0
    %v8298 = vadd.f32 %v8209, %v8297
    %v8299 = vpop.f32.mrf.mxu0
    %v8300 = vadd.f32 %v8211, %v8299
    %8301 = vdwg.mxu0
    %8302 = vmatpush.bf16.msra.mxu0 %v4955
    %8303 = vmatpush.bf16.msra.mxu0 %v4951
    %8304 = vmatpush.bf16.msra.mxu0 %v4947
    %8305 = vmatpush.bf16.msra.mxu0 %v4943
    %8306 = vmatpush.bf16.msra.mxu0 %v4939
    %8307 = vmatpush.bf16.msra.mxu0 %v4935
    %8308 = vmatpush.bf16.msra.mxu0 %v4931
    %8309 = vmatpush.bf16.msra.mxu0 %v4927
    %8310 = vmatmul.bf16.gmra.mxu0 %v3401
    %v8311 = vpop.f32.mrf.mxu0
    %v8312 = vadd.f32 %v8223, %v8311
    %v8313 = vpop.f32.mrf.mxu0
    %v8314 = vadd.f32 %v8225, %v8313
    %8315 = vmatmul.bf16.gmra.mxu0 %v3410
    %v8316 = vpop.f32.mrf.mxu0
    %v8317 = vadd.f32 %v8228, %v8316
    %v8318 = vpop.f32.mrf.mxu0
    %v8319 = vadd.f32 %v8230, %v8318
    %8320 = vmatmul.bf16.gmra.mxu0 %v3419
    %v8321 = vpop.f32.mrf.mxu0
    %v8322 = vadd.f32 %v8233, %v8321
    %v8323 = vpop.f32.mrf.mxu0
    %v8324 = vadd.f32 %v8235, %v8323
    %8325 = vmatmul.bf16.gmra.mxu0 %v3428
    %v8326 = vpop.f32.mrf.mxu0
    %v8327 = vadd.f32 %v8238, %v8326
    %v8328 = vpop.f32.mrf.mxu0
    %v8329 = vadd.f32 %v8240, %v8328
    %8330 = vmatmul.bf16.gmra.mxu0 %v3437
    %v8331 = vpop.f32.mrf.mxu0
    %v8332 = vadd.f32 %v8243, %v8331
    %v8333 = vpop.f32.mrf.mxu0
    %v8334 = vadd.f32 %v8245, %v8333
    %8335 = vmatmul.bf16.gmra.mxu0 %v3446
    %v8336 = vpop.f32.mrf.mxu0
    %v8337 = vadd.f32 %v8248, %v8336
    %v8338 = vpop.f32.mrf.mxu0
    %v8339 = vadd.f32 %v8250, %v8338
    %8340 = vmatmul.bf16.gmra.mxu0 %v3455
    %v8341 = vpop.f32.mrf.mxu0
    %v8342 = vadd.f32 %v8253, %v8341
    %v8343 = vpop.f32.mrf.mxu0
    %v8344 = vadd.f32 %v8255, %v8343
    %8345 = vmatmul.bf16.gmra.mxu0 %v3464
    %v8346 = vpop.f32.mrf.mxu0
    %v8347 = vadd.f32 %v8258, %v8346
    %v8348 = vpop.f32.mrf.mxu0
    %v8349 = vadd.f32 %v8260, %v8348
    %8350 = vmatmul.bf16.gmra.mxu0 %v3473
    %v8351 = vpop.f32.mrf.mxu0
    %v8352 = vadd.f32 %v8263, %v8351
    %v8353 = vpop.f32.mrf.mxu0
    %v8354 = vadd.f32 %v8265, %v8353
    %8355 = vmatmul.bf16.gmra.mxu0 %v3482
    %v8356 = vpop.f32.mrf.mxu0
    %v8357 = vadd.f32 %v8268, %v8356
    %v8358 = vpop.f32.mrf.mxu0
    %v8359 = vadd.f32 %v8270, %v8358
    %8360 = vmatmul.bf16.gmra.mxu0 %v3491
    %v8361 = vpop.f32.mrf.mxu0
    %v8362 = vadd.f32 %v8273, %v8361
    %v8363 = vpop.f32.mrf.mxu0
    %v8364 = vadd.f32 %v8275, %v8363
    %8365 = vmatmul.bf16.gmra.mxu0 %v3500
    %v8366 = vpop.f32.mrf.mxu0
    %v8367 = vadd.f32 %v8278, %v8366
    %v8368 = vpop.f32.mrf.mxu0
    %v8369 = vadd.f32 %v8280, %v8368
    %8370 = vmatmul.bf16.gmra.mxu0 %v3509
    %v8371 = vpop.f32.mrf.mxu0
    %v8372 = vadd.f32 %v8283, %v8371
    %v8373 = vpop.f32.mrf.mxu0
    %v8374 = vadd.f32 %v8285, %v8373
    %8375 = vmatmul.bf16.gmra.mxu0 %v3518
    %v8376 = vpop.f32.mrf.mxu0
    %v8377 = vadd.f32 %v8288, %v8376
    %v8378 = vpop.f32.mrf.mxu0
    %v8379 = vadd.f32 %v8290, %v8378
    %8380 = vmatmul.bf16.gmra.mxu0 %v3527
    %v8381 = vpop.f32.mrf.mxu0
    %v8382 = vadd.f32 %v8293, %v8381
    %v8383 = vpop.f32.mrf.mxu0
    %v8384 = vadd.f32 %v8295, %v8383
    %8385 = vmatmul.bf16.gmra.mxu0 %v3536
    %v8386 = vpop.f32.mrf.mxu0
    %v8387 = vadd.f32 %v8298, %v8386
    %v8388 = vpop.f32.mrf.mxu0
    %v8389 = vadd.f32 %v8300, %v8388
    %8390 = vdwg.mxu0
    %8391 = vmatpush.bf16.msra.mxu0 %v4987
    %8392 = vmatpush.bf16.msra.mxu0 %v4983
    %8393 = vmatpush.bf16.msra.mxu0 %v4979
    %8394 = vmatpush.bf16.msra.mxu0 %v4975
    %8395 = vmatpush.bf16.msra.mxu0 %v4971
    %8396 = vmatpush.bf16.msra.mxu0 %v4967
    %8397 = vmatpush.bf16.msra.mxu0 %v4963
    %8398 = vmatpush.bf16.msra.mxu0 %v4959
    %8399 = vmatmul.bf16.gmra.mxu0 %v3402
    %v8400 = vpop.f32.mrf.mxu0
    %v8401 = vadd.f32 %v8312, %v8400
    %v8402 = vpop.f32.mrf.mxu0
    %v8403 = vadd.f32 %v8314, %v8402
    %8404 = vmatmul.bf16.gmra.mxu0 %v3411
    %v8405 = vpop.f32.mrf.mxu0
    %v8406 = vadd.f32 %v8317, %v8405
    %v8407 = vpop.f32.mrf.mxu0
    %v8408 = vadd.f32 %v8319, %v8407
    %8409 = vmatmul.bf16.gmra.mxu0 %v3420
    %v8410 = vpop.f32.mrf.mxu0
    %v8411 = vadd.f32 %v8322, %v8410
    %v8412 = vpop.f32.mrf.mxu0
    %v8413 = vadd.f32 %v8324, %v8412
    %8414 = vmatmul.bf16.gmra.mxu0 %v3429
    %v8415 = vpop.f32.mrf.mxu0
    %v8416 = vadd.f32 %v8327, %v8415
    %v8417 = vpop.f32.mrf.mxu0
    %v8418 = vadd.f32 %v8329, %v8417
    %8419 = vmatmul.bf16.gmra.mxu0 %v3438
    %v8420 = vpop.f32.mrf.mxu0
    %v8421 = vadd.f32 %v8332, %v8420
    %v8422 = vpop.f32.mrf.mxu0
    %v8423 = vadd.f32 %v8334, %v8422
    %8424 = vmatmul.bf16.gmra.mxu0 %v3447
    %v8425 = vpop.f32.mrf.mxu0
    %v8426 = vadd.f32 %v8337, %v8425
    %v8427 = vpop.f32.mrf.mxu0
    %v8428 = vadd.f32 %v8339, %v8427
    %8429 = vmatmul.bf16.gmra.mxu0 %v3456
    %v8430 = vpop.f32.mrf.mxu0
    %v8431 = vadd.f32 %v8342, %v8430
    %v8432 = vpop.f32.mrf.mxu0
    %v8433 = vadd.f32 %v8344, %v8432
    %8434 = vmatmul.bf16.gmra.mxu0 %v3465
    %v8435 = vpop.f32.mrf.mxu0
    %v8436 = vadd.f32 %v8347, %v8435
    %v8437 = vpop.f32.mrf.mxu0
    %v8438 = vadd.f32 %v8349, %v8437
    %8439 = vmatmul.bf16.gmra.mxu0 %v3474
    %v8440 = vpop.f32.mrf.mxu0
    %v8441 = vadd.f32 %v8352, %v8440
    %v8442 = vpop.f32.mrf.mxu0
    %v8443 = vadd.f32 %v8354, %v8442
    %8444 = vmatmul.bf16.gmra.mxu0 %v3483
    %v8445 = vpop.f32.mrf.mxu0
    %v8446 = vadd.f32 %v8357, %v8445
    %v8447 = vpop.f32.mrf.mxu0
    %v8448 = vadd.f32 %v8359, %v8447
    %8449 = vmatmul.bf16.gmra.mxu0 %v3492
    %v8450 = vpop.f32.mrf.mxu0
    %v8451 = vadd.f32 %v8362, %v8450
    %v8452 = vpop.f32.mrf.mxu0
    %v8453 = vadd.f32 %v8364, %v8452
    %8454 = vmatmul.bf16.gmra.mxu0 %v3501
    %v8455 = vpop.f32.mrf.mxu0
    %v8456 = vadd.f32 %v8367, %v8455
    %v8457 = vpop.f32.mrf.mxu0
    %v8458 = vadd.f32 %v8369, %v8457
    %8459 = vmatmul.bf16.gmra.mxu0 %v3510
    %v8460 = vpop.f32.mrf.mxu0
    %v8461 = vadd.f32 %v8372, %v8460
    %v8462 = vpop.f32.mrf.mxu0
    %v8463 = vadd.f32 %v8374, %v8462
    %8464 = vmatmul.bf16.gmra.mxu0 %v3519
    %v8465 = vpop.f32.mrf.mxu0
    %v8466 = vadd.f32 %v8377, %v8465
    %v8467 = vpop.f32.mrf.mxu0
    %v8468 = vadd.f32 %v8379, %v8467
    %8469 = vmatmul.bf16.gmra.mxu0 %v3528
    %v8470 = vpop.f32.mrf.mxu0
    %v8471 = vadd.f32 %v8382, %v8470
    %v8472 = vpop.f32.mrf.mxu0
    %v8473 = vadd.f32 %v8384, %v8472
    %8474 = vmatmul.bf16.gmra.mxu0 %v3537
    %v8475 = vpop.f32.mrf.mxu0
    %v8476 = vadd.f32 %v8387, %v8475
    %v8477 = vpop.f32.mrf.mxu0
    %v8478 = vadd.f32 %v8389, %v8477
    %8479 = vdwg.mxu0
    %v8480 = vpack.c.bf16 %v6000, %v5998
    %v8481 = vpack.c.bf16 %v6801, %v6799
    %v8482 = vpack.c.bf16 %v7602, %v7600
    %v8483 = vpack.c.bf16 %v8403, %v8401
    %v8484 = vpack.c.bf16 %v6005, %v6003
    %v8485 = vpack.c.bf16 %v6806, %v6804
    %v8486 = vpack.c.bf16 %v7607, %v7605
    %v8487 = vpack.c.bf16 %v8408, %v8406
    %v8488 = vpack.c.bf16 %v6010, %v6008
    %v8489 = vpack.c.bf16 %v6811, %v6809
    %v8490 = vpack.c.bf16 %v7612, %v7610
    %v8491 = vpack.c.bf16 %v8413, %v8411
    %v8492 = vpack.c.bf16 %v6015, %v6013
    %v8493 = vpack.c.bf16 %v6816, %v6814
    %v8494 = vpack.c.bf16 %v7617, %v7615
    %v8495 = vpack.c.bf16 %v8418, %v8416
    %v8496 = vpack.c.bf16 %v6020, %v6018
    %v8497 = vpack.c.bf16 %v6821, %v6819
    %v8498 = vpack.c.bf16 %v7622, %v7620
    %v8499 = vpack.c.bf16 %v8423, %v8421
    %v8500 = vpack.c.bf16 %v6025, %v6023
    %v8501 = vpack.c.bf16 %v6826, %v6824
    %v8502 = vpack.c.bf16 %v7627, %v7625
    %v8503 = vpack.c.bf16 %v8428, %v8426
    %v8504 = vpack.c.bf16 %v6030, %v6028
    %v8505 = vpack.c.bf16 %v6831, %v6829
    %v8506 = vpack.c.bf16 %v7632, %v7630
    %v8507 = vpack.c.bf16 %v8433, %v8431
    %v8508 = vpack.c.bf16 %v6035, %v6033
    %v8509 = vpack.c.bf16 %v6836, %v6834
    %v8510 = vpack.c.bf16 %v7637, %v7635
    %v8511 = vpack.c.bf16 %v8438, %v8436
    %v8512 = vpack.c.bf16 %v6040, %v6038
    %v8513 = vpack.c.bf16 %v6841, %v6839
    %v8514 = vpack.c.bf16 %v7642, %v7640
    %v8515 = vpack.c.bf16 %v8443, %v8441
    %v8516 = vpack.c.bf16 %v6045, %v6043
    %v8517 = vpack.c.bf16 %v6846, %v6844
    %v8518 = vpack.c.bf16 %v7647, %v7645
    %v8519 = vpack.c.bf16 %v8448, %v8446
    %v8520 = vpack.c.bf16 %v6050, %v6048
    %v8521 = vpack.c.bf16 %v6851, %v6849
    %v8522 = vpack.c.bf16 %v7652, %v7650
    %v8523 = vpack.c.bf16 %v8453, %v8451
    %v8524 = vpack.c.bf16 %v6055, %v6053
    %v8525 = vpack.c.bf16 %v6856, %v6854
    %v8526 = vpack.c.bf16 %v7657, %v7655
    %v8527 = vpack.c.bf16 %v8458, %v8456
    %v8528 = vpack.c.bf16 %v6060, %v6058
    %v8529 = vpack.c.bf16 %v6861, %v6859
    %v8530 = vpack.c.bf16 %v7662, %v7660
    %v8531 = vpack.c.bf16 %v8463, %v8461
    %v8532 = vpack.c.bf16 %v6065, %v6063
    %v8533 = vpack.c.bf16 %v6866, %v6864
    %v8534 = vpack.c.bf16 %v7667, %v7665
    %v8535 = vpack.c.bf16 %v8468, %v8466
    %v8536 = vpack.c.bf16 %v6070, %v6068
    %v8537 = vpack.c.bf16 %v6871, %v6869
    %v8538 = vpack.c.bf16 %v7672, %v7670
    %v8539 = vpack.c.bf16 %v8473, %v8471
    %v8540 = vpack.c.bf16 %v6075, %v6073
    %v8541 = vpack.c.bf16 %v6876, %v6874
    %v8542 = vpack.c.bf16 %v7677, %v7675
    %v8543 = vpack.c.bf16 %v8478, %v8476
    %v8544 = vld [vmem:[#allocation14] sm:$0xf]
    %v8545 = vld [vmem:[#allocation14 + $0x4] sm:$0xf]
    %v8546 = vld [vmem:[#allocation14 + $0x8] sm:$0xf]
    %v8547 = vld [vmem:[#allocation14 + $0xc] sm:$0xf]
    %v8548 = vld [vmem:[#allocation14 + $0x10] sm:$0xf]
    %v8549 = vld [vmem:[#allocation14 + $0x14] sm:$0xf]
    %v8550 = vld [vmem:[#allocation14 + $0x18] sm:$0xf]
    %v8551 = vld [vmem:[#allocation14 + $0x1c] sm:$0xf]
    %v8552 = vld [vmem:[#allocation14 + $0x20] sm:$0xf]
    %v8553 = vld [vmem:[#allocation14 + $0x24] sm:$0xf]
    %v8554 = vld [vmem:[#allocation14 + $0x28] sm:$0xf]
    %v8555 = vld [vmem:[#allocation14 + $0x2c] sm:$0xf]
    %v8556 = vld [vmem:[#allocation14 + $0x30] sm:$0xf]
    %v8557 = vld [vmem:[#allocation14 + $0x34] sm:$0xf]
    %v8558 = vld [vmem:[#allocation14 + $0x38] sm:$0xf]
    %v8559 = vld [vmem:[#allocation14 + $0x3c] sm:$0xf]
    %v8560 = vld [vmem:[#allocation14 + $0x40] sm:$0xf]
    %v8561 = vld [vmem:[#allocation14 + $0x44] sm:$0xf]
    %v8562 = vld [vmem:[#allocation14 + $0x48] sm:$0xf]
    %v8563 = vld [vmem:[#allocation14 + $0x4c] sm:$0xf]
    %v8564 = vld [vmem:[#allocation14 + $0x50] sm:$0xf]
    %v8565 = vld [vmem:[#allocation14 + $0x54] sm:$0xf]
    %v8566 = vld [vmem:[#allocation14 + $0x58] sm:$0xf]
    %v8567 = vld [vmem:[#allocation14 + $0x5c] sm:$0xf]
    %v8568 = vld [vmem:[#allocation14 + $0x60] sm:$0xf]
    %v8569 = vld [vmem:[#allocation14 + $0x64] sm:$0xf]
    %v8570 = vld [vmem:[#allocation14 + $0x68] sm:$0xf]
    %v8571 = vld [vmem:[#allocation14 + $0x6c] sm:$0xf]
    %v8572 = vld [vmem:[#allocation14 + $0x70] sm:$0xf]
    %v8573 = vld [vmem:[#allocation14 + $0x74] sm:$0xf]
    %v8574 = vld [vmem:[#allocation14 + $0x78] sm:$0xf]
    %v8575 = vld [vmem:[#allocation14 + $0x7c] sm:$0xf]
    %v8576 = vld [vmem:[#allocation14 + $0x80] sm:$0xf]
    %v8577 = vld [vmem:[#allocation14 + $0x84] sm:$0xf]
    %v8578 = vld [vmem:[#allocation14 + $0x88] sm:$0xf]
    %v8579 = vld [vmem:[#allocation14 + $0x8c] sm:$0xf]
    %v8580 = vld [vmem:[#allocation14 + $0x90] sm:$0xf]
    %v8581 = vld [vmem:[#allocation14 + $0x94] sm:$0xf]
    %v8582 = vld [vmem:[#allocation14 + $0x98] sm:$0xf]
    %v8583 = vld [vmem:[#allocation14 + $0x9c] sm:$0xf]
    %v8584 = vld [vmem:[#allocation14 + $0xa0] sm:$0xf]
    %v8585 = vld [vmem:[#allocation14 + $0xa4] sm:$0xf]
    %v8586 = vld [vmem:[#allocation14 + $0xa8] sm:$0xf]
    %v8587 = vld [vmem:[#allocation14 + $0xac] sm:$0xf]
    %v8588 = vld [vmem:[#allocation14 + $0xb0] sm:$0xf]
    %v8589 = vld [vmem:[#allocation14 + $0xb4] sm:$0xf]
    %v8590 = vld [vmem:[#allocation14 + $0xb8] sm:$0xf]
    %v8591 = vld [vmem:[#allocation14 + $0xbc] sm:$0xf]
    %v8592 = vld [vmem:[#allocation14 + $0xc0] sm:$0xf]
    %v8593 = vld [vmem:[#allocation14 + $0xc4] sm:$0xf]
    %v8594 = vld [vmem:[#allocation14 + $0xc8] sm:$0xf]
    %v8595 = vld [vmem:[#allocation14 + $0xcc] sm:$0xf]
    %v8596 = vld [vmem:[#allocation14 + $0xd0] sm:$0xf]
    %v8597 = vld [vmem:[#allocation14 + $0xd4] sm:$0xf]
    %v8598 = vld [vmem:[#allocation14 + $0xd8] sm:$0xf]
    %v8599 = vld [vmem:[#allocation14 + $0xdc] sm:$0xf]
    %v8600 = vld [vmem:[#allocation14 + $0xe0] sm:$0xf]
    %v8601 = vld [vmem:[#allocation14 + $0xe4] sm:$0xf]
    %v8602 = vld [vmem:[#allocation14 + $0xe8] sm:$0xf]
    %v8603 = vld [vmem:[#allocation14 + $0xec] sm:$0xf]
    %v8604 = vld [vmem:[#allocation14 + $0xf0] sm:$0xf]
    %v8605 = vld [vmem:[#allocation14 + $0xf4] sm:$0xf]
    %v8606 = vld [vmem:[#allocation14 + $0xf8] sm:$0xf]
    %v8607 = vld [vmem:[#allocation14 + $0xfc] sm:$0xf]
    %v8608 = vld [vmem:[#allocation16] sm:$0x1]
    %v8610 = vperm.slane %v8608, 0
    %v8676 = vunpack.c.l.b16 %v8544
    %v8677 = vunpack.c.l.b16 %v8545
    %v8678 = vunpack.c.l.b16 %v8546
    %v8679 = vunpack.c.l.b16 %v8547
    %v8680 = vunpack.c.l.b16 %v8548
    %v8681 = vunpack.c.l.b16 %v8549
    %v8682 = vunpack.c.l.b16 %v8550
    %v8683 = vunpack.c.l.b16 %v8551
    %v8684 = vunpack.c.l.b16 %v8552
    %v8685 = vunpack.c.l.b16 %v8553
    %v8686 = vunpack.c.l.b16 %v8554
    %v8687 = vunpack.c.l.b16 %v8555
    %v8688 = vunpack.c.l.b16 %v8556
    %v8689 = vunpack.c.l.b16 %v8557
    %v8690 = vunpack.c.l.b16 %v8558
    %v8691 = vunpack.c.l.b16 %v8559
    %v8692 = vunpack.c.l.b16 %v8560
    %v8693 = vunpack.c.l.b16 %v8561
    %v8694 = vunpack.c.l.b16 %v8562
    %v8695 = vunpack.c.l.b16 %v8563
    %v8696 = vunpack.c.l.b16 %v8564
    %v8697 = vunpack.c.l.b16 %v8565
    %v8698 = vunpack.c.l.b16 %v8566
    %v8699 = vunpack.c.l.b16 %v8567
    %v8700 = vunpack.c.l.b16 %v8568
    %v8701 = vunpack.c.l.b16 %v8569
    %v8702 = vunpack.c.l.b16 %v8570
    %v8703 = vunpack.c.l.b16 %v8571
    %v8704 = vunpack.c.l.b16 %v8572
    %v8705 = vunpack.c.l.b16 %v8573
    %v8706 = vunpack.c.l.b16 %v8574
    %v8707 = vunpack.c.l.b16 %v8575
    %v8708 = vunpack.c.l.b16 %v8576
    %v8709 = vunpack.c.l.b16 %v8577
    %v8710 = vunpack.c.l.b16 %v8578
    %v8711 = vunpack.c.l.b16 %v8579
    %v8712 = vunpack.c.l.b16 %v8580
    %v8713 = vunpack.c.l.b16 %v8581
    %v8714 = vunpack.c.l.b16 %v8582
    %v8715 = vunpack.c.l.b16 %v8583
    %v8716 = vunpack.c.l.b16 %v8584
    %v8717 = vunpack.c.l.b16 %v8585
    %v8718 = vunpack.c.l.b16 %v8586
    %v8719 = vunpack.c.l.b16 %v8587
    %v8720 = vunpack.c.l.b16 %v8588
    %v8721 = vunpack.c.l.b16 %v8589
    %v8722 = vunpack.c.l.b16 %v8590
    %v8723 = vunpack.c.l.b16 %v8591
    %v8724 = vunpack.c.l.b16 %v8592
    %v8725 = vunpack.c.l.b16 %v8593
    %v8726 = vunpack.c.l.b16 %v8594
    %v8727 = vunpack.c.l.b16 %v8595
    %v8728 = vunpack.c.l.b16 %v8596
    %v8729 = vunpack.c.l.b16 %v8597
    %v8730 = vunpack.c.l.b16 %v8598
    %v8731 = vunpack.c.l.b16 %v8599
    %v8732 = vunpack.c.l.b16 %v8600
    %v8733 = vunpack.c.l.b16 %v8601
    %v8734 = vunpack.c.l.b16 %v8602
    %v8735 = vunpack.c.l.b16 %v8603
    %v8736 = vunpack.c.l.b16 %v8604
    %v8737 = vunpack.c.l.b16 %v8605
    %v8738 = vunpack.c.l.b16 %v8606
    %v8739 = vunpack.c.l.b16 %v8607
    %v8740 = vpack.c.b16 %v8677, %v8676
    %v8741 = vpack.c.b16 %v8679, %v8678
    %v8742 = vpack.c.b16 %v8681, %v8680
    %v8743 = vpack.c.b16 %v8683, %v8682
    %v8744 = vpack.c.b16 %v8685, %v8684
    %v8745 = vpack.c.b16 %v8687, %v8686
    %v8746 = vpack.c.b16 %v8689, %v8688
    %v8747 = vpack.c.b16 %v8691, %v8690
    %v8748 = vpack.c.b16 %v8693, %v8692
    %v8749 = vpack.c.b16 %v8695, %v8694
    %v8750 = vpack.c.b16 %v8697, %v8696
    %v8751 = vpack.c.b16 %v8699, %v8698
    %v8752 = vpack.c.b16 %v8701, %v8700
    %v8753 = vpack.c.b16 %v8703, %v8702
    %v8754 = vpack.c.b16 %v8705, %v8704
    %v8755 = vpack.c.b16 %v8707, %v8706
    %v8756 = vpack.c.b16 %v8709, %v8708
    %v8757 = vpack.c.b16 %v8711, %v8710
    %v8758 = vpack.c.b16 %v8713, %v8712
    %v8759 = vpack.c.b16 %v8715, %v8714
    %v8760 = vpack.c.b16 %v8717, %v8716
    %v8761 = vpack.c.b16 %v8719, %v8718
    %v8762 = vpack.c.b16 %v8721, %v8720
    %v8763 = vpack.c.b16 %v8723, %v8722
    %v8764 = vpack.c.b16 %v8725, %v8724
    %v8765 = vpack.c.b16 %v8727, %v8726
    %v8766 = vpack.c.b16 %v8729, %v8728
    %v8767 = vpack.c.b16 %v8731, %v8730
    %v8768 = vpack.c.b16 %v8733, %v8732
    %v8769 = vpack.c.b16 %v8735, %v8734
    %v8770 = vpack.c.b16 %v8737, %v8736
    %v8771 = vpack.c.b16 %v8739, %v8738
    %8804 = vmatpush.bf16.msra.mxu0 %v8747
    %8805 = vmatpush.bf16.msra.mxu0 %v8746
    %8806 = vmatpush.bf16.msra.mxu0 %v8745
    %8807 = vmatpush.bf16.msra.mxu0 %v8744
    %8808 = vmatpush.bf16.msra.mxu0 %v8743
    %8809 = vmatpush.bf16.msra.mxu0 %v8742
    %8810 = vmatpush.bf16.msra.mxu0 %v8741
    %8811 = vmatpush.bf16.msra.mxu0 %v8740
    %8812 = vmatmul.bf16.gmra.mxu0 %v8480
    %v8813 = vpop.f32.mrf.mxu0
    %v8814 = vadd.f32 %v8610, %v8813
    %v8815 = vpop.f32.mrf.mxu0
    %v8816 = vadd.f32 %v8610, %v8815
    %8817 = vmatmul.bf16.gmra.mxu0 %v8484
    %v8818 = vpop.f32.mrf.mxu0
    %v8819 = vadd.f32 %v8610, %v8818
    %v8820 = vpop.f32.mrf.mxu0
    %v8821 = vadd.f32 %v8610, %v8820
    %8822 = vmatmul.bf16.gmra.mxu0 %v8488
    %v8823 = vpop.f32.mrf.mxu0
    %v8824 = vadd.f32 %v8610, %v8823
    %v8825 = vpop.f32.mrf.mxu0
    %v8826 = vadd.f32 %v8610, %v8825
    %8827 = vmatmul.bf16.gmra.mxu0 %v8492
    %v8828 = vpop.f32.mrf.mxu0
    %v8829 = vadd.f32 %v8610, %v8828
    %v8830 = vpop.f32.mrf.mxu0
    %v8831 = vadd.f32 %v8610, %v8830
    %8832 = vmatmul.bf16.gmra.mxu0 %v8496
    %v8833 = vpop.f32.mrf.mxu0
    %v8834 = vadd.f32 %v8610, %v8833
    %v8835 = vpop.f32.mrf.mxu0
    %v8836 = vadd.f32 %v8610, %v8835
    %8837 = vmatmul.bf16.gmra.mxu0 %v8500
    %v8838 = vpop.f32.mrf.mxu0
    %v8839 = vadd.f32 %v8610, %v8838
    %v8840 = vpop.f32.mrf.mxu0
    %v8841 = vadd.f32 %v8610, %v8840
    %8842 = vmatmul.bf16.gmra.mxu0 %v8504
    %v8843 = vpop.f32.mrf.mxu0
    %v8844 = vadd.f32 %v8610, %v8843
    %v8845 = vpop.f32.mrf.mxu0
    %v8846 = vadd.f32 %v8610, %v8845
    %8847 = vmatmul.bf16.gmra.mxu0 %v8508
    %v8848 = vpop.f32.mrf.mxu0
    %v8849 = vadd.f32 %v8610, %v8848
    %v8850 = vpop.f32.mrf.mxu0
    %v8851 = vadd.f32 %v8610, %v8850
    %8852 = vmatmul.bf16.gmra.mxu0 %v8512
    %v8853 = vpop.f32.mrf.mxu0
    %v8854 = vadd.f32 %v8610, %v8853
    %v8855 = vpop.f32.mrf.mxu0
    %v8856 = vadd.f32 %v8610, %v8855
    %8857 = vmatmul.bf16.gmra.mxu0 %v8516
    %v8858 = vpop.f32.mrf.mxu0
    %v8859 = vadd.f32 %v8610, %v8858
    %v8860 = vpop.f32.mrf.mxu0
    %v8861 = vadd.f32 %v8610, %v8860
    %8862 = vmatmul.bf16.gmra.mxu0 %v8520
    %v8863 = vpop.f32.mrf.mxu0
    %v8864 = vadd.f32 %v8610, %v8863
    %v8865 = vpop.f32.mrf.mxu0
    %v8866 = vadd.f32 %v8610, %v8865
    %8867 = vmatmul.bf16.gmra.mxu0 %v8524
    %v8868 = vpop.f32.mrf.mxu0
    %v8869 = vadd.f32 %v8610, %v8868
    %v8870 = vpop.f32.mrf.mxu0
    %v8871 = vadd.f32 %v8610, %v8870
    %8872 = vmatmul.bf16.gmra.mxu0 %v8528
    %v8873 = vpop.f32.mrf.mxu0
    %v8874 = vadd.f32 %v8610, %v8873
    %v8875 = vpop.f32.mrf.mxu0
    %v8876 = vadd.f32 %v8610, %v8875
    %8877 = vmatmul.bf16.gmra.mxu0 %v8532
    %v8878 = vpop.f32.mrf.mxu0
    %v8879 = vadd.f32 %v8610, %v8878
    %v8880 = vpop.f32.mrf.mxu0
    %v8881 = vadd.f32 %v8610, %v8880
    %8882 = vmatmul.bf16.gmra.mxu0 %v8536
    %v8883 = vpop.f32.mrf.mxu0
    %v8884 = vadd.f32 %v8610, %v8883
    %v8885 = vpop.f32.mrf.mxu0
    %v8886 = vadd.f32 %v8610, %v8885
    %8887 = vmatmul.bf16.gmra.mxu0 %v8540
    %v8888 = vpop.f32.mrf.mxu0
    %v8889 = vadd.f32 %v8610, %v8888
    %v8890 = vpop.f32.mrf.mxu0
    %v8891 = vadd.f32 %v8610, %v8890
    %8892 = vdwg.mxu0
    %8893 = vmatpush.bf16.msra.mxu0 %v8755
    %8894 = vmatpush.bf16.msra.mxu0 %v8754
    %8895 = vmatpush.bf16.msra.mxu0 %v8753
    %8896 = vmatpush.bf16.msra.mxu0 %v8752
    %8897 = vmatpush.bf16.msra.mxu0 %v8751
    %8898 = vmatpush.bf16.msra.mxu0 %v8750
    %8899 = vmatpush.bf16.msra.mxu0 %v8749
    %8900 = vmatpush.bf16.msra.mxu0 %v8748
    %8901 = vmatmul.bf16.gmra.mxu0 %v8481
    %v8902 = vpop.f32.mrf.mxu0
    %v8903 = vadd.f32 %v8814, %v8902
    %v8904 = vpop.f32.mrf.mxu0
    %v8905 = vadd.f32 %v8816, %v8904
    %8906 = vmatmul.bf16.gmra.mxu0 %v8485
    %v8907 = vpop.f32.mrf.mxu0
    %v8908 = vadd.f32 %v8819, %v8907
    %v8909 = vpop.f32.mrf.mxu0
    %v8910 = vadd.f32 %v8821, %v8909
    %8911 = vmatmul.bf16.gmra.mxu0 %v8489
    %v8912 = vpop.f32.mrf.mxu0
    %v8913 = vadd.f32 %v8824, %v8912
    %v8914 = vpop.f32.mrf.mxu0
    %v8915 = vadd.f32 %v8826, %v8914
    %8916 = vmatmul.bf16.gmra.mxu0 %v8493
    %v8917 = vpop.f32.mrf.mxu0
    %v8918 = vadd.f32 %v8829, %v8917
    %v8919 = vpop.f32.mrf.mxu0
    %v8920 = vadd.f32 %v8831, %v8919
    %8921 = vmatmul.bf16.gmra.mxu0 %v8497
    %v8922 = vpop.f32.mrf.mxu0
    %v8923 = vadd.f32 %v8834, %v8922
    %v8924 = vpop.f32.mrf.mxu0
    %v8925 = vadd.f32 %v8836, %v8924
    %8926 = vmatmul.bf16.gmra.mxu0 %v8501
    %v8927 = vpop.f32.mrf.mxu0
    %v8928 = vadd.f32 %v8839, %v8927
    %v8929 = vpop.f32.mrf.mxu0
    %v8930 = vadd.f32 %v8841, %v8929
    %8931 = vmatmul.bf16.gmra.mxu0 %v8505
    %v8932 = vpop.f32.mrf.mxu0
    %v8933 = vadd.f32 %v8844, %v8932
    %v8934 = vpop.f32.mrf.mxu0
    %v8935 = vadd.f32 %v8846, %v8934
    %8936 = vmatmul.bf16.gmra.mxu0 %v8509
    %v8937 = vpop.f32.mrf.mxu0
    %v8938 = vadd.f32 %v8849, %v8937
    %v8939 = vpop.f32.mrf.mxu0
    %v8940 = vadd.f32 %v8851, %v8939
    %8941 = vmatmul.bf16.gmra.mxu0 %v8513
    %v8942 = vpop.f32.mrf.mxu0
    %v8943 = vadd.f32 %v8854, %v8942
    %v8944 = vpop.f32.mrf.mxu0
    %v8945 = vadd.f32 %v8856, %v8944
    %8946 = vmatmul.bf16.gmra.mxu0 %v8517
    %v8947 = vpop.f32.mrf.mxu0
    %v8948 = vadd.f32 %v8859, %v8947
    %v8949 = vpop.f32.mrf.mxu0
    %v8950 = vadd.f32 %v8861, %v8949
    %8951 = vmatmul.bf16.gmra.mxu0 %v8521
    %v8952 = vpop.f32.mrf.mxu0
    %v8953 = vadd.f32 %v8864, %v8952
    %v8954 = vpop.f32.mrf.mxu0
    %v8955 = vadd.f32 %v8866, %v8954
    %8956 = vmatmul.bf16.gmra.mxu0 %v8525
    %v8957 = vpop.f32.mrf.mxu0
    %v8958 = vadd.f32 %v8869, %v8957
    %v8959 = vpop.f32.mrf.mxu0
    %v8960 = vadd.f32 %v8871, %v8959
    %8961 = vmatmul.bf16.gmra.mxu0 %v8529
    %v8962 = vpop.f32.mrf.mxu0
    %v8963 = vadd.f32 %v8874, %v8962
    %v8964 = vpop.f32.mrf.mxu0
    %v8965 = vadd.f32 %v8876, %v8964
    %8966 = vmatmul.bf16.gmra.mxu0 %v8533
    %v8967 = vpop.f32.mrf.mxu0
    %v8968 = vadd.f32 %v8879, %v8967
    %v8969 = vpop.f32.mrf.mxu0
    %v8970 = vadd.f32 %v8881, %v8969
    %8971 = vmatmul.bf16.gmra.mxu0 %v8537
    %v8972 = vpop.f32.mrf.mxu0
    %v8973 = vadd.f32 %v8884, %v8972
    %v8974 = vpop.f32.mrf.mxu0
    %v8975 = vadd.f32 %v8886, %v8974
    %8976 = vmatmul.bf16.gmra.mxu0 %v8541
    %v8977 = vpop.f32.mrf.mxu0
    %v8978 = vadd.f32 %v8889, %v8977
    %v8979 = vpop.f32.mrf.mxu0
    %v8980 = vadd.f32 %v8891, %v8979
    %8981 = vdwg.mxu0
    %8982 = vmatpush.bf16.msra.mxu0 %v8763
    %8983 = vmatpush.bf16.msra.mxu0 %v8762
    %8984 = vmatpush.bf16.msra.mxu0 %v8761
    %8985 = vmatpush.bf16.msra.mxu0 %v8760
    %8986 = vmatpush.bf16.msra.mxu0 %v8759
    %8987 = vmatpush.bf16.msra.mxu0 %v8758
    %8988 = vmatpush.bf16.msra.mxu0 %v8757
    %8989 = vmatpush.bf16.msra.mxu0 %v8756
    %8990 = vmatmul.bf16.gmra.mxu0 %v8482
    %v8991 = vpop.f32.mrf.mxu0
    %v8992 = vadd.f32 %v8903, %v8991
    %v8993 = vpop.f32.mrf.mxu0
    %v8994 = vadd.f32 %v8905, %v8993
    %8995 = vmatmul.bf16.gmra.mxu0 %v8486
    %v8996 = vpop.f32.mrf.mxu0
    %v8997 = vadd.f32 %v8908, %v8996
    %v8998 = vpop.f32.mrf.mxu0
    %v8999 = vadd.f32 %v8910, %v8998
    %9000 = vmatmul.bf16.gmra.mxu0 %v8490
    %v9001 = vpop.f32.mrf.mxu0
    %v9002 = vadd.f32 %v8913, %v9001
    %v9003 = vpop.f32.mrf.mxu0
    %v9004 = vadd.f32 %v8915, %v9003
    %9005 = vmatmul.bf16.gmra.mxu0 %v8494
    %v9006 = vpop.f32.mrf.mxu0
    %v9007 = vadd.f32 %v8918, %v9006
    %v9008 = vpop.f32.mrf.mxu0
    %v9009 = vadd.f32 %v8920, %v9008
    %9010 = vmatmul.bf16.gmra.mxu0 %v8498
    %v9011 = vpop.f32.mrf.mxu0
    %v9012 = vadd.f32 %v8923, %v9011
    %v9013 = vpop.f32.mrf.mxu0
    %v9014 = vadd.f32 %v8925, %v9013
    %9015 = vmatmul.bf16.gmra.mxu0 %v8502
    %v9016 = vpop.f32.mrf.mxu0
    %v9017 = vadd.f32 %v8928, %v9016
    %v9018 = vpop.f32.mrf.mxu0
    %v9019 = vadd.f32 %v8930, %v9018
    %9020 = vmatmul.bf16.gmra.mxu0 %v8506
    %v9021 = vpop.f32.mrf.mxu0
    %v9022 = vadd.f32 %v8933, %v9021
    %v9023 = vpop.f32.mrf.mxu0
    %v9024 = vadd.f32 %v8935, %v9023
    %9025 = vmatmul.bf16.gmra.mxu0 %v8510
    %v9026 = vpop.f32.mrf.mxu0
    %v9027 = vadd.f32 %v8938, %v9026
    %v9028 = vpop.f32.mrf.mxu0
    %v9029 = vadd.f32 %v8940, %v9028
    %9030 = vmatmul.bf16.gmra.mxu0 %v8514
    %v9031 = vpop.f32.mrf.mxu0
    %v9032 = vadd.f32 %v8943, %v9031
    %v9033 = vpop.f32.mrf.mxu0
    %v9034 = vadd.f32 %v8945, %v9033
    %9035 = vmatmul.bf16.gmra.mxu0 %v8518
    %v9036 = vpop.f32.mrf.mxu0
    %v9037 = vadd.f32 %v8948, %v9036
    %v9038 = vpop.f32.mrf.mxu0
    %v9039 = vadd.f32 %v8950, %v9038
    %9040 = vmatmul.bf16.gmra.mxu0 %v8522
    %v9041 = vpop.f32.mrf.mxu0
    %v9042 = vadd.f32 %v8953, %v9041
    %v9043 = vpop.f32.mrf.mxu0
    %v9044 = vadd.f32 %v8955, %v9043
    %9045 = vmatmul.bf16.gmra.mxu0 %v8526
    %v9046 = vpop.f32.mrf.mxu0
    %v9047 = vadd.f32 %v8958, %v9046
    %v9048 = vpop.f32.mrf.mxu0
    %v9049 = vadd.f32 %v8960, %v9048
    %9050 = vmatmul.bf16.gmra.mxu0 %v8530
    %v9051 = vpop.f32.mrf.mxu0
    %v9052 = vadd.f32 %v8963, %v9051
    %v9053 = vpop.f32.mrf.mxu0
    %v9054 = vadd.f32 %v8965, %v9053
    %9055 = vmatmul.bf16.gmra.mxu0 %v8534
    %v9056 = vpop.f32.mrf.mxu0
    %v9057 = vadd.f32 %v8968, %v9056
    %v9058 = vpop.f32.mrf.mxu0
    %v9059 = vadd.f32 %v8970, %v9058
    %9060 = vmatmul.bf16.gmra.mxu0 %v8538
    %v9061 = vpop.f32.mrf.mxu0
    %v9062 = vadd.f32 %v8973, %v9061
    %v9063 = vpop.f32.mrf.mxu0
    %v9064 = vadd.f32 %v8975, %v9063
    %9065 = vmatmul.bf16.gmra.mxu0 %v8542
    %v9066 = vpop.f32.mrf.mxu0
    %v9067 = vadd.f32 %v8978, %v9066
    %v9068 = vpop.f32.mrf.mxu0
    %v9069 = vadd.f32 %v8980, %v9068
    %9070 = vdwg.mxu0
    %9071 = vmatpush.bf16.msra.mxu0 %v8771
    %9072 = vmatpush.bf16.msra.mxu0 %v8770
    %9073 = vmatpush.bf16.msra.mxu0 %v8769
    %9074 = vmatpush.bf16.msra.mxu0 %v8768
    %9075 = vmatpush.bf16.msra.mxu0 %v8767
    %9076 = vmatpush.bf16.msra.mxu0 %v8766
    %9077 = vmatpush.bf16.msra.mxu0 %v8765
    %9078 = vmatpush.bf16.msra.mxu0 %v8764
    %9079 = vmatmul.bf16.gmra.mxu0 %v8483
    %v9080 = vpop.f32.mrf.mxu0
    %v9081 = vadd.f32 %v8992, %v9080
    %v9082 = vpop.f32.mrf.mxu0
    %v9083 = vadd.f32 %v8994, %v9082
    %9084 = vmatmul.bf16.gmra.mxu0 %v8487
    %v9085 = vpop.f32.mrf.mxu0
    %v9086 = vadd.f32 %v8997, %v9085
    %v9087 = vpop.f32.mrf.mxu0
    %v9088 = vadd.f32 %v8999, %v9087
    %9089 = vmatmul.bf16.gmra.mxu0 %v8491
    %v9090 = vpop.f32.mrf.mxu0
    %v9091 = vadd.f32 %v9002, %v9090
    %v9092 = vpop.f32.mrf.mxu0
    %v9093 = vadd.f32 %v9004, %v9092
    %9094 = vmatmul.bf16.gmra.mxu0 %v8495
    %v9095 = vpop.f32.mrf.mxu0
    %v9096 = vadd.f32 %v9007, %v9095
    %v9097 = vpop.f32.mrf.mxu0
    %v9098 = vadd.f32 %v9009, %v9097
    %9099 = vmatmul.bf16.gmra.mxu0 %v8499
    %v9100 = vpop.f32.mrf.mxu0
    %v9101 = vadd.f32 %v9012, %v9100
    %v9102 = vpop.f32.mrf.mxu0
    %v9103 = vadd.f32 %v9014, %v9102
    %9104 = vmatmul.bf16.gmra.mxu0 %v8503
    %v9105 = vpop.f32.mrf.mxu0
    %v9106 = vadd.f32 %v9017, %v9105
    %v9107 = vpop.f32.mrf.mxu0
    %v9108 = vadd.f32 %v9019, %v9107
    %9109 = vmatmul.bf16.gmra.mxu0 %v8507
    %v9110 = vpop.f32.mrf.mxu0
    %v9111 = vadd.f32 %v9022, %v9110
    %v9112 = vpop.f32.mrf.mxu0
    %v9113 = vadd.f32 %v9024, %v9112
    %9114 = vmatmul.bf16.gmra.mxu0 %v8511
    %v9115 = vpop.f32.mrf.mxu0
    %v9116 = vadd.f32 %v9027, %v9115
    %v9117 = vpop.f32.mrf.mxu0
    %v9118 = vadd.f32 %v9029, %v9117
    %9119 = vmatmul.bf16.gmra.mxu0 %v8515
    %v9120 = vpop.f32.mrf.mxu0
    %v9121 = vadd.f32 %v9032, %v9120
    %v9122 = vpop.f32.mrf.mxu0
    %v9123 = vadd.f32 %v9034, %v9122
    %9124 = vmatmul.bf16.gmra.mxu0 %v8519
    %v9125 = vpop.f32.mrf.mxu0
    %v9126 = vadd.f32 %v9037, %v9125
    %v9127 = vpop.f32.mrf.mxu0
    %v9128 = vadd.f32 %v9039, %v9127
    %9129 = vmatmul.bf16.gmra.mxu0 %v8523
    %v9130 = vpop.f32.mrf.mxu0
    %v9131 = vadd.f32 %v9042, %v9130
    %v9132 = vpop.f32.mrf.mxu0
    %v9133 = vadd.f32 %v9044, %v9132
    %9134 = vmatmul.bf16.gmra.mxu0 %v8527
    %v9135 = vpop.f32.mrf.mxu0
    %v9136 = vadd.f32 %v9047, %v9135
    %v9137 = vpop.f32.mrf.mxu0
    %v9138 = vadd.f32 %v9049, %v9137
    %9139 = vmatmul.bf16.gmra.mxu0 %v8531
    %v9140 = vpop.f32.mrf.mxu0
    %v9141 = vadd.f32 %v9052, %v9140
    %v9142 = vpop.f32.mrf.mxu0
    %v9143 = vadd.f32 %v9054, %v9142
    %9144 = vmatmul.bf16.gmra.mxu0 %v8535
    %v9145 = vpop.f32.mrf.mxu0
    %v9146 = vadd.f32 %v9057, %v9145
    %v9147 = vpop.f32.mrf.mxu0
    %v9148 = vadd.f32 %v9059, %v9147
    %9149 = vmatmul.bf16.gmra.mxu0 %v8539
    %v9150 = vpop.f32.mrf.mxu0
    %v9151 = vadd.f32 %v9062, %v9150
    %v9152 = vpop.f32.mrf.mxu0
    %v9153 = vadd.f32 %v9064, %v9152
    %9154 = vmatmul.bf16.gmra.mxu0 %v8543
    %v9155 = vpop.f32.mrf.mxu0
    %v9156 = vadd.f32 %v9067, %v9155
    %v9157 = vpop.f32.mrf.mxu0
    %v9158 = vadd.f32 %v9069, %v9157
    %9159 = vdwg.mxu0
    %v9160 = vpack.c.bf16 %v9083, %v9081
    %v9161 = vpack.c.bf16 %v9088, %v9086
    %v9162 = vpack.c.bf16 %v9093, %v9091
    %v9163 = vpack.c.bf16 %v9098, %v9096
    %v9164 = vpack.c.bf16 %v9103, %v9101
    %v9165 = vpack.c.bf16 %v9108, %v9106
    %v9166 = vpack.c.bf16 %v9113, %v9111
    %v9167 = vpack.c.bf16 %v9118, %v9116
    %v9168 = vpack.c.bf16 %v9123, %v9121
    %v9169 = vpack.c.bf16 %v9128, %v9126
    %v9170 = vpack.c.bf16 %v9133, %v9131
    %v9171 = vpack.c.bf16 %v9138, %v9136
    %v9172 = vpack.c.bf16 %v9143, %v9141
    %v9173 = vpack.c.bf16 %v9148, %v9146
    %v9174 = vpack.c.bf16 %v9153, %v9151
    %v9175 = vpack.c.bf16 %v9158, %v9156
    %v9176 = vld [vmem:[#allocation17] sm:$0xf]
    %v9177 = vld [vmem:[#allocation17 + $0x4] sm:$0xf]
    %v9178 = vld [vmem:[#allocation17 + $0x8] sm:$0xf]
    %v9179 = vld [vmem:[#allocation17 + $0xc] sm:$0xf]
    %v9180 = vld [vmem:[#allocation17 + $0x10] sm:$0xf]
    %v9181 = vld [vmem:[#allocation17 + $0x14] sm:$0xf]
    %v9182 = vld [vmem:[#allocation17 + $0x18] sm:$0xf]
    %v9183 = vld [vmem:[#allocation17 + $0x1c] sm:$0xf]
    %v9184 = vld [vmem:[#allocation17 + $0x20] sm:$0xf]
    %v9185 = vld [vmem:[#allocation17 + $0x24] sm:$0xf]
    %v9186 = vld [vmem:[#allocation17 + $0x28] sm:$0xf]
    %v9187 = vld [vmem:[#allocation17 + $0x2c] sm:$0xf]
    %v9188 = vld [vmem:[#allocation17 + $0x30] sm:$0xf]
    %v9189 = vld [vmem:[#allocation17 + $0x34] sm:$0xf]
    %v9190 = vld [vmem:[#allocation17 + $0x38] sm:$0xf]
    %v9191 = vld [vmem:[#allocation17 + $0x3c] sm:$0xf]
    %v9192 = vld [vmem:[#allocation19] sm:$0x1]
    %v9194 = vperm.slane %v9192, 0
    %v9212 = vunpack.c.l.b16 %v9176
    %v9213 = vunpack.c.l.b16 %v9177
    %v9214 = vunpack.c.l.b16 %v9178
    %v9215 = vunpack.c.l.b16 %v9179
    %v9216 = vunpack.c.l.b16 %v9180
    %v9217 = vunpack.c.l.b16 %v9181
    %v9218 = vunpack.c.l.b16 %v9182
    %v9219 = vunpack.c.l.b16 %v9183
    %v9220 = vunpack.c.l.b16 %v9184
    %v9221 = vunpack.c.l.b16 %v9185
    %v9222 = vunpack.c.l.b16 %v9186
    %v9223 = vunpack.c.l.b16 %v9187
    %v9224 = vunpack.c.l.b16 %v9188
    %v9225 = vunpack.c.l.b16 %v9189
    %v9226 = vunpack.c.l.b16 %v9190
    %v9227 = vunpack.c.l.b16 %v9191
    %v9228 = vpack.c.b16 %v9213, %v9212
    %v9229 = vpack.c.b16 %v9215, %v9214
    %v9230 = vpack.c.b16 %v9217, %v9216
    %v9231 = vpack.c.b16 %v9219, %v9218
    %v9232 = vpack.c.b16 %v9221, %v9220
    %v9233 = vpack.c.b16 %v9223, %v9222
    %v9234 = vpack.c.b16 %v9225, %v9224
    %v9235 = vpack.c.b16 %v9227, %v9226
    %9244 = vmatpush.bf16.msra.mxu0 %v9235
    %9245 = vmatpush.bf16.msra.mxu0 %v9234
    %9246 = vmatpush.bf16.msra.mxu0 %v9233
    %9247 = vmatpush.bf16.msra.mxu0 %v9232
    %9248 = vmatpush.bf16.msra.mxu0 %v9231
    %9249 = vmatpush.bf16.msra.mxu0 %v9230
    %9250 = vmatpush.bf16.msra.mxu0 %v9229
    %9251 = vmatpush.bf16.msra.mxu0 %v9228
    %9252 = vmatmul.bf16.gmra.mxu0 %v9160
    %v9253 = vpop.f32.mrf.mxu0
    %v9254 = vadd.f32 %v9194, %v9253
    %v9255 = vpop.f32.mrf.mxu0
    %v9256 = vadd.f32 %v9194, %v9255
    %9257 = vmatmul.bf16.gmra.mxu0 %v9161
    %v9258 = vpop.f32.mrf.mxu0
    %v9259 = vadd.f32 %v9194, %v9258
    %v9260 = vpop.f32.mrf.mxu0
    %v9261 = vadd.f32 %v9194, %v9260
    %9262 = vmatmul.bf16.gmra.mxu0 %v9162
    %v9263 = vpop.f32.mrf.mxu0
    %v9264 = vadd.f32 %v9194, %v9263
    %v9265 = vpop.f32.mrf.mxu0
    %v9266 = vadd.f32 %v9194, %v9265
    %9267 = vmatmul.bf16.gmra.mxu0 %v9163
    %v9268 = vpop.f32.mrf.mxu0
    %v9269 = vadd.f32 %v9194, %v9268
    %v9270 = vpop.f32.mrf.mxu0
    %v9271 = vadd.f32 %v9194, %v9270
    %9272 = vmatmul.bf16.gmra.mxu0 %v9164
    %v9273 = vpop.f32.mrf.mxu0
    %v9274 = vadd.f32 %v9194, %v9273
    %v9275 = vpop.f32.mrf.mxu0
    %v9276 = vadd.f32 %v9194, %v9275
    %9277 = vmatmul.bf16.gmra.mxu0 %v9165
    %v9278 = vpop.f32.mrf.mxu0
    %v9279 = vadd.f32 %v9194, %v9278
    %v9280 = vpop.f32.mrf.mxu0
    %v9281 = vadd.f32 %v9194, %v9280
    %9282 = vmatmul.bf16.gmra.mxu0 %v9166
    %v9283 = vpop.f32.mrf.mxu0
    %v9284 = vadd.f32 %v9194, %v9283
    %v9285 = vpop.f32.mrf.mxu0
    %v9286 = vadd.f32 %v9194, %v9285
    %9287 = vmatmul.bf16.gmra.mxu0 %v9167
    %v9288 = vpop.f32.mrf.mxu0
    %v9289 = vadd.f32 %v9194, %v9288
    %v9290 = vpop.f32.mrf.mxu0
    %v9291 = vadd.f32 %v9194, %v9290
    %9292 = vmatmul.bf16.gmra.mxu0 %v9168
    %v9293 = vpop.f32.mrf.mxu0
    %v9294 = vadd.f32 %v9194, %v9293
    %v9295 = vpop.f32.mrf.mxu0
    %v9296 = vadd.f32 %v9194, %v9295
    %9297 = vmatmul.bf16.gmra.mxu0 %v9169
    %v9298 = vpop.f32.mrf.mxu0
    %v9299 = vadd.f32 %v9194, %v9298
    %v9300 = vpop.f32.mrf.mxu0
    %v9301 = vadd.f32 %v9194, %v9300
    %9302 = vmatmul.bf16.gmra.mxu0 %v9170
    %v9303 = vpop.f32.mrf.mxu0
    %v9304 = vadd.f32 %v9194, %v9303
    %v9305 = vpop.f32.mrf.mxu0
    %v9306 = vadd.f32 %v9194, %v9305
    %9307 = vmatmul.bf16.gmra.mxu0 %v9171
    %v9308 = vpop.f32.mrf.mxu0
    %v9309 = vadd.f32 %v9194, %v9308
    %v9310 = vpop.f32.mrf.mxu0
    %v9311 = vadd.f32 %v9194, %v9310
    %9312 = vmatmul.bf16.gmra.mxu0 %v9172
    %v9313 = vpop.f32.mrf.mxu0
    %v9314 = vadd.f32 %v9194, %v9313
    %v9315 = vpop.f32.mrf.mxu0
    %v9316 = vadd.f32 %v9194, %v9315
    %9317 = vmatmul.bf16.gmra.mxu0 %v9173
    %v9318 = vpop.f32.mrf.mxu0
    %v9319 = vadd.f32 %v9194, %v9318
    %v9320 = vpop.f32.mrf.mxu0
    %v9321 = vadd.f32 %v9194, %v9320
    %9322 = vmatmul.bf16.gmra.mxu0 %v9174
    %v9323 = vpop.f32.mrf.mxu0
    %v9324 = vadd.f32 %v9194, %v9323
    %v9325 = vpop.f32.mrf.mxu0
    %v9326 = vadd.f32 %v9194, %v9325
    %9327 = vmatmul.bf16.gmra.mxu0 %v9175
    %v9328 = vpop.f32.mrf.mxu0
    %v9329 = vadd.f32 %v9194, %v9328
    %v9330 = vpop.f32.mrf.mxu0
    %v9331 = vadd.f32 %v9194, %v9330
    %9332 = vdwg.mxu0
    %9333 = vst [vmem:[#allocation20] sm:$0xff] %v9254
    %9334 = vst [vmem:[#allocation20 + $0x8] sm:$0xff] %v9256
    %9335 = vst [vmem:[#allocation20 + $0x10] sm:$0xff] %v9259
    %9336 = vst [vmem:[#allocation20 + $0x18] sm:$0xff] %v9261
    %9337 = vst [vmem:[#allocation20 + $0x20] sm:$0xff] %v9264
    %9338 = vst [vmem:[#allocation20 + $0x28] sm:$0xff] %v9266
    %9339 = vst [vmem:[#allocation20 + $0x30] sm:$0xff] %v9269
    %9340 = vst [vmem:[#allocation20 + $0x38] sm:$0xff] %v9271
    %9341 = vst [vmem:[#allocation20 + $0x40] sm:$0xff] %v9274
    %9342 = vst [vmem:[#allocation20 + $0x48] sm:$0xff] %v9276
    %9343 = vst [vmem:[#allocation20 + $0x50] sm:$0xff] %v9279
    %9344 = vst [vmem:[#allocation20 + $0x58] sm:$0xff] %v9281
    %9345 = vst [vmem:[#allocation20 + $0x60] sm:$0xff] %v9284
    %9346 = vst [vmem:[#allocation20 + $0x68] sm:$0xff] %v9286
    %9347 = vst [vmem:[#allocation20 + $0x70] sm:$0xff] %v9289
    %9348 = vst [vmem:[#allocation20 + $0x78] sm:$0xff] %v9291
    %9349 = vst [vmem:[#allocation20 + $0x80] sm:$0xff] %v9294
    %9350 = vst [vmem:[#allocation20 + $0x88] sm:$0xff] %v9296
    %9351 = vst [vmem:[#allocation20 + $0x90] sm:$0xff] %v9299
    %9352 = vst [vmem:[#allocation20 + $0x98] sm:$0xff] %v9301
    %9353 = vst [vmem:[#allocation20 + $0xa0] sm:$0xff] %v9304
    %9354 = vst [vmem:[#allocation20 + $0xa8] sm:$0xff] %v9306
    %9355 = vst [vmem:[#allocation20 + $0xb0] sm:$0xff] %v9309
    %9356 = vst [vmem:[#allocation20 + $0xb8] sm:$0xff] %v9311
    %9357 = vst [vmem:[#allocation20 + $0xc0] sm:$0xff] %v9314
    %9358 = vst [vmem:[#allocation20 + $0xc8] sm:$0xff] %v9316
    %9359 = vst [vmem:[#allocation20 + $0xd0] sm:$0xff] %v9319
    %9360 = vst [vmem:[#allocation20 + $0xd8] sm:$0xff] %v9321
    %9361 = vst [vmem:[#allocation20 + $0xe0] sm:$0xff] %v9324
    %9362 = vst [vmem:[#allocation20 + $0xe8] sm:$0xff] %v9326
    %9363 = vst [vmem:[#allocation20 + $0xf0] sm:$0xff] %v9329
    %9364 = vst [vmem:[#allocation20 + $0xf8] sm:$0xff] %v9331
    // Predicated region
    $region90: #{tpu_custom_call.1} parent=1 // pred_check
      _
    $region91: #{tpu_custom_call.1} parent=1 // pred_check_branch
      %9366 = sbr.rel (0) target = $region93
    $region92: #{tpu_custom_call.1} parent=1 // pred_region
      %9368 = vsyncadd [#allocation4], 0
      %s9369 = sshll.u32 [#allocation20], 4
      %s9370 = int_to_ptr.vmem [resolvable:$true] %s9369
      %s9371 = sshll.u32 %s11, 4
      %s9372 = int_to_ptr.hbm [resolvable:$true] %s9371
      %9377 = dma.vmem_to_hbm [thread:$0]  %s9370, 4096, %s9372, [#allocation4], 128, 128, 8
    $region93: #{tpu_custom_call.1} parent=1 // pred_fallthru
      _
    // Predicated region
    $region94: #{tpu_custom_call.1} parent=1 // pred_check
      _
    $region95: #{tpu_custom_call.1} parent=1 // pred_check_branch
      %9379 = sbr.rel (0) target = $region97
    $region96: #{tpu_custom_call.1} parent=1 // pred_region
      %9381 = dma.done [#allocation4], 4096
    $region97: #{tpu_custom_call.1} parent=1 // pred_fallthru
      _
    %9382 = vsyncpa [#allocation3], 1
    %9383 = vsyncpa [#allocation6], 1
    %9384 = vsyncpa [#allocation9], 1
    %9385 = vsyncpa [#allocation12], 1
    %9386 = vsyncpa [#allocation15], 1
    %9387 = vsyncpa [#allocation18], 1
    %9388 = vsyncpa [#allocation4], 1

</llo_original>
